<compile_context>
chip_gen: v6e
topology: v6e:2x2x1
jax: 0.10.0
libtpu: 0.0.40
codegen_flags: <defaults>
</compile_context>

<pallas_src>
import functools

import jax
import jax.numpy as jnp
from jax.experimental import pallas as pl
from jax.experimental.pallas import tpu as pltpu

EPS = 1e-5              # nn.BatchNorm2d default eps
LEAKY_SLOPE = 0.2       # nn.LeakyReLU(0.2)
KSIZE = 4               # all ConvTranspose2d layers use kernel_size=4
VMEM_BUDGET = 10 * 1024 * 1024   # stay under the 16 MiB v5e scoped-VMEM default


def _round_up(x, m):
    return ((x + m - 1) // m) * m


def _cdiv(a, b):
    return (a + b - 1) // b


# ----------------------------------------------------------------------------
# Pallas kernels
# ----------------------------------------------------------------------------
def _fused_matmul_bn_lrelu_kernel(p_ref, w_ref, g_ref, b_ref, fold_ref, unfold_ref,
                                  o_ref, y_ref, sum_ref, ssq_ref, *, tm, count):
    """One fused layer: matmul (bf16 in, f32 acc) + BN stats + BN apply + LeakyReLU.

    Grid axis 0 iterates M-tiles ("arbitrary").  y (pre-BN, f32) lives in a VMEM
    scratch; sum / sum-of-squares accumulate in VMEM; on the last step the
    full-batch BN scale/shift is computed and the bf16 output is written.
    """
    t = pl.program_id(0)

    @pl.when(t == 0)
    def _init():
        sum_ref[...] = jnp.zeros_like(sum_ref)
        ssq_ref[...] = jnp.zeros_like(ssq_ref)

    acc = jnp.dot(p_ref[...], w_ref[...], preferred_element_type=jnp.float32)
    row0 = pl.multiple_of(t * tm, tm)
    y_ref[pl.ds(row0, tm), :] = acc
    sum_ref[...] += jnp.sum(acc, axis=0, keepdims=True)
    ssq_ref[...] += jnp.sum(acc * acc, axis=0, keepdims=True)

    @pl.when(t == pl.num_programs(0) - 1)
    def _finalize():
        # Fold the phase-major column stats into per-channel stats (tiny dots).
        ch_sum = jnp.dot(sum_ref[...], fold_ref[...], preferred_element_type=jnp.float32)
        ch_ssq = jnp.dot(ssq_ref[...], fold_ref[...], preferred_element_type=jnp.float32)
        inv_n = 1.0 / count
        mean = ch_sum * inv_n
        # TODO(synk): switch to per-tile centered (Welford) sums if batches get
        # large enough for E[x^2]-mean^2 cancellation to matter.
        var = jnp.maximum(ch_ssq * inv_n - mean * mean, 0.0)
        scale_c = g_ref[...] * jax.lax.rsqrt(var + EPS)      # (1, CS)
        shift_c = b_ref[...] - mean * scale_c                # (1, CS)
        # Unfold per-channel scale/shift back to per-column vectors.
        scale = jnp.dot(scale_c, unfold_ref[...], preferred_element_type=jnp.float32)
        shift = jnp.dot(shift_c, unfold_ref[...], preferred_element_type=jnp.float32)

        def _apply(i, carry):
            r0 = pl.multiple_of(i * tm, tm)
            yv = y_ref[pl.ds(r0, tm), :] * scale + shift
            o_ref[pl.ds(r0, tm), :] = jnp.where(
                yv >= 0.0, yv, LEAKY_SLOPE * yv).astype(o_ref.dtype)
            return carry

        jax.lax.fori_loop(0, pl.num_programs(0), _apply, 0)


def _matmul_stats_kernel(p_ref, w_ref, y_ref, s_ref):
    """Two-pass fallback, pass 1: bf16 matmul (f32 acc) + per-tile partial stats."""
    acc = jnp.dot(p_ref[...], w_ref[...], preferred_element_type=jnp.float32)
    y_ref[...] = acc.astype(y_ref.dtype)                       # bf16 intermediate
    s_ref[0:1, :] = jnp.sum(acc, axis=0, keepdims=True)        # row 0: sum
    s_ref[1:2, :] = jnp.sum(acc * acc, axis=0, keepdims=True)  # row 1: sum of squares


def _bn_lrelu_kernel(y_ref, scale_ref, shift_ref, o_ref):
    """Two-pass fallback, pass 2: per-column BN scale/shift + LeakyReLU(0.2)."""
    y = y_ref[...].astype(jnp.float32) * scale_ref[...] + shift_ref[...]
    o_ref[...] = jnp.where(y >= 0.0, y, LEAKY_SLOPE * y).astype(o_ref.dtype)


def _matmul_bias_tanh_kernel(p_ref, w_ref, b_ref, o_ref):
    """Final ConvTranspose2d (phase fused) + bias + Tanh, bf16 output."""
    acc = jnp.dot(p_ref[...], w_ref[...], preferred_element_type=jnp.float32)
    o_ref[...] = jnp.tanh(acc + b_ref[...]).astype(o_ref.dtype)


# ----------------------------------------------------------------------------
# pallas_call wrappers
# ----------------------------------------------------------------------------
def _fused_matmul_bn_lrelu(patches, wmat, gamma, beta, phases, m_real):
    """Single-call fused layer.  Returns the (Mp, Cp) bf16 slab, or None if the
    slab does not fit comfortably in scoped VMEM (caller falls back)."""
    M, Kd = patches.shape
    Cp = wmat.shape[1]
    Co = gamma.shape[0]
    CS = _round_up(Co, 128)

    if M <= 1024:
        TM = _round_up(M, 16)
        Mp = TM
    else:
        TM = 512
        Mp = _round_up(M, TM)
    nt = Mp // TM

    vmem_est = (2 * TM * Kd * 2      # double-buffered bf16 patch tiles
                + 2 * Kd * Cp * 2    # weight block
                + Mp * Cp * 4        # f32 y scratch (resident)
                + Mp * Cp * 2        # bf16 output block (resident)
                + 2 * Cp * CS * 4    # fold / unfold matrices
                + 4 * Cp * 4 + 4 * CS * 4)
    if vmem_est > VMEM_BUDGET:
        return None

    if Mp != M:
        patches = jnp.pad(patches, ((0, Mp - M), (0, 0)))   # zero rows: stats unaffected
    p_bf = patches.astype(jnp.bfloat16)
    w_bf = wmat.astype(jnp.bfloat16)

    # fold[(phase*Co + c), c] = 1 ; zero rows for padded columns.
    eye = jnp.eye(Co, CS, dtype=jnp.float32)
    fold = jnp.pad(jnp.tile(eye, (phases, 1)), ((0, Cp - phases * Co), (0, 0)))
    unfold = fold.T
    g2 = jnp.pad(gamma.astype(jnp.float32), (0, CS - Co)).reshape(1, CS)
    b2 = jnp.pad(beta.astype(jnp.float32), (0, CS - Co)).reshape(1, CS)

    kernel = functools.partial(_fused_matmul_bn_lrelu_kernel,
                               tm=TM, count=float(phases * m_real))
    cost = pl.CostEstimate(
        flops=int(2 * Mp * Kd * Cp + 6 * Mp * Cp),
        transcendentals=0,
        bytes_accessed=int(Mp * Kd * 2 + Kd * Cp * 2 + Mp * Cp * 2),
    )
    return pl.pallas_call(
        kernel,
        out_shape=jax.ShapeDtypeStruct((Mp, Cp), jnp.bfloat16),
        grid=(nt,),
        in_specs=[pl.BlockSpec((TM, Kd), lambda i: (i, 0)),
                  pl.BlockSpec((Kd, Cp), lambda i: (0, 0)),
                  pl.BlockSpec((1, CS), lambda i: (0, 0)),
                  pl.BlockSpec((1, CS), lambda i: (0, 0)),
                  pl.BlockSpec((Cp, CS), lambda i: (0, 0)),
                  pl.BlockSpec((CS, Cp), lambda i: (0, 0))],
        out_specs=pl.BlockSpec((Mp, Cp), lambda i: (0, 0)),   # resident accumulator
        scratch_shapes=[pltpu.VMEM((Mp, Cp), jnp.float32),    # pre-BN y
                        pltpu.VMEM((1, Cp), jnp.float32),     # running sum
                        pltpu.VMEM((1, Cp), jnp.float32)],    # running sum of squares
        compiler_params=pltpu.CompilerParams(dimension_semantics=("arbitrary",)),
        cost_estimate=cost,
    )(p_bf, w_bf, g2, b2, fold, unfold)


def _tiled_matmul_stats(patches, wmat):
    """Fallback pass 1: (M, K) @ (K, Cp) -> bf16 y + per-tile BN partial stats."""
    M, Kd = patches.shape
    Cp = wmat.shape[1]
    per_row = 2 * (Kd * 2 + Cp * 2)
    fixed = 2 * Kd * Cp * 2 + 2 * 8 * Cp * 4
    fit = max(256, ((VMEM_BUDGET - fixed) // max(per_row, 1)) // 16 * 16)
    TM = int(max(16, min(2048, fit, _round_up(M, 16))))
    Mp = _round_up(M, TM)
    nt = Mp // TM
    if Mp != M:
        patches = jnp.pad(patches, ((0, Mp - M), (0, 0)))
    y, stats = pl.pallas_call(
        _matmul_stats_kernel,
        out_shape=(jax.ShapeDtypeStruct((Mp, Cp), jnp.bfloat16),
                   jax.ShapeDtypeStruct((nt * 8, Cp), jnp.float32)),
        grid=(nt,),
        in_specs=[pl.BlockSpec((TM, Kd), lambda i: (i, 0)),
                  pl.BlockSpec((Kd, Cp), lambda i: (0, 0))],
        out_specs=(pl.BlockSpec((TM, Cp), lambda i: (i, 0)),
                   pl.BlockSpec((8, Cp), lambda i: (i, 0))),
        compiler_params=pltpu.CompilerParams(dimension_semantics=("parallel",)),
        cost_estimate=pl.CostEstimate(
            flops=int(2 * Mp * Kd * Cp), transcendentals=0,
            bytes_accessed=int(Mp * Kd * 2 + Kd * Cp * 2 + Mp * Cp * 2 + nt * 8 * Cp * 4)),
    )(patches.astype(jnp.bfloat16), wmat.astype(jnp.bfloat16))
    stats = stats.reshape(nt, 8, Cp)
    return y, jnp.sum(stats[:, 0, :], axis=0), jnp.sum(stats[:, 1, :], axis=0), TM, nt


def _tiled_bn_lrelu(y, scale_cols, shift_cols, TM, nt):
    """Fallback pass 2: elementwise BN apply + LeakyReLU over the (Mp, Cp) slab."""
    Mp, Cp = y.shape
    return pl.pallas_call(
        _bn_lrelu_kernel,
        out_shape=jax.ShapeDtypeStruct((Mp, Cp), jnp.bfloat16),
        grid=(nt,),
        in_specs=[pl.BlockSpec((TM, Cp), lambda i: (i, 0)),
                  pl.BlockSpec((1, Cp), lambda i: (0, 0)),
                  pl.BlockSpec((1, Cp), lambda i: (0, 0))],
        out_specs=pl.BlockSpec((TM, Cp), lambda i: (i, 0)),
        compiler_params=pltpu.CompilerParams(dimension_semantics=("parallel",)),
    )(y, scale_cols.astype(jnp.float32), shift_cols.astype(jnp.float32))


def _two_pass_matmul_bn_lrelu(patches, wmat, gamma, beta, phases, m_real):
    """Fallback when the fused slab does not fit in VMEM."""
    Co = gamma.shape[0]
    Cp = wmat.shape[1]
    Creal = phases * Co
    y, col_sum, col_ssq, TM, nt = _tiled_matmul_stats(patches, wmat)
    sum_c = col_sum[:Creal].reshape(phases, Co).sum(axis=0)
    ssq_c = col_ssq[:Creal].reshape(phases, Co).sum(axis=0)
    count = float(phases * m_real)
    mean = sum_c / count
    var = jnp.maximum(ssq_c / count - mean * mean, 0.0)
    scale = gamma * jax.lax.rsqrt(var + EPS)
    shift = beta - mean * scale
    scale_cols = jnp.pad(jnp.tile(scale, phases), (0, Cp - Creal)).reshape(1, Cp)
    shift_cols = jnp.pad(jnp.tile(shift, phases), (0, Cp - Creal)).reshape(1, Cp)
    return _tiled_bn_lrelu(y, scale_cols, shift_cols, TM, nt)


def _tiled_matmul_bias_tanh(patches, wmat, bias_cols):
    """Final layer: (M, K) @ (K, Cp) + bias + tanh, bf16 output, tiled over M."""
    M, Kd = patches.shape
    Cp = wmat.shape[1]
    per_row = 2 * (Kd * 2 + Cp * 2)
    fixed = 2 * Kd * Cp * 2 + 2 * Cp * 4
    fit = max(16, ((VMEM_BUDGET - fixed) // max(per_row, 1)) // 16 * 16)
    TM = int(min(1024, fit, _round_up(M, 16)))
    if M >= 32:                       # >=2 tiles so a v7x megacore can shard the grid
        TM = min(TM, _round_up(_cdiv(M, 2), 16))
    TM = max(16, TM)
    Mp = _round_up(M, TM)
    nt = Mp // TM
    if Mp != M:
        patches = jnp.pad(patches, ((0, Mp - M), (0, 0)))
    out = pl.pallas_call(
        _matmul_bias_tanh_kernel,
        out_shape=jax.ShapeDtypeStruct((Mp, Cp), jnp.bfloat16),
        grid=(nt,),
        in_specs=[pl.BlockSpec((TM, Kd), lambda i: (i, 0)),
                  pl.BlockSpec((Kd, Cp), lambda i: (0, 0)),
                  pl.BlockSpec((1, Cp), lambda i: (0, 0))],
        out_specs=pl.BlockSpec((TM, Cp), lambda i: (i, 0)),
        compiler_params=pltpu.CompilerParams(dimension_semantics=("parallel",)),
        cost_estimate=pl.CostEstimate(
            flops=int(2 * Mp * Kd * Cp), transcendentals=int(Mp * Cp),
            bytes_accessed=int(Mp * Kd * 2 + Kd * Cp * 2 + Cp * 4 + Mp * Cp * 2)),
    )(patches.astype(jnp.bfloat16), wmat.astype(jnp.bfloat16),
      bias_cols.reshape(1, Cp).astype(jnp.float32))
    return out[:M]


# ----------------------------------------------------------------------------
# Plain-JAX glue: transposed-conv geometry (zero-FLOP layout work)
# ----------------------------------------------------------------------------
def _deconv_patches(x_nhwc, K, stride, padding):
    """Generic ConvTranspose2d -> stride-1 conv patches (s=1 layer and reference)."""
    N, H, W, Ci = x_nhwc.shape
    Hd = (H - 1) * stride + 1
    Wd = (W - 1) * stride + 1
    xd = jnp.zeros((N, Hd, Wd, Ci), x_nhwc.dtype)
    xd = xd.at[:, ::stride, ::stride, :].set(x_nhwc)
    pad = K - 1 - padding
    xp = jnp.pad(xd, ((0, 0), (pad, pad), (pad, pad), (0, 0)))
    OH = Hd + 2 * pad - K + 1
    OW = Wd + 2 * pad - K + 1
    cols = [xp[:, kh:kh + OH, kw:kw + OW, :].reshape(N * OH * OW, Ci)
            for kh in range(K) for kw in range(K)]
    return jnp.concatenate(cols, axis=1), (N, OH, OW)      # (N*OH*OW, K*K*Ci)


def _deconv_weight_to_mat(w):
    """PyTorch ConvTranspose2d weight (Cin, Cout, K, K) -> (K*K*Cin, Cout)."""
    Ci, Co, K, _ = w.shape
    wf = jnp.flip(w, axis=(2, 3))                    # flip spatial taps
    wf = jnp.transpose(wf, (2, 3, 0, 1))             # (K, K, Cin, Cout)
    return wf.reshape(K * K * Ci, Co)


def _fused_phase_patches(x_nhwc):
    """stride=2/K=4/pad=1 deconv -> 3x3 stride-1 patches on a 1-padded input."""
    # TODO(synk): form these patches inside the kernel (halo'd BlockSpecs) to cut
    # the dominant HBM traffic on the memory-bound stride-2 layers.
    N, H, W, Ci = x_nhwc.shape
    xp = jnp.pad(x_nhwc, ((0, 0), (1, 1), (1, 1), (0, 0)))
    cols = [xp[:, r:r + H, s:s + W, :].reshape(N * H * W, Ci)
            for r in range(3) for s in range(3)]
    return jnp.concatenate(cols, axis=1), (N, H, W)         # (N*H*W, 9*Ci)


def _fused_phase_weight(w):
    """Fuse the 4 output phases of a s=2/K=4/p=1 deconv: (9*Cin, 4*Cout)."""
    Ci, Co, K, _ = w.shape                                   # K == 4
    Wf = jnp.zeros((3, 3, Ci, 4, Co), w.dtype)
    for py in range(2):
        for px in range(2):
            for kh in range(py, K, 2):
                for kw in range(px, K, 2):
                    r = (py + kh) // 2
                    s = (px + kw) // 2
                    Wf = Wf.at[r, s, :, py * 2 + px, :].set(w[:, :, K - 1 - kh, K - 1 - kw])
    return Wf.reshape(9 * Ci, 4 * Co)


def _depth_to_space(y, N, H, W, Co):
    """(N*H*W, 4*Co) with columns (phase, co) -> (N, 2H, 2W, Co)."""
    y = y.reshape(N, H, W, 2, 2, Co)
    y = jnp.transpose(y, (0, 1, 3, 2, 4, 5))
    return y.reshape(N, 2 * H, 2 * W, Co)


# ----------------------------------------------------------------------------
# Layer wrappers
# ----------------------------------------------------------------------------
def _deconv_bn_lrelu_matmul(patches, wmat, gamma, beta, phases, m_real):
    out = _fused_matmul_bn_lrelu(patches, wmat, gamma, beta, phases, m_real)
    if out is None:
        out = _two_pass_matmul_bn_lrelu(patches, wmat, gamma, beta, phases, m_real)
    return out


def deconv_bn_lrelu_s1(x_nhwc, w, gamma, beta, padding):
    """stride-1 ConvTranspose2d + BatchNorm2d + LeakyReLU (first projection layer)."""
    Co = w.shape[1]
    patches, (N, OH, OW) = _deconv_patches(x_nhwc, KSIZE, 1, padding)
    Cp = _round_up(Co, 128)
    wmat = jnp.pad(_deconv_weight_to_mat(w), ((0, 0), (0, Cp - Co)))
    M = N * OH * OW
    out = _deconv_bn_lrelu_matmul(patches, wmat, gamma, beta, phases=1, m_real=M)
    return out[:M, :Co].reshape(N, OH, OW, Co)


def deconv_bn_lrelu_s2(x_nhwc, w, gamma, beta):
    """stride-2 ConvTranspose2d (phase-fused) + BatchNorm2d + LeakyReLU."""
    Co = w.shape[1]
    patches, (N, H, W) = _fused_phase_patches(x_nhwc)
    Creal = 4 * Co
    Cp = _round_up(Creal, 128)
    wmat = jnp.pad(_fused_phase_weight(w), ((0, 0), (0, Cp - Creal)))
    M = N * H * W
    out = _deconv_bn_lrelu_matmul(patches, wmat, gamma, beta, phases=4, m_real=M)
    return _depth_to_space(out[:M, :Creal], N, H, W, Co)


def deconv_tanh_s2(x_nhwc, w, bias):
    """Final stride-2 ConvTranspose2d (phase-fused, with bias) + Tanh."""
    Co = w.shape[1]
    patches, (N, H, W) = _fused_phase_patches(x_nhwc)
    Creal = 4 * Co
    Cp = _round_up(Creal, 128)
    wmat = jnp.pad(_fused_phase_weight(w), ((0, 0), (0, Cp - Creal)))
    bias_cols = jnp.pad(jnp.tile(bias, 4), (0, Cp - Creal))
    out = _tiled_matmul_bias_tanh(patches, wmat, bias_cols)
    return _depth_to_space(out[:, :Creal], N, H, W, Co)


# ----------------------------------------------------------------------------
# Full generator forward
# ----------------------------------------------------------------------------
def generator_forward(params, x_nchw):
    x = jnp.transpose(x_nchw, (0, 2, 3, 1)).astype(jnp.bfloat16)   # NCHW -> NHWC
    w0, g0, b0 = params["blocks"][0]
    x = deconv_bn_lrelu_s1(x, w0, g0, b0, padding=0)
    for (w, g, b) in params["blocks"][1:]:
        x = deconv_bn_lrelu_s2(x, w, g, b)
    x = deconv_tanh_s2(x, params["final_w"], params["final_b"])
    return jnp.transpose(x, (0, 3, 1, 2)).astype(jnp.float32)       # NHWC -> NCHW


def generator_reference(params, x_nchw):
    """Pure-JAX f32 reference (zero-dilated formulation, no Pallas)."""
    hi = jax.lax.Precision.HIGHEST
    strides_pads = [(1, 0), (2, 1), (2, 1), (2, 1)]
    x = jnp.transpose(x_nchw, (0, 2, 3, 1))
    for (w, g, b), (s, p) in zip(params["blocks"], strides_pads):
        patches, (N, OH, OW) = _deconv_patches(x, KSIZE, s, p)
        acc = jnp.dot(patches, _deconv_weight_to_mat(w), precision=hi)
        mean = acc.mean(0, keepdims=True)
        var = jnp.square(acc - mean).mean(0, keepdims=True)
        y = (acc - mean) / jnp.sqrt(var + EPS) * g.reshape(1, -1) + b.reshape(1, -1)
        y = jnp.where(y >= 0.0, y, LEAKY_SLOPE * y)
        x = y.reshape(N, OH, OW, -1)
    patches, (N, OH, OW) = _deconv_patches(x, KSIZE, 2, 1)
    acc = jnp.dot(patches, _deconv_weight_to_mat(params["final_w"]), precision=hi)
    acc = acc + params["final_b"].reshape(1, -1)
    y = jnp.tanh(acc).reshape(N, OH, OW, -1)
    return jnp.transpose(y, (0, 3, 1, 2))


# ----------------------------------------------------------------------------
# Deterministic parameter init (synthetic; shapes follow Generator.__init__)
# ----------------------------------------------------------------------------
def init_generator_params(key, noise_dim, channels_img, features_g):
    keys = jax.random.split(key, 16)
    chans = [
        (noise_dim, features_g * 16),
        (features_g * 16, features_g * 8),
        (features_g * 8, features_g * 4),
        (features_g * 4, features_g * 2),
    ]
    blocks = []
    for i, (ci, co) in enumerate(chans):
        w = 0.05 * jax.random.normal(keys[3 * i], (ci, co, KSIZE, KSIZE), jnp.float32)
        gamma = 1.0 + 0.1 * jax.random.normal(keys[3 * i + 1], (co,), jnp.float32)
        beta = 0.1 * jax.random.normal(keys[3 * i + 2], (co,), jnp.float32)
        blocks.append((w, gamma, beta))
    final_w = 0.05 * jax.random.normal(
        keys[12], (features_g * 2, channels_img, KSIZE, KSIZE), jnp.float32
    )
    final_b = 0.1 * jax.random.normal(keys[13], (channels_img,), jnp.float32)
    return {"blocks": blocks, "final_w": final_w, "final_b": final_b}, keys[14]


if __name__ == "__main__":
    noise_dim, channels_img, features_g, batch = 32, 3, 8, 2

    params, xkey = init_generator_params(
        jax.random.PRNGKey(0), noise_dim, channels_img, features_g
    )
    x = jax.random.normal(xkey, (batch, noise_dim, 1, 1), jnp.float32)

    fwd = jax.jit(generator_forward)
    out = jax.block_until_ready(fwd(params, x))

    assert out.shape == (batch, channels_img, 64, 64), out.shape
    assert bool(jnp.all(jnp.isfinite(out)))

    ref = jax.block_until_ready(generator_reference(params, x))
    max_err = float(jnp.max(jnp.abs(out - ref)))
    # bf16 matmul inputs / bf16 activations (f32 accumulation & BN stats) vs an
    # f32 HIGHEST-precision reference, compounded across 5 layers.
    assert max_err < 1e-1, f"mismatch vs reference: {max_err}"

    print("KERNEL_OK")
</pallas_src>

<mosaic_0001>
module attributes {stable_mosaic.version = 11 : i64} {
  func.func @_fused_matmul_bn_lrelu_kernel(%arg0: i32, %arg1: memref<32x512xbf16, #tpu.memory_space<vmem>>, %arg2: memref<512x128xbf16, #tpu.memory_space<vmem>>, %arg3: memref<1x128xf32, #tpu.memory_space<vmem>>, %arg4: memref<1x128xf32, #tpu.memory_space<vmem>>, %arg5: memref<128x128xf32, #tpu.memory_space<vmem>>, %arg6: memref<128x128xf32, #tpu.memory_space<vmem>>, %arg7: memref<32x128xbf16, #tpu.memory_space<vmem>>, %arg8: memref<32x128xf32, #tpu.memory_space<vmem>>, %arg9: memref<1x128xf32, #tpu.memory_space<vmem>>, %arg10: memref<1x128xf32, #tpu.memory_space<vmem>>) attributes {dimension_semantics = [#tpu.dimension_semantics<arbitrary>], iteration_bounds = array<i64: 1>, scalar_prefetch = 0 : i64, scratch_operands = 3 : i64, tpu.core_type = #tpu.core_type<tc>, window_params = [{transform_indices = @transform_0, window_bounds = array<i64: 32, 512>}, {pipeline_mode = #tpu.pipeline_mode<synchronous>, transform_indices = @transform_1, window_bounds = array<i64: 512, 128>}, {pipeline_mode = #tpu.pipeline_mode<synchronous>, transform_indices = @transform_2, window_bounds = array<i64: 1, 128>}, {pipeline_mode = #tpu.pipeline_mode<synchronous>, transform_indices = @transform_3, window_bounds = array<i64: 1, 128>}, {pipeline_mode = #tpu.pipeline_mode<synchronous>, transform_indices = @transform_4, window_bounds = array<i64: 128, 128>}, {pipeline_mode = #tpu.pipeline_mode<synchronous>, transform_indices = @transform_5, window_bounds = array<i64: 128, 128>}, {pipeline_mode = #tpu.pipeline_mode<synchronous>, transform_indices = @transform_6, window_bounds = array<i64: 32, 128>}]} {
    %c0_i32 = arith.constant 0 : i32
    %0 = arith.cmpi eq, %arg0, %c0_i32 : i32
    %1 = arith.extui %0 : i1 to i32
    %c0_i32_0 = arith.constant 0 : i32
    %2 = arith.cmpi ne, %1, %c0_i32_0 : i32
    scf.if %2 {
      %cst_17 = arith.constant 0.000000e+00 : f32
      %24 = vector.broadcast %cst_17 : f32 to vector<1x128xf32>
      %c0_18 = arith.constant 0 : index
      %c0_19 = arith.constant 0 : index
      %25 = vector.load %arg9[%c0_18, %c0_19] : memref<1x128xf32, #tpu.memory_space<vmem>>, vector<1x128xf32>
      tpu.vector_store %arg9[%c0_18, %c0_19], %24 {strides = array<i32>} : memref<1x128xf32, #tpu.memory_space<vmem>>, vector<1x128xf32>,
      %cst_20 = arith.constant 0.000000e+00 : f32
      %26 = vector.broadcast %cst_20 : f32 to vector<1x128xf32>
      %c0_21 = arith.constant 0 : index
      %c0_22 = arith.constant 0 : index
      %27 = vector.load %arg10[%c0_21, %c0_22] : memref<1x128xf32, #tpu.memory_space<vmem>>, vector<1x128xf32>
      tpu.vector_store %arg10[%c0_21, %c0_22], %26 {strides = array<i32>} : memref<1x128xf32, #tpu.memory_space<vmem>>, vector<1x128xf32>,
    } else {
    }
    %c0 = arith.constant 0 : index
    %c0_1 = arith.constant 0 : index
    %3 = vector.load %arg1[%c0, %c0_1] : memref<32x512xbf16, #tpu.memory_space<vmem>>, vector<32x512xbf16>
    %c0_2 = arith.constant 0 : index
    %c0_3 = arith.constant 0 : index
    %4 = vector.load %arg2[%c0_2, %c0_3] : memref<512x128xbf16, #tpu.memory_space<vmem>>, vector<512x128xbf16>
    %cst = arith.constant dense<0.000000e+00> : vector<32x128xf32>
    %5 = tpu.matmul %3, %4, %cst {dimension_numbers = #tpu.dot_dimension_numbers<[1], [0], [0], [1], [0, 0, 1, 1], [], []>} : vector<32x512xbf16>, vector<512x128xbf16>, vector<32x128xf32> -> vector<32x128xf32>
    %c32_i32 = arith.constant 32 : i32
    %6 = arith.muli %arg0, %c32_i32 : i32
    %7 = tpu.assume_multiple %6, 32 : i32
    %8 = arith.index_cast %7 : i32 to index
    %c0_4 = arith.constant 0 : index
    %9 = vector.load %arg8[%8, %c0_4] : memref<32x128xf32, #tpu.memory_space<vmem>>, vector<32x128xf32>
    tpu.vector_store %arg8[%8, %c0_4], %5 {strides = array<i32>} : memref<32x128xf32, #tpu.memory_space<vmem>>, vector<32x128xf32>,
    %c0_5 = arith.constant 0 : index
    %c0_6 = arith.constant 0 : index
    %10 = vector.load %arg9[%c0_5, %c0_6] : memref<1x128xf32, #tpu.memory_space<vmem>>, vector<1x128xf32>
    %cst_7 = arith.constant dense<0.000000e+00> : vector<128xf32>
    %11 = vector.multi_reduction <add>, %5, %cst_7 [0] : vector<32x128xf32> to vector<128xf32>
    %12 = vector.shape_cast %11 : vector<128xf32> to vector<1x128xf32>
    %13 = arith.addf %10, %12 : vector<1x128xf32>
    %c0_8 = arith.constant 0 : index
    %c0_9 = arith.constant 0 : index
    %14 = vector.load %arg9[%c0_8, %c0_9] : memref<1x128xf32, #tpu.memory_space<vmem>>, vector<1x128xf32>
    tpu.vector_store %arg9[%c0_8, %c0_9], %13 {strides = array<i32>} : memref<1x128xf32, #tpu.memory_space<vmem>>, vector<1x128xf32>,
    %c0_10 = arith.constant 0 : index
    %c0_11 = arith.constant 0 : index
    %15 = vector.load %arg10[%c0_10, %c0_11] : memref<1x128xf32, #tpu.memory_space<vmem>>, vector<1x128xf32>
    %16 = arith.mulf %5, %5 : vector<32x128xf32>
    %cst_12 = arith.constant dense<0.000000e+00> : vector<128xf32>
    %17 = vector.multi_reduction <add>, %16, %cst_12 [0] : vector<32x128xf32> to vector<128xf32>
    %18 = vector.shape_cast %17 : vector<128xf32> to vector<1x128xf32>
    %19 = arith.addf %15, %18 : vector<1x128xf32>
    %c0_13 = arith.constant 0 : index
    %c0_14 = arith.constant 0 : index
    %20 = vector.load %arg10[%c0_13, %c0_14] : memref<1x128xf32, #tpu.memory_space<vmem>>, vector<1x128xf32>
    tpu.vector_store %arg10[%c0_13, %c0_14], %19 {strides = array<i32>} : memref<1x128xf32, #tpu.memory_space<vmem>>, vector<1x128xf32>,
    %c0_i32_15 = arith.constant 0 : i32
    %21 = arith.cmpi eq, %arg0, %c0_i32_15 : i32
    %22 = arith.extui %21 : i1 to i32
    %c0_i32_16 = arith.constant 0 : i32
    %23 = arith.cmpi ne, %22, %c0_i32_16 : i32
    scf.if %23 {
      %c0_17 = arith.constant 0 : index
      %c0_18 = arith.constant 0 : index
      %24 = vector.load %arg9[%c0_17, %c0_18] : memref<1x128xf32, #tpu.memory_space<vmem>>, vector<1x128xf32>
      %c0_19 = arith.constant 0 : index
      %c0_20 = arith.constant 0 : index
      %25 = vector.load %arg5[%c0_19, %c0_20] : memref<128x128xf32, #tpu.memory_space<vmem>>, vector<128x128xf32>
      %cst_21 = arith.constant dense<0.000000e+00> : vector<1x128xf32>
      %26 = tpu.matmul %24, %25, %cst_21 {dimension_numbers = #tpu.dot_dimension_numbers<[1], [0], [0], [1], [0, 0, 1, 1], [], []>} : vector<1x128xf32>, vector<128x128xf32>, vector<1x128xf32> -> vector<1x128xf32>
      %c0_22 = arith.constant 0 : index
      %c0_23 = arith.constant 0 : index
      %27 = vector.load %arg10[%c0_22, %c0_23] : memref<1x128xf32, #tpu.memory_space<vmem>>, vector<1x128xf32>
      %c0_24 = arith.constant 0 : index
      %c0_25 = arith.constant 0 : index
      %28 = vector.load %arg5[%c0_24, %c0_25] : memref<128x128xf32, #tpu.memory_space<vmem>>, vector<128x128xf32>
      %cst_26 = arith.constant dense<0.000000e+00> : vector<1x128xf32>
      %29 = tpu.matmul %27, %28, %cst_26 {dimension_numbers = #tpu.dot_dimension_numbers<[1], [0], [0], [1], [0, 0, 1, 1], [], []>} : vector<1x128xf32>, vector<128x128xf32>, vector<1x128xf32> -> vector<1x128xf32>
      %cst_27 = arith.constant 3.125000e-02 : f32
      %30 = vector.broadcast %cst_27 : f32 to vector<1x128xf32>
      %31 = arith.mulf %26, %30 : vector<1x128xf32>
      %cst_28 = arith.constant 3.125000e-02 : f32
      %32 = vector.broadcast %cst_28 : f32 to vector<1x128xf32>
      %33 = arith.mulf %29, %32 : vector<1x128xf32>
      %34 = arith.mulf %31, %31 : vector<1x128xf32>
      %35 = arith.subf %33, %34 : vector<1x128xf32>
      %cst_29 = arith.constant 0.000000e+00 : f32
      %36 = vector.broadcast %cst_29 : f32 to vector<1x128xf32>
      %37 = arith.maximumf %35, %36 : vector<1x128xf32>
      %c0_30 = arith.constant 0 : index
      %c0_31 = arith.constant 0 : index
      %38 = vector.load %arg3[%c0_30, %c0_31] : memref<1x128xf32, #tpu.memory_space<vmem>>, vector<1x128xf32>
      %cst_32 = arith.constant 9.99999974E-6 : f32
      %39 = vector.broadcast %cst_32 : f32 to vector<1x128xf32>
      %40 = arith.addf %37, %39 : vector<1x128xf32>
      %41 = math.rsqrt %40 : vector<1x128xf32>
      %42 = arith.mulf %38, %41 : vector<1x128xf32>
      %c0_33 = arith.constant 0 : index
      %c0_34 = arith.constant 0 : index
      %43 = vector.load %arg4[%c0_33, %c0_34] : memref<1x128xf32, #tpu.memory_space<vmem>>, vector<1x128xf32>
      %44 = arith.mulf %31, %42 : vector<1x128xf32>
      %45 = arith.subf %43, %44 : vector<1x128xf32>
      %c0_35 = arith.constant 0 : index
      %c0_36 = arith.constant 0 : index
      %46 = vector.load %arg6[%c0_35, %c0_36] : memref<128x128xf32, #tpu.memory_space<vmem>>, vector<128x128xf32>
      %cst_37 = arith.constant dense<0.000000e+00> : vector<1x128xf32>
      %47 = tpu.matmul %42, %46, %cst_37 {dimension_numbers = #tpu.dot_dimension_numbers<[1], [0], [0], [1], [0, 0, 1, 1], [], []>} : vector<1x128xf32>, vector<128x128xf32>, vector<1x128xf32> -> vector<1x128xf32>
      %c0_38 = arith.constant 0 : index
      %c0_39 = arith.constant 0 : index
      %48 = vector.load %arg6[%c0_38, %c0_39] : memref<128x128xf32, #tpu.memory_space<vmem>>, vector<128x128xf32>
      %cst_40 = arith.constant dense<0.000000e+00> : vector<1x128xf32>
      %49 = tpu.matmul %45, %48, %cst_40 {dimension_numbers = #tpu.dot_dimension_numbers<[1], [0], [0], [1], [0, 0, 1, 1], [], []>} : vector<1x128xf32>, vector<128x128xf32>, vector<1x128xf32> -> vector<1x128xf32>
      %c0_i32_41 = arith.constant 0 : i32
      %c32_i32_42 = arith.constant 32 : i32
      %50 = arith.muli %c0_i32_41, %c32_i32_42 : i32
      %51 = tpu.assume_multiple %50, 32 : i32
      %52 = arith.index_cast %51 : i32 to index
      %c0_43 = arith.constant 0 : index
      %53 = vector.load %arg8[%52, %c0_43] : memref<32x128xf32, #tpu.memory_space<vmem>>, vector<32x128xf32>
      %54 = vector.broadcast %47 : vector<1x128xf32> to vector<32x128xf32>
      %55 = arith.mulf %53, %54 : vector<32x128xf32>
      %56 = vector.broadcast %49 : vector<1x128xf32> to vector<32x128xf32>
      %57 = arith.addf %55, %56 : vector<32x128xf32>
      %cst_44 = arith.constant 0.000000e+00 : f32
      %58 = vector.broadcast %cst_44 : f32 to vector<32x128xf32>
      %59 = arith.cmpf oge, %57, %58 : vector<32x128xf32>
      %cst_45 = arith.constant 2.000000e-01 : f32
      %60 = vector.broadcast %cst_45 : f32 to vector<32x128xf32>
      %61 = arith.mulf %60, %57 : vector<32x128xf32>
      %62 = arith.select %59, %57, %61 : vector<32x128xi1>, vector<32x128xf32>
      %63 = arith.truncf %62 : vector<32x128xf32> to vector<32x128xbf16>
      %64 = arith.index_cast %51 : i32 to index
      %c0_46 = arith.constant 0 : index
      %65 = vector.load %arg7[%64, %c0_46] : memref<32x128xbf16, #tpu.memory_space<vmem>>, vector<32x128xbf16>
      tpu.vector_store %arg7[%64, %c0_46], %63 {strides = array<i32>} : memref<32x128xbf16, #tpu.memory_space<vmem>>, vector<32x128xbf16>,
      %c1_i32 = arith.constant 1 : i32
    } else {
    }
    return
  }
  func.func @transform_0(%arg0: i32) -> (i32, i32) {
    %c0_i32 = arith.constant 0 : i32
    %c0_i32_0 = arith.constant 0 : i32
    return %arg0, %c0_i32 : i32, i32
  }
  func.func @transform_1(%arg0: i32) -> (i32, i32) {
    %c0_i32 = arith.constant 0 : i32
    %c0_i32_0 = arith.constant 0 : i32
    %c0_i32_1 = arith.constant 0 : i32
    return %c0_i32, %c0_i32_0 : i32, i32
  }
  func.func @transform_2(%arg0: i32) -> (i32, i32) {
    %c0_i32 = arith.constant 0 : i32
    %c0_i32_0 = arith.constant 0 : i32
    %c0_i32_1 = arith.constant 0 : i32
    return %c0_i32, %c0_i32_0 : i32, i32
  }
  func.func @transform_3(%arg0: i32) -> (i32, i32) {
    %c0_i32 = arith.constant 0 : i32
    %c0_i32_0 = arith.constant 0 : i32
    %c0_i32_1 = arith.constant 0 : i32
    return %c0_i32, %c0_i32_0 : i32, i32
  }
  func.func @transform_4(%arg0: i32) -> (i32, i32) {
    %c0_i32 = arith.constant 0 : i32
    %c0_i32_0 = arith.constant 0 : i32
    %c0_i32_1 = arith.constant 0 : i32
    return %c0_i32, %c0_i32_0 : i32, i32
  }
  func.func @transform_5(%arg0: i32) -> (i32, i32) {
    %c0_i32 = arith.constant 0 : i32
    %c0_i32_0 = arith.constant 0 : i32
    %c0_i32_1 = arith.constant 0 : i32
    return %c0_i32, %c0_i32_0 : i32, i32
  }
  func.func @transform_6(%arg0: i32) -> (i32, i32) {
    %c0_i32 = arith.constant 0 : i32
    %c0_i32_0 = arith.constant 0 : i32
    %c0_i32_1 = arith.constant 0 : i32
    return %c0_i32, %c0_i32_0 : i32, i32
  }
}

module attributes {stable_mosaic.version = 11 : i64} {
  func.func @_fused_matmul_bn_lrelu_kernel(%arg0: i32, %arg1: memref<32x1152xbf16, #tpu.memory_space<vmem>>, %arg2: memref<1152x256xbf16, #tpu.memory_space<vmem>>, %arg3: memref<1x128xf32, #tpu.memory_space<vmem>>, %arg4: memref<1x128xf32, #tpu.memory_space<vmem>>, %arg5: memref<256x128xf32, #tpu.memory_space<vmem>>, %arg6: memref<128x256xf32, #tpu.memory_space<vmem>>, %arg7: memref<32x256xbf16, #tpu.memory_space<vmem>>, %arg8: memref<32x256xf32, #tpu.memory_space<vmem>>, %arg9: memref<1x256xf32, #tpu.memory_space<vmem>>, %arg10: memref<1x256xf32, #tpu.memory_space<vmem>>) attributes {dimension_semantics = [#tpu.dimension_semantics<arbitrary>], iteration_bounds = array<i64: 1>, scalar_prefetch = 0 : i64, scratch_operands = 3 : i64, tpu.core_type = #tpu.core_type<tc>, window_params = [{transform_indices = @transform_0, window_bounds = array<i64: 32, 1152>}, {pipeline_mode = #tpu.pipeline_mode<synchronous>, transform_indices = @transform_1, window_bounds = array<i64: 1152, 256>}, {pipeline_mode = #tpu.pipeline_mode<synchronous>, transform_indices = @transform_2, window_bounds = array<i64: 1, 128>}, {pipeline_mode = #tpu.pipeline_mode<synchronous>, transform_indices = @transform_3, window_bounds = array<i64: 1, 128>}, {pipeline_mode = #tpu.pipeline_mode<synchronous>, transform_indices = @transform_4, window_bounds = array<i64: 256, 128>}, {pipeline_mode = #tpu.pipeline_mode<synchronous>, transform_indices = @transform_5, window_bounds = array<i64: 128, 256>}, {pipeline_mode = #tpu.pipeline_mode<synchronous>, transform_indices = @transform_6, window_bounds = array<i64: 32, 256>}]} {
    %c0_i32 = arith.constant 0 : i32
    %0 = arith.cmpi eq, %arg0, %c0_i32 : i32
    %1 = arith.extui %0 : i1 to i32
    %c0_i32_0 = arith.constant 0 : i32
    %2 = arith.cmpi ne, %1, %c0_i32_0 : i32
    scf.if %2 {
      %cst_17 = arith.constant 0.000000e+00 : f32
      %24 = vector.broadcast %cst_17 : f32 to vector<1x256xf32>
      %c0_18 = arith.constant 0 : index
      %c0_19 = arith.constant 0 : index
      %25 = vector.load %arg9[%c0_18, %c0_19] : memref<1x256xf32, #tpu.memory_space<vmem>>, vector<1x256xf32>
      tpu.vector_store %arg9[%c0_18, %c0_19], %24 {strides = array<i32>} : memref<1x256xf32, #tpu.memory_space<vmem>>, vector<1x256xf32>,
      %cst_20 = arith.constant 0.000000e+00 : f32
      %26 = vector.broadcast %cst_20 : f32 to vector<1x256xf32>
      %c0_21 = arith.constant 0 : index
      %c0_22 = arith.constant 0 : index
      %27 = vector.load %arg10[%c0_21, %c0_22] : memref<1x256xf32, #tpu.memory_space<vmem>>, vector<1x256xf32>
      tpu.vector_store %arg10[%c0_21, %c0_22], %26 {strides = array<i32>} : memref<1x256xf32, #tpu.memory_space<vmem>>, vector<1x256xf32>,
    } else {
    }
    %c0 = arith.constant 0 : index
    %c0_1 = arith.constant 0 : index
    %3 = vector.load %arg1[%c0, %c0_1] : memref<32x1152xbf16, #tpu.memory_space<vmem>>, vector<32x1152xbf16>
    %c0_2 = arith.constant 0 : index
    %c0_3 = arith.constant 0 : index
    %4 = vector.load %arg2[%c0_2, %c0_3] : memref<1152x256xbf16, #tpu.memory_space<vmem>>, vector<1152x256xbf16>
    %cst = arith.constant dense<0.000000e+00> : vector<32x256xf32>
    %5 = tpu.matmul %3, %4, %cst {dimension_numbers = #tpu.dot_dimension_numbers<[1], [0], [0], [1], [0, 0, 1, 1], [], []>} : vector<32x1152xbf16>, vector<1152x256xbf16>, vector<32x256xf32> -> vector<32x256xf32>
    %c32_i32 = arith.constant 32 : i32
    %6 = arith.muli %arg0, %c32_i32 : i32
    %7 = tpu.assume_multiple %6, 32 : i32
    %8 = arith.index_cast %7 : i32 to index
    %c0_4 = arith.constant 0 : index
    %9 = vector.load %arg8[%8, %c0_4] : memref<32x256xf32, #tpu.memory_space<vmem>>, vector<32x256xf32>
    tpu.vector_store %arg8[%8, %c0_4], %5 {strides = array<i32>} : memref<32x256xf32, #tpu.memory_space<vmem>>, vector<32x256xf32>,
    %c0_5 = arith.constant 0 : index
    %c0_6 = arith.constant 0 : index
    %10 = vector.load %arg9[%c0_5, %c0_6] : memref<1x256xf32, #tpu.memory_space<vmem>>, vector<1x256xf32>
    %cst_7 = arith.constant dense<0.000000e+00> : vector<256xf32>
    %11 = vector.multi_reduction <add>, %5, %cst_7 [0] : vector<32x256xf32> to vector<256xf32>
    %12 = vector.shape_cast %11 : vector<256xf32> to vector<1x256xf32>
    %13 = arith.addf %10, %12 : vector<1x256xf32>
    %c0_8 = arith.constant 0 : index
    %c0_9 = arith.constant 0 : index
    %14 = vector.load %arg9[%c0_8, %c0_9] : memref<1x256xf32, #tpu.memory_space<vmem>>, vector<1x256xf32>
    tpu.vector_store %arg9[%c0_8, %c0_9], %13 {strides = array<i32>} : memref<1x256xf32, #tpu.memory_space<vmem>>, vector<1x256xf32>,
    %c0_10 = arith.constant 0 : index
    %c0_11 = arith.constant 0 : index
    %15 = vector.load %arg10[%c0_10, %c0_11] : memref<1x256xf32, #tpu.memory_space<vmem>>, vector<1x256xf32>
    %16 = arith.mulf %5, %5 : vector<32x256xf32>
    %cst_12 = arith.constant dense<0.000000e+00> : vector<256xf32>
    %17 = vector.multi_reduction <add>, %16, %cst_12 [0] : vector<32x256xf32> to vector<256xf32>
    %18 = vector.shape_cast %17 : vector<256xf32> to vector<1x256xf32>
    %19 = arith.addf %15, %18 : vector<1x256xf32>
    %c0_13 = arith.constant 0 : index
    %c0_14 = arith.constant 0 : index
    %20 = vector.load %arg10[%c0_13, %c0_14] : memref<1x256xf32, #tpu.memory_space<vmem>>, vector<1x256xf32>
    tpu.vector_store %arg10[%c0_13, %c0_14], %19 {strides = array<i32>} : memref<1x256xf32, #tpu.memory_space<vmem>>, vector<1x256xf32>,
    %c0_i32_15 = arith.constant 0 : i32
    %21 = arith.cmpi eq, %arg0, %c0_i32_15 : i32
    %22 = arith.extui %21 : i1 to i32
    %c0_i32_16 = arith.constant 0 : i32
    %23 = arith.cmpi ne, %22, %c0_i32_16 : i32
    scf.if %23 {
      %c0_17 = arith.constant 0 : index
      %c0_18 = arith.constant 0 : index
      %24 = vector.load %arg9[%c0_17, %c0_18] : memref<1x256xf32, #tpu.memory_space<vmem>>, vector<1x256xf32>
      %c0_19 = arith.constant 0 : index
      %c0_20 = arith.constant 0 : index
      %25 = vector.load %arg5[%c0_19, %c0_20] : memref<256x128xf32, #tpu.memory_space<vmem>>, vector<256x128xf32>
      %cst_21 = arith.constant dense<0.000000e+00> : vector<1x128xf32>
      %26 = tpu.matmul %24, %25, %cst_21 {dimension_numbers = #tpu.dot_dimension_numbers<[1], [0], [0], [1], [0, 0, 1, 1], [], []>} : vector<1x256xf32>, vector<256x128xf32>, vector<1x128xf32> -> vector<1x128xf32>
      %c0_22 = arith.constant 0 : index
      %c0_23 = arith.constant 0 : index
      %27 = vector.load %arg10[%c0_22, %c0_23] : memref<1x256xf32, #tpu.memory_space<vmem>>, vector<1x256xf32>
      %c0_24 = arith.constant 0 : index
      %c0_25 = arith.constant 0 : index
      %28 = vector.load %arg5[%c0_24, %c0_25] : memref<256x128xf32, #tpu.memory_space<vmem>>, vector<256x128xf32>
      %cst_26 = arith.constant dense<0.000000e+00> : vector<1x128xf32>
      %29 = tpu.matmul %27, %28, %cst_26 {dimension_numbers = #tpu.dot_dimension_numbers<[1], [0], [0], [1], [0, 0, 1, 1], [], []>} : vector<1x256xf32>, vector<256x128xf32>, vector<1x128xf32> -> vector<1x128xf32>
      %cst_27 = arith.constant 7.812500e-03 : f32
      %30 = vector.broadcast %cst_27 : f32 to vector<1x128xf32>
      %31 = arith.mulf %26, %30 : vector<1x128xf32>
      %cst_28 = arith.constant 7.812500e-03 : f32
      %32 = vector.broadcast %cst_28 : f32 to vector<1x128xf32>
      %33 = arith.mulf %29, %32 : vector<1x128xf32>
      %34 = arith.mulf %31, %31 : vector<1x128xf32>
      %35 = arith.subf %33, %34 : vector<1x128xf32>
      %cst_29 = arith.constant 0.000000e+00 : f32
      %36 = vector.broadcast %cst_29 : f32 to vector<1x128xf32>
      %37 = arith.maximumf %35, %36 : vector<1x128xf32>
      %c0_30 = arith.constant 0 : index
      %c0_31 = arith.constant 0 : index
      %38 = vector.load %arg3[%c0_30, %c0_31] : memref<1x128xf32, #tpu.memory_space<vmem>>, vector<1x128xf32>
      %cst_32 = arith.constant 9.99999974E-6 : f32
      %39 = vector.broadcast %cst_32 : f32 to vector<1x128xf32>
      %40 = arith.addf %37, %39 : vector<1x128xf32>
      %41 = math.rsqrt %40 : vector<1x128xf32>
      %42 = arith.mulf %38, %41 : vector<1x128xf32>
      %c0_33 = arith.constant 0 : index
      %c0_34 = arith.constant 0 : index
      %43 = vector.load %arg4[%c0_33, %c0_34] : memref<1x128xf32, #tpu.memory_space<vmem>>, vector<1x128xf32>
      %44 = arith.mulf %31, %42 : vector<1x128xf32>
      %45 = arith.subf %43, %44 : vector<1x128xf32>
      %c0_35 = arith.constant 0 : index
      %c0_36 = arith.constant 0 : index
      %46 = vector.load %arg6[%c0_35, %c0_36] : memref<128x256xf32, #tpu.memory_space<vmem>>, vector<128x256xf32>
      %cst_37 = arith.constant dense<0.000000e+00> : vector<1x256xf32>
      %47 = tpu.matmul %42, %46, %cst_37 {dimension_numbers = #tpu.dot_dimension_numbers<[1], [0], [0], [1], [0, 0, 1, 1], [], []>} : vector<1x128xf32>, vector<128x256xf32>, vector<1x256xf32> -> vector<1x256xf32>
      %c0_38 = arith.constant 0 : index
      %c0_39 = arith.constant 0 : index
      %48 = vector.load %arg6[%c0_38, %c0_39] : memref<128x256xf32, #tpu.memory_space<vmem>>, vector<128x256xf32>
      %cst_40 = arith.constant dense<0.000000e+00> : vector<1x256xf32>
      %49 = tpu.matmul %45, %48, %cst_40 {dimension_numbers = #tpu.dot_dimension_numbers<[1], [0], [0], [1], [0, 0, 1, 1], [], []>} : vector<1x128xf32>, vector<128x256xf32>, vector<1x256xf32> -> vector<1x256xf32>
      %c0_i32_41 = arith.constant 0 : i32
      %c32_i32_42 = arith.constant 32 : i32
      %50 = arith.muli %c0_i32_41, %c32_i32_42 : i32
      %51 = tpu.assume_multiple %50, 32 : i32
      %52 = arith.index_cast %51 : i32 to index
      %c0_43 = arith.constant 0 : index
      %53 = vector.load %arg8[%52, %c0_43] : memref<32x256xf32, #tpu.memory_space<vmem>>, vector<32x256xf32>
      %54 = vector.broadcast %47 : vector<1x256xf32> to vector<32x256xf32>
      %55 = arith.mulf %53, %54 : vector<32x256xf32>
      %56 = vector.broadcast %49 : vector<1x256xf32> to vector<32x256xf32>
      %57 = arith.addf %55, %56 : vector<32x256xf32>
      %cst_44 = arith.constant 0.000000e+00 : f32
      %58 = vector.broadcast %cst_44 : f32 to vector<32x256xf32>
      %59 = arith.cmpf oge, %57, %58 : vector<32x256xf32>
      %cst_45 = arith.constant 2.000000e-01 : f32
      %60 = vector.broadcast %cst_45 : f32 to vector<32x256xf32>
      %61 = arith.mulf %60, %57 : vector<32x256xf32>
      %62 = arith.select %59, %57, %61 : vector<32x256xi1>, vector<32x256xf32>
      %63 = arith.truncf %62 : vector<32x256xf32> to vector<32x256xbf16>
      %64 = arith.index_cast %51 : i32 to index
      %c0_46 = arith.constant 0 : index
      %65 = vector.load %arg7[%64, %c0_46] : memref<32x256xbf16, #tpu.memory_space<vmem>>, vector<32x256xbf16>
      tpu.vector_store %arg7[%64, %c0_46], %63 {strides = array<i32>} : memref<32x256xbf16, #tpu.memory_space<vmem>>, vector<32x256xbf16>,
      %c1_i32 = arith.constant 1 : i32
    } else {
    }
    return
  }
  func.func @transform_0(%arg0: i32) -> (i32, i32) {
    %c0_i32 = arith.constant 0 : i32
    %c0_i32_0 = arith.constant 0 : i32
    return %arg0, %c0_i32 : i32, i32
  }
  func.func @transform_1(%arg0: i32) -> (i32, i32) {
    %c0_i32 = arith.constant 0 : i32
    %c0_i32_0 = arith.constant 0 : i32
    %c0_i32_1 = arith.constant 0 : i32
    return %c0_i32, %c0_i32_0 : i32, i32
  }
  func.func @transform_2(%arg0: i32) -> (i32, i32) {
    %c0_i32 = arith.constant 0 : i32
    %c0_i32_0 = arith.constant 0 : i32
    %c0_i32_1 = arith.constant 0 : i32
    return %c0_i32, %c0_i32_0 : i32, i32
  }
  func.func @transform_3(%arg0: i32) -> (i32, i32) {
    %c0_i32 = arith.constant 0 : i32
    %c0_i32_0 = arith.constant 0 : i32
    %c0_i32_1 = arith.constant 0 : i32
    return %c0_i32, %c0_i32_0 : i32, i32
  }
  func.func @transform_4(%arg0: i32) -> (i32, i32) {
    %c0_i32 = arith.constant 0 : i32
    %c0_i32_0 = arith.constant 0 : i32
    %c0_i32_1 = arith.constant 0 : i32
    return %c0_i32, %c0_i32_0 : i32, i32
  }
  func.func @transform_5(%arg0: i32) -> (i32, i32) {
    %c0_i32 = arith.constant 0 : i32
    %c0_i32_0 = arith.constant 0 : i32
    %c0_i32_1 = arith.constant 0 : i32
    return %c0_i32, %c0_i32_0 : i32, i32
  }
  func.func @transform_6(%arg0: i32) -> (i32, i32) {
    %c0_i32 = arith.constant 0 : i32
    %c0_i32_0 = arith.constant 0 : i32
    %c0_i32_1 = arith.constant 0 : i32
    return %c0_i32, %c0_i32_0 : i32, i32
  }
}

module attributes {stable_mosaic.version = 11 : i64} {
  func.func @_fused_matmul_bn_lrelu_kernel(%arg0: i32, %arg1: memref<128x576xbf16, #tpu.memory_space<vmem>>, %arg2: memref<576x128xbf16, #tpu.memory_space<vmem>>, %arg3: memref<1x128xf32, #tpu.memory_space<vmem>>, %arg4: memref<1x128xf32, #tpu.memory_space<vmem>>, %arg5: memref<128x128xf32, #tpu.memory_space<vmem>>, %arg6: memref<128x128xf32, #tpu.memory_space<vmem>>, %arg7: memref<128x128xbf16, #tpu.memory_space<vmem>>, %arg8: memref<128x128xf32, #tpu.memory_space<vmem>>, %arg9: memref<1x128xf32, #tpu.memory_space<vmem>>, %arg10: memref<1x128xf32, #tpu.memory_space<vmem>>) attributes {dimension_semantics = [#tpu.dimension_semantics<arbitrary>], iteration_bounds = array<i64: 1>, scalar_prefetch = 0 : i64, scratch_operands = 3 : i64, tpu.core_type = #tpu.core_type<tc>, window_params = [{transform_indices = @transform_0, window_bounds = array<i64: 128, 576>}, {pipeline_mode = #tpu.pipeline_mode<synchronous>, transform_indices = @transform_1, window_bounds = array<i64: 576, 128>}, {pipeline_mode = #tpu.pipeline_mode<synchronous>, transform_indices = @transform_2, window_bounds = array<i64: 1, 128>}, {pipeline_mode = #tpu.pipeline_mode<synchronous>, transform_indices = @transform_3, window_bounds = array<i64: 1, 128>}, {pipeline_mode = #tpu.pipeline_mode<synchronous>, transform_indices = @transform_4, window_bounds = array<i64: 128, 128>}, {pipeline_mode = #tpu.pipeline_mode<synchronous>, transform_indices = @transform_5, window_bounds = array<i64: 128, 128>}, {pipeline_mode = #tpu.pipeline_mode<synchronous>, transform_indices = @transform_6, window_bounds = array<i64: 128, 128>}]} {
    %c0_i32 = arith.constant 0 : i32
    %0 = arith.cmpi eq, %arg0, %c0_i32 : i32
    %1 = arith.extui %0 : i1 to i32
    %c0_i32_0 = arith.constant 0 : i32
    %2 = arith.cmpi ne, %1, %c0_i32_0 : i32
    scf.if %2 {
      %cst_17 = arith.constant 0.000000e+00 : f32
      %24 = vector.broadcast %cst_17 : f32 to vector<1x128xf32>
      %c0_18 = arith.constant 0 : index
      %c0_19 = arith.constant 0 : index
      %25 = vector.load %arg9[%c0_18, %c0_19] : memref<1x128xf32, #tpu.memory_space<vmem>>, vector<1x128xf32>
      tpu.vector_store %arg9[%c0_18, %c0_19], %24 {strides = array<i32>} : memref<1x128xf32, #tpu.memory_space<vmem>>, vector<1x128xf32>,
      %cst_20 = arith.constant 0.000000e+00 : f32
      %26 = vector.broadcast %cst_20 : f32 to vector<1x128xf32>
      %c0_21 = arith.constant 0 : index
      %c0_22 = arith.constant 0 : index
      %27 = vector.load %arg10[%c0_21, %c0_22] : memref<1x128xf32, #tpu.memory_space<vmem>>, vector<1x128xf32>
      tpu.vector_store %arg10[%c0_21, %c0_22], %26 {strides = array<i32>} : memref<1x128xf32, #tpu.memory_space<vmem>>, vector<1x128xf32>,
    } else {
    }
    %c0 = arith.constant 0 : index
    %c0_1 = arith.constant 0 : index
    %3 = vector.load %arg1[%c0, %c0_1] : memref<128x576xbf16, #tpu.memory_space<vmem>>, vector<128x576xbf16>
    %c0_2 = arith.constant 0 : index
    %c0_3 = arith.constant 0 : index
    %4 = vector.load %arg2[%c0_2, %c0_3] : memref<576x128xbf16, #tpu.memory_space<vmem>>, vector<576x128xbf16>
    %cst = arith.constant dense<0.000000e+00> : vector<128x128xf32>
    %5 = tpu.matmul %3, %4, %cst {dimension_numbers = #tpu.dot_dimension_numbers<[1], [0], [0], [1], [0, 0, 1, 1], [], []>} : vector<128x576xbf16>, vector<576x128xbf16>, vector<128x128xf32> -> vector<128x128xf32>
    %c128_i32 = arith.constant 128 : i32
    %6 = arith.muli %arg0, %c128_i32 : i32
    %7 = tpu.assume_multiple %6, 128 : i32
    %8 = arith.index_cast %7 : i32 to index
    %c0_4 = arith.constant 0 : index
    %9 = vector.load %arg8[%8, %c0_4] : memref<128x128xf32, #tpu.memory_space<vmem>>, vector<128x128xf32>
    tpu.vector_store %arg8[%8, %c0_4], %5 {strides = array<i32>} : memref<128x128xf32, #tpu.memory_space<vmem>>, vector<128x128xf32>,
    %c0_5 = arith.constant 0 : index
    %c0_6 = arith.constant 0 : index
    %10 = vector.load %arg9[%c0_5, %c0_6] : memref<1x128xf32, #tpu.memory_space<vmem>>, vector<1x128xf32>
    %cst_7 = arith.constant dense<0.000000e+00> : vector<128xf32>
    %11 = vector.multi_reduction <add>, %5, %cst_7 [0] : vector<128x128xf32> to vector<128xf32>
    %12 = vector.shape_cast %11 : vector<128xf32> to vector<1x128xf32>
    %13 = arith.addf %10, %12 : vector<1x128xf32>
    %c0_8 = arith.constant 0 : index
    %c0_9 = arith.constant 0 : index
    %14 = vector.load %arg9[%c0_8, %c0_9] : memref<1x128xf32, #tpu.memory_space<vmem>>, vector<1x128xf32>
    tpu.vector_store %arg9[%c0_8, %c0_9], %13 {strides = array<i32>} : memref<1x128xf32, #tpu.memory_space<vmem>>, vector<1x128xf32>,
    %c0_10 = arith.constant 0 : index
    %c0_11 = arith.constant 0 : index
    %15 = vector.load %arg10[%c0_10, %c0_11] : memref<1x128xf32, #tpu.memory_space<vmem>>, vector<1x128xf32>
    %16 = arith.mulf %5, %5 : vector<128x128xf32>
    %cst_12 = arith.constant dense<0.000000e+00> : vector<128xf32>
    %17 = vector.multi_reduction <add>, %16, %cst_12 [0] : vector<128x128xf32> to vector<128xf32>
    %18 = vector.shape_cast %17 : vector<128xf32> to vector<1x128xf32>
    %19 = arith.addf %15, %18 : vector<1x128xf32>
    %c0_13 = arith.constant 0 : index
    %c0_14 = arith.constant 0 : index
    %20 = vector.load %arg10[%c0_13, %c0_14] : memref<1x128xf32, #tpu.memory_space<vmem>>, vector<1x128xf32>
    tpu.vector_store %arg10[%c0_13, %c0_14], %19 {strides = array<i32>} : memref<1x128xf32, #tpu.memory_space<vmem>>, vector<1x128xf32>,
    %c0_i32_15 = arith.constant 0 : i32
    %21 = arith.cmpi eq, %arg0, %c0_i32_15 : i32
    %22 = arith.extui %21 : i1 to i32
    %c0_i32_16 = arith.constant 0 : i32
    %23 = arith.cmpi ne, %22, %c0_i32_16 : i32
    scf.if %23 {
      %c0_17 = arith.constant 0 : index
      %c0_18 = arith.constant 0 : index
      %24 = vector.load %arg9[%c0_17, %c0_18] : memref<1x128xf32, #tpu.memory_space<vmem>>, vector<1x128xf32>
      %c0_19 = arith.constant 0 : index
      %c0_20 = arith.constant 0 : index
      %25 = vector.load %arg5[%c0_19, %c0_20] : memref<128x128xf32, #tpu.memory_space<vmem>>, vector<128x128xf32>
      %cst_21 = arith.constant dense<0.000000e+00> : vector<1x128xf32>
      %26 = tpu.matmul %24, %25, %cst_21 {dimension_numbers = #tpu.dot_dimension_numbers<[1], [0], [0], [1], [0, 0, 1, 1], [], []>} : vector<1x128xf32>, vector<128x128xf32>, vector<1x128xf32> -> vector<1x128xf32>
      %c0_22 = arith.constant 0 : index
      %c0_23 = arith.constant 0 : index
      %27 = vector.load %arg10[%c0_22, %c0_23] : memref<1x128xf32, #tpu.memory_space<vmem>>, vector<1x128xf32>
      %c0_24 = arith.constant 0 : index
      %c0_25 = arith.constant 0 : index
      %28 = vector.load %arg5[%c0_24, %c0_25] : memref<128x128xf32, #tpu.memory_space<vmem>>, vector<128x128xf32>
      %cst_26 = arith.constant dense<0.000000e+00> : vector<1x128xf32>
      %29 = tpu.matmul %27, %28, %cst_26 {dimension_numbers = #tpu.dot_dimension_numbers<[1], [0], [0], [1], [0, 0, 1, 1], [], []>} : vector<1x128xf32>, vector<128x128xf32>, vector<1x128xf32> -> vector<1x128xf32>
      %cst_27 = arith.constant 0.001953125 : f32
      %30 = vector.broadcast %cst_27 : f32 to vector<1x128xf32>
      %31 = arith.mulf %26, %30 : vector<1x128xf32>
      %cst_28 = arith.constant 0.001953125 : f32
      %32 = vector.broadcast %cst_28 : f32 to vector<1x128xf32>
      %33 = arith.mulf %29, %32 : vector<1x128xf32>
      %34 = arith.mulf %31, %31 : vector<1x128xf32>
      %35 = arith.subf %33, %34 : vector<1x128xf32>
      %cst_29 = arith.constant 0.000000e+00 : f32
      %36 = vector.broadcast %cst_29 : f32 to vector<1x128xf32>
      %37 = arith.maximumf %35, %36 : vector<1x128xf32>
      %c0_30 = arith.constant 0 : index
      %c0_31 = arith.constant 0 : index
      %38 = vector.load %arg3[%c0_30, %c0_31] : memref<1x128xf32, #tpu.memory_space<vmem>>, vector<1x128xf32>
      %cst_32 = arith.constant 9.99999974E-6 : f32
      %39 = vector.broadcast %cst_32 : f32 to vector<1x128xf32>
      %40 = arith.addf %37, %39 : vector<1x128xf32>
      %41 = math.rsqrt %40 : vector<1x128xf32>
      %42 = arith.mulf %38, %41 : vector<1x128xf32>
      %c0_33 = arith.constant 0 : index
      %c0_34 = arith.constant 0 : index
      %43 = vector.load %arg4[%c0_33, %c0_34] : memref<1x128xf32, #tpu.memory_space<vmem>>, vector<1x128xf32>
      %44 = arith.mulf %31, %42 : vector<1x128xf32>
      %45 = arith.subf %43, %44 : vector<1x128xf32>
      %c0_35 = arith.constant 0 : index
      %c0_36 = arith.constant 0 : index
      %46 = vector.load %arg6[%c0_35, %c0_36] : memref<128x128xf32, #tpu.memory_space<vmem>>, vector<128x128xf32>
      %cst_37 = arith.constant dense<0.000000e+00> : vector<1x128xf32>
      %47 = tpu.matmul %42, %46, %cst_37 {dimension_numbers = #tpu.dot_dimension_numbers<[1], [0], [0], [1], [0, 0, 1, 1], [], []>} : vector<1x128xf32>, vector<128x128xf32>, vector<1x128xf32> -> vector<1x128xf32>
      %c0_38 = arith.constant 0 : index
      %c0_39 = arith.constant 0 : index
      %48 = vector.load %arg6[%c0_38, %c0_39] : memref<128x128xf32, #tpu.memory_space<vmem>>, vector<128x128xf32>
      %cst_40 = arith.constant dense<0.000000e+00> : vector<1x128xf32>
      %49 = tpu.matmul %45, %48, %cst_40 {dimension_numbers = #tpu.dot_dimension_numbers<[1], [0], [0], [1], [0, 0, 1, 1], [], []>} : vector<1x128xf32>, vector<128x128xf32>, vector<1x128xf32> -> vector<1x128xf32>
      %c0_i32_41 = arith.constant 0 : i32
      %c128_i32_42 = arith.constant 128 : i32
      %50 = arith.muli %c0_i32_41, %c128_i32_42 : i32
      %51 = tpu.assume_multiple %50, 128 : i32
      %52 = arith.index_cast %51 : i32 to index
      %c0_43 = arith.constant 0 : index
      %53 = vector.load %arg8[%52, %c0_43] : memref<128x128xf32, #tpu.memory_space<vmem>>, vector<128x128xf32>
      %54 = vector.broadcast %47 : vector<1x128xf32> to vector<128x128xf32>
      %55 = arith.mulf %53, %54 : vector<128x128xf32>
      %56 = vector.broadcast %49 : vector<1x128xf32> to vector<128x128xf32>
      %57 = arith.addf %55, %56 : vector<128x128xf32>
      %cst_44 = arith.constant 0.000000e+00 : f32
      %58 = vector.broadcast %cst_44 : f32 to vector<128x128xf32>
      %59 = arith.cmpf oge, %57, %58 : vector<128x128xf32>
      %cst_45 = arith.constant 2.000000e-01 : f32
      %60 = vector.broadcast %cst_45 : f32 to vector<128x128xf32>
      %61 = arith.mulf %60, %57 : vector<128x128xf32>
      %62 = arith.select %59, %57, %61 : vector<128x128xi1>, vector<128x128xf32>
      %63 = arith.truncf %62 : vector<128x128xf32> to vector<128x128xbf16>
      %64 = arith.index_cast %51 : i32 to index
      %c0_46 = arith.constant 0 : index
      %65 = vector.load %arg7[%64, %c0_46] : memref<128x128xbf16, #tpu.memory_space<vmem>>, vector<128x128xbf16>
      tpu.vector_store %arg7[%64, %c0_46], %63 {strides = array<i32>} : memref<128x128xbf16, #tpu.memory_space<vmem>>, vector<128x128xbf16>,
      %c1_i32 = arith.constant 1 : i32
    } else {
    }
    return
  }
  func.func @transform_0(%arg0: i32) -> (i32, i32) {
    %c0_i32 = arith.constant 0 : i32
    %c0_i32_0 = arith.constant 0 : i32
    return %arg0, %c0_i32 : i32, i32
  }
  func.func @transform_1(%arg0: i32) -> (i32, i32) {
    %c0_i32 = arith.constant 0 : i32
    %c0_i32_0 = arith.constant 0 : i32
    %c0_i32_1 = arith.constant 0 : i32
    return %c0_i32, %c0_i32_0 : i32, i32
  }
  func.func @transform_2(%arg0: i32) -> (i32, i32) {
    %c0_i32 = arith.constant 0 : i32
    %c0_i32_0 = arith.constant 0 : i32
    %c0_i32_1 = arith.constant 0 : i32
    return %c0_i32, %c0_i32_0 : i32, i32
  }
  func.func @transform_3(%arg0: i32) -> (i32, i32) {
    %c0_i32 = arith.constant 0 : i32
    %c0_i32_0 = arith.constant 0 : i32
    %c0_i32_1 = arith.constant 0 : i32
    return %c0_i32, %c0_i32_0 : i32, i32
  }
  func.func @transform_4(%arg0: i32) -> (i32, i32) {
    %c0_i32 = arith.constant 0 : i32
    %c0_i32_0 = arith.constant 0 : i32
    %c0_i32_1 = arith.constant 0 : i32
    return %c0_i32, %c0_i32_0 : i32, i32
  }
  func.func @transform_5(%arg0: i32) -> (i32, i32) {
    %c0_i32 = arith.constant 0 : i32
    %c0_i32_0 = arith.constant 0 : i32
    %c0_i32_1 = arith.constant 0 : i32
    return %c0_i32, %c0_i32_0 : i32, i32
  }
  func.func @transform_6(%arg0: i32) -> (i32, i32) {
    %c0_i32 = arith.constant 0 : i32
    %c0_i32_0 = arith.constant 0 : i32
    %c0_i32_1 = arith.constant 0 : i32
    return %c0_i32, %c0_i32_0 : i32, i32
  }
}

module attributes {stable_mosaic.version = 11 : i64} {
  func.func @_fused_matmul_bn_lrelu_kernel(%arg0: i32, %arg1: memref<512x288xbf16, #tpu.memory_space<vmem>>, %arg2: memref<288x128xbf16, #tpu.memory_space<vmem>>, %arg3: memref<1x128xf32, #tpu.memory_space<vmem>>, %arg4: memref<1x128xf32, #tpu.memory_space<vmem>>, %arg5: memref<128x128xf32, #tpu.memory_space<vmem>>, %arg6: memref<128x128xf32, #tpu.memory_space<vmem>>, %arg7: memref<512x128xbf16, #tpu.memory_space<vmem>>, %arg8: memref<512x128xf32, #tpu.memory_space<vmem>>, %arg9: memref<1x128xf32, #tpu.memory_space<vmem>>, %arg10: memref<1x128xf32, #tpu.memory_space<vmem>>) attributes {dimension_semantics = [#tpu.dimension_semantics<arbitrary>], iteration_bounds = array<i64: 1>, scalar_prefetch = 0 : i64, scratch_operands = 3 : i64, tpu.core_type = #tpu.core_type<tc>, window_params = [{transform_indices = @transform_0, window_bounds = array<i64: 512, 288>}, {pipeline_mode = #tpu.pipeline_mode<synchronous>, transform_indices = @transform_1, window_bounds = array<i64: 288, 128>}, {pipeline_mode = #tpu.pipeline_mode<synchronous>, transform_indices = @transform_2, window_bounds = array<i64: 1, 128>}, {pipeline_mode = #tpu.pipeline_mode<synchronous>, transform_indices = @transform_3, window_bounds = array<i64: 1, 128>}, {pipeline_mode = #tpu.pipeline_mode<synchronous>, transform_indices = @transform_4, window_bounds = array<i64: 128, 128>}, {pipeline_mode = #tpu.pipeline_mode<synchronous>, transform_indices = @transform_5, window_bounds = array<i64: 128, 128>}, {pipeline_mode = #tpu.pipeline_mode<synchronous>, transform_indices = @transform_6, window_bounds = array<i64: 512, 128>}]} {
    %c0_i32 = arith.constant 0 : i32
    %0 = arith.cmpi eq, %arg0, %c0_i32 : i32
    %1 = arith.extui %0 : i1 to i32
    %c0_i32_0 = arith.constant 0 : i32
    %2 = arith.cmpi ne, %1, %c0_i32_0 : i32
    scf.if %2 {
      %cst_17 = arith.constant 0.000000e+00 : f32
      %24 = vector.broadcast %cst_17 : f32 to vector<1x128xf32>
      %c0_18 = arith.constant 0 : index
      %c0_19 = arith.constant 0 : index
      %25 = vector.load %arg9[%c0_18, %c0_19] : memref<1x128xf32, #tpu.memory_space<vmem>>, vector<1x128xf32>
      tpu.vector_store %arg9[%c0_18, %c0_19], %24 {strides = array<i32>} : memref<1x128xf32, #tpu.memory_space<vmem>>, vector<1x128xf32>,
      %cst_20 = arith.constant 0.000000e+00 : f32
      %26 = vector.broadcast %cst_20 : f32 to vector<1x128xf32>
      %c0_21 = arith.constant 0 : index
      %c0_22 = arith.constant 0 : index
      %27 = vector.load %arg10[%c0_21, %c0_22] : memref<1x128xf32, #tpu.memory_space<vmem>>, vector<1x128xf32>
      tpu.vector_store %arg10[%c0_21, %c0_22], %26 {strides = array<i32>} : memref<1x128xf32, #tpu.memory_space<vmem>>, vector<1x128xf32>,
    } else {
    }
    %c0 = arith.constant 0 : index
    %c0_1 = arith.constant 0 : index
    %3 = vector.load %arg1[%c0, %c0_1] : memref<512x288xbf16, #tpu.memory_space<vmem>>, vector<512x288xbf16>
    %c0_2 = arith.constant 0 : index
    %c0_3 = arith.constant 0 : index
    %4 = vector.load %arg2[%c0_2, %c0_3] : memref<288x128xbf16, #tpu.memory_space<vmem>>, vector<288x128xbf16>
    %cst = arith.constant dense<0.000000e+00> : vector<512x128xf32>
    %5 = tpu.matmul %3, %4, %cst {dimension_numbers = #tpu.dot_dimension_numbers<[1], [0], [0], [1], [0, 0, 1, 1], [], []>} : vector<512x288xbf16>, vector<288x128xbf16>, vector<512x128xf32> -> vector<512x128xf32>
    %c512_i32 = arith.constant 512 : i32
    %6 = arith.muli %arg0, %c512_i32 : i32
    %7 = tpu.assume_multiple %6, 512 : i32
    %8 = arith.index_cast %7 : i32 to index
    %c0_4 = arith.constant 0 : index
    %9 = vector.load %arg8[%8, %c0_4] : memref<512x128xf32, #tpu.memory_space<vmem>>, vector<512x128xf32>
    tpu.vector_store %arg8[%8, %c0_4], %5 {strides = array<i32>} : memref<512x128xf32, #tpu.memory_space<vmem>>, vector<512x128xf32>,
    %c0_5 = arith.constant 0 : index
    %c0_6 = arith.constant 0 : index
    %10 = vector.load %arg9[%c0_5, %c0_6] : memref<1x128xf32, #tpu.memory_space<vmem>>, vector<1x128xf32>
    %cst_7 = arith.constant dense<0.000000e+00> : vector<128xf32>
    %11 = vector.multi_reduction <add>, %5, %cst_7 [0] : vector<512x128xf32> to vector<128xf32>
    %12 = vector.shape_cast %11 : vector<128xf32> to vector<1x128xf32>
    %13 = arith.addf %10, %12 : vector<1x128xf32>
    %c0_8 = arith.constant 0 : index
    %c0_9 = arith.constant 0 : index
    %14 = vector.load %arg9[%c0_8, %c0_9] : memref<1x128xf32, #tpu.memory_space<vmem>>, vector<1x128xf32>
    tpu.vector_store %arg9[%c0_8, %c0_9], %13 {strides = array<i32>} : memref<1x128xf32, #tpu.memory_space<vmem>>, vector<1x128xf32>,
    %c0_10 = arith.constant 0 : index
    %c0_11 = arith.constant 0 : index
    %15 = vector.load %arg10[%c0_10, %c0_11] : memref<1x128xf32, #tpu.memory_space<vmem>>, vector<1x128xf32>
    %16 = arith.mulf %5, %5 : vector<512x128xf32>
    %cst_12 = arith.constant dense<0.000000e+00> : vector<128xf32>
    %17 = vector.multi_reduction <add>, %16, %cst_12 [0] : vector<512x128xf32> to vector<128xf32>
    %18 = vector.shape_cast %17 : vector<128xf32> to vector<1x128xf32>
    %19 = arith.addf %15, %18 : vector<1x128xf32>
    %c0_13 = arith.constant 0 : index
    %c0_14 = arith.constant 0 : index
    %20 = vector.load %arg10[%c0_13, %c0_14] : memref<1x128xf32, #tpu.memory_space<vmem>>, vector<1x128xf32>
    tpu.vector_store %arg10[%c0_13, %c0_14], %19 {strides = array<i32>} : memref<1x128xf32, #tpu.memory_space<vmem>>, vector<1x128xf32>,
    %c0_i32_15 = arith.constant 0 : i32
    %21 = arith.cmpi eq, %arg0, %c0_i32_15 : i32
    %22 = arith.extui %21 : i1 to i32
    %c0_i32_16 = arith.constant 0 : i32
    %23 = arith.cmpi ne, %22, %c0_i32_16 : i32
    scf.if %23 {
      %c0_17 = arith.constant 0 : index
      %c0_18 = arith.constant 0 : index
      %24 = vector.load %arg9[%c0_17, %c0_18] : memref<1x128xf32, #tpu.memory_space<vmem>>, vector<1x128xf32>
      %c0_19 = arith.constant 0 : index
      %c0_20 = arith.constant 0 : index
      %25 = vector.load %arg5[%c0_19, %c0_20] : memref<128x128xf32, #tpu.memory_space<vmem>>, vector<128x128xf32>
      %cst_21 = arith.constant dense<0.000000e+00> : vector<1x128xf32>
      %26 = tpu.matmul %24, %25, %cst_21 {dimension_numbers = #tpu.dot_dimension_numbers<[1], [0], [0], [1], [0, 0, 1, 1], [], []>} : vector<1x128xf32>, vector<128x128xf32>, vector<1x128xf32> -> vector<1x128xf32>
      %c0_22 = arith.constant 0 : index
      %c0_23 = arith.constant 0 : index
      %27 = vector.load %arg10[%c0_22, %c0_23] : memref<1x128xf32, #tpu.memory_space<vmem>>, vector<1x128xf32>
      %c0_24 = arith.constant 0 : index
      %c0_25 = arith.constant 0 : index
      %28 = vector.load %arg5[%c0_24, %c0_25] : memref<128x128xf32, #tpu.memory_space<vmem>>, vector<128x128xf32>
      %cst_26 = arith.constant dense<0.000000e+00> : vector<1x128xf32>
      %29 = tpu.matmul %27, %28, %cst_26 {dimension_numbers = #tpu.dot_dimension_numbers<[1], [0], [0], [1], [0, 0, 1, 1], [], []>} : vector<1x128xf32>, vector<128x128xf32>, vector<1x128xf32> -> vector<1x128xf32>
      %cst_27 = arith.constant 4.8828125E-4 : f32
      %30 = vector.broadcast %cst_27 : f32 to vector<1x128xf32>
      %31 = arith.mulf %26, %30 : vector<1x128xf32>
      %cst_28 = arith.constant 4.8828125E-4 : f32
      %32 = vector.broadcast %cst_28 : f32 to vector<1x128xf32>
      %33 = arith.mulf %29, %32 : vector<1x128xf32>
      %34 = arith.mulf %31, %31 : vector<1x128xf32>
      %35 = arith.subf %33, %34 : vector<1x128xf32>
      %cst_29 = arith.constant 0.000000e+00 : f32
      %36 = vector.broadcast %cst_29 : f32 to vector<1x128xf32>
      %37 = arith.maximumf %35, %36 : vector<1x128xf32>
      %c0_30 = arith.constant 0 : index
      %c0_31 = arith.constant 0 : index
      %38 = vector.load %arg3[%c0_30, %c0_31] : memref<1x128xf32, #tpu.memory_space<vmem>>, vector<1x128xf32>
      %cst_32 = arith.constant 9.99999974E-6 : f32
      %39 = vector.broadcast %cst_32 : f32 to vector<1x128xf32>
      %40 = arith.addf %37, %39 : vector<1x128xf32>
      %41 = math.rsqrt %40 : vector<1x128xf32>
      %42 = arith.mulf %38, %41 : vector<1x128xf32>
      %c0_33 = arith.constant 0 : index
      %c0_34 = arith.constant 0 : index
      %43 = vector.load %arg4[%c0_33, %c0_34] : memref<1x128xf32, #tpu.memory_space<vmem>>, vector<1x128xf32>
      %44 = arith.mulf %31, %42 : vector<1x128xf32>
      %45 = arith.subf %43, %44 : vector<1x128xf32>
      %c0_35 = arith.constant 0 : index
      %c0_36 = arith.constant 0 : index
      %46 = vector.load %arg6[%c0_35, %c0_36] : memref<128x128xf32, #tpu.memory_space<vmem>>, vector<128x128xf32>
      %cst_37 = arith.constant dense<0.000000e+00> : vector<1x128xf32>
      %47 = tpu.matmul %42, %46, %cst_37 {dimension_numbers = #tpu.dot_dimension_numbers<[1], [0], [0], [1], [0, 0, 1, 1], [], []>} : vector<1x128xf32>, vector<128x128xf32>, vector<1x128xf32> -> vector<1x128xf32>
      %c0_38 = arith.constant 0 : index
      %c0_39 = arith.constant 0 : index
      %48 = vector.load %arg6[%c0_38, %c0_39] : memref<128x128xf32, #tpu.memory_space<vmem>>, vector<128x128xf32>
      %cst_40 = arith.constant dense<0.000000e+00> : vector<1x128xf32>
      %49 = tpu.matmul %45, %48, %cst_40 {dimension_numbers = #tpu.dot_dimension_numbers<[1], [0], [0], [1], [0, 0, 1, 1], [], []>} : vector<1x128xf32>, vector<128x128xf32>, vector<1x128xf32> -> vector<1x128xf32>
      %c0_i32_41 = arith.constant 0 : i32
      %c512_i32_42 = arith.constant 512 : i32
      %50 = arith.muli %c0_i32_41, %c512_i32_42 : i32
      %51 = tpu.assume_multiple %50, 512 : i32
      %52 = arith.index_cast %51 : i32 to index
      %c0_43 = arith.constant 0 : index
      %53 = vector.load %arg8[%52, %c0_43] : memref<512x128xf32, #tpu.memory_space<vmem>>, vector<512x128xf32>
      %54 = vector.broadcast %47 : vector<1x128xf32> to vector<512x128xf32>
      %55 = arith.mulf %53, %54 : vector<512x128xf32>
      %56 = vector.broadcast %49 : vector<1x128xf32> to vector<512x128xf32>
      %57 = arith.addf %55, %56 : vector<512x128xf32>
      %cst_44 = arith.constant 0.000000e+00 : f32
      %58 = vector.broadcast %cst_44 : f32 to vector<512x128xf32>
      %59 = arith.cmpf oge, %57, %58 : vector<512x128xf32>
      %cst_45 = arith.constant 2.000000e-01 : f32
      %60 = vector.broadcast %cst_45 : f32 to vector<512x128xf32>
      %61 = arith.mulf %60, %57 : vector<512x128xf32>
      %62 = arith.select %59, %57, %61 : vector<512x128xi1>, vector<512x128xf32>
      %63 = arith.truncf %62 : vector<512x128xf32> to vector<512x128xbf16>
      %64 = arith.index_cast %51 : i32 to index
      %c0_46 = arith.constant 0 : index
      %65 = vector.load %arg7[%64, %c0_46] : memref<512x128xbf16, #tpu.memory_space<vmem>>, vector<512x128xbf16>
      tpu.vector_store %arg7[%64, %c0_46], %63 {strides = array<i32>} : memref<512x128xbf16, #tpu.memory_space<vmem>>, vector<512x128xbf16>,
      %c1_i32 = arith.constant 1 : i32
    } else {
    }
    return
  }
  func.func @transform_0(%arg0: i32) -> (i32, i32) {
    %c0_i32 = arith.constant 0 : i32
    %c0_i32_0 = arith.constant 0 : i32
    return %arg0, %c0_i32 : i32, i32
  }
  func.func @transform_1(%arg0: i32) -> (i32, i32) {
    %c0_i32 = arith.constant 0 : i32
    %c0_i32_0 = arith.constant 0 : i32
    %c0_i32_1 = arith.constant 0 : i32
    return %c0_i32, %c0_i32_0 : i32, i32
  }
  func.func @transform_2(%arg0: i32) -> (i32, i32) {
    %c0_i32 = arith.constant 0 : i32
    %c0_i32_0 = arith.constant 0 : i32
    %c0_i32_1 = arith.constant 0 : i32
    return %c0_i32, %c0_i32_0 : i32, i32
  }
  func.func @transform_3(%arg0: i32) -> (i32, i32) {
    %c0_i32 = arith.constant 0 : i32
    %c0_i32_0 = arith.constant 0 : i32
    %c0_i32_1 = arith.constant 0 : i32
    return %c0_i32, %c0_i32_0 : i32, i32
  }
  func.func @transform_4(%arg0: i32) -> (i32, i32) {
    %c0_i32 = arith.constant 0 : i32
    %c0_i32_0 = arith.constant 0 : i32
    %c0_i32_1 = arith.constant 0 : i32
    return %c0_i32, %c0_i32_0 : i32, i32
  }
  func.func @transform_5(%arg0: i32) -> (i32, i32) {
    %c0_i32 = arith.constant 0 : i32
    %c0_i32_0 = arith.constant 0 : i32
    %c0_i32_1 = arith.constant 0 : i32
    return %c0_i32, %c0_i32_0 : i32, i32
  }
  func.func @transform_6(%arg0: i32) -> (i32, i32) {
    %c0_i32 = arith.constant 0 : i32
    %c0_i32_0 = arith.constant 0 : i32
    %c0_i32_1 = arith.constant 0 : i32
    return %c0_i32, %c0_i32_0 : i32, i32
  }
}

module attributes {stable_mosaic.version = 11 : i64} {
  func.func @_matmul_bias_tanh_kernel(%arg0: i32, %arg1: memref<1024x144xbf16, #tpu.memory_space<vmem>>, %arg2: memref<144x128xbf16, #tpu.memory_space<vmem>>, %arg3: memref<1x128xf32, #tpu.memory_space<vmem>>, %arg4: memref<1024x128xbf16, #tpu.memory_space<vmem>>) attributes {dimension_semantics = [#tpu.dimension_semantics<parallel>], iteration_bounds = array<i64: 2>, scalar_prefetch = 0 : i64, scratch_operands = 0 : i64, tpu.core_type = #tpu.core_type<tc>, window_params = [{transform_indices = @transform_0, window_bounds = array<i64: 1024, 144>}, {pipeline_mode = #tpu.pipeline_mode<synchronous>, transform_indices = @transform_1, window_bounds = array<i64: 144, 128>}, {pipeline_mode = #tpu.pipeline_mode<synchronous>, transform_indices = @transform_2, window_bounds = array<i64: 1, 128>}, {transform_indices = @transform_3, window_bounds = array<i64: 1024, 128>}]} {
    %c0 = arith.constant 0 : index
    %c0_0 = arith.constant 0 : index
    %0 = vector.load %arg1[%c0, %c0_0] : memref<1024x144xbf16, #tpu.memory_space<vmem>>, vector<1024x144xbf16>
    %c0_1 = arith.constant 0 : index
    %c0_2 = arith.constant 0 : index
    %1 = vector.load %arg2[%c0_1, %c0_2] : memref<144x128xbf16, #tpu.memory_space<vmem>>, vector<144x128xbf16>
    %cst = arith.constant dense<0.000000e+00> : vector<1024x128xf32>
    %2 = tpu.matmul %0, %1, %cst {dimension_numbers = #tpu.dot_dimension_numbers<[1], [0], [0], [1], [0, 0, 1, 1], [], []>} : vector<1024x144xbf16>, vector<144x128xbf16>, vector<1024x128xf32> -> vector<1024x128xf32>
    %c0_3 = arith.constant 0 : index
    %c0_4 = arith.constant 0 : index
    %3 = vector.load %arg3[%c0_3, %c0_4] : memref<1x128xf32, #tpu.memory_space<vmem>>, vector<1x128xf32>
    %4 = vector.broadcast %3 : vector<1x128xf32> to vector<1024x128xf32>
    %5 = arith.addf %2, %4 : vector<1024x128xf32>
    %6 = math.tanh %5 : vector<1024x128xf32>
    %7 = arith.truncf %6 : vector<1024x128xf32> to vector<1024x128xbf16>
    %c0_5 = arith.constant 0 : index
    %c0_6 = arith.constant 0 : index
    %8 = vector.load %arg4[%c0_5, %c0_6] : memref<1024x128xbf16, #tpu.memory_space<vmem>>, vector<1024x128xbf16>
    tpu.vector_store %arg4[%c0_5, %c0_6], %7 {strides = array<i32>} : memref<1024x128xbf16, #tpu.memory_space<vmem>>, vector<1024x128xbf16>,
    return
  }
  func.func @transform_0(%arg0: i32) -> (i32, i32) {
    %c0_i32 = arith.constant 0 : i32
    %c0_i32_0 = arith.constant 0 : i32
    return %arg0, %c0_i32 : i32, i32
  }
  func.func @transform_1(%arg0: i32) -> (i32, i32) {
    %c0_i32 = arith.constant 0 : i32
    %c0_i32_0 = arith.constant 0 : i32
    %c0_i32_1 = arith.constant 0 : i32
    return %c0_i32, %c0_i32_0 : i32, i32
  }
  func.func @transform_2(%arg0: i32) -> (i32, i32) {
    %c0_i32 = arith.constant 0 : i32
    %c0_i32_0 = arith.constant 0 : i32
    %c0_i32_1 = arith.constant 0 : i32
    return %c0_i32, %c0_i32_0 : i32, i32
  }
  func.func @transform_3(%arg0: i32) -> (i32, i32) {
    %c0_i32 = arith.constant 0 : i32
    %c0_i32_0 = arith.constant 0 : i32
    return %arg0, %c0_i32 : i32, i32
  }
}

</mosaic_0001>

<llo_original>
// kernel: tile.38
$region0: #{tile.38}
  #allocation2 [shape = 's32[1]{0}', space=sflag, size = 0x4, scoped, tag = 'scoped memory for tile.38']
  %s0 = inlined_call_operand.hbm [shape: f32[3], index: 0, kind: input, shape index: {}]
  %s1 = inlined_call_operand.vmem [shape: f32[4,3], index: 1, kind: output, shape index: {}]
  $region1: #{tile.38} parent=0
    #allocation0 [shape = 'u8[512]{0}', space=vmem, size = 0x400, scoped, tag = 'operand span for operand 0']
    #allocation1 [shape = 's32[1]{0}', space=sflag, size = 0x4, scoped, tag = 'scoped memory for tile.38']
    %2 = vsyncpa [#allocation1], 0
    // Predicated region
    $region2: #{tile.38} parent=1 // pred_check
      _
    $region3: #{tile.38} parent=1 // pred_check_branch
      %4 = sbr.rel (0) target = $region5
    $region4: #{tile.38} parent=1 // pred_region
      %s6 = ssub.s32 16, 16
      %7 = vsyncadd [#allocation1], %s6
      %s9 = sshll.u32 [#allocation0], 4
      %s10 = int_to_ptr.vmem [resolvable:$true] %s9
      %12 = dma.hbm_to_vmem [thread:$0]  %s0, 16, %s10, [#allocation1]
    $region5: #{tile.38} parent=1 // pred_fallthru
      _
    // Predicated region
    $region6: #{tile.38} parent=1 // pred_check
      _
    $region7: #{tile.38} parent=1 // pred_check_branch
      %14 = sbr.rel (0) target = $region9
    $region8: #{tile.38} parent=1 // pred_region
      %15 = dma.done [#allocation1], 16
    $region9: #{tile.38} parent=1 // pred_fallthru
      _
    %v16 = vld [vmem:[#allocation0] ss:$0 sm:$0xff]
    %17 = vst [vmem:[%s1] sm:$0xf] %v16
    %18 = vsyncpa [#allocation1], 1

// kernel: tile.39
$region0: #{tile.39}
  %s0 = inlined_call_operand.vmem [shape: f32[4,3], index: 0, kind: input, shape index: {}]
  %s1 = inlined_call_operand.vmem [shape: f32[12], index: 1, kind: output, shape index: {}]
  $region1: #{tile.39} parent=0
    #allocation0 [shape = 'u8[4096]{0}', space=vmem, size = 0x1000, scoped, tag = 'scoped mem for output reshape']
    #allocation1 [shape = 'u8[4096]{0}', space=vmem, size = 0x1000, scoped, tag = 'scoped mem for input reshape']
    %s3 = sshll.u32 1, 4
    %s4 = ssub.s32 %s3, 1
    %v5 = vld [vmem:[%s0] sm:%s4]
    %6 = vst [vmem:[#allocation1] sm:%s4] %v5
    %v7 = vld [vmem:[#allocation1] sm:$0x1]
    %vm8 = vcmask 23552
    %9 = vst.msk [vmem:[#allocation0] sm:$0x1] %vm8, %v7
    %s10 = scalar_lea.vmem [#allocation1], 3
    %v11 = vld [vmem:[%s10] sm:$0x1]
    %12 = vrot.lane.b32.xlu0 %v11, 9
    %v13 = vpop.permute.xlu0 %12
    %vm14 = vcmask 97352
    %15 = vst.msk [vmem:[#allocation0] sm:$0x1] %vm14, %v13
    %s16 = scalar_lea.vmem [#allocation1], 2
    %v17 = vld [vmem:[%s16] sm:$0x1]
    %18 = vrot.lane.b32.xlu0 %v17, 6
    %v19 = vpop.permute.xlu0 %18
    %vm20 = vcmask 72752
    %21 = vst.msk [vmem:[#allocation0] sm:$0x1] %vm20, %v19
    %s22 = scalar_lea.vmem [#allocation1], 1
    %v23 = vld [vmem:[%s22] sm:$0x1]
    %24 = vrot.lane.b32.xlu0 %v23, 3
    %v25 = vpop.permute.xlu0 %24
    %vm26 = vcmask 48152
    %27 = vst.msk [vmem:[#allocation0] sm:$0x1] %vm26, %v25
    %s29 = sshll.u32 1, 1
    %s30 = ssub.s32 %s29, 1
    %v32 = vld [vmem:[#allocation0] sm:%s30]
    %s33 = sshll.u32 1, 1
    %s34 = ssub.s32 %s33, 1
    %35 = vst [vmem:[%s1] sm:%s34] %v32

// kernel: generator_forward.5
$region0: #{generator_forward.5}
  #allocation0 [shape = 'u32[]', space=smem, size = 0x4, offset = 0x4, fixed_abs, tag = 'smem constant byte address 0x4 - core index']
  #allocation1 [shape = 'u32[144,128]{1,0:T(1,128)}', space=vmem, size = 0x12000, scoped, tag = 'internal scratch']
  #allocation2 [shape = 'f32[32,128]{1,0:T(8,128)}', space=vmem, size = 0x4000, scoped, tag = 'scratch operand']
  #allocation3 [shape = 'f32[1,128]{1,0:T(1,128)}', space=vmem, size = 0x200, scoped, tag = 'scratch operand']
  #allocation4 [shape = 'f32[1,128]{1,0:T(1,128)}', space=vmem, size = 0x200, scoped, tag = 'scratch operand']
  %s0 = inlined_call_operand.vmem [shape: bf16[32,512], index: 0, kind: input, shape index: {}]
  %s1 = inlined_call_operand.vmem [shape: bf16[512,128], index: 1, kind: input, shape index: {}]
  %s2 = inlined_call_operand.hbm [shape: f32[1,128], index: 2, kind: input, shape index: {}]
  %s3 = inlined_call_operand.hbm [shape: f32[1,128], index: 3, kind: input, shape index: {}]
  %s4 = inlined_call_operand.vmem [shape: f32[128,128], index: 4, kind: input, shape index: {}]
  %s5 = inlined_call_operand.vmem [shape: f32[128,128], index: 5, kind: input, shape index: {}]
  %s6 = inlined_call_operand.vmem [shape: bf16[32,128], index: 6, kind: output, shape index: {}]
  %s7 = sld [smem:[#allocation0]]
  $region50: #{generator_forward.5} parent=0
    _
  %s9 = ssub.s32 1, %s7
  %s10 = scalar_select 0, %s9, %s7
  $region1: #{generator_forward.5} parent=0
    #allocation5 [shape = 'u8[512]{0}', space=vmem, size = 0x400, scoped, tag = 'input window, operand 2, single buffered']
    #allocation6 [shape = 's32[1]{0}', space=sflag, size = 0x4, scoped, tag = 'scoped memory for generator_forward.5']
    #allocation7 [shape = 'u8[512]{0}', space=vmem, size = 0x400, scoped, tag = 'input window, operand 3, single buffered']
    #allocation8 [shape = 's32[1]{0}', space=sflag, size = 0x4, scoped, tag = 'scoped memory for generator_forward.5']
    %11 = vsyncpa [#allocation6], 0
    %12 = vsyncpa [#allocation8], 0
    // Predicated region
    $region2: #{generator_forward.5} parent=1 // pred_check
      _
    $region3: #{generator_forward.5} parent=1 // pred_check_branch
      %14 = sbr.rel (0) target = $region5
    $region4: #{generator_forward.5} parent=1 // pred_region
      _
    $region5: #{generator_forward.5} parent=1 // pred_fallthru
      _
    // Predicated region
    $region6: #{generator_forward.5} parent=1 // pred_check
      _
    $region7: #{generator_forward.5} parent=1 // pred_check_branch
      %16 = sbr.rel (0) target = $region9
    $region8: #{generator_forward.5} parent=1 // pred_region
      _
    $region9: #{generator_forward.5} parent=1 // pred_fallthru
      _
    // Predicated region
    $region10: #{generator_forward.5} parent=1 // pred_check
      _
    $region11: #{generator_forward.5} parent=1 // pred_check_branch
      %18 = sbr.rel (0) target = $region13
    $region12: #{generator_forward.5} parent=1 // pred_region
      %s20 = ssub.s32 16, 16
      %21 = vsyncadd [#allocation6], %s20
      %s23 = sshll.u32 [#allocation5], 4
      %s24 = int_to_ptr.vmem [resolvable:$true] %s23
      %26 = dma.hbm_to_vmem [thread:$0]  %s2, 16, %s24, [#allocation6]
    $region13: #{generator_forward.5} parent=1 // pred_fallthru
      _
    // Predicated region
    $region14: #{generator_forward.5} parent=1 // pred_check
      _
    $region15: #{generator_forward.5} parent=1 // pred_check_branch
      %28 = sbr.rel (0) target = $region17
    $region16: #{generator_forward.5} parent=1 // pred_region
      %s30 = ssub.s32 16, 16
      %31 = vsyncadd [#allocation8], %s30
      %s33 = sshll.u32 [#allocation7], 4
      %s34 = int_to_ptr.vmem [resolvable:$true] %s33
      %36 = dma.hbm_to_vmem [thread:$0]  %s3, 16, %s34, [#allocation8]
    $region17: #{generator_forward.5} parent=1 // pred_fallthru
      _
    // Predicated region
    $region18: #{generator_forward.5} parent=1 // pred_check
      _
    $region19: #{generator_forward.5} parent=1 // pred_check_branch
      %38 = sbr.rel (0) target = $region21
    $region20: #{generator_forward.5} parent=1 // pred_region
      _
    $region21: #{generator_forward.5} parent=1 // pred_fallthru
      _
    // Predicated region
    $region22: #{generator_forward.5} parent=1 // pred_check
      _
    $region23: #{generator_forward.5} parent=1 // pred_check_branch
      %40 = sbr.rel (0) target = $region25
    $region24: #{generator_forward.5} parent=1 // pred_region
      _
    $region25: #{generator_forward.5} parent=1 // pred_fallthru
      _
    // Predicated region
    $region26: #{generator_forward.5} parent=1 // pred_check
      _
    $region27: #{generator_forward.5} parent=1 // pred_check_branch
      %42 = sbr.rel (0) target = $region29
    $region28: #{generator_forward.5} parent=1 // pred_region
      %43 = dma.done [#allocation6], 16
    $region29: #{generator_forward.5} parent=1 // pred_fallthru
      _
    // Predicated region
    $region30: #{generator_forward.5} parent=1 // pred_check
      _
    $region31: #{generator_forward.5} parent=1 // pred_check_branch
      %45 = sbr.rel (0) target = $region33
    $region32: #{generator_forward.5} parent=1 // pred_region
      %46 = dma.done [#allocation8], 16
    $region33: #{generator_forward.5} parent=1 // pred_fallthru
      _
    %p48 = scmp.eq.s32.totalorder 0, 0
    // Predicated region
    $region34: #{generator_forward.5} parent=1 // pred_check
      %p49 = pneg %p48
    $region35: #{generator_forward.5} parent=1 // pred_check_branch
      %51 = sbr.rel (%p49) target = $region37
    $region36: #{generator_forward.5} parent=1 // pred_region
      %52 = vst [vmem:[#allocation3] sm:$0x1] 0.0
      %53 = vst [vmem:[#allocation4] sm:$0x1] 0.0
    $region37: #{generator_forward.5} parent=1 // pred_fallthru
      _
    %v54 = vld [vmem:[%s0] sm:$0xff]
    %v55 = vld [vmem:[%s0 + $0x8] sm:$0xff]
    %v56 = vld [vmem:[%s0 + $0x10] sm:$0xff]
    %v57 = vld [vmem:[%s0 + $0x18] sm:$0xff]
    %v58 = vld [vmem:[%s0 + $0x20] sm:$0xff]
    %v59 = vld [vmem:[%s0 + $0x28] sm:$0xff]
    %v60 = vld [vmem:[%s0 + $0x30] sm:$0xff]
    %v61 = vld [vmem:[%s0 + $0x38] sm:$0xff]
    %v62 = vld [vmem:[%s1] sm:$0xf]
    %v63 = vld [vmem:[%s1 + $0x4] sm:$0xf]
    %v64 = vld [vmem:[%s1 + $0x8] sm:$0xf]
    %v65 = vld [vmem:[%s1 + $0xc] sm:$0xf]
    %v66 = vld [vmem:[%s1 + $0x10] sm:$0xf]
    %v67 = vld [vmem:[%s1 + $0x14] sm:$0xf]
    %v68 = vld [vmem:[%s1 + $0x18] sm:$0xf]
    %v69 = vld [vmem:[%s1 + $0x1c] sm:$0xf]
    %v70 = vld [vmem:[%s1 + $0x20] sm:$0xf]
    %v71 = vld [vmem:[%s1 + $0x24] sm:$0xf]
    %v72 = vld [vmem:[%s1 + $0x28] sm:$0xf]
    %v73 = vld [vmem:[%s1 + $0x2c] sm:$0xf]
    %v74 = vld [vmem:[%s1 + $0x30] sm:$0xf]
    %v75 = vld [vmem:[%s1 + $0x34] sm:$0xf]
    %v76 = vld [vmem:[%s1 + $0x38] sm:$0xf]
    %v77 = vld [vmem:[%s1 + $0x3c] sm:$0xf]
    %v78 = vld [vmem:[%s1 + $0x40] sm:$0xf]
    %v79 = vld [vmem:[%s1 + $0x44] sm:$0xf]
    %v80 = vld [vmem:[%s1 + $0x48] sm:$0xf]
    %v81 = vld [vmem:[%s1 + $0x4c] sm:$0xf]
    %v82 = vld [vmem:[%s1 + $0x50] sm:$0xf]
    %v83 = vld [vmem:[%s1 + $0x54] sm:$0xf]
    %v84 = vld [vmem:[%s1 + $0x58] sm:$0xf]
    %v85 = vld [vmem:[%s1 + $0x5c] sm:$0xf]
    %v86 = vld [vmem:[%s1 + $0x60] sm:$0xf]
    %v87 = vld [vmem:[%s1 + $0x64] sm:$0xf]
    %v88 = vld [vmem:[%s1 + $0x68] sm:$0xf]
    %v89 = vld [vmem:[%s1 + $0x6c] sm:$0xf]
    %v90 = vld [vmem:[%s1 + $0x70] sm:$0xf]
    %v91 = vld [vmem:[%s1 + $0x74] sm:$0xf]
    %v92 = vld [vmem:[%s1 + $0x78] sm:$0xf]
    %v93 = vld [vmem:[%s1 + $0x7c] sm:$0xf]
    %v94 = vld [vmem:[%s1 + $0x80] sm:$0xf]
    %v95 = vld [vmem:[%s1 + $0x84] sm:$0xf]
    %v96 = vld [vmem:[%s1 + $0x88] sm:$0xf]
    %v97 = vld [vmem:[%s1 + $0x8c] sm:$0xf]
    %v98 = vld [vmem:[%s1 + $0x90] sm:$0xf]
    %v99 = vld [vmem:[%s1 + $0x94] sm:$0xf]
    %v100 = vld [vmem:[%s1 + $0x98] sm:$0xf]
    %v101 = vld [vmem:[%s1 + $0x9c] sm:$0xf]
    %v102 = vld [vmem:[%s1 + $0xa0] sm:$0xf]
    %v103 = vld [vmem:[%s1 + $0xa4] sm:$0xf]
    %v104 = vld [vmem:[%s1 + $0xa8] sm:$0xf]
    %v105 = vld [vmem:[%s1 + $0xac] sm:$0xf]
    %v106 = vld [vmem:[%s1 + $0xb0] sm:$0xf]
    %v107 = vld [vmem:[%s1 + $0xb4] sm:$0xf]
    %v108 = vld [vmem:[%s1 + $0xb8] sm:$0xf]
    %v109 = vld [vmem:[%s1 + $0xbc] sm:$0xf]
    %v110 = vld [vmem:[%s1 + $0xc0] sm:$0xf]
    %v111 = vld [vmem:[%s1 + $0xc4] sm:$0xf]
    %v112 = vld [vmem:[%s1 + $0xc8] sm:$0xf]
    %v113 = vld [vmem:[%s1 + $0xcc] sm:$0xf]
    %v114 = vld [vmem:[%s1 + $0xd0] sm:$0xf]
    %v115 = vld [vmem:[%s1 + $0xd4] sm:$0xf]
    %v116 = vld [vmem:[%s1 + $0xd8] sm:$0xf]
    %v117 = vld [vmem:[%s1 + $0xdc] sm:$0xf]
    %v118 = vld [vmem:[%s1 + $0xe0] sm:$0xf]
    %v119 = vld [vmem:[%s1 + $0xe4] sm:$0xf]
    %v120 = vld [vmem:[%s1 + $0xe8] sm:$0xf]
    %v121 = vld [vmem:[%s1 + $0xec] sm:$0xf]
    %v122 = vld [vmem:[%s1 + $0xf0] sm:$0xf]
    %v123 = vld [vmem:[%s1 + $0xf4] sm:$0xf]
    %v124 = vld [vmem:[%s1 + $0xf8] sm:$0xf]
    %v125 = vld [vmem:[%s1 + $0xfc] sm:$0xf]
    %v134 = vunpack.c.l.b16 %v54
    %v135 = vunpack.c.h.b16 %v54
    %v136 = vunpack.c.l.b16 %v55
    %v137 = vunpack.c.h.b16 %v55
    %v138 = vunpack.c.l.b16 %v56
    %v139 = vunpack.c.h.b16 %v56
    %v140 = vunpack.c.l.b16 %v57
    %v141 = vunpack.c.h.b16 %v57
    %v142 = vunpack.c.l.b16 %v58
    %v143 = vunpack.c.h.b16 %v58
    %v144 = vunpack.c.l.b16 %v59
    %v145 = vunpack.c.h.b16 %v59
    %v146 = vunpack.c.l.b16 %v60
    %v147 = vunpack.c.h.b16 %v60
    %v148 = vunpack.c.l.b16 %v61
    %v149 = vunpack.c.h.b16 %v61
    %v150 = vpack.c.b16 %v138, %v134
    %v151 = vpack.c.b16 %v139, %v135
    %v152 = vpack.c.b16 %v140, %v136
    %v153 = vpack.c.b16 %v141, %v137
    %v154 = vpack.c.b16 %v146, %v142
    %v155 = vpack.c.b16 %v147, %v143
    %v156 = vpack.c.b16 %v148, %v144
    %v157 = vpack.c.b16 %v149, %v145
    %v230 = vunpack.c.l.b16 %v62
    %v231 = vunpack.c.l.b16 %v63
    %v232 = vunpack.c.l.b16 %v64
    %v233 = vunpack.c.l.b16 %v65
    %v234 = vunpack.c.l.b16 %v66
    %v235 = vunpack.c.l.b16 %v67
    %v236 = vunpack.c.l.b16 %v68
    %v237 = vunpack.c.l.b16 %v69
    %v238 = vunpack.c.l.b16 %v70
    %v239 = vunpack.c.l.b16 %v71
    %v240 = vunpack.c.l.b16 %v72
    %v241 = vunpack.c.l.b16 %v73
    %v242 = vunpack.c.l.b16 %v74
    %v243 = vunpack.c.l.b16 %v75
    %v244 = vunpack.c.l.b16 %v76
    %v245 = vunpack.c.l.b16 %v77
    %v246 = vunpack.c.l.b16 %v78
    %v247 = vunpack.c.l.b16 %v79
    %v248 = vunpack.c.l.b16 %v80
    %v249 = vunpack.c.l.b16 %v81
    %v250 = vunpack.c.l.b16 %v82
    %v251 = vunpack.c.l.b16 %v83
    %v252 = vunpack.c.l.b16 %v84
    %v253 = vunpack.c.l.b16 %v85
    %v254 = vunpack.c.l.b16 %v86
    %v255 = vunpack.c.l.b16 %v87
    %v256 = vunpack.c.l.b16 %v88
    %v257 = vunpack.c.l.b16 %v89
    %v258 = vunpack.c.l.b16 %v90
    %v259 = vunpack.c.l.b16 %v91
    %v260 = vunpack.c.l.b16 %v92
    %v261 = vunpack.c.l.b16 %v93
    %v262 = vunpack.c.l.b16 %v94
    %v263 = vunpack.c.l.b16 %v95
    %v264 = vunpack.c.l.b16 %v96
    %v265 = vunpack.c.l.b16 %v97
    %v266 = vunpack.c.l.b16 %v98
    %v267 = vunpack.c.l.b16 %v99
    %v268 = vunpack.c.l.b16 %v100
    %v269 = vunpack.c.l.b16 %v101
    %v270 = vunpack.c.l.b16 %v102
    %v271 = vunpack.c.l.b16 %v103
    %v272 = vunpack.c.l.b16 %v104
    %v273 = vunpack.c.l.b16 %v105
    %v274 = vunpack.c.l.b16 %v106
    %v275 = vunpack.c.l.b16 %v107
    %v276 = vunpack.c.l.b16 %v108
    %v277 = vunpack.c.l.b16 %v109
    %v278 = vunpack.c.l.b16 %v110
    %v279 = vunpack.c.l.b16 %v111
    %v280 = vunpack.c.l.b16 %v112
    %v281 = vunpack.c.l.b16 %v113
    %v282 = vunpack.c.l.b16 %v114
    %v283 = vunpack.c.l.b16 %v115
    %v284 = vunpack.c.l.b16 %v116
    %v285 = vunpack.c.l.b16 %v117
    %v286 = vunpack.c.l.b16 %v118
    %v287 = vunpack.c.l.b16 %v119
    %v288 = vunpack.c.l.b16 %v120
    %v289 = vunpack.c.l.b16 %v121
    %v290 = vunpack.c.l.b16 %v122
    %v291 = vunpack.c.l.b16 %v123
    %v292 = vunpack.c.l.b16 %v124
    %v293 = vunpack.c.l.b16 %v125
    %v294 = vpack.c.b16 %v231, %v230
    %v295 = vpack.c.b16 %v233, %v232
    %v296 = vpack.c.b16 %v235, %v234
    %v297 = vpack.c.b16 %v237, %v236
    %v298 = vpack.c.b16 %v239, %v238
    %v299 = vpack.c.b16 %v241, %v240
    %v300 = vpack.c.b16 %v243, %v242
    %v301 = vpack.c.b16 %v245, %v244
    %v302 = vpack.c.b16 %v247, %v246
    %v303 = vpack.c.b16 %v249, %v248
    %v304 = vpack.c.b16 %v251, %v250
    %v305 = vpack.c.b16 %v253, %v252
    %v306 = vpack.c.b16 %v255, %v254
    %v307 = vpack.c.b16 %v257, %v256
    %v308 = vpack.c.b16 %v259, %v258
    %v309 = vpack.c.b16 %v261, %v260
    %v310 = vpack.c.b16 %v263, %v262
    %v311 = vpack.c.b16 %v265, %v264
    %v312 = vpack.c.b16 %v267, %v266
    %v313 = vpack.c.b16 %v269, %v268
    %v314 = vpack.c.b16 %v271, %v270
    %v315 = vpack.c.b16 %v273, %v272
    %v316 = vpack.c.b16 %v275, %v274
    %v317 = vpack.c.b16 %v277, %v276
    %v318 = vpack.c.b16 %v279, %v278
    %v319 = vpack.c.b16 %v281, %v280
    %v320 = vpack.c.b16 %v283, %v282
    %v321 = vpack.c.b16 %v285, %v284
    %v322 = vpack.c.b16 %v287, %v286
    %v323 = vpack.c.b16 %v289, %v288
    %v324 = vpack.c.b16 %v291, %v290
    %v325 = vpack.c.b16 %v293, %v292
    %358 = vmatprep.subr.bf16.mxu0 0
    %359 = vmatpush1.bf16.msra.mxu0 %v301
    %360 = vmatprep.subr.bf16.mxu0 0
    %361 = vmatpush1.bf16.msra.mxu0 %v300
    %362 = vmatprep.subr.bf16.mxu0 0
    %363 = vmatpush1.bf16.msra.mxu0 %v299
    %364 = vmatprep.subr.bf16.mxu0 0
    %365 = vmatpush1.bf16.msra.mxu0 %v298
    %366 = vmatprep.subr.bf16.mxu0 0
    %367 = vmatpush1.bf16.msra.mxu0 %v297
    %368 = vmatprep.subr.bf16.mxu0 0
    %369 = vmatpush1.bf16.msra.mxu0 %v296
    %370 = vmatprep.subr.bf16.mxu0 0
    %371 = vmatpush1.bf16.msra.mxu0 %v295
    %372 = vmatprep.subr.bf16.mxu0 0
    %373 = vmatpush1.bf16.msra.mxu0 %v294
    %374 = vmatprep.subr.bf16.mxu0 0
    %375 = vmatpush2.bf16.msra.mxu0 %v309
    %376 = vmatprep.subr.bf16.mxu0 0
    %377 = vmatpush2.bf16.msra.mxu0 %v308
    %378 = vmatprep.subr.bf16.mxu0 0
    %379 = vmatpush2.bf16.msra.mxu0 %v307
    %380 = vmatprep.subr.bf16.mxu0 0
    %381 = vmatpush2.bf16.msra.mxu0 %v306
    %382 = vmatprep.subr.bf16.mxu0 0
    %383 = vmatpush2.bf16.msra.mxu0 %v305
    %384 = vmatprep.subr.bf16.mxu0 0
    %385 = vmatpush2.bf16.msra.mxu0 %v304
    %386 = vmatprep.subr.bf16.mxu0 0
    %387 = vmatpush2.bf16.msra.mxu0 %v303
    %388 = vmatprep.subr.bf16.mxu0 0
    %389 = vmatpush2.bf16.msra.mxu0 %v302
    %390 = vmatprep.mubr.bf16.mxu0 %v151
    %391 = vmatmul.mubr.bf16.gmra.mxu0 %v150
    %v392 = vpop.f32.mrf.mxu0
    %v393 = vadd.f32 0.0, %v392
    %v394 = vpop.f32.mrf.mxu0
    %v395 = vpop.f32.mrf.mxu0
    %v396 = vadd.f32 0.0, %v395
    %v397 = vpop.f32.mrf.mxu0
    %398 = vmatprep.mubr.bf16.mxu0 %v155
    %399 = vmatmul.mubr.bf16.gmra.mxu0 %v154
    %v400 = vpop.f32.mrf.mxu0
    %v401 = vadd.f32 0.0, %v400
    %v402 = vpop.f32.mrf.mxu0
    %v403 = vpop.f32.mrf.mxu0
    %v404 = vadd.f32 0.0, %v403
    %v405 = vpop.f32.mrf.mxu0
    %406 = vdwg.mxu0
    %407 = vmatprep.subr.bf16.mxu0 0
    %408 = vmatpush1.bf16.msra.mxu0 %v317
    %409 = vmatprep.subr.bf16.mxu0 0
    %410 = vmatpush1.bf16.msra.mxu0 %v316
    %411 = vmatprep.subr.bf16.mxu0 0
    %412 = vmatpush1.bf16.msra.mxu0 %v315
    %413 = vmatprep.subr.bf16.mxu0 0
    %414 = vmatpush1.bf16.msra.mxu0 %v314
    %415 = vmatprep.subr.bf16.mxu0 0
    %416 = vmatpush1.bf16.msra.mxu0 %v313
    %417 = vmatprep.subr.bf16.mxu0 0
    %418 = vmatpush1.bf16.msra.mxu0 %v312
    %419 = vmatprep.subr.bf16.mxu0 0
    %420 = vmatpush1.bf16.msra.mxu0 %v311
    %421 = vmatprep.subr.bf16.mxu0 0
    %422 = vmatpush1.bf16.msra.mxu0 %v310
    %423 = vmatprep.subr.bf16.mxu0 0
    %424 = vmatpush2.bf16.msra.mxu0 %v325
    %425 = vmatprep.subr.bf16.mxu0 0
    %426 = vmatpush2.bf16.msra.mxu0 %v324
    %427 = vmatprep.subr.bf16.mxu0 0
    %428 = vmatpush2.bf16.msra.mxu0 %v323
    %429 = vmatprep.subr.bf16.mxu0 0
    %430 = vmatpush2.bf16.msra.mxu0 %v322
    %431 = vmatprep.subr.bf16.mxu0 0
    %432 = vmatpush2.bf16.msra.mxu0 %v321
    %433 = vmatprep.subr.bf16.mxu0 0
    %434 = vmatpush2.bf16.msra.mxu0 %v320
    %435 = vmatprep.subr.bf16.mxu0 0
    %436 = vmatpush2.bf16.msra.mxu0 %v319
    %437 = vmatprep.subr.bf16.mxu0 0
    %438 = vmatpush2.bf16.msra.mxu0 %v318
    %439 = vmatprep.mubr.bf16.mxu0 %v153
    %440 = vmatmul.mubr.bf16.gmra.mxu0 %v152
    %v441 = vpop.f32.mrf.mxu0
    %v442 = vadd.f32 %v393, %v441
    %v443 = vpop.f32.mrf.mxu0
    %v444 = vpop.f32.mrf.mxu0
    %v445 = vadd.f32 %v396, %v444
    %v446 = vpop.f32.mrf.mxu0
    %447 = vmatprep.mubr.bf16.mxu0 %v157
    %448 = vmatmul.mubr.bf16.gmra.mxu0 %v156
    %v449 = vpop.f32.mrf.mxu0
    %v450 = vadd.f32 %v401, %v449
    %v451 = vpop.f32.mrf.mxu0
    %v452 = vpop.f32.mrf.mxu0
    %v453 = vadd.f32 %v404, %v452
    %v454 = vpop.f32.mrf.mxu0
    %455 = vdwg.mxu0
    %s456 = smul.u32 0, 32
    %s457 = scalar_lea.vmem [#allocation2], %s456
    %458 = vst [vmem:[%s457] sm:$0xff] %v442
    %459 = vst [vmem:[%s457 + $0x8] sm:$0xff] %v445
    %460 = vst [vmem:[%s457 + $0x10] sm:$0xff] %v450
    %461 = vst [vmem:[%s457 + $0x18] sm:$0xff] %v453
    %v462 = vld [vmem:[#allocation3] sm:$0x1]
    %v463 = vadd.f32 %v442, %v445
    %v464 = vadd.f32 %v463, %v450
    %v465 = vadd.f32 %v464, %v453
    %v466 = vrot.slane %v465, 4
    %v467 = vadd.f32 %v465, %v466
    %v468 = vrot.slane %v467, 2
    %v469 = vadd.f32 %v467, %v468
    %v470 = vrot.slane %v469, 1
    %v471 = vadd.f32 %v469, %v470
    %v472 = vadd.f32 %v462, %v471
    %473 = vst [vmem:[#allocation3] sm:$0x1] %v472
    %v474 = vld [vmem:[#allocation4] sm:$0x1]
    %v475 = vmul.f32 %v442, %v442
    %v476 = vmul.f32 %v445, %v445
    %v477 = vmul.f32 %v450, %v450
    %v478 = vmul.f32 %v453, %v453
    %v479 = vadd.f32 %v475, %v476
    %v480 = vadd.f32 %v479, %v477
    %v481 = vadd.f32 %v480, %v478
    %v482 = vrot.slane %v481, 4
    %v483 = vadd.f32 %v481, %v482
    %v484 = vrot.slane %v483, 2
    %v485 = vadd.f32 %v483, %v484
    %v486 = vrot.slane %v485, 1
    %v487 = vadd.f32 %v485, %v486
    %v488 = vadd.f32 %v474, %v487
    %489 = vst [vmem:[#allocation4] sm:$0x1] %v488
    // Predicated region
    $region38: #{generator_forward.5} parent=1 // pred_check
      %p490 = pneg %p48
    $region39: #{generator_forward.5} parent=1 // pred_check_branch
      %492 = sbr.rel (%p490) target = $region41
    $region40: #{generator_forward.5} parent=1 // pred_region
      %v493 = vld [vmem:[#allocation3] sm:$0x1]
      %v494 = vld [vmem:[%s4] sm:$0xff]
      %v495 = vld [vmem:[%s4 + $0x8] sm:$0xff]
      %v496 = vld [vmem:[%s4 + $0x10] sm:$0xff]
      %v497 = vld [vmem:[%s4 + $0x18] sm:$0xff]
      %v498 = vld [vmem:[%s4 + $0x20] sm:$0xff]
      %v499 = vld [vmem:[%s4 + $0x28] sm:$0xff]
      %v500 = vld [vmem:[%s4 + $0x30] sm:$0xff]
      %v501 = vld [vmem:[%s4 + $0x38] sm:$0xff]
      %v502 = vld [vmem:[%s4 + $0x40] sm:$0xff]
      %v503 = vld [vmem:[%s4 + $0x48] sm:$0xff]
      %v504 = vld [vmem:[%s4 + $0x50] sm:$0xff]
      %v505 = vld [vmem:[%s4 + $0x58] sm:$0xff]
      %v506 = vld [vmem:[%s4 + $0x60] sm:$0xff]
      %v507 = vld [vmem:[%s4 + $0x68] sm:$0xff]
      %v508 = vld [vmem:[%s4 + $0x70] sm:$0xff]
      %v509 = vld [vmem:[%s4 + $0x78] sm:$0xff]
      %510 = vmatprep.subr.mxu0 0.0
      %511 = vmatpush1.msra.mxu0 %v509
      %512 = vmatprep.subr.mxu0 0.0
      %513 = vmatpush1.msra.mxu0 %v508
      %514 = vmatprep.subr.mxu0 0.0
      %515 = vmatpush1.msra.mxu0 %v507
      %516 = vmatprep.subr.mxu0 0.0
      %517 = vmatpush1.msra.mxu0 %v506
      %518 = vmatprep.subr.mxu0 0.0
      %519 = vmatpush1.msra.mxu0 %v505
      %520 = vmatprep.subr.mxu0 0.0
      %521 = vmatpush1.msra.mxu0 %v504
      %522 = vmatprep.subr.mxu0 0.0
      %523 = vmatpush1.msra.mxu0 %v503
      %524 = vmatprep.subr.mxu0 0.0
      %525 = vmatpush1.msra.mxu0 %v502
      %526 = vmatprep.subr.mxu0 0.0
      %527 = vmatpush1.msra.mxu0 %v501
      %528 = vmatprep.subr.mxu0 0.0
      %529 = vmatpush1.msra.mxu0 %v500
      %530 = vmatprep.subr.mxu0 0.0
      %531 = vmatpush1.msra.mxu0 %v499
      %532 = vmatprep.subr.mxu0 0.0
      %533 = vmatpush1.msra.mxu0 %v498
      %534 = vmatprep.subr.mxu0 0.0
      %535 = vmatpush1.msra.mxu0 %v497
      %536 = vmatprep.subr.mxu0 0.0
      %537 = vmatpush1.msra.mxu0 %v496
      %538 = vmatprep.subr.mxu0 0.0
      %539 = vmatpush1.msra.mxu0 %v495
      %540 = vmatprep.subr.mxu0 0.0
      %541 = vmatpush1.msra.mxu0 %v494
      %542 = vmatprep.subr.mxu0 0.0
      %543 = vmatpush2.msra.mxu0 0.0
      %544 = vmatprep.subr.mxu0 0.0
      %545 = vmatpush2.msra.mxu0 0.0
      %546 = vmatprep.subr.mxu0 0.0
      %547 = vmatpush2.msra.mxu0 0.0
      %548 = vmatprep.subr.mxu0 0.0
      %549 = vmatpush2.msra.mxu0 0.0
      %550 = vmatprep.subr.mxu0 0.0
      %551 = vmatpush2.msra.mxu0 0.0
      %552 = vmatprep.subr.mxu0 0.0
      %553 = vmatpush2.msra.mxu0 0.0
      %554 = vmatprep.subr.mxu0 0.0
      %555 = vmatpush2.msra.mxu0 0.0
      %556 = vmatprep.subr.mxu0 0.0
      %557 = vmatpush2.msra.mxu0 0.0
      %558 = vmatprep.subr.mxu0 0.0
      %559 = vmatpush2.msra.mxu0 0.0
      %560 = vmatprep.subr.mxu0 0.0
      %561 = vmatpush2.msra.mxu0 0.0
      %562 = vmatprep.subr.mxu0 0.0
      %563 = vmatpush2.msra.mxu0 0.0
      %564 = vmatprep.subr.mxu0 0.0
      %565 = vmatpush2.msra.mxu0 0.0
      %566 = vmatprep.subr.mxu0 0.0
      %567 = vmatpush2.msra.mxu0 0.0
      %568 = vmatprep.subr.mxu0 0.0
      %569 = vmatpush2.msra.mxu0 0.0
      %570 = vmatprep.subr.mxu0 0.0
      %571 = vmatpush2.msra.mxu0 0.0
      %572 = vmatprep.subr.mxu0 0.0
      %573 = vmatpush2.msra.mxu0 0.0
      %574 = vmatprep.mubr.f32.mxu0 0.0
      %575 = vmatmul.mubr.f32.gmra.mxu0 %v493
      %v576 = vpop.f32.mrf.mxu0
      %v577 = vadd.f32 0.0, %v576
      %v578 = vpop.f32.mrf.mxu0
      %579 = vdwg.mxu0
      %v580 = vld [vmem:[#allocation4] sm:$0x1]
      %581 = vmatprep.subr.mxu0 0.0
      %582 = vmatpush1.msra.mxu0 %v509
      %583 = vmatprep.subr.mxu0 0.0
      %584 = vmatpush1.msra.mxu0 %v508
      %585 = vmatprep.subr.mxu0 0.0
      %586 = vmatpush1.msra.mxu0 %v507
      %587 = vmatprep.subr.mxu0 0.0
      %588 = vmatpush1.msra.mxu0 %v506
      %589 = vmatprep.subr.mxu0 0.0
      %590 = vmatpush1.msra.mxu0 %v505
      %591 = vmatprep.subr.mxu0 0.0
      %592 = vmatpush1.msra.mxu0 %v504
      %593 = vmatprep.subr.mxu0 0.0
      %594 = vmatpush1.msra.mxu0 %v503
      %595 = vmatprep.subr.mxu0 0.0
      %596 = vmatpush1.msra.mxu0 %v502
      %597 = vmatprep.subr.mxu0 0.0
      %598 = vmatpush1.msra.mxu0 %v501
      %599 = vmatprep.subr.mxu0 0.0
      %600 = vmatpush1.msra.mxu0 %v500
      %601 = vmatprep.subr.mxu0 0.0
      %602 = vmatpush1.msra.mxu0 %v499
      %603 = vmatprep.subr.mxu0 0.0
      %604 = vmatpush1.msra.mxu0 %v498
      %605 = vmatprep.subr.mxu0 0.0
      %606 = vmatpush1.msra.mxu0 %v497
      %607 = vmatprep.subr.mxu0 0.0
      %608 = vmatpush1.msra.mxu0 %v496
      %609 = vmatprep.subr.mxu0 0.0
      %610 = vmatpush1.msra.mxu0 %v495
      %611 = vmatprep.subr.mxu0 0.0
      %612 = vmatpush1.msra.mxu0 %v494
      %613 = vmatprep.subr.mxu0 0.0
      %614 = vmatpush2.msra.mxu0 0.0
      %615 = vmatprep.subr.mxu0 0.0
      %616 = vmatpush2.msra.mxu0 0.0
      %617 = vmatprep.subr.mxu0 0.0
      %618 = vmatpush2.msra.mxu0 0.0
      %619 = vmatprep.subr.mxu0 0.0
      %620 = vmatpush2.msra.mxu0 0.0
      %621 = vmatprep.subr.mxu0 0.0
      %622 = vmatpush2.msra.mxu0 0.0
      %623 = vmatprep.subr.mxu0 0.0
      %624 = vmatpush2.msra.mxu0 0.0
      %625 = vmatprep.subr.mxu0 0.0
      %626 = vmatpush2.msra.mxu0 0.0
      %627 = vmatprep.subr.mxu0 0.0
      %628 = vmatpush2.msra.mxu0 0.0
      %629 = vmatprep.subr.mxu0 0.0
      %630 = vmatpush2.msra.mxu0 0.0
      %631 = vmatprep.subr.mxu0 0.0
      %632 = vmatpush2.msra.mxu0 0.0
      %633 = vmatprep.subr.mxu0 0.0
      %634 = vmatpush2.msra.mxu0 0.0
      %635 = vmatprep.subr.mxu0 0.0
      %636 = vmatpush2.msra.mxu0 0.0
      %637 = vmatprep.subr.mxu0 0.0
      %638 = vmatpush2.msra.mxu0 0.0
      %639 = vmatprep.subr.mxu0 0.0
      %640 = vmatpush2.msra.mxu0 0.0
      %641 = vmatprep.subr.mxu0 0.0
      %642 = vmatpush2.msra.mxu0 0.0
      %643 = vmatprep.subr.mxu0 0.0
      %644 = vmatpush2.msra.mxu0 0.0
      %645 = vmatprep.mubr.f32.mxu0 0.0
      %646 = vmatmul.mubr.f32.gmra.mxu0 %v580
      %v647 = vpop.f32.mrf.mxu0
      %v648 = vadd.f32 0.0, %v647
      %v649 = vpop.f32.mrf.mxu0
      %650 = vdwg.mxu0
      %v651 = vmul.f32 %v577, 0.03125
      %v652 = vmul.f32 %v648, 0.03125
      %v653 = vmul.f32 %v651, %v651
      %v654 = vsub.f32 %v652, %v653
      %v655 = vmax.f32 %v654, 0.0
      %v656 = vld [vmem:[#allocation5] sm:$0x1]
      %v657 = vadd.f32 %v655, 1e-05
      %v658 = vrsqrt.pop %v657
      %v659 = vmul.f32 %v656, %v658
      %v660 = vld [vmem:[#allocation7] sm:$0x1]
      %v661 = vmul.f32 %v651, %v659
      %v662 = vsub.f32 %v660, %v661
      %v663 = vld [vmem:[%s5] sm:$0xff]
      %v664 = vld [vmem:[%s5 + $0x8] sm:$0xff]
      %v665 = vld [vmem:[%s5 + $0x10] sm:$0xff]
      %v666 = vld [vmem:[%s5 + $0x18] sm:$0xff]
      %v667 = vld [vmem:[%s5 + $0x20] sm:$0xff]
      %v668 = vld [vmem:[%s5 + $0x28] sm:$0xff]
      %v669 = vld [vmem:[%s5 + $0x30] sm:$0xff]
      %v670 = vld [vmem:[%s5 + $0x38] sm:$0xff]
      %v671 = vld [vmem:[%s5 + $0x40] sm:$0xff]
      %v672 = vld [vmem:[%s5 + $0x48] sm:$0xff]
      %v673 = vld [vmem:[%s5 + $0x50] sm:$0xff]
      %v674 = vld [vmem:[%s5 + $0x58] sm:$0xff]
      %v675 = vld [vmem:[%s5 + $0x60] sm:$0xff]
      %v676 = vld [vmem:[%s5 + $0x68] sm:$0xff]
      %v677 = vld [vmem:[%s5 + $0x70] sm:$0xff]
      %v678 = vld [vmem:[%s5 + $0x78] sm:$0xff]
      %679 = vmatprep.subr.mxu0 0.0
      %680 = vmatpush1.msra.mxu0 %v678
      %681 = vmatprep.subr.mxu0 0.0
      %682 = vmatpush1.msra.mxu0 %v677
      %683 = vmatprep.subr.mxu0 0.0
      %684 = vmatpush1.msra.mxu0 %v676
      %685 = vmatprep.subr.mxu0 0.0
      %686 = vmatpush1.msra.mxu0 %v675
      %687 = vmatprep.subr.mxu0 0.0
      %688 = vmatpush1.msra.mxu0 %v674
      %689 = vmatprep.subr.mxu0 0.0
      %690 = vmatpush1.msra.mxu0 %v673
      %691 = vmatprep.subr.mxu0 0.0
      %692 = vmatpush1.msra.mxu0 %v672
      %693 = vmatprep.subr.mxu0 0.0
      %694 = vmatpush1.msra.mxu0 %v671
      %695 = vmatprep.subr.mxu0 0.0
      %696 = vmatpush1.msra.mxu0 %v670
      %697 = vmatprep.subr.mxu0 0.0
      %698 = vmatpush1.msra.mxu0 %v669
      %699 = vmatprep.subr.mxu0 0.0
      %700 = vmatpush1.msra.mxu0 %v668
      %701 = vmatprep.subr.mxu0 0.0
      %702 = vmatpush1.msra.mxu0 %v667
      %703 = vmatprep.subr.mxu0 0.0
      %704 = vmatpush1.msra.mxu0 %v666
      %705 = vmatprep.subr.mxu0 0.0
      %706 = vmatpush1.msra.mxu0 %v665
      %707 = vmatprep.subr.mxu0 0.0
      %708 = vmatpush1.msra.mxu0 %v664
      %709 = vmatprep.subr.mxu0 0.0
      %710 = vmatpush1.msra.mxu0 %v663
      %711 = vmatprep.subr.mxu0 0.0
      %712 = vmatpush2.msra.mxu0 0.0
      %713 = vmatprep.subr.mxu0 0.0
      %714 = vmatpush2.msra.mxu0 0.0
      %715 = vmatprep.subr.mxu0 0.0
      %716 = vmatpush2.msra.mxu0 0.0
      %717 = vmatprep.subr.mxu0 0.0
      %718 = vmatpush2.msra.mxu0 0.0
      %719 = vmatprep.subr.mxu0 0.0
      %720 = vmatpush2.msra.mxu0 0.0
      %721 = vmatprep.subr.mxu0 0.0
      %722 = vmatpush2.msra.mxu0 0.0
      %723 = vmatprep.subr.mxu0 0.0
      %724 = vmatpush2.msra.mxu0 0.0
      %725 = vmatprep.subr.mxu0 0.0
      %726 = vmatpush2.msra.mxu0 0.0
      %727 = vmatprep.subr.mxu0 0.0
      %728 = vmatpush2.msra.mxu0 0.0
      %729 = vmatprep.subr.mxu0 0.0
      %730 = vmatpush2.msra.mxu0 0.0
      %731 = vmatprep.subr.mxu0 0.0
      %732 = vmatpush2.msra.mxu0 0.0
      %733 = vmatprep.subr.mxu0 0.0
      %734 = vmatpush2.msra.mxu0 0.0
      %735 = vmatprep.subr.mxu0 0.0
      %736 = vmatpush2.msra.mxu0 0.0
      %737 = vmatprep.subr.mxu0 0.0
      %738 = vmatpush2.msra.mxu0 0.0
      %739 = vmatprep.subr.mxu0 0.0
      %740 = vmatpush2.msra.mxu0 0.0
      %741 = vmatprep.subr.mxu0 0.0
      %742 = vmatpush2.msra.mxu0 0.0
      %743 = vmatprep.mubr.f32.mxu0 0.0
      %744 = vmatmul.mubr.f32.gmra.mxu0 %v659
      %v745 = vpop.f32.mrf.mxu0
      %v746 = vadd.f32 0.0, %v745
      %v747 = vpop.f32.mrf.mxu0
      %748 = vdwg.mxu0
      %749 = vmatprep.subr.mxu0 0.0
      %750 = vmatpush1.msra.mxu0 %v678
      %751 = vmatprep.subr.mxu0 0.0
      %752 = vmatpush1.msra.mxu0 %v677
      %753 = vmatprep.subr.mxu0 0.0
      %754 = vmatpush1.msra.mxu0 %v676
      %755 = vmatprep.subr.mxu0 0.0
      %756 = vmatpush1.msra.mxu0 %v675
      %757 = vmatprep.subr.mxu0 0.0
      %758 = vmatpush1.msra.mxu0 %v674
      %759 = vmatprep.subr.mxu0 0.0
      %760 = vmatpush1.msra.mxu0 %v673
      %761 = vmatprep.subr.mxu0 0.0
      %762 = vmatpush1.msra.mxu0 %v672
      %763 = vmatprep.subr.mxu0 0.0
      %764 = vmatpush1.msra.mxu0 %v671
      %765 = vmatprep.subr.mxu0 0.0
      %766 = vmatpush1.msra.mxu0 %v670
      %767 = vmatprep.subr.mxu0 0.0
      %768 = vmatpush1.msra.mxu0 %v669
      %769 = vmatprep.subr.mxu0 0.0
      %770 = vmatpush1.msra.mxu0 %v668
      %771 = vmatprep.subr.mxu0 0.0
      %772 = vmatpush1.msra.mxu0 %v667
      %773 = vmatprep.subr.mxu0 0.0
      %774 = vmatpush1.msra.mxu0 %v666
      %775 = vmatprep.subr.mxu0 0.0
      %776 = vmatpush1.msra.mxu0 %v665
      %777 = vmatprep.subr.mxu0 0.0
      %778 = vmatpush1.msra.mxu0 %v664
      %779 = vmatprep.subr.mxu0 0.0
      %780 = vmatpush1.msra.mxu0 %v663
      %781 = vmatprep.subr.mxu0 0.0
      %782 = vmatpush2.msra.mxu0 0.0
      %783 = vmatprep.subr.mxu0 0.0
      %784 = vmatpush2.msra.mxu0 0.0
      %785 = vmatprep.subr.mxu0 0.0
      %786 = vmatpush2.msra.mxu0 0.0
      %787 = vmatprep.subr.mxu0 0.0
      %788 = vmatpush2.msra.mxu0 0.0
      %789 = vmatprep.subr.mxu0 0.0
      %790 = vmatpush2.msra.mxu0 0.0
      %791 = vmatprep.subr.mxu0 0.0
      %792 = vmatpush2.msra.mxu0 0.0
      %793 = vmatprep.subr.mxu0 0.0
      %794 = vmatpush2.msra.mxu0 0.0
      %795 = vmatprep.subr.mxu0 0.0
      %796 = vmatpush2.msra.mxu0 0.0
      %797 = vmatprep.subr.mxu0 0.0
      %798 = vmatpush2.msra.mxu0 0.0
      %799 = vmatprep.subr.mxu0 0.0
      %800 = vmatpush2.msra.mxu0 0.0
      %801 = vmatprep.subr.mxu0 0.0
      %802 = vmatpush2.msra.mxu0 0.0
      %803 = vmatprep.subr.mxu0 0.0
      %804 = vmatpush2.msra.mxu0 0.0
      %805 = vmatprep.subr.mxu0 0.0
      %806 = vmatpush2.msra.mxu0 0.0
      %807 = vmatprep.subr.mxu0 0.0
      %808 = vmatpush2.msra.mxu0 0.0
      %809 = vmatprep.subr.mxu0 0.0
      %810 = vmatpush2.msra.mxu0 0.0
      %811 = vmatprep.subr.mxu0 0.0
      %812 = vmatpush2.msra.mxu0 0.0
      %813 = vmatprep.mubr.f32.mxu0 0.0
      %814 = vmatmul.mubr.f32.gmra.mxu0 %v662
      %v815 = vpop.f32.mrf.mxu0
      %v816 = vadd.f32 0.0, %v815
      %v817 = vpop.f32.mrf.mxu0
      %818 = vdwg.mxu0
      %v819 = vld [vmem:[#allocation2] sm:$0xff]
      %v820 = vld [vmem:[#allocation2 + $0x8] sm:$0xff]
      %v821 = vld [vmem:[#allocation2 + $0x10] sm:$0xff]
      %v822 = vld [vmem:[#allocation2 + $0x18] sm:$0xff]
      %v823 = vlaneseq
      %v824 = vshrl.u32 %v823, 7
      %v825 = vsub.s32 0, %v824
      %v826 = vrot.slane %v746, %v825
      %v827 = vmul.f32 %v819, %v826
      %v828 = vmul.f32 %v820, %v826
      %v829 = vmul.f32 %v821, %v826
      %v830 = vmul.f32 %v822, %v826
      %v831 = vlaneseq
      %v832 = vshrl.u32 %v831, 7
      %v833 = vsub.s32 0, %v832
      %v834 = vrot.slane %v816, %v833
      %v835 = vadd.f32 %v827, %v834
      %v836 = vadd.f32 %v828, %v834
      %v837 = vadd.f32 %v829, %v834
      %v838 = vadd.f32 %v830, %v834
      %vm839 = vcmp.ge.f32.partialorder %v835, 0.0
      %vm840 = vcmp.ge.f32.partialorder %v836, 0.0
      %vm841 = vcmp.ge.f32.partialorder %v837, 0.0
      %vm842 = vcmp.ge.f32.partialorder %v838, 0.0
      %v843 = vmul.f32 %v835, 0.2
      %v844 = vmul.f32 %v836, 0.2
      %v845 = vmul.f32 %v837, 0.2
      %v846 = vmul.f32 %v838, 0.2
      %v847 = vsel %vm839, %v835, %v843
      %v848 = vsel %vm840, %v836, %v844
      %v849 = vsel %vm841, %v837, %v845
      %v850 = vsel %vm842, %v838, %v846
      %v851 = vpack.c.bf16 %v848, %v847
      %v852 = vpack.c.bf16 %v850, %v849
      %v855 = vunpack.c.l.b16 %v851
      %v856 = vunpack.c.h.b16 %v851
      %v857 = vunpack.c.l.b16 %v852
      %v858 = vunpack.c.h.b16 %v852
      %v859 = vpack.c.b16 %v855, %v855
      %v860 = vpack.c.b16 %v856, %v856
      %v861 = vpack.c.b16 %v857, %v857
      %v862 = vpack.c.b16 %v858, %v858
      %867 = vst [vmem:[%s6] sm:$0xf] %v859
      %868 = vst [vmem:[%s6 + $0x4] sm:$0xf] %v860
      %869 = vst [vmem:[%s6 + $0x8] sm:$0xf] %v861
      %870 = vst [vmem:[%s6 + $0xc] sm:$0xf] %v862
    $region41: #{generator_forward.5} parent=1 // pred_fallthru
      _
    // Predicated region
    $region42: #{generator_forward.5} parent=1 // pred_check
      _
    $region43: #{generator_forward.5} parent=1 // pred_check_branch
      %872 = sbr.rel (0) target = $region45
    $region44: #{generator_forward.5} parent=1 // pred_region
      _
    $region45: #{generator_forward.5} parent=1 // pred_fallthru
      _
    // Predicated region
    $region46: #{generator_forward.5} parent=1 // pred_check
      _
    $region47: #{generator_forward.5} parent=1 // pred_check_branch
      %874 = sbr.rel (0) target = $region49
    $region48: #{generator_forward.5} parent=1 // pred_region
      _
    $region49: #{generator_forward.5} parent=1 // pred_fallthru
      _
    %875 = vsyncpa [#allocation6], 1
    %876 = vsyncpa [#allocation8], 1

// kernel: generator_forward.6
$region0: #{generator_forward.6}
  #allocation0 [shape = 'u32[]', space=smem, size = 0x4, offset = 0x4, fixed_abs, tag = 'smem constant byte address 0x4 - core index']
  #allocation1 [shape = 'u32[144,128]{1,0:T(1,128)}', space=vmem, size = 0x12000, scoped, tag = 'internal scratch']
  #allocation2 [shape = 'f32[32,256]{1,0:T(8,128)}', space=vmem, size = 0x8000, scoped, tag = 'scratch operand']
  #allocation3 [shape = 'f32[1,256]{1,0:T(1,128)}', space=vmem, size = 0x400, scoped, tag = 'scratch operand']
  #allocation4 [shape = 'f32[1,256]{1,0:T(1,128)}', space=vmem, size = 0x400, scoped, tag = 'scratch operand']
  %s0 = inlined_call_operand.vmem [shape: bf16[32,1152], index: 0, kind: input, shape index: {}]
  %s1 = inlined_call_operand.vmem [shape: bf16[1152,256], index: 1, kind: input, shape index: {}]
  %s2 = inlined_call_operand.vmem [shape: f32[1,128], index: 2, kind: input, shape index: {}]
  %s3 = inlined_call_operand.vmem [shape: f32[1,128], index: 3, kind: input, shape index: {}]
  %s4 = inlined_call_operand.vmem [shape: f32[256,128], index: 4, kind: input, shape index: {}]
  %s5 = inlined_call_operand.vmem [shape: f32[128,256], index: 5, kind: input, shape index: {}]
  %s6 = inlined_call_operand.vmem [shape: bf16[32,256], index: 6, kind: output, shape index: {}]
  %s7 = sld [smem:[#allocation0]]
  $region42: #{generator_forward.6} parent=0
    _
  %s9 = ssub.s32 1, %s7
  %s10 = scalar_select 0, %s9, %s7
  // Predicated region
  $region2: #{generator_forward.6} parent=0 // pred_check
    _
  $region3: #{generator_forward.6} parent=0 // pred_check_branch
    %12 = sbr.rel (0) target = $region5
  $region4: #{generator_forward.6} parent=0 // pred_region
    _
  $region5: #{generator_forward.6} parent=0 // pred_fallthru
    _
  // Predicated region
  $region6: #{generator_forward.6} parent=0 // pred_check
    _
  $region7: #{generator_forward.6} parent=0 // pred_check_branch
    %14 = sbr.rel (0) target = $region9
  $region8: #{generator_forward.6} parent=0 // pred_region
    _
  $region9: #{generator_forward.6} parent=0 // pred_fallthru
    _
  // Predicated region
  $region10: #{generator_forward.6} parent=0 // pred_check
    _
  $region11: #{generator_forward.6} parent=0 // pred_check_branch
    %16 = sbr.rel (0) target = $region13
  $region12: #{generator_forward.6} parent=0 // pred_region
    _
  $region13: #{generator_forward.6} parent=0 // pred_fallthru
    _
  // Predicated region
  $region14: #{generator_forward.6} parent=0 // pred_check
    _
  $region15: #{generator_forward.6} parent=0 // pred_check_branch
    %18 = sbr.rel (0) target = $region17
  $region16: #{generator_forward.6} parent=0 // pred_region
    _
  $region17: #{generator_forward.6} parent=0 // pred_fallthru
    _
  // Predicated region
  $region18: #{generator_forward.6} parent=0 // pred_check
    _
  $region19: #{generator_forward.6} parent=0 // pred_check_branch
    %20 = sbr.rel (0) target = $region21
  $region20: #{generator_forward.6} parent=0 // pred_region
    _
  $region21: #{generator_forward.6} parent=0 // pred_fallthru
    _
  // Predicated region
  $region22: #{generator_forward.6} parent=0 // pred_check
    _
  $region23: #{generator_forward.6} parent=0 // pred_check_branch
    %22 = sbr.rel (0) target = $region25
  $region24: #{generator_forward.6} parent=0 // pred_region
    _
  $region25: #{generator_forward.6} parent=0 // pred_fallthru
    _
  %p24 = scmp.eq.s32.totalorder 0, 0
  // Predicated region
  $region26: #{generator_forward.6} parent=0 // pred_check
    %p25 = pneg %p24
  $region27: #{generator_forward.6} parent=0 // pred_check_branch
    %27 = sbr.rel (%p25) target = $region29
  $region28: #{generator_forward.6} parent=0 // pred_region
    %v28 = vlaneseq
    %vm29 = vcmp.ge.s32.totalorder %v28, 0
    %vm30 = vcmp.lt.s32.totalorder %v28, 256
    %vm31 = vmand %vm29, %vm30
    %32 = vst.msk [vmem:[#allocation3] sm:$0x3] %vm31, 0.0
    %33 = vst.msk [vmem:[#allocation4] sm:$0x3] %vm31, 0.0
  $region29: #{generator_forward.6} parent=0 // pred_fallthru
    _
  %v34 = vld [vmem:[%s0] sm:$0xff]
  %v35 = vld [vmem:[%s0 + $0x8] sm:$0xff]
  %v36 = vld [vmem:[%s0 + $0x10] sm:$0xff]
  %v37 = vld [vmem:[%s0 + $0x18] sm:$0xff]
  %v38 = vld [vmem:[%s0 + $0x20] sm:$0xf]
  %v39 = vld [vmem:[%s0 + $0x24] sm:$0xff]
  %v40 = vld [vmem:[%s0 + $0x2c] sm:$0xff]
  %v41 = vld [vmem:[%s0 + $0x34] sm:$0xff]
  %v42 = vld [vmem:[%s0 + $0x3c] sm:$0xff]
  %v43 = vld [vmem:[%s0 + $0x44] sm:$0xf]
  %v44 = vld [vmem:[%s0 + $0x48] sm:$0xff]
  %v45 = vld [vmem:[%s0 + $0x50] sm:$0xff]
  %v46 = vld [vmem:[%s0 + $0x58] sm:$0xff]
  %v47 = vld [vmem:[%s0 + $0x60] sm:$0xff]
  %v48 = vld [vmem:[%s0 + $0x68] sm:$0xf]
  %v49 = vld [vmem:[%s0 + $0x6c] sm:$0xff]
  %v50 = vld [vmem:[%s0 + $0x74] sm:$0xff]
  %v51 = vld [vmem:[%s0 + $0x7c] sm:$0xff]
  %v52 = vld [vmem:[%s0 + $0x84] sm:$0xff]
  %v53 = vld [vmem:[%s0 + $0x8c] sm:$0xf]
  %v54 = vld [vmem:[%s1] sm:$0xff]
  %v55 = vld [vmem:[%s1 + $0x8] sm:$0xff]
  %v56 = vld [vmem:[%s1 + $0x10] sm:$0xff]
  %v57 = vld [vmem:[%s1 + $0x18] sm:$0xff]
  %v58 = vld [vmem:[%s1 + $0x20] sm:$0xff]
  %v59 = vld [vmem:[%s1 + $0x28] sm:$0xff]
  %v60 = vld [vmem:[%s1 + $0x30] sm:$0xff]
  %v61 = vld [vmem:[%s1 + $0x38] sm:$0xff]
  %v62 = vld [vmem:[%s1 + $0x40] sm:$0xff]
  %v63 = vld [vmem:[%s1 + $0x48] sm:$0xff]
  %v64 = vld [vmem:[%s1 + $0x50] sm:$0xff]
  %v65 = vld [vmem:[%s1 + $0x58] sm:$0xff]
  %v66 = vld [vmem:[%s1 + $0x60] sm:$0xff]
  %v67 = vld [vmem:[%s1 + $0x68] sm:$0xff]
  %v68 = vld [vmem:[%s1 + $0x70] sm:$0xff]
  %v69 = vld [vmem:[%s1 + $0x78] sm:$0xff]
  %v70 = vld [vmem:[%s1 + $0x80] sm:$0xff]
  %v71 = vld [vmem:[%s1 + $0x88] sm:$0xff]
  %v72 = vld [vmem:[%s1 + $0x90] sm:$0xff]
  %v73 = vld [vmem:[%s1 + $0x98] sm:$0xff]
  %v74 = vld [vmem:[%s1 + $0xa0] sm:$0xff]
  %v75 = vld [vmem:[%s1 + $0xa8] sm:$0xff]
  %v76 = vld [vmem:[%s1 + $0xb0] sm:$0xff]
  %v77 = vld [vmem:[%s1 + $0xb8] sm:$0xff]
  %v78 = vld [vmem:[%s1 + $0xc0] sm:$0xff]
  %v79 = vld [vmem:[%s1 + $0xc8] sm:$0xff]
  %v80 = vld [vmem:[%s1 + $0xd0] sm:$0xff]
  %v81 = vld [vmem:[%s1 + $0xd8] sm:$0xff]
  %v82 = vld [vmem:[%s1 + $0xe0] sm:$0xff]
  %v83 = vld [vmem:[%s1 + $0xe8] sm:$0xff]
  %v84 = vld [vmem:[%s1 + $0xf0] sm:$0xff]
  %v85 = vld [vmem:[%s1 + $0xf8] sm:$0xff]
  %v86 = vld [vmem:[%s1 + $0x100] sm:$0xff]
  %v87 = vld [vmem:[%s1 + $0x108] sm:$0xff]
  %v88 = vld [vmem:[%s1 + $0x110] sm:$0xff]
  %v89 = vld [vmem:[%s1 + $0x118] sm:$0xff]
  %v90 = vld [vmem:[%s1 + $0x120] sm:$0xff]
  %v91 = vld [vmem:[%s1 + $0x128] sm:$0xff]
  %v92 = vld [vmem:[%s1 + $0x130] sm:$0xff]
  %v93 = vld [vmem:[%s1 + $0x138] sm:$0xff]
  %v94 = vld [vmem:[%s1 + $0x140] sm:$0xff]
  %v95 = vld [vmem:[%s1 + $0x148] sm:$0xff]
  %v96 = vld [vmem:[%s1 + $0x150] sm:$0xff]
  %v97 = vld [vmem:[%s1 + $0x158] sm:$0xff]
  %v98 = vld [vmem:[%s1 + $0x160] sm:$0xff]
  %v99 = vld [vmem:[%s1 + $0x168] sm:$0xff]
  %v100 = vld [vmem:[%s1 + $0x170] sm:$0xff]
  %v101 = vld [vmem:[%s1 + $0x178] sm:$0xff]
  %v102 = vld [vmem:[%s1 + $0x180] sm:$0xff]
  %v103 = vld [vmem:[%s1 + $0x188] sm:$0xff]
  %v104 = vld [vmem:[%s1 + $0x190] sm:$0xff]
  %v105 = vld [vmem:[%s1 + $0x198] sm:$0xff]
  %v106 = vld [vmem:[%s1 + $0x1a0] sm:$0xff]
  %v107 = vld [vmem:[%s1 + $0x1a8] sm:$0xff]
  %v108 = vld [vmem:[%s1 + $0x1b0] sm:$0xff]
  %v109 = vld [vmem:[%s1 + $0x1b8] sm:$0xff]
  %v110 = vld [vmem:[%s1 + $0x1c0] sm:$0xff]
  %v111 = vld [vmem:[%s1 + $0x1c8] sm:$0xff]
  %v112 = vld [vmem:[%s1 + $0x1d0] sm:$0xff]
  %v113 = vld [vmem:[%s1 + $0x1d8] sm:$0xff]
  %v114 = vld [vmem:[%s1 + $0x1e0] sm:$0xff]
  %v115 = vld [vmem:[%s1 + $0x1e8] sm:$0xff]
  %v116 = vld [vmem:[%s1 + $0x1f0] sm:$0xff]
  %v117 = vld [vmem:[%s1 + $0x1f8] sm:$0xff]
  %v118 = vld [vmem:[%s1 + $0x200] sm:$0xff]
  %v119 = vld [vmem:[%s1 + $0x208] sm:$0xff]
  %v120 = vld [vmem:[%s1 + $0x210] sm:$0xff]
  %v121 = vld [vmem:[%s1 + $0x218] sm:$0xff]
  %v122 = vld [vmem:[%s1 + $0x220] sm:$0xff]
  %v123 = vld [vmem:[%s1 + $0x228] sm:$0xff]
  %v124 = vld [vmem:[%s1 + $0x230] sm:$0xff]
  %v125 = vld [vmem:[%s1 + $0x238] sm:$0xff]
  %v126 = vld [vmem:[%s1 + $0x240] sm:$0xff]
  %v127 = vld [vmem:[%s1 + $0x248] sm:$0xff]
  %v128 = vld [vmem:[%s1 + $0x250] sm:$0xff]
  %v129 = vld [vmem:[%s1 + $0x258] sm:$0xff]
  %v130 = vld [vmem:[%s1 + $0x260] sm:$0xff]
  %v131 = vld [vmem:[%s1 + $0x268] sm:$0xff]
  %v132 = vld [vmem:[%s1 + $0x270] sm:$0xff]
  %v133 = vld [vmem:[%s1 + $0x278] sm:$0xff]
  %v134 = vld [vmem:[%s1 + $0x280] sm:$0xff]
  %v135 = vld [vmem:[%s1 + $0x288] sm:$0xff]
  %v136 = vld [vmem:[%s1 + $0x290] sm:$0xff]
  %v137 = vld [vmem:[%s1 + $0x298] sm:$0xff]
  %v138 = vld [vmem:[%s1 + $0x2a0] sm:$0xff]
  %v139 = vld [vmem:[%s1 + $0x2a8] sm:$0xff]
  %v140 = vld [vmem:[%s1 + $0x2b0] sm:$0xff]
  %v141 = vld [vmem:[%s1 + $0x2b8] sm:$0xff]
  %v142 = vld [vmem:[%s1 + $0x2c0] sm:$0xff]
  %v143 = vld [vmem:[%s1 + $0x2c8] sm:$0xff]
  %v144 = vld [vmem:[%s1 + $0x2d0] sm:$0xff]
  %v145 = vld [vmem:[%s1 + $0x2d8] sm:$0xff]
  %v146 = vld [vmem:[%s1 + $0x2e0] sm:$0xff]
  %v147 = vld [vmem:[%s1 + $0x2e8] sm:$0xff]
  %v148 = vld [vmem:[%s1 + $0x2f0] sm:$0xff]
  %v149 = vld [vmem:[%s1 + $0x2f8] sm:$0xff]
  %v150 = vld [vmem:[%s1 + $0x300] sm:$0xff]
  %v151 = vld [vmem:[%s1 + $0x308] sm:$0xff]
  %v152 = vld [vmem:[%s1 + $0x310] sm:$0xff]
  %v153 = vld [vmem:[%s1 + $0x318] sm:$0xff]
  %v154 = vld [vmem:[%s1 + $0x320] sm:$0xff]
  %v155 = vld [vmem:[%s1 + $0x328] sm:$0xff]
  %v156 = vld [vmem:[%s1 + $0x330] sm:$0xff]
  %v157 = vld [vmem:[%s1 + $0x338] sm:$0xff]
  %v158 = vld [vmem:[%s1 + $0x340] sm:$0xff]
  %v159 = vld [vmem:[%s1 + $0x348] sm:$0xff]
  %v160 = vld [vmem:[%s1 + $0x350] sm:$0xff]
  %v161 = vld [vmem:[%s1 + $0x358] sm:$0xff]
  %v162 = vld [vmem:[%s1 + $0x360] sm:$0xff]
  %v163 = vld [vmem:[%s1 + $0x368] sm:$0xff]
  %v164 = vld [vmem:[%s1 + $0x370] sm:$0xff]
  %v165 = vld [vmem:[%s1 + $0x378] sm:$0xff]
  %v166 = vld [vmem:[%s1 + $0x380] sm:$0xff]
  %v167 = vld [vmem:[%s1 + $0x388] sm:$0xff]
  %v168 = vld [vmem:[%s1 + $0x390] sm:$0xff]
  %v169 = vld [vmem:[%s1 + $0x398] sm:$0xff]
  %v170 = vld [vmem:[%s1 + $0x3a0] sm:$0xff]
  %v171 = vld [vmem:[%s1 + $0x3a8] sm:$0xff]
  %v172 = vld [vmem:[%s1 + $0x3b0] sm:$0xff]
  %v173 = vld [vmem:[%s1 + $0x3b8] sm:$0xff]
  %v174 = vld [vmem:[%s1 + $0x3c0] sm:$0xff]
  %v175 = vld [vmem:[%s1 + $0x3c8] sm:$0xff]
  %v176 = vld [vmem:[%s1 + $0x3d0] sm:$0xff]
  %v177 = vld [vmem:[%s1 + $0x3d8] sm:$0xff]
  %v178 = vld [vmem:[%s1 + $0x3e0] sm:$0xff]
  %v179 = vld [vmem:[%s1 + $0x3e8] sm:$0xff]
  %v180 = vld [vmem:[%s1 + $0x3f0] sm:$0xff]
  %v181 = vld [vmem:[%s1 + $0x3f8] sm:$0xff]
  %v182 = vld [vmem:[%s1 + $0x400] sm:$0xff]
  %v183 = vld [vmem:[%s1 + $0x408] sm:$0xff]
  %v184 = vld [vmem:[%s1 + $0x410] sm:$0xff]
  %v185 = vld [vmem:[%s1 + $0x418] sm:$0xff]
  %v186 = vld [vmem:[%s1 + $0x420] sm:$0xff]
  %v187 = vld [vmem:[%s1 + $0x428] sm:$0xff]
  %v188 = vld [vmem:[%s1 + $0x430] sm:$0xff]
  %v189 = vld [vmem:[%s1 + $0x438] sm:$0xff]
  %v190 = vld [vmem:[%s1 + $0x440] sm:$0xff]
  %v191 = vld [vmem:[%s1 + $0x448] sm:$0xff]
  %v192 = vld [vmem:[%s1 + $0x450] sm:$0xff]
  %v193 = vld [vmem:[%s1 + $0x458] sm:$0xff]
  %v194 = vld [vmem:[%s1 + $0x460] sm:$0xff]
  %v195 = vld [vmem:[%s1 + $0x468] sm:$0xff]
  %v196 = vld [vmem:[%s1 + $0x470] sm:$0xff]
  %v197 = vld [vmem:[%s1 + $0x478] sm:$0xff]
  %v218 = vunpack.c.l.b16 %v34
  %v219 = vunpack.c.h.b16 %v34
  %v220 = vunpack.c.l.b16 %v35
  %v221 = vunpack.c.h.b16 %v35
  %v222 = vunpack.c.l.b16 %v36
  %v223 = vunpack.c.h.b16 %v36
  %v224 = vunpack.c.l.b16 %v37
  %v225 = vunpack.c.h.b16 %v37
  %v226 = vunpack.c.l.b16 %v38
  %v227 = vunpack.c.l.b16 %v39
  %v228 = vunpack.c.h.b16 %v39
  %v229 = vunpack.c.l.b16 %v40
  %v230 = vunpack.c.h.b16 %v40
  %v231 = vunpack.c.l.b16 %v41
  %v232 = vunpack.c.h.b16 %v41
  %v233 = vunpack.c.l.b16 %v42
  %v234 = vunpack.c.h.b16 %v42
  %v235 = vunpack.c.l.b16 %v43
  %v236 = vunpack.c.l.b16 %v44
  %v237 = vunpack.c.h.b16 %v44
  %v238 = vunpack.c.l.b16 %v45
  %v239 = vunpack.c.h.b16 %v45
  %v240 = vunpack.c.l.b16 %v46
  %v241 = vunpack.c.h.b16 %v46
  %v242 = vunpack.c.l.b16 %v47
  %v243 = vunpack.c.h.b16 %v47
  %v244 = vunpack.c.l.b16 %v48
  %v245 = vunpack.c.l.b16 %v49
  %v246 = vunpack.c.h.b16 %v49
  %v247 = vunpack.c.l.b16 %v50
  %v248 = vunpack.c.h.b16 %v50
  %v249 = vunpack.c.l.b16 %v51
  %v250 = vunpack.c.h.b16 %v51
  %v251 = vunpack.c.l.b16 %v52
  %v252 = vunpack.c.h.b16 %v52
  %v253 = vunpack.c.l.b16 %v53
  %v254 = vpack.c.b16 %v227, %v218
  %v255 = vpack.c.b16 %v228, %v219
  %v256 = vpack.c.b16 %v229, %v220
  %v257 = vpack.c.b16 %v230, %v221
  %v258 = vpack.c.b16 %v231, %v222
  %v259 = vpack.c.b16 %v232, %v223
  %v260 = vpack.c.b16 %v233, %v224
  %v261 = vpack.c.b16 %v234, %v225
  %v262 = vpack.c.b16 %v235, %v226
  %v263 = vpack.c.b16 %v245, %v236
  %v264 = vpack.c.b16 %v246, %v237
  %v265 = vpack.c.b16 %v247, %v238
  %v266 = vpack.c.b16 %v248, %v239
  %v267 = vpack.c.b16 %v249, %v240
  %v268 = vpack.c.b16 %v250, %v241
  %v269 = vpack.c.b16 %v251, %v242
  %v270 = vpack.c.b16 %v252, %v243
  %v271 = vpack.c.b16 %v253, %v244
  %v434 = vunpack.c.l.b16 %v54
  %v435 = vunpack.c.h.b16 %v54
  %v436 = vunpack.c.l.b16 %v55
  %v437 = vunpack.c.h.b16 %v55
  %v438 = vunpack.c.l.b16 %v56
  %v439 = vunpack.c.h.b16 %v56
  %v440 = vunpack.c.l.b16 %v57
  %v441 = vunpack.c.h.b16 %v57
  %v442 = vunpack.c.l.b16 %v58
  %v443 = vunpack.c.h.b16 %v58
  %v444 = vunpack.c.l.b16 %v59
  %v445 = vunpack.c.h.b16 %v59
  %v446 = vunpack.c.l.b16 %v60
  %v447 = vunpack.c.h.b16 %v60
  %v448 = vunpack.c.l.b16 %v61
  %v449 = vunpack.c.h.b16 %v61
  %v450 = vunpack.c.l.b16 %v62
  %v451 = vunpack.c.h.b16 %v62
  %v452 = vunpack.c.l.b16 %v63
  %v453 = vunpack.c.h.b16 %v63
  %v454 = vunpack.c.l.b16 %v64
  %v455 = vunpack.c.h.b16 %v64
  %v456 = vunpack.c.l.b16 %v65
  %v457 = vunpack.c.h.b16 %v65
  %v458 = vunpack.c.l.b16 %v66
  %v459 = vunpack.c.h.b16 %v66
  %v460 = vunpack.c.l.b16 %v67
  %v461 = vunpack.c.h.b16 %v67
  %v462 = vunpack.c.l.b16 %v68
  %v463 = vunpack.c.h.b16 %v68
  %v464 = vunpack.c.l.b16 %v69
  %v465 = vunpack.c.h.b16 %v69
  %v466 = vunpack.c.l.b16 %v70
  %v467 = vunpack.c.h.b16 %v70
  %v468 = vunpack.c.l.b16 %v71
  %v469 = vunpack.c.h.b16 %v71
  %v470 = vunpack.c.l.b16 %v72
  %v471 = vunpack.c.h.b16 %v72
  %v472 = vunpack.c.l.b16 %v73
  %v473 = vunpack.c.h.b16 %v73
  %v474 = vunpack.c.l.b16 %v74
  %v475 = vunpack.c.h.b16 %v74
  %v476 = vunpack.c.l.b16 %v75
  %v477 = vunpack.c.h.b16 %v75
  %v478 = vunpack.c.l.b16 %v76
  %v479 = vunpack.c.h.b16 %v76
  %v480 = vunpack.c.l.b16 %v77
  %v481 = vunpack.c.h.b16 %v77
  %v482 = vunpack.c.l.b16 %v78
  %v483 = vunpack.c.h.b16 %v78
  %v484 = vunpack.c.l.b16 %v79
  %v485 = vunpack.c.h.b16 %v79
  %v486 = vunpack.c.l.b16 %v80
  %v487 = vunpack.c.h.b16 %v80
  %v488 = vunpack.c.l.b16 %v81
  %v489 = vunpack.c.h.b16 %v81
  %v490 = vunpack.c.l.b16 %v82
  %v491 = vunpack.c.h.b16 %v82
  %v492 = vunpack.c.l.b16 %v83
  %v493 = vunpack.c.h.b16 %v83
  %v494 = vunpack.c.l.b16 %v84
  %v495 = vunpack.c.h.b16 %v84
  %v496 = vunpack.c.l.b16 %v85
  %v497 = vunpack.c.h.b16 %v85
  %v498 = vunpack.c.l.b16 %v86
  %v499 = vunpack.c.h.b16 %v86
  %v500 = vunpack.c.l.b16 %v87
  %v501 = vunpack.c.h.b16 %v87
  %v502 = vunpack.c.l.b16 %v88
  %v503 = vunpack.c.h.b16 %v88
  %v504 = vunpack.c.l.b16 %v89
  %v505 = vunpack.c.h.b16 %v89
  %v506 = vunpack.c.l.b16 %v90
  %v507 = vunpack.c.h.b16 %v90
  %v508 = vunpack.c.l.b16 %v91
  %v509 = vunpack.c.h.b16 %v91
  %v510 = vunpack.c.l.b16 %v92
  %v511 = vunpack.c.h.b16 %v92
  %v512 = vunpack.c.l.b16 %v93
  %v513 = vunpack.c.h.b16 %v93
  %v514 = vunpack.c.l.b16 %v94
  %v515 = vunpack.c.h.b16 %v94
  %v516 = vunpack.c.l.b16 %v95
  %v517 = vunpack.c.h.b16 %v95
  %v518 = vunpack.c.l.b16 %v96
  %v519 = vunpack.c.h.b16 %v96
  %v520 = vunpack.c.l.b16 %v97
  %v521 = vunpack.c.h.b16 %v97
  %v522 = vunpack.c.l.b16 %v98
  %v523 = vunpack.c.h.b16 %v98
  %v524 = vunpack.c.l.b16 %v99
  %v525 = vunpack.c.h.b16 %v99
  %v526 = vunpack.c.l.b16 %v100
  %v527 = vunpack.c.h.b16 %v100
  %v528 = vunpack.c.l.b16 %v101
  %v529 = vunpack.c.h.b16 %v101
  %v530 = vunpack.c.l.b16 %v102
  %v531 = vunpack.c.h.b16 %v102
  %v532 = vunpack.c.l.b16 %v103
  %v533 = vunpack.c.h.b16 %v103
  %v534 = vunpack.c.l.b16 %v104
  %v535 = vunpack.c.h.b16 %v104
  %v536 = vunpack.c.l.b16 %v105
  %v537 = vunpack.c.h.b16 %v105
  %v538 = vunpack.c.l.b16 %v106
  %v539 = vunpack.c.h.b16 %v106
  %v540 = vunpack.c.l.b16 %v107
  %v541 = vunpack.c.h.b16 %v107
  %v542 = vunpack.c.l.b16 %v108
  %v543 = vunpack.c.h.b16 %v108
  %v544 = vunpack.c.l.b16 %v109
  %v545 = vunpack.c.h.b16 %v109
  %v546 = vunpack.c.l.b16 %v110
  %v547 = vunpack.c.h.b16 %v110
  %v548 = vunpack.c.l.b16 %v111
  %v549 = vunpack.c.h.b16 %v111
  %v550 = vunpack.c.l.b16 %v112
  %v551 = vunpack.c.h.b16 %v112
  %v552 = vunpack.c.l.b16 %v113
  %v553 = vunpack.c.h.b16 %v113
  %v554 = vunpack.c.l.b16 %v114
  %v555 = vunpack.c.h.b16 %v114
  %v556 = vunpack.c.l.b16 %v115
  %v557 = vunpack.c.h.b16 %v115
  %v558 = vunpack.c.l.b16 %v116
  %v559 = vunpack.c.h.b16 %v116
  %v560 = vunpack.c.l.b16 %v117
  %v561 = vunpack.c.h.b16 %v117
  %v562 = vunpack.c.l.b16 %v118
  %v563 = vunpack.c.h.b16 %v118
  %v564 = vunpack.c.l.b16 %v119
  %v565 = vunpack.c.h.b16 %v119
  %v566 = vunpack.c.l.b16 %v120
  %v567 = vunpack.c.h.b16 %v120
  %v568 = vunpack.c.l.b16 %v121
  %v569 = vunpack.c.h.b16 %v121
  %v570 = vunpack.c.l.b16 %v122
  %v571 = vunpack.c.h.b16 %v122
  %v572 = vunpack.c.l.b16 %v123
  %v573 = vunpack.c.h.b16 %v123
  %v574 = vunpack.c.l.b16 %v124
  %v575 = vunpack.c.h.b16 %v124
  %v576 = vunpack.c.l.b16 %v125
  %v577 = vunpack.c.h.b16 %v125
  %v578 = vunpack.c.l.b16 %v126
  %v579 = vunpack.c.h.b16 %v126
  %v580 = vunpack.c.l.b16 %v127
  %v581 = vunpack.c.h.b16 %v127
  %v582 = vunpack.c.l.b16 %v128
  %v583 = vunpack.c.h.b16 %v128
  %v584 = vunpack.c.l.b16 %v129
  %v585 = vunpack.c.h.b16 %v129
  %v586 = vunpack.c.l.b16 %v130
  %v587 = vunpack.c.h.b16 %v130
  %v588 = vunpack.c.l.b16 %v131
  %v589 = vunpack.c.h.b16 %v131
  %v590 = vunpack.c.l.b16 %v132
  %v591 = vunpack.c.h.b16 %v132
  %v592 = vunpack.c.l.b16 %v133
  %v593 = vunpack.c.h.b16 %v133
  %v594 = vunpack.c.l.b16 %v134
  %v595 = vunpack.c.h.b16 %v134
  %v596 = vunpack.c.l.b16 %v135
  %v597 = vunpack.c.h.b16 %v135
  %v598 = vunpack.c.l.b16 %v136
  %v599 = vunpack.c.h.b16 %v136
  %v600 = vunpack.c.l.b16 %v137
  %v601 = vunpack.c.h.b16 %v137
  %v602 = vunpack.c.l.b16 %v138
  %v603 = vunpack.c.h.b16 %v138
  %v604 = vunpack.c.l.b16 %v139
  %v605 = vunpack.c.h.b16 %v139
  %v606 = vunpack.c.l.b16 %v140
  %v607 = vunpack.c.h.b16 %v140
  %v608 = vunpack.c.l.b16 %v141
  %v609 = vunpack.c.h.b16 %v141
  %v610 = vunpack.c.l.b16 %v142
  %v611 = vunpack.c.h.b16 %v142
  %v612 = vunpack.c.l.b16 %v143
  %v613 = vunpack.c.h.b16 %v143
  %v614 = vunpack.c.l.b16 %v144
  %v615 = vunpack.c.h.b16 %v144
  %v616 = vunpack.c.l.b16 %v145
  %v617 = vunpack.c.h.b16 %v145
  %v618 = vunpack.c.l.b16 %v146
  %v619 = vunpack.c.h.b16 %v146
  %v620 = vunpack.c.l.b16 %v147
  %v621 = vunpack.c.h.b16 %v147
  %v622 = vunpack.c.l.b16 %v148
  %v623 = vunpack.c.h.b16 %v148
  %v624 = vunpack.c.l.b16 %v149
  %v625 = vunpack.c.h.b16 %v149
  %v626 = vunpack.c.l.b16 %v150
  %v627 = vunpack.c.h.b16 %v150
  %v628 = vunpack.c.l.b16 %v151
  %v629 = vunpack.c.h.b16 %v151
  %v630 = vunpack.c.l.b16 %v152
  %v631 = vunpack.c.h.b16 %v152
  %v632 = vunpack.c.l.b16 %v153
  %v633 = vunpack.c.h.b16 %v153
  %v634 = vunpack.c.l.b16 %v154
  %v635 = vunpack.c.h.b16 %v154
  %v636 = vunpack.c.l.b16 %v155
  %v637 = vunpack.c.h.b16 %v155
  %v638 = vunpack.c.l.b16 %v156
  %v639 = vunpack.c.h.b16 %v156
  %v640 = vunpack.c.l.b16 %v157
  %v641 = vunpack.c.h.b16 %v157
  %v642 = vunpack.c.l.b16 %v158
  %v643 = vunpack.c.h.b16 %v158
  %v644 = vunpack.c.l.b16 %v159
  %v645 = vunpack.c.h.b16 %v159
  %v646 = vunpack.c.l.b16 %v160
  %v647 = vunpack.c.h.b16 %v160
  %v648 = vunpack.c.l.b16 %v161
  %v649 = vunpack.c.h.b16 %v161
  %v650 = vunpack.c.l.b16 %v162
  %v651 = vunpack.c.h.b16 %v162
  %v652 = vunpack.c.l.b16 %v163
  %v653 = vunpack.c.h.b16 %v163
  %v654 = vunpack.c.l.b16 %v164
  %v655 = vunpack.c.h.b16 %v164
  %v656 = vunpack.c.l.b16 %v165
  %v657 = vunpack.c.h.b16 %v165
  %v658 = vunpack.c.l.b16 %v166
  %v659 = vunpack.c.h.b16 %v166
  %v660 = vunpack.c.l.b16 %v167
  %v661 = vunpack.c.h.b16 %v167
  %v662 = vunpack.c.l.b16 %v168
  %v663 = vunpack.c.h.b16 %v168
  %v664 = vunpack.c.l.b16 %v169
  %v665 = vunpack.c.h.b16 %v169
  %v666 = vunpack.c.l.b16 %v170
  %v667 = vunpack.c.h.b16 %v170
  %v668 = vunpack.c.l.b16 %v171
  %v669 = vunpack.c.h.b16 %v171
  %v670 = vunpack.c.l.b16 %v172
  %v671 = vunpack.c.h.b16 %v172
  %v672 = vunpack.c.l.b16 %v173
  %v673 = vunpack.c.h.b16 %v173
  %v674 = vunpack.c.l.b16 %v174
  %v675 = vunpack.c.h.b16 %v174
  %v676 = vunpack.c.l.b16 %v175
  %v677 = vunpack.c.h.b16 %v175
  %v678 = vunpack.c.l.b16 %v176
  %v679 = vunpack.c.h.b16 %v176
  %v680 = vunpack.c.l.b16 %v177
  %v681 = vunpack.c.h.b16 %v177
  %v682 = vunpack.c.l.b16 %v178
  %v683 = vunpack.c.h.b16 %v178
  %v684 = vunpack.c.l.b16 %v179
  %v685 = vunpack.c.h.b16 %v179
  %v686 = vunpack.c.l.b16 %v180
  %v687 = vunpack.c.h.b16 %v180
  %v688 = vunpack.c.l.b16 %v181
  %v689 = vunpack.c.h.b16 %v181
  %v690 = vunpack.c.l.b16 %v182
  %v691 = vunpack.c.h.b16 %v182
  %v692 = vunpack.c.l.b16 %v183
  %v693 = vunpack.c.h.b16 %v183
  %v694 = vunpack.c.l.b16 %v184
  %v695 = vunpack.c.h.b16 %v184
  %v696 = vunpack.c.l.b16 %v185
  %v697 = vunpack.c.h.b16 %v185
  %v698 = vunpack.c.l.b16 %v186
  %v699 = vunpack.c.h.b16 %v186
  %v700 = vunpack.c.l.b16 %v187
  %v701 = vunpack.c.h.b16 %v187
  %v702 = vunpack.c.l.b16 %v188
  %v703 = vunpack.c.h.b16 %v188
  %v704 = vunpack.c.l.b16 %v189
  %v705 = vunpack.c.h.b16 %v189
  %v706 = vunpack.c.l.b16 %v190
  %v707 = vunpack.c.h.b16 %v190
  %v708 = vunpack.c.l.b16 %v191
  %v709 = vunpack.c.h.b16 %v191
  %v710 = vunpack.c.l.b16 %v192
  %v711 = vunpack.c.h.b16 %v192
  %v712 = vunpack.c.l.b16 %v193
  %v713 = vunpack.c.h.b16 %v193
  %v714 = vunpack.c.l.b16 %v194
  %v715 = vunpack.c.h.b16 %v194
  %v716 = vunpack.c.l.b16 %v195
  %v717 = vunpack.c.h.b16 %v195
  %v718 = vunpack.c.l.b16 %v196
  %v719 = vunpack.c.h.b16 %v196
  %v720 = vunpack.c.l.b16 %v197
  %v721 = vunpack.c.h.b16 %v197
  %v722 = vpack.c.b16 %v436, %v434
  %v723 = vpack.c.b16 %v437, %v435
  %v724 = vpack.c.b16 %v440, %v438
  %v725 = vpack.c.b16 %v441, %v439
  %v726 = vpack.c.b16 %v444, %v442
  %v727 = vpack.c.b16 %v445, %v443
  %v728 = vpack.c.b16 %v448, %v446
  %v729 = vpack.c.b16 %v449, %v447
  %v730 = vpack.c.b16 %v452, %v450
  %v731 = vpack.c.b16 %v453, %v451
  %v732 = vpack.c.b16 %v456, %v454
  %v733 = vpack.c.b16 %v457, %v455
  %v734 = vpack.c.b16 %v460, %v458
  %v735 = vpack.c.b16 %v461, %v459
  %v736 = vpack.c.b16 %v464, %v462
  %v737 = vpack.c.b16 %v465, %v463
  %v738 = vpack.c.b16 %v468, %v466
  %v739 = vpack.c.b16 %v469, %v467
  %v740 = vpack.c.b16 %v472, %v470
  %v741 = vpack.c.b16 %v473, %v471
  %v742 = vpack.c.b16 %v476, %v474
  %v743 = vpack.c.b16 %v477, %v475
  %v744 = vpack.c.b16 %v480, %v478
  %v745 = vpack.c.b16 %v481, %v479
  %v746 = vpack.c.b16 %v484, %v482
  %v747 = vpack.c.b16 %v485, %v483
  %v748 = vpack.c.b16 %v488, %v486
  %v749 = vpack.c.b16 %v489, %v487
  %v750 = vpack.c.b16 %v492, %v490
  %v751 = vpack.c.b16 %v493, %v491
  %v752 = vpack.c.b16 %v496, %v494
  %v753 = vpack.c.b16 %v497, %v495
  %v754 = vpack.c.b16 %v500, %v498
  %v755 = vpack.c.b16 %v501, %v499
  %v756 = vpack.c.b16 %v504, %v502
  %v757 = vpack.c.b16 %v505, %v503
  %v758 = vpack.c.b16 %v508, %v506
  %v759 = vpack.c.b16 %v509, %v507
  %v760 = vpack.c.b16 %v512, %v510
  %v761 = vpack.c.b16 %v513, %v511
  %v762 = vpack.c.b16 %v516, %v514
  %v763 = vpack.c.b16 %v517, %v515
  %v764 = vpack.c.b16 %v520, %v518
  %v765 = vpack.c.b16 %v521, %v519
  %v766 = vpack.c.b16 %v524, %v522
  %v767 = vpack.c.b16 %v525, %v523
  %v768 = vpack.c.b16 %v528, %v526
  %v769 = vpack.c.b16 %v529, %v527
  %v770 = vpack.c.b16 %v532, %v530
  %v771 = vpack.c.b16 %v533, %v531
  %v772 = vpack.c.b16 %v536, %v534
  %v773 = vpack.c.b16 %v537, %v535
  %v774 = vpack.c.b16 %v540, %v538
  %v775 = vpack.c.b16 %v541, %v539
  %v776 = vpack.c.b16 %v544, %v542
  %v777 = vpack.c.b16 %v545, %v543
  %v778 = vpack.c.b16 %v548, %v546
  %v779 = vpack.c.b16 %v549, %v547
  %v780 = vpack.c.b16 %v552, %v550
  %v781 = vpack.c.b16 %v553, %v551
  %v782 = vpack.c.b16 %v556, %v554
  %v783 = vpack.c.b16 %v557, %v555
  %v784 = vpack.c.b16 %v560, %v558
  %v785 = vpack.c.b16 %v561, %v559
  %v786 = vpack.c.b16 %v564, %v562
  %v787 = vpack.c.b16 %v565, %v563
  %v788 = vpack.c.b16 %v568, %v566
  %v789 = vpack.c.b16 %v569, %v567
  %v790 = vpack.c.b16 %v572, %v570
  %v791 = vpack.c.b16 %v573, %v571
  %v792 = vpack.c.b16 %v576, %v574
  %v793 = vpack.c.b16 %v577, %v575
  %v794 = vpack.c.b16 %v580, %v578
  %v795 = vpack.c.b16 %v581, %v579
  %v796 = vpack.c.b16 %v584, %v582
  %v797 = vpack.c.b16 %v585, %v583
  %v798 = vpack.c.b16 %v588, %v586
  %v799 = vpack.c.b16 %v589, %v587
  %v800 = vpack.c.b16 %v592, %v590
  %v801 = vpack.c.b16 %v593, %v591
  %v802 = vpack.c.b16 %v596, %v594
  %v803 = vpack.c.b16 %v597, %v595
  %v804 = vpack.c.b16 %v600, %v598
  %v805 = vpack.c.b16 %v601, %v599
  %v806 = vpack.c.b16 %v604, %v602
  %v807 = vpack.c.b16 %v605, %v603
  %v808 = vpack.c.b16 %v608, %v606
  %v809 = vpack.c.b16 %v609, %v607
  %v810 = vpack.c.b16 %v612, %v610
  %v811 = vpack.c.b16 %v613, %v611
  %v812 = vpack.c.b16 %v616, %v614
  %v813 = vpack.c.b16 %v617, %v615
  %v814 = vpack.c.b16 %v620, %v618
  %v815 = vpack.c.b16 %v621, %v619
  %v816 = vpack.c.b16 %v624, %v622
  %v817 = vpack.c.b16 %v625, %v623
  %v818 = vpack.c.b16 %v628, %v626
  %v819 = vpack.c.b16 %v629, %v627
  %v820 = vpack.c.b16 %v632, %v630
  %v821 = vpack.c.b16 %v633, %v631
  %v822 = vpack.c.b16 %v636, %v634
  %v823 = vpack.c.b16 %v637, %v635
  %v824 = vpack.c.b16 %v640, %v638
  %v825 = vpack.c.b16 %v641, %v639
  %v826 = vpack.c.b16 %v644, %v642
  %v827 = vpack.c.b16 %v645, %v643
  %v828 = vpack.c.b16 %v648, %v646
  %v829 = vpack.c.b16 %v649, %v647
  %v830 = vpack.c.b16 %v652, %v650
  %v831 = vpack.c.b16 %v653, %v651
  %v832 = vpack.c.b16 %v656, %v654
  %v833 = vpack.c.b16 %v657, %v655
  %v834 = vpack.c.b16 %v660, %v658
  %v835 = vpack.c.b16 %v661, %v659
  %v836 = vpack.c.b16 %v664, %v662
  %v837 = vpack.c.b16 %v665, %v663
  %v838 = vpack.c.b16 %v668, %v666
  %v839 = vpack.c.b16 %v669, %v667
  %v840 = vpack.c.b16 %v672, %v670
  %v841 = vpack.c.b16 %v673, %v671
  %v842 = vpack.c.b16 %v676, %v674
  %v843 = vpack.c.b16 %v677, %v675
  %v844 = vpack.c.b16 %v680, %v678
  %v845 = vpack.c.b16 %v681, %v679
  %v846 = vpack.c.b16 %v684, %v682
  %v847 = vpack.c.b16 %v685, %v683
  %v848 = vpack.c.b16 %v688, %v686
  %v849 = vpack.c.b16 %v689, %v687
  %v850 = vpack.c.b16 %v692, %v690
  %v851 = vpack.c.b16 %v693, %v691
  %v852 = vpack.c.b16 %v696, %v694
  %v853 = vpack.c.b16 %v697, %v695
  %v854 = vpack.c.b16 %v700, %v698
  %v855 = vpack.c.b16 %v701, %v699
  %v856 = vpack.c.b16 %v704, %v702
  %v857 = vpack.c.b16 %v705, %v703
  %v858 = vpack.c.b16 %v708, %v706
  %v859 = vpack.c.b16 %v709, %v707
  %v860 = vpack.c.b16 %v712, %v710
  %v861 = vpack.c.b16 %v713, %v711
  %v862 = vpack.c.b16 %v716, %v714
  %v863 = vpack.c.b16 %v717, %v715
  %v864 = vpack.c.b16 %v720, %v718
  %v865 = vpack.c.b16 %v721, %v719
  %1010 = vmatprep.subr.bf16.mxu0 %v737
  %1011 = vmatpush1.bf16.msra.mxu0 %v736
  %1012 = vmatprep.subr.bf16.mxu0 %v735
  %1013 = vmatpush1.bf16.msra.mxu0 %v734
  %1014 = vmatprep.subr.bf16.mxu0 %v733
  %1015 = vmatpush1.bf16.msra.mxu0 %v732
  %1016 = vmatprep.subr.bf16.mxu0 %v731
  %1017 = vmatpush1.bf16.msra.mxu0 %v730
  %1018 = vmatprep.subr.bf16.mxu0 %v729
  %1019 = vmatpush1.bf16.msra.mxu0 %v728
  %1020 = vmatprep.subr.bf16.mxu0 %v727
  %1021 = vmatpush1.bf16.msra.mxu0 %v726
  %1022 = vmatprep.subr.bf16.mxu0 %v725
  %1023 = vmatpush1.bf16.msra.mxu0 %v724
  %1024 = vmatprep.subr.bf16.mxu0 %v723
  %1025 = vmatpush1.bf16.msra.mxu0 %v722
  %1026 = vmatprep.subr.bf16.mxu0 %v753
  %1027 = vmatpush2.bf16.msra.mxu0 %v752
  %1028 = vmatprep.subr.bf16.mxu0 %v751
  %1029 = vmatpush2.bf16.msra.mxu0 %v750
  %1030 = vmatprep.subr.bf16.mxu0 %v749
  %1031 = vmatpush2.bf16.msra.mxu0 %v748
  %1032 = vmatprep.subr.bf16.mxu0 %v747
  %1033 = vmatpush2.bf16.msra.mxu0 %v746
  %1034 = vmatprep.subr.bf16.mxu0 %v745
  %1035 = vmatpush2.bf16.msra.mxu0 %v744
  %1036 = vmatprep.subr.bf16.mxu0 %v743
  %1037 = vmatpush2.bf16.msra.mxu0 %v742
  %1038 = vmatprep.subr.bf16.mxu0 %v741
  %1039 = vmatpush2.bf16.msra.mxu0 %v740
  %1040 = vmatprep.subr.bf16.mxu0 %v739
  %1041 = vmatpush2.bf16.msra.mxu0 %v738
  %1042 = vmatprep.mubr.bf16.mxu0 %v255
  %1043 = vmatmul.mubr.bf16.gmra.mxu0 %v254
  %v1044 = vpop.f32.mrf.mxu0
  %v1045 = vadd.f32 0.0, %v1044
  %v1046 = vpop.f32.mrf.mxu0
  %v1047 = vadd.f32 0.0, %v1046
  %v1048 = vpop.f32.mrf.mxu0
  %v1049 = vadd.f32 0.0, %v1048
  %v1050 = vpop.f32.mrf.mxu0
  %v1051 = vadd.f32 0.0, %v1050
  %1052 = vmatprep.mubr.bf16.mxu0 %v264
  %1053 = vmatmul.mubr.bf16.gmra.mxu0 %v263
  %v1054 = vpop.f32.mrf.mxu0
  %v1055 = vadd.f32 0.0, %v1054
  %v1056 = vpop.f32.mrf.mxu0
  %v1057 = vadd.f32 0.0, %v1056
  %v1058 = vpop.f32.mrf.mxu0
  %v1059 = vadd.f32 0.0, %v1058
  %v1060 = vpop.f32.mrf.mxu0
  %v1061 = vadd.f32 0.0, %v1060
  %1062 = vdwg.mxu0
  %1063 = vmatprep.subr.bf16.mxu0 %v769
  %1064 = vmatpush1.bf16.msra.mxu0 %v768
  %1065 = vmatprep.subr.bf16.mxu0 %v767
  %1066 = vmatpush1.bf16.msra.mxu0 %v766
  %1067 = vmatprep.subr.bf16.mxu0 %v765
  %1068 = vmatpush1.bf16.msra.mxu0 %v764
  %1069 = vmatprep.subr.bf16.mxu0 %v763
  %1070 = vmatpush1.bf16.msra.mxu0 %v762
  %1071 = vmatprep.subr.bf16.mxu0 %v761
  %1072 = vmatpush1.bf16.msra.mxu0 %v760
  %1073 = vmatprep.subr.bf16.mxu0 %v759
  %1074 = vmatpush1.bf16.msra.mxu0 %v758
  %1075 = vmatprep.subr.bf16.mxu0 %v757
  %1076 = vmatpush1.bf16.msra.mxu0 %v756
  %1077 = vmatprep.subr.bf16.mxu0 %v755
  %1078 = vmatpush1.bf16.msra.mxu0 %v754
  %1079 = vmatprep.subr.bf16.mxu0 %v785
  %1080 = vmatpush2.bf16.msra.mxu0 %v784
  %1081 = vmatprep.subr.bf16.mxu0 %v783
  %1082 = vmatpush2.bf16.msra.mxu0 %v782
  %1083 = vmatprep.subr.bf16.mxu0 %v781
  %1084 = vmatpush2.bf16.msra.mxu0 %v780
  %1085 = vmatprep.subr.bf16.mxu0 %v779
  %1086 = vmatpush2.bf16.msra.mxu0 %v778
  %1087 = vmatprep.subr.bf16.mxu0 %v777
  %1088 = vmatpush2.bf16.msra.mxu0 %v776
  %1089 = vmatprep.subr.bf16.mxu0 %v775
  %1090 = vmatpush2.bf16.msra.mxu0 %v774
  %1091 = vmatprep.subr.bf16.mxu0 %v773
  %1092 = vmatpush2.bf16.msra.mxu0 %v772
  %1093 = vmatprep.subr.bf16.mxu0 %v771
  %1094 = vmatpush2.bf16.msra.mxu0 %v770
  %1095 = vmatprep.mubr.bf16.mxu0 %v257
  %1096 = vmatmul.mubr.bf16.gmra.mxu0 %v256
  %v1097 = vpop.f32.mrf.mxu0
  %v1098 = vadd.f32 %v1045, %v1097
  %v1099 = vpop.f32.mrf.mxu0
  %v1100 = vadd.f32 %v1047, %v1099
  %v1101 = vpop.f32.mrf.mxu0
  %v1102 = vadd.f32 %v1049, %v1101
  %v1103 = vpop.f32.mrf.mxu0
  %v1104 = vadd.f32 %v1051, %v1103
  %1105 = vmatprep.mubr.bf16.mxu0 %v266
  %1106 = vmatmul.mubr.bf16.gmra.mxu0 %v265
  %v1107 = vpop.f32.mrf.mxu0
  %v1108 = vadd.f32 %v1055, %v1107
  %v1109 = vpop.f32.mrf.mxu0
  %v1110 = vadd.f32 %v1057, %v1109
  %v1111 = vpop.f32.mrf.mxu0
  %v1112 = vadd.f32 %v1059, %v1111
  %v1113 = vpop.f32.mrf.mxu0
  %v1114 = vadd.f32 %v1061, %v1113
  %1115 = vdwg.mxu0
  %1116 = vmatprep.subr.bf16.mxu0 %v801
  %1117 = vmatpush1.bf16.msra.mxu0 %v800
  %1118 = vmatprep.subr.bf16.mxu0 %v799
  %1119 = vmatpush1.bf16.msra.mxu0 %v798
  %1120 = vmatprep.subr.bf16.mxu0 %v797
  %1121 = vmatpush1.bf16.msra.mxu0 %v796
  %1122 = vmatprep.subr.bf16.mxu0 %v795
  %1123 = vmatpush1.bf16.msra.mxu0 %v794
  %1124 = vmatprep.subr.bf16.mxu0 %v793
  %1125 = vmatpush1.bf16.msra.mxu0 %v792
  %1126 = vmatprep.subr.bf16.mxu0 %v791
  %1127 = vmatpush1.bf16.msra.mxu0 %v790
  %1128 = vmatprep.subr.bf16.mxu0 %v789
  %1129 = vmatpush1.bf16.msra.mxu0 %v788
  %1130 = vmatprep.subr.bf16.mxu0 %v787
  %1131 = vmatpush1.bf16.msra.mxu0 %v786
  %1132 = vmatprep.subr.bf16.mxu0 %v817
  %1133 = vmatpush2.bf16.msra.mxu0 %v816
  %1134 = vmatprep.subr.bf16.mxu0 %v815
  %1135 = vmatpush2.bf16.msra.mxu0 %v814
  %1136 = vmatprep.subr.bf16.mxu0 %v813
  %1137 = vmatpush2.bf16.msra.mxu0 %v812
  %1138 = vmatprep.subr.bf16.mxu0 %v811
  %1139 = vmatpush2.bf16.msra.mxu0 %v810
  %1140 = vmatprep.subr.bf16.mxu0 %v809
  %1141 = vmatpush2.bf16.msra.mxu0 %v808
  %1142 = vmatprep.subr.bf16.mxu0 %v807
  %1143 = vmatpush2.bf16.msra.mxu0 %v806
  %1144 = vmatprep.subr.bf16.mxu0 %v805
  %1145 = vmatpush2.bf16.msra.mxu0 %v804
  %1146 = vmatprep.subr.bf16.mxu0 %v803
  %1147 = vmatpush2.bf16.msra.mxu0 %v802
  %1148 = vmatprep.mubr.bf16.mxu0 %v259
  %1149 = vmatmul.mubr.bf16.gmra.mxu0 %v258
  %v1150 = vpop.f32.mrf.mxu0
  %v1151 = vadd.f32 %v1098, %v1150
  %v1152 = vpop.f32.mrf.mxu0
  %v1153 = vadd.f32 %v1100, %v1152
  %v1154 = vpop.f32.mrf.mxu0
  %v1155 = vadd.f32 %v1102, %v1154
  %v1156 = vpop.f32.mrf.mxu0
  %v1157 = vadd.f32 %v1104, %v1156
  %1158 = vmatprep.mubr.bf16.mxu0 %v268
  %1159 = vmatmul.mubr.bf16.gmra.mxu0 %v267
  %v1160 = vpop.f32.mrf.mxu0
  %v1161 = vadd.f32 %v1108, %v1160
  %v1162 = vpop.f32.mrf.mxu0
  %v1163 = vadd.f32 %v1110, %v1162
  %v1164 = vpop.f32.mrf.mxu0
  %v1165 = vadd.f32 %v1112, %v1164
  %v1166 = vpop.f32.mrf.mxu0
  %v1167 = vadd.f32 %v1114, %v1166
  %1168 = vdwg.mxu0
  %1169 = vmatprep.subr.bf16.mxu0 %v833
  %1170 = vmatpush1.bf16.msra.mxu0 %v832
  %1171 = vmatprep.subr.bf16.mxu0 %v831
  %1172 = vmatpush1.bf16.msra.mxu0 %v830
  %1173 = vmatprep.subr.bf16.mxu0 %v829
  %1174 = vmatpush1.bf16.msra.mxu0 %v828
  %1175 = vmatprep.subr.bf16.mxu0 %v827
  %1176 = vmatpush1.bf16.msra.mxu0 %v826
  %1177 = vmatprep.subr.bf16.mxu0 %v825
  %1178 = vmatpush1.bf16.msra.mxu0 %v824
  %1179 = vmatprep.subr.bf16.mxu0 %v823
  %1180 = vmatpush1.bf16.msra.mxu0 %v822
  %1181 = vmatprep.subr.bf16.mxu0 %v821
  %1182 = vmatpush1.bf16.msra.mxu0 %v820
  %1183 = vmatprep.subr.bf16.mxu0 %v819
  %1184 = vmatpush1.bf16.msra.mxu0 %v818
  %1185 = vmatprep.subr.bf16.mxu0 %v849
  %1186 = vmatpush2.bf16.msra.mxu0 %v848
  %1187 = vmatprep.subr.bf16.mxu0 %v847
  %1188 = vmatpush2.bf16.msra.mxu0 %v846
  %1189 = vmatprep.subr.bf16.mxu0 %v845
  %1190 = vmatpush2.bf16.msra.mxu0 %v844
  %1191 = vmatprep.subr.bf16.mxu0 %v843
  %1192 = vmatpush2.bf16.msra.mxu0 %v842
  %1193 = vmatprep.subr.bf16.mxu0 %v841
  %1194 = vmatpush2.bf16.msra.mxu0 %v840
  %1195 = vmatprep.subr.bf16.mxu0 %v839
  %1196 = vmatpush2.bf16.msra.mxu0 %v838
  %1197 = vmatprep.subr.bf16.mxu0 %v837
  %1198 = vmatpush2.bf16.msra.mxu0 %v836
  %1199 = vmatprep.subr.bf16.mxu0 %v835
  %1200 = vmatpush2.bf16.msra.mxu0 %v834
  %1201 = vmatprep.mubr.bf16.mxu0 %v261
  %1202 = vmatmul.mubr.bf16.gmra.mxu0 %v260
  %v1203 = vpop.f32.mrf.mxu0
  %v1204 = vadd.f32 %v1151, %v1203
  %v1205 = vpop.f32.mrf.mxu0
  %v1206 = vadd.f32 %v1153, %v1205
  %v1207 = vpop.f32.mrf.mxu0
  %v1208 = vadd.f32 %v1155, %v1207
  %v1209 = vpop.f32.mrf.mxu0
  %v1210 = vadd.f32 %v1157, %v1209
  %1211 = vmatprep.mubr.bf16.mxu0 %v270
  %1212 = vmatmul.mubr.bf16.gmra.mxu0 %v269
  %v1213 = vpop.f32.mrf.mxu0
  %v1214 = vadd.f32 %v1161, %v1213
  %v1215 = vpop.f32.mrf.mxu0
  %v1216 = vadd.f32 %v1163, %v1215
  %v1217 = vpop.f32.mrf.mxu0
  %v1218 = vadd.f32 %v1165, %v1217
  %v1219 = vpop.f32.mrf.mxu0
  %v1220 = vadd.f32 %v1167, %v1219
  %1221 = vdwg.mxu0
  %1222 = vmatprep.subr.bf16.mxu0 %v865
  %1223 = vmatpush1.bf16.msra.mxu0 %v864
  %1224 = vmatprep.subr.bf16.mxu0 %v863
  %1225 = vmatpush1.bf16.msra.mxu0 %v862
  %1226 = vmatprep.subr.bf16.mxu0 %v861
  %1227 = vmatpush1.bf16.msra.mxu0 %v860
  %1228 = vmatprep.subr.bf16.mxu0 %v859
  %1229 = vmatpush1.bf16.msra.mxu0 %v858
  %1230 = vmatprep.subr.bf16.mxu0 %v857
  %1231 = vmatpush1.bf16.msra.mxu0 %v856
  %1232 = vmatprep.subr.bf16.mxu0 %v855
  %1233 = vmatpush1.bf16.msra.mxu0 %v854
  %1234 = vmatprep.subr.bf16.mxu0 %v853
  %1235 = vmatpush1.bf16.msra.mxu0 %v852
  %1236 = vmatprep.subr.bf16.mxu0 %v851
  %1237 = vmatpush1.bf16.msra.mxu0 %v850
  %1238 = vmatprep.subr.bf16.mxu0 0
  %1239 = vmatpush2.bf16.msra.mxu0 0
  %1240 = vmatprep.subr.bf16.mxu0 0
  %1241 = vmatpush2.bf16.msra.mxu0 0
  %1242 = vmatprep.subr.bf16.mxu0 0
  %1243 = vmatpush2.bf16.msra.mxu0 0
  %1244 = vmatprep.subr.bf16.mxu0 0
  %1245 = vmatpush2.bf16.msra.mxu0 0
  %1246 = vmatprep.subr.bf16.mxu0 0
  %1247 = vmatpush2.bf16.msra.mxu0 0
  %1248 = vmatprep.subr.bf16.mxu0 0
  %1249 = vmatpush2.bf16.msra.mxu0 0
  %1250 = vmatprep.subr.bf16.mxu0 0
  %1251 = vmatpush2.bf16.msra.mxu0 0
  %1252 = vmatprep.subr.bf16.mxu0 0
  %1253 = vmatpush2.bf16.msra.mxu0 0
  %1254 = vmatprep.mubr.bf16.mxu0 0
  %1255 = vmatmul.mubr.bf16.gmra.mxu0 %v262
  %v1256 = vpop.f32.mrf.mxu0
  %v1257 = vadd.f32 %v1204, %v1256
  %v1258 = vpop.f32.mrf.mxu0
  %v1259 = vadd.f32 %v1206, %v1258
  %v1260 = vpop.f32.mrf.mxu0
  %v1261 = vadd.f32 %v1208, %v1260
  %v1262 = vpop.f32.mrf.mxu0
  %v1263 = vadd.f32 %v1210, %v1262
  %1264 = vmatprep.mubr.bf16.mxu0 0
  %1265 = vmatmul.mubr.bf16.gmra.mxu0 %v271
  %v1266 = vpop.f32.mrf.mxu0
  %v1267 = vadd.f32 %v1214, %v1266
  %v1268 = vpop.f32.mrf.mxu0
  %v1269 = vadd.f32 %v1216, %v1268
  %v1270 = vpop.f32.mrf.mxu0
  %v1271 = vadd.f32 %v1218, %v1270
  %v1272 = vpop.f32.mrf.mxu0
  %v1273 = vadd.f32 %v1220, %v1272
  %1274 = vdwg.mxu0
  %s1275 = smul.u32 0, 32
  %s1276 = sshra.s32 %s1275, 3
  %s1277 = sand.u32 %s1275, 7
  %s1278 = smul.u32 %s1276, 2
  %s1279 = smul.addr %s1278, 8
  %s1280 = scalar_lea.vmem [#allocation2], %s1279
  %1281 = vst [vmem:[%s1280] sm:$0xff] %v1257
  %1282 = vst [vmem:[%s1280 + $0x8] sm:$0xff] %v1259
  %1283 = vst [vmem:[%s1280 + $0x10] sm:$0xff] %v1261
  %1284 = vst [vmem:[%s1280 + $0x18] sm:$0xff] %v1263
  %1285 = vst [vmem:[%s1280 + $0x20] sm:$0xff] %v1267
  %1286 = vst [vmem:[%s1280 + $0x28] sm:$0xff] %v1269
  %1287 = vst [vmem:[%s1280 + $0x30] sm:$0xff] %v1271
  %1288 = vst [vmem:[%s1280 + $0x38] sm:$0xff] %v1273
  %v1289 = vld [vmem:[#allocation3] sm:$0x3]
  %v1290 = vadd.f32 %v1257, %v1261
  %v1291 = vadd.f32 %v1290, %v1267
  %v1292 = vadd.f32 %v1291, %v1271
  %v1293 = vrot.slane %v1292, 4
  %v1294 = vadd.f32 %v1292, %v1293
  %v1295 = vrot.slane %v1294, 2
  %v1296 = vadd.f32 %v1294, %v1295
  %v1297 = vrot.slane %v1296, 1
  %v1298 = vadd.f32 %v1296, %v1297
  %v1299 = vadd.f32 %v1259, %v1263
  %v1300 = vadd.f32 %v1299, %v1269
  %v1301 = vadd.f32 %v1300, %v1273
  %v1302 = vrot.slane %v1301, 4
  %v1303 = vadd.f32 %v1301, %v1302
  %v1304 = vrot.slane %v1303, 2
  %v1305 = vadd.f32 %v1303, %v1304
  %v1306 = vrot.slane %v1305, 1
  %v1307 = vadd.f32 %v1305, %v1306
  %v1310 = vcombine.low %v1298, %v1307
  %v1312 = vunpack.c.l.s4 1966171168
  %v1313 = vunpack.c.0.s8 %v1312
  %v1314 = vlaneseq
  %v1315 = vshrl.u32 %v1314, 7
  %v1316 = vsub.s32 %v1313, %v1315
  %v1317 = vrot.slane %v1310, %v1316
  %v1319 = vunpack.c.l.s4 1966171168
  %v1320 = vunpack.c.0.s8 %v1319
  %v1321 = vlaneseq
  %v1322 = vshrl.u32 %v1321, 7
  %v1323 = vsub.s32 %v1320, %v1322
  %v1324 = vrot.slane %v1317, %v1323
  %v1326 = vadd.f32 %v1289, %v1324
  %v1327 = vlaneseq
  %vm1328 = vcmp.ge.s32.totalorder %v1327, 0
  %vm1329 = vcmp.lt.s32.totalorder %v1327, 256
  %vm1330 = vmand %vm1328, %vm1329
  %1331 = vst.msk [vmem:[#allocation3] sm:$0x3] %vm1330, %v1326
  %v1332 = vld [vmem:[#allocation4] sm:$0x3]
  %v1333 = vmul.f32 %v1257, %v1257
  %v1334 = vmul.f32 %v1259, %v1259
  %v1335 = vmul.f32 %v1261, %v1261
  %v1336 = vmul.f32 %v1263, %v1263
  %v1337 = vmul.f32 %v1267, %v1267
  %v1338 = vmul.f32 %v1269, %v1269
  %v1339 = vmul.f32 %v1271, %v1271
  %v1340 = vmul.f32 %v1273, %v1273
  %v1341 = vadd.f32 %v1333, %v1335
  %v1342 = vadd.f32 %v1341, %v1337
  %v1343 = vadd.f32 %v1342, %v1339
  %v1344 = vrot.slane %v1343, 4
  %v1345 = vadd.f32 %v1343, %v1344
  %v1346 = vrot.slane %v1345, 2
  %v1347 = vadd.f32 %v1345, %v1346
  %v1348 = vrot.slane %v1347, 1
  %v1349 = vadd.f32 %v1347, %v1348
  %v1350 = vadd.f32 %v1334, %v1336
  %v1351 = vadd.f32 %v1350, %v1338
  %v1352 = vadd.f32 %v1351, %v1340
  %v1353 = vrot.slane %v1352, 4
  %v1354 = vadd.f32 %v1352, %v1353
  %v1355 = vrot.slane %v1354, 2
  %v1356 = vadd.f32 %v1354, %v1355
  %v1357 = vrot.slane %v1356, 1
  %v1358 = vadd.f32 %v1356, %v1357
  %v1361 = vcombine.low %v1349, %v1358
  %v1363 = vunpack.c.l.s4 1966171168
  %v1364 = vunpack.c.0.s8 %v1363
  %v1365 = vlaneseq
  %v1366 = vshrl.u32 %v1365, 7
  %v1367 = vsub.s32 %v1364, %v1366
  %v1368 = vrot.slane %v1361, %v1367
  %v1370 = vunpack.c.l.s4 1966171168
  %v1371 = vunpack.c.0.s8 %v1370
  %v1372 = vlaneseq
  %v1373 = vshrl.u32 %v1372, 7
  %v1374 = vsub.s32 %v1371, %v1373
  %v1375 = vrot.slane %v1368, %v1374
  %v1377 = vadd.f32 %v1332, %v1375
  %1378 = vst.msk [vmem:[#allocation4] sm:$0x3] %vm1330, %v1377
  // Predicated region
  $region30: #{generator_forward.6} parent=0 // pred_check
    %p1379 = pneg %p24
  $region31: #{generator_forward.6} parent=0 // pred_check_branch
    %1381 = sbr.rel (%p1379) target = $region33
  $region32: #{generator_forward.6} parent=0 // pred_region
    %v1382 = vld [vmem:[#allocation3] sm:$0x3]
    %v1383 = vld [vmem:[%s4] sm:$0xff]
    %v1384 = vld [vmem:[%s4 + $0x8] sm:$0xff]
    %v1385 = vld [vmem:[%s4 + $0x10] sm:$0xff]
    %v1386 = vld [vmem:[%s4 + $0x18] sm:$0xff]
    %v1387 = vld [vmem:[%s4 + $0x20] sm:$0xff]
    %v1388 = vld [vmem:[%s4 + $0x28] sm:$0xff]
    %v1389 = vld [vmem:[%s4 + $0x30] sm:$0xff]
    %v1390 = vld [vmem:[%s4 + $0x38] sm:$0xff]
    %v1391 = vld [vmem:[%s4 + $0x40] sm:$0xff]
    %v1392 = vld [vmem:[%s4 + $0x48] sm:$0xff]
    %v1393 = vld [vmem:[%s4 + $0x50] sm:$0xff]
    %v1394 = vld [vmem:[%s4 + $0x58] sm:$0xff]
    %v1395 = vld [vmem:[%s4 + $0x60] sm:$0xff]
    %v1396 = vld [vmem:[%s4 + $0x68] sm:$0xff]
    %v1397 = vld [vmem:[%s4 + $0x70] sm:$0xff]
    %v1398 = vld [vmem:[%s4 + $0x78] sm:$0xff]
    %v1399 = vld [vmem:[%s4 + $0x80] sm:$0xff]
    %v1400 = vld [vmem:[%s4 + $0x88] sm:$0xff]
    %v1401 = vld [vmem:[%s4 + $0x90] sm:$0xff]
    %v1402 = vld [vmem:[%s4 + $0x98] sm:$0xff]
    %v1403 = vld [vmem:[%s4 + $0xa0] sm:$0xff]
    %v1404 = vld [vmem:[%s4 + $0xa8] sm:$0xff]
    %v1405 = vld [vmem:[%s4 + $0xb0] sm:$0xff]
    %v1406 = vld [vmem:[%s4 + $0xb8] sm:$0xff]
    %v1407 = vld [vmem:[%s4 + $0xc0] sm:$0xff]
    %v1408 = vld [vmem:[%s4 + $0xc8] sm:$0xff]
    %v1409 = vld [vmem:[%s4 + $0xd0] sm:$0xff]
    %v1410 = vld [vmem:[%s4 + $0xd8] sm:$0xff]
    %v1411 = vld [vmem:[%s4 + $0xe0] sm:$0xff]
    %v1412 = vld [vmem:[%s4 + $0xe8] sm:$0xff]
    %v1413 = vld [vmem:[%s4 + $0xf0] sm:$0xff]
    %v1414 = vld [vmem:[%s4 + $0xf8] sm:$0xff]
    %v1416 = vlaneseq
    %v1417 = vshrl.u32 %v1416, 7
    %v1418 = vsub.s32 0, %v1417
    %v1419 = vrot.slane %v1382, %v1418
    %v1420 = vlaneseq
    %v1421 = vshrl.u32 %v1420, 7
    %v1422 = vsub.s32 1, %v1421
    %v1423 = vrot.slane %v1382, %v1422
    %1426 = vmatprep.subr.mxu0 0.0
    %1427 = vmatpush1.msra.mxu0 %v1398
    %1428 = vmatprep.subr.mxu0 0.0
    %1429 = vmatpush1.msra.mxu0 %v1397
    %1430 = vmatprep.subr.mxu0 0.0
    %1431 = vmatpush1.msra.mxu0 %v1396
    %1432 = vmatprep.subr.mxu0 0.0
    %1433 = vmatpush1.msra.mxu0 %v1395
    %1434 = vmatprep.subr.mxu0 0.0
    %1435 = vmatpush1.msra.mxu0 %v1394
    %1436 = vmatprep.subr.mxu0 0.0
    %1437 = vmatpush1.msra.mxu0 %v1393
    %1438 = vmatprep.subr.mxu0 0.0
    %1439 = vmatpush1.msra.mxu0 %v1392
    %1440 = vmatprep.subr.mxu0 0.0
    %1441 = vmatpush1.msra.mxu0 %v1391
    %1442 = vmatprep.subr.mxu0 0.0
    %1443 = vmatpush1.msra.mxu0 %v1390
    %1444 = vmatprep.subr.mxu0 0.0
    %1445 = vmatpush1.msra.mxu0 %v1389
    %1446 = vmatprep.subr.mxu0 0.0
    %1447 = vmatpush1.msra.mxu0 %v1388
    %1448 = vmatprep.subr.mxu0 0.0
    %1449 = vmatpush1.msra.mxu0 %v1387
    %1450 = vmatprep.subr.mxu0 0.0
    %1451 = vmatpush1.msra.mxu0 %v1386
    %1452 = vmatprep.subr.mxu0 0.0
    %1453 = vmatpush1.msra.mxu0 %v1385
    %1454 = vmatprep.subr.mxu0 0.0
    %1455 = vmatpush1.msra.mxu0 %v1384
    %1456 = vmatprep.subr.mxu0 0.0
    %1457 = vmatpush1.msra.mxu0 %v1383
    %1458 = vmatprep.subr.mxu0 0.0
    %1459 = vmatpush2.msra.mxu0 %v1414
    %1460 = vmatprep.subr.mxu0 0.0
    %1461 = vmatpush2.msra.mxu0 %v1413
    %1462 = vmatprep.subr.mxu0 0.0
    %1463 = vmatpush2.msra.mxu0 %v1412
    %1464 = vmatprep.subr.mxu0 0.0
    %1465 = vmatpush2.msra.mxu0 %v1411
    %1466 = vmatprep.subr.mxu0 0.0
    %1467 = vmatpush2.msra.mxu0 %v1410
    %1468 = vmatprep.subr.mxu0 0.0
    %1469 = vmatpush2.msra.mxu0 %v1409
    %1470 = vmatprep.subr.mxu0 0.0
    %1471 = vmatpush2.msra.mxu0 %v1408
    %1472 = vmatprep.subr.mxu0 0.0
    %1473 = vmatpush2.msra.mxu0 %v1407
    %1474 = vmatprep.subr.mxu0 0.0
    %1475 = vmatpush2.msra.mxu0 %v1406
    %1476 = vmatprep.subr.mxu0 0.0
    %1477 = vmatpush2.msra.mxu0 %v1405
    %1478 = vmatprep.subr.mxu0 0.0
    %1479 = vmatpush2.msra.mxu0 %v1404
    %1480 = vmatprep.subr.mxu0 0.0
    %1481 = vmatpush2.msra.mxu0 %v1403
    %1482 = vmatprep.subr.mxu0 0.0
    %1483 = vmatpush2.msra.mxu0 %v1402
    %1484 = vmatprep.subr.mxu0 0.0
    %1485 = vmatpush2.msra.mxu0 %v1401
    %1486 = vmatprep.subr.mxu0 0.0
    %1487 = vmatpush2.msra.mxu0 %v1400
    %1488 = vmatprep.subr.mxu0 0.0
    %1489 = vmatpush2.msra.mxu0 %v1399
    %1490 = vmatprep.mubr.f32.mxu0 %v1423
    %1491 = vmatmul.mubr.f32.gmra.mxu0 %v1419
    %v1492 = vpop.f32.mrf.mxu0
    %v1493 = vadd.f32 0.0, %v1492
    %v1494 = vpop.f32.mrf.mxu0
    %1495 = vdwg.mxu0
    %v1496 = vld [vmem:[#allocation4] sm:$0x3]
    %v1498 = vlaneseq
    %v1499 = vshrl.u32 %v1498, 7
    %v1500 = vsub.s32 0, %v1499
    %v1501 = vrot.slane %v1496, %v1500
    %v1502 = vlaneseq
    %v1503 = vshrl.u32 %v1502, 7
    %v1504 = vsub.s32 1, %v1503
    %v1505 = vrot.slane %v1496, %v1504
    %1508 = vmatprep.subr.mxu0 0.0
    %1509 = vmatpush1.msra.mxu0 %v1398
    %1510 = vmatprep.subr.mxu0 0.0
    %1511 = vmatpush1.msra.mxu0 %v1397
    %1512 = vmatprep.subr.mxu0 0.0
    %1513 = vmatpush1.msra.mxu0 %v1396
    %1514 = vmatprep.subr.mxu0 0.0
    %1515 = vmatpush1.msra.mxu0 %v1395
    %1516 = vmatprep.subr.mxu0 0.0
    %1517 = vmatpush1.msra.mxu0 %v1394
    %1518 = vmatprep.subr.mxu0 0.0
    %1519 = vmatpush1.msra.mxu0 %v1393
    %1520 = vmatprep.subr.mxu0 0.0
    %1521 = vmatpush1.msra.mxu0 %v1392
    %1522 = vmatprep.subr.mxu0 0.0
    %1523 = vmatpush1.msra.mxu0 %v1391
    %1524 = vmatprep.subr.mxu0 0.0
    %1525 = vmatpush1.msra.mxu0 %v1390
    %1526 = vmatprep.subr.mxu0 0.0
    %1527 = vmatpush1.msra.mxu0 %v1389
    %1528 = vmatprep.subr.mxu0 0.0
    %1529 = vmatpush1.msra.mxu0 %v1388
    %1530 = vmatprep.subr.mxu0 0.0
    %1531 = vmatpush1.msra.mxu0 %v1387
    %1532 = vmatprep.subr.mxu0 0.0
    %1533 = vmatpush1.msra.mxu0 %v1386
    %1534 = vmatprep.subr.mxu0 0.0
    %1535 = vmatpush1.msra.mxu0 %v1385
    %1536 = vmatprep.subr.mxu0 0.0
    %1537 = vmatpush1.msra.mxu0 %v1384
    %1538 = vmatprep.subr.mxu0 0.0
    %1539 = vmatpush1.msra.mxu0 %v1383
    %1540 = vmatprep.subr.mxu0 0.0
    %1541 = vmatpush2.msra.mxu0 %v1414
    %1542 = vmatprep.subr.mxu0 0.0
    %1543 = vmatpush2.msra.mxu0 %v1413
    %1544 = vmatprep.subr.mxu0 0.0
    %1545 = vmatpush2.msra.mxu0 %v1412
    %1546 = vmatprep.subr.mxu0 0.0
    %1547 = vmatpush2.msra.mxu0 %v1411
    %1548 = vmatprep.subr.mxu0 0.0
    %1549 = vmatpush2.msra.mxu0 %v1410
    %1550 = vmatprep.subr.mxu0 0.0
    %1551 = vmatpush2.msra.mxu0 %v1409
    %1552 = vmatprep.subr.mxu0 0.0
    %1553 = vmatpush2.msra.mxu0 %v1408
    %1554 = vmatprep.subr.mxu0 0.0
    %1555 = vmatpush2.msra.mxu0 %v1407
    %1556 = vmatprep.subr.mxu0 0.0
    %1557 = vmatpush2.msra.mxu0 %v1406
    %1558 = vmatprep.subr.mxu0 0.0
    %1559 = vmatpush2.msra.mxu0 %v1405
    %1560 = vmatprep.subr.mxu0 0.0
    %1561 = vmatpush2.msra.mxu0 %v1404
    %1562 = vmatprep.subr.mxu0 0.0
    %1563 = vmatpush2.msra.mxu0 %v1403
    %1564 = vmatprep.subr.mxu0 0.0
    %1565 = vmatpush2.msra.mxu0 %v1402
    %1566 = vmatprep.subr.mxu0 0.0
    %1567 = vmatpush2.msra.mxu0 %v1401
    %1568 = vmatprep.subr.mxu0 0.0
    %1569 = vmatpush2.msra.mxu0 %v1400
    %1570 = vmatprep.subr.mxu0 0.0
    %1571 = vmatpush2.msra.mxu0 %v1399
    %1572 = vmatprep.mubr.f32.mxu0 %v1505
    %1573 = vmatmul.mubr.f32.gmra.mxu0 %v1501
    %v1574 = vpop.f32.mrf.mxu0
    %v1575 = vadd.f32 0.0, %v1574
    %v1576 = vpop.f32.mrf.mxu0
    %1577 = vdwg.mxu0
    %v1578 = vmul.f32 %v1493, 0.0078125
    %v1579 = vmul.f32 %v1575, 0.0078125
    %v1580 = vmul.f32 %v1578, %v1578
    %v1581 = vsub.f32 %v1579, %v1580
    %v1582 = vmax.f32 %v1581, 0.0
    %v1583 = vld [vmem:[%s2] sm:$0x1]
    %v1584 = vadd.f32 %v1582, 1e-05
    %v1585 = vrsqrt.pop %v1584
    %v1586 = vmul.f32 %v1583, %v1585
    %v1587 = vld [vmem:[%s3] sm:$0x1]
    %v1588 = vmul.f32 %v1578, %v1586
    %v1589 = vsub.f32 %v1587, %v1588
    %v1590 = vld [vmem:[%s5] sm:$0xff]
    %v1591 = vld [vmem:[%s5 + $0x8] sm:$0xff]
    %v1592 = vld [vmem:[%s5 + $0x10] sm:$0xff]
    %v1593 = vld [vmem:[%s5 + $0x18] sm:$0xff]
    %v1594 = vld [vmem:[%s5 + $0x20] sm:$0xff]
    %v1595 = vld [vmem:[%s5 + $0x28] sm:$0xff]
    %v1596 = vld [vmem:[%s5 + $0x30] sm:$0xff]
    %v1597 = vld [vmem:[%s5 + $0x38] sm:$0xff]
    %v1598 = vld [vmem:[%s5 + $0x40] sm:$0xff]
    %v1599 = vld [vmem:[%s5 + $0x48] sm:$0xff]
    %v1600 = vld [vmem:[%s5 + $0x50] sm:$0xff]
    %v1601 = vld [vmem:[%s5 + $0x58] sm:$0xff]
    %v1602 = vld [vmem:[%s5 + $0x60] sm:$0xff]
    %v1603 = vld [vmem:[%s5 + $0x68] sm:$0xff]
    %v1604 = vld [vmem:[%s5 + $0x70] sm:$0xff]
    %v1605 = vld [vmem:[%s5 + $0x78] sm:$0xff]
    %v1606 = vld [vmem:[%s5 + $0x80] sm:$0xff]
    %v1607 = vld [vmem:[%s5 + $0x88] sm:$0xff]
    %v1608 = vld [vmem:[%s5 + $0x90] sm:$0xff]
    %v1609 = vld [vmem:[%s5 + $0x98] sm:$0xff]
    %v1610 = vld [vmem:[%s5 + $0xa0] sm:$0xff]
    %v1611 = vld [vmem:[%s5 + $0xa8] sm:$0xff]
    %v1612 = vld [vmem:[%s5 + $0xb0] sm:$0xff]
    %v1613 = vld [vmem:[%s5 + $0xb8] sm:$0xff]
    %v1614 = vld [vmem:[%s5 + $0xc0] sm:$0xff]
    %v1615 = vld [vmem:[%s5 + $0xc8] sm:$0xff]
    %v1616 = vld [vmem:[%s5 + $0xd0] sm:$0xff]
    %v1617 = vld [vmem:[%s5 + $0xd8] sm:$0xff]
    %v1618 = vld [vmem:[%s5 + $0xe0] sm:$0xff]
    %v1619 = vld [vmem:[%s5 + $0xe8] sm:$0xff]
    %v1620 = vld [vmem:[%s5 + $0xf0] sm:$0xff]
    %v1621 = vld [vmem:[%s5 + $0xf8] sm:$0xff]
    %1622 = vmatprep.subr.mxu0 %v1621
    %1623 = vmatpush1.msra.mxu0 %v1620
    %1624 = vmatprep.subr.mxu0 %v1619
    %1625 = vmatpush1.msra.mxu0 %v1618
    %1626 = vmatprep.subr.mxu0 %v1617
    %1627 = vmatpush1.msra.mxu0 %v1616
    %1628 = vmatprep.subr.mxu0 %v1615
    %1629 = vmatpush1.msra.mxu0 %v1614
    %1630 = vmatprep.subr.mxu0 %v1613
    %1631 = vmatpush1.msra.mxu0 %v1612
    %1632 = vmatprep.subr.mxu0 %v1611
    %1633 = vmatpush1.msra.mxu0 %v1610
    %1634 = vmatprep.subr.mxu0 %v1609
    %1635 = vmatpush1.msra.mxu0 %v1608
    %1636 = vmatprep.subr.mxu0 %v1607
    %1637 = vmatpush1.msra.mxu0 %v1606
    %1638 = vmatprep.subr.mxu0 %v1605
    %1639 = vmatpush1.msra.mxu0 %v1604
    %1640 = vmatprep.subr.mxu0 %v1603
    %1641 = vmatpush1.msra.mxu0 %v1602
    %1642 = vmatprep.subr.mxu0 %v1601
    %1643 = vmatpush1.msra.mxu0 %v1600
    %1644 = vmatprep.subr.mxu0 %v1599
    %1645 = vmatpush1.msra.mxu0 %v1598
    %1646 = vmatprep.subr.mxu0 %v1597
    %1647 = vmatpush1.msra.mxu0 %v1596
    %1648 = vmatprep.subr.mxu0 %v1595
    %1649 = vmatpush1.msra.mxu0 %v1594
    %1650 = vmatprep.subr.mxu0 %v1593
    %1651 = vmatpush1.msra.mxu0 %v1592
    %1652 = vmatprep.subr.mxu0 %v1591
    %1653 = vmatpush1.msra.mxu0 %v1590
    %1654 = vmatprep.subr.mxu0 0.0
    %1655 = vmatpush2.msra.mxu0 0.0
    %1656 = vmatprep.subr.mxu0 0.0
    %1657 = vmatpush2.msra.mxu0 0.0
    %1658 = vmatprep.subr.mxu0 0.0
    %1659 = vmatpush2.msra.mxu0 0.0
    %1660 = vmatprep.subr.mxu0 0.0
    %1661 = vmatpush2.msra.mxu0 0.0
    %1662 = vmatprep.subr.mxu0 0.0
    %1663 = vmatpush2.msra.mxu0 0.0
    %1664 = vmatprep.subr.mxu0 0.0
    %1665 = vmatpush2.msra.mxu0 0.0
    %1666 = vmatprep.subr.mxu0 0.0
    %1667 = vmatpush2.msra.mxu0 0.0
    %1668 = vmatprep.subr.mxu0 0.0
    %1669 = vmatpush2.msra.mxu0 0.0
    %1670 = vmatprep.subr.mxu0 0.0
    %1671 = vmatpush2.msra.mxu0 0.0
    %1672 = vmatprep.subr.mxu0 0.0
    %1673 = vmatpush2.msra.mxu0 0.0
    %1674 = vmatprep.subr.mxu0 0.0
    %1675 = vmatpush2.msra.mxu0 0.0
    %1676 = vmatprep.subr.mxu0 0.0
    %1677 = vmatpush2.msra.mxu0 0.0
    %1678 = vmatprep.subr.mxu0 0.0
    %1679 = vmatpush2.msra.mxu0 0.0
    %1680 = vmatprep.subr.mxu0 0.0
    %1681 = vmatpush2.msra.mxu0 0.0
    %1682 = vmatprep.subr.mxu0 0.0
    %1683 = vmatpush2.msra.mxu0 0.0
    %1684 = vmatprep.subr.mxu0 0.0
    %1685 = vmatpush2.msra.mxu0 0.0
    %1686 = vmatprep.mubr.f32.mxu0 0.0
    %1687 = vmatmul.mubr.f32.gmra.mxu0 %v1586
    %v1688 = vpop.f32.mrf.mxu0
    %v1689 = vadd.f32 0.0, %v1688
    %v1690 = vpop.f32.mrf.mxu0
    %v1691 = vadd.f32 0.0, %v1690
    %1692 = vdwg.mxu0
    %1693 = vmatprep.subr.mxu0 %v1621
    %1694 = vmatpush1.msra.mxu0 %v1620
    %1695 = vmatprep.subr.mxu0 %v1619
    %1696 = vmatpush1.msra.mxu0 %v1618
    %1697 = vmatprep.subr.mxu0 %v1617
    %1698 = vmatpush1.msra.mxu0 %v1616
    %1699 = vmatprep.subr.mxu0 %v1615
    %1700 = vmatpush1.msra.mxu0 %v1614
    %1701 = vmatprep.subr.mxu0 %v1613
    %1702 = vmatpush1.msra.mxu0 %v1612
    %1703 = vmatprep.subr.mxu0 %v1611
    %1704 = vmatpush1.msra.mxu0 %v1610
    %1705 = vmatprep.subr.mxu0 %v1609
    %1706 = vmatpush1.msra.mxu0 %v1608
    %1707 = vmatprep.subr.mxu0 %v1607
    %1708 = vmatpush1.msra.mxu0 %v1606
    %1709 = vmatprep.subr.mxu0 %v1605
    %1710 = vmatpush1.msra.mxu0 %v1604
    %1711 = vmatprep.subr.mxu0 %v1603
    %1712 = vmatpush1.msra.mxu0 %v1602
    %1713 = vmatprep.subr.mxu0 %v1601
    %1714 = vmatpush1.msra.mxu0 %v1600
    %1715 = vmatprep.subr.mxu0 %v1599
    %1716 = vmatpush1.msra.mxu0 %v1598
    %1717 = vmatprep.subr.mxu0 %v1597
    %1718 = vmatpush1.msra.mxu0 %v1596
    %1719 = vmatprep.subr.mxu0 %v1595
    %1720 = vmatpush1.msra.mxu0 %v1594
    %1721 = vmatprep.subr.mxu0 %v1593
    %1722 = vmatpush1.msra.mxu0 %v1592
    %1723 = vmatprep.subr.mxu0 %v1591
    %1724 = vmatpush1.msra.mxu0 %v1590
    %1725 = vmatprep.subr.mxu0 0.0
    %1726 = vmatpush2.msra.mxu0 0.0
    %1727 = vmatprep.subr.mxu0 0.0
    %1728 = vmatpush2.msra.mxu0 0.0
    %1729 = vmatprep.subr.mxu0 0.0
    %1730 = vmatpush2.msra.mxu0 0.0
    %1731 = vmatprep.subr.mxu0 0.0
    %1732 = vmatpush2.msra.mxu0 0.0
    %1733 = vmatprep.subr.mxu0 0.0
    %1734 = vmatpush2.msra.mxu0 0.0
    %1735 = vmatprep.subr.mxu0 0.0
    %1736 = vmatpush2.msra.mxu0 0.0
    %1737 = vmatprep.subr.mxu0 0.0
    %1738 = vmatpush2.msra.mxu0 0.0
    %1739 = vmatprep.subr.mxu0 0.0
    %1740 = vmatpush2.msra.mxu0 0.0
    %1741 = vmatprep.subr.mxu0 0.0
    %1742 = vmatpush2.msra.mxu0 0.0
    %1743 = vmatprep.subr.mxu0 0.0
    %1744 = vmatpush2.msra.mxu0 0.0
    %1745 = vmatprep.subr.mxu0 0.0
    %1746 = vmatpush2.msra.mxu0 0.0
    %1747 = vmatprep.subr.mxu0 0.0
    %1748 = vmatpush2.msra.mxu0 0.0
    %1749 = vmatprep.subr.mxu0 0.0
    %1750 = vmatpush2.msra.mxu0 0.0
    %1751 = vmatprep.subr.mxu0 0.0
    %1752 = vmatpush2.msra.mxu0 0.0
    %1753 = vmatprep.subr.mxu0 0.0
    %1754 = vmatpush2.msra.mxu0 0.0
    %1755 = vmatprep.subr.mxu0 0.0
    %1756 = vmatpush2.msra.mxu0 0.0
    %1757 = vmatprep.mubr.f32.mxu0 0.0
    %1758 = vmatmul.mubr.f32.gmra.mxu0 %v1589
    %v1759 = vpop.f32.mrf.mxu0
    %v1760 = vadd.f32 0.0, %v1759
    %v1761 = vpop.f32.mrf.mxu0
    %v1762 = vadd.f32 0.0, %v1761
    %1763 = vdwg.mxu0
    %s1764 = smul.u32 0, 2
    %s1765 = smul.addr %s1764, 8
    %s1766 = scalar_lea.vmem [#allocation2], %s1765
    %v1767 = vld [vmem:[%s1766] sm:$0xff]
    %v1768 = vld [vmem:[%s1766 + $0x8] sm:$0xff]
    %v1769 = vld [vmem:[%s1766 + $0x10] sm:$0xff]
    %v1770 = vld [vmem:[%s1766 + $0x18] sm:$0xff]
    %v1771 = vld [vmem:[%s1766 + $0x20] sm:$0xff]
    %v1772 = vld [vmem:[%s1766 + $0x28] sm:$0xff]
    %v1773 = vld [vmem:[%s1766 + $0x30] sm:$0xff]
    %v1774 = vld [vmem:[%s1766 + $0x38] sm:$0xff]
    %v1775 = vlaneseq
    %v1776 = vshrl.u32 %v1775, 7
    %v1777 = vsub.s32 0, %v1776
    %v1778 = vrot.slane %v1689, %v1777
    %v1779 = vlaneseq
    %v1780 = vshrl.u32 %v1779, 7
    %v1781 = vsub.s32 0, %v1780
    %v1782 = vrot.slane %v1691, %v1781
    %v1783 = vmul.f32 %v1767, %v1778
    %v1784 = vmul.f32 %v1768, %v1782
    %v1785 = vmul.f32 %v1769, %v1778
    %v1786 = vmul.f32 %v1770, %v1782
    %v1787 = vmul.f32 %v1771, %v1778
    %v1788 = vmul.f32 %v1772, %v1782
    %v1789 = vmul.f32 %v1773, %v1778
    %v1790 = vmul.f32 %v1774, %v1782
    %v1791 = vlaneseq
    %v1792 = vshrl.u32 %v1791, 7
    %v1793 = vsub.s32 0, %v1792
    %v1794 = vrot.slane %v1760, %v1793
    %v1795 = vlaneseq
    %v1796 = vshrl.u32 %v1795, 7
    %v1797 = vsub.s32 0, %v1796
    %v1798 = vrot.slane %v1762, %v1797
    %v1799 = vadd.f32 %v1783, %v1794
    %v1800 = vadd.f32 %v1784, %v1798
    %v1801 = vadd.f32 %v1785, %v1794
    %v1802 = vadd.f32 %v1786, %v1798
    %v1803 = vadd.f32 %v1787, %v1794
    %v1804 = vadd.f32 %v1788, %v1798
    %v1805 = vadd.f32 %v1789, %v1794
    %v1806 = vadd.f32 %v1790, %v1798
    %vm1807 = vcmp.ge.f32.partialorder %v1799, 0.0
    %vm1808 = vcmp.ge.f32.partialorder %v1800, 0.0
    %vm1809 = vcmp.ge.f32.partialorder %v1801, 0.0
    %vm1810 = vcmp.ge.f32.partialorder %v1802, 0.0
    %vm1811 = vcmp.ge.f32.partialorder %v1803, 0.0
    %vm1812 = vcmp.ge.f32.partialorder %v1804, 0.0
    %vm1813 = vcmp.ge.f32.partialorder %v1805, 0.0
    %vm1814 = vcmp.ge.f32.partialorder %v1806, 0.0
    %v1815 = vmul.f32 %v1799, 0.2
    %v1816 = vmul.f32 %v1800, 0.2
    %v1817 = vmul.f32 %v1801, 0.2
    %v1818 = vmul.f32 %v1802, 0.2
    %v1819 = vmul.f32 %v1803, 0.2
    %v1820 = vmul.f32 %v1804, 0.2
    %v1821 = vmul.f32 %v1805, 0.2
    %v1822 = vmul.f32 %v1806, 0.2
    %v1823 = vsel %vm1807, %v1799, %v1815
    %v1824 = vsel %vm1808, %v1800, %v1816
    %v1825 = vsel %vm1809, %v1801, %v1817
    %v1826 = vsel %vm1810, %v1802, %v1818
    %v1827 = vsel %vm1811, %v1803, %v1819
    %v1828 = vsel %vm1812, %v1804, %v1820
    %v1829 = vsel %vm1813, %v1805, %v1821
    %v1830 = vsel %vm1814, %v1806, %v1822
    %v1831 = vpack.c.bf16 %v1825, %v1823
    %v1832 = vpack.c.bf16 %v1826, %v1824
    %v1833 = vpack.c.bf16 %v1829, %v1827
    %v1834 = vpack.c.bf16 %v1830, %v1828
    %v1839 = vunpack.c.l.b16 %v1831
    %v1840 = vunpack.c.l.b16 %v1832
    %v1841 = vunpack.c.h.b16 %v1831
    %v1842 = vunpack.c.h.b16 %v1832
    %v1843 = vunpack.c.l.b16 %v1833
    %v1844 = vunpack.c.l.b16 %v1834
    %v1845 = vunpack.c.h.b16 %v1833
    %v1846 = vunpack.c.h.b16 %v1834
    %v1847 = vpack.c.b16 %v1840, %v1839
    %v1848 = vpack.c.b16 %v1842, %v1841
    %v1849 = vpack.c.b16 %v1844, %v1843
    %v1850 = vpack.c.b16 %v1846, %v1845
    %s1855 = smul.addr %s1764, 4
    %s1856 = scalar_lea.vmem %s6, %s1855
    %1857 = vst [vmem:[%s1856] sm:$0xff] %v1847
    %1858 = vst [vmem:[%s1856 + $0x8] sm:$0xff] %v1848
    %1859 = vst [vmem:[%s1856 + $0x10] sm:$0xff] %v1849
    %1860 = vst [vmem:[%s1856 + $0x18] sm:$0xff] %v1850
  $region33: #{generator_forward.6} parent=0 // pred_fallthru
    _
  // Predicated region
  $region34: #{generator_forward.6} parent=0 // pred_check
    _
  $region35: #{generator_forward.6} parent=0 // pred_check_branch
    %1862 = sbr.rel (0) target = $region37
  $region36: #{generator_forward.6} parent=0 // pred_region
    _
  $region37: #{generator_forward.6} parent=0 // pred_fallthru
    _
  // Predicated region
  $region38: #{generator_forward.6} parent=0 // pred_check
    _
  $region39: #{generator_forward.6} parent=0 // pred_check_branch
    %1864 = sbr.rel (0) target = $region41
  $region40: #{generator_forward.6} parent=0 // pred_region
    _
  $region41: #{generator_forward.6} parent=0 // pred_fallthru
    _

// kernel: generator_forward.7
$region0: #{generator_forward.7}
  #allocation0 [shape = 'u32[]', space=smem, size = 0x4, offset = 0x4, fixed_abs, tag = 'smem constant byte address 0x4 - core index']
  #allocation1 [shape = 'u32[144,128]{1,0:T(1,128)}', space=vmem, size = 0x12000, scoped, tag = 'internal scratch']
  #allocation2 [shape = 'f32[128,128]{1,0:T(8,128)}', space=vmem, size = 0x10000, scoped, tag = 'scratch operand']
  #allocation3 [shape = 'f32[1,128]{1,0:T(1,128)}', space=vmem, size = 0x200, scoped, tag = 'scratch operand']
  #allocation4 [shape = 'f32[1,128]{1,0:T(1,128)}', space=vmem, size = 0x200, scoped, tag = 'scratch operand']
  %s0 = inlined_call_operand.vmem [shape: bf16[128,576], index: 0, kind: input, shape index: {}]
  %s1 = inlined_call_operand.vmem [shape: bf16[576,128], index: 1, kind: input, shape index: {}]
  %s2 = inlined_call_operand.vmem [shape: f32[1,128], index: 2, kind: input, shape index: {}]
  %s3 = inlined_call_operand.vmem [shape: f32[1,128], index: 3, kind: input, shape index: {}]
  %s4 = inlined_call_operand.vmem [shape: f32[128,128], index: 4, kind: input, shape index: {}]
  %s5 = inlined_call_operand.vmem [shape: f32[128,128], index: 5, kind: input, shape index: {}]
  %s6 = inlined_call_operand.vmem [shape: bf16[128,128], index: 6, kind: output, shape index: {}]
  %s7 = sld [smem:[#allocation0]]
  $region42: #{generator_forward.7} parent=0
    _
  %s9 = ssub.s32 1, %s7
  %s10 = scalar_select 0, %s9, %s7
  // Predicated region
  $region2: #{generator_forward.7} parent=0 // pred_check
    _
  $region3: #{generator_forward.7} parent=0 // pred_check_branch
    %12 = sbr.rel (0) target = $region5
  $region4: #{generator_forward.7} parent=0 // pred_region
    _
  $region5: #{generator_forward.7} parent=0 // pred_fallthru
    _
  // Predicated region
  $region6: #{generator_forward.7} parent=0 // pred_check
    _
  $region7: #{generator_forward.7} parent=0 // pred_check_branch
    %14 = sbr.rel (0) target = $region9
  $region8: #{generator_forward.7} parent=0 // pred_region
    _
  $region9: #{generator_forward.7} parent=0 // pred_fallthru
    _
  // Predicated region
  $region10: #{generator_forward.7} parent=0 // pred_check
    _
  $region11: #{generator_forward.7} parent=0 // pred_check_branch
    %16 = sbr.rel (0) target = $region13
  $region12: #{generator_forward.7} parent=0 // pred_region
    _
  $region13: #{generator_forward.7} parent=0 // pred_fallthru
    _
  // Predicated region
  $region14: #{generator_forward.7} parent=0 // pred_check
    _
  $region15: #{generator_forward.7} parent=0 // pred_check_branch
    %18 = sbr.rel (0) target = $region17
  $region16: #{generator_forward.7} parent=0 // pred_region
    _
  $region17: #{generator_forward.7} parent=0 // pred_fallthru
    _
  // Predicated region
  $region18: #{generator_forward.7} parent=0 // pred_check
    _
  $region19: #{generator_forward.7} parent=0 // pred_check_branch
    %20 = sbr.rel (0) target = $region21
  $region20: #{generator_forward.7} parent=0 // pred_region
    _
  $region21: #{generator_forward.7} parent=0 // pred_fallthru
    _
  // Predicated region
  $region22: #{generator_forward.7} parent=0 // pred_check
    _
  $region23: #{generator_forward.7} parent=0 // pred_check_branch
    %22 = sbr.rel (0) target = $region25
  $region24: #{generator_forward.7} parent=0 // pred_region
    _
  $region25: #{generator_forward.7} parent=0 // pred_fallthru
    _
  %p24 = scmp.eq.s32.totalorder 0, 0
  // Predicated region
  $region26: #{generator_forward.7} parent=0 // pred_check
    %p25 = pneg %p24
  $region27: #{generator_forward.7} parent=0 // pred_check_branch
    %27 = sbr.rel (%p25) target = $region29
  $region28: #{generator_forward.7} parent=0 // pred_region
    %28 = vst [vmem:[#allocation3] sm:$0x1] 0.0
    %29 = vst [vmem:[#allocation4] sm:$0x1] 0.0
  $region29: #{generator_forward.7} parent=0 // pred_fallthru
    _
  %v30 = vld [vmem:[%s0] sm:$0xff]
  %v31 = vld [vmem:[%s0 + $0x8] sm:$0xff]
  %v32 = vld [vmem:[%s0 + $0x10] sm:$0xf]
  %v33 = vld [vmem:[%s0 + $0x14] sm:$0xff]
  %v34 = vld [vmem:[%s0 + $0x1c] sm:$0xff]
  %v35 = vld [vmem:[%s0 + $0x24] sm:$0xf]
  %v36 = vld [vmem:[%s0 + $0x28] sm:$0xff]
  %v37 = vld [vmem:[%s0 + $0x30] sm:$0xff]
  %v38 = vld [vmem:[%s0 + $0x38] sm:$0xf]
  %v39 = vld [vmem:[%s0 + $0x3c] sm:$0xff]
  %v40 = vld [vmem:[%s0 + $0x44] sm:$0xff]
  %v41 = vld [vmem:[%s0 + $0x4c] sm:$0xf]
  %v42 = vld [vmem:[%s0 + $0x50] sm:$0xff]
  %v43 = vld [vmem:[%s0 + $0x58] sm:$0xff]
  %v44 = vld [vmem:[%s0 + $0x60] sm:$0xf]
  %v45 = vld [vmem:[%s0 + $0x64] sm:$0xff]
  %v46 = vld [vmem:[%s0 + $0x6c] sm:$0xff]
  %v47 = vld [vmem:[%s0 + $0x74] sm:$0xf]
  %v48 = vld [vmem:[%s0 + $0x78] sm:$0xff]
  %v49 = vld [vmem:[%s0 + $0x80] sm:$0xff]
  %v50 = vld [vmem:[%s0 + $0x88] sm:$0xf]
  %v51 = vld [vmem:[%s0 + $0x8c] sm:$0xff]
  %v52 = vld [vmem:[%s0 + $0x94] sm:$0xff]
  %v53 = vld [vmem:[%s0 + $0x9c] sm:$0xf]
  %v54 = vld [vmem:[%s0 + $0xa0] sm:$0xff]
  %v55 = vld [vmem:[%s0 + $0xa8] sm:$0xff]
  %v56 = vld [vmem:[%s0 + $0xb0] sm:$0xf]
  %v57 = vld [vmem:[%s0 + $0xb4] sm:$0xff]
  %v58 = vld [vmem:[%s0 + $0xbc] sm:$0xff]
  %v59 = vld [vmem:[%s0 + $0xc4] sm:$0xf]
  %v60 = vld [vmem:[%s0 + $0xc8] sm:$0xff]
  %v61 = vld [vmem:[%s0 + $0xd0] sm:$0xff]
  %v62 = vld [vmem:[%s0 + $0xd8] sm:$0xf]
  %v63 = vld [vmem:[%s0 + $0xdc] sm:$0xff]
  %v64 = vld [vmem:[%s0 + $0xe4] sm:$0xff]
  %v65 = vld [vmem:[%s0 + $0xec] sm:$0xf]
  %v66 = vld [vmem:[%s0 + $0xf0] sm:$0xff]
  %v67 = vld [vmem:[%s0 + $0xf8] sm:$0xff]
  %v68 = vld [vmem:[%s0 + $0x100] sm:$0xf]
  %v69 = vld [vmem:[%s0 + $0x104] sm:$0xff]
  %v70 = vld [vmem:[%s0 + $0x10c] sm:$0xff]
  %v71 = vld [vmem:[%s0 + $0x114] sm:$0xf]
  %v72 = vld [vmem:[%s0 + $0x118] sm:$0xff]
  %v73 = vld [vmem:[%s0 + $0x120] sm:$0xff]
  %v74 = vld [vmem:[%s0 + $0x128] sm:$0xf]
  %v75 = vld [vmem:[%s0 + $0x12c] sm:$0xff]
  %v76 = vld [vmem:[%s0 + $0x134] sm:$0xff]
  %v77 = vld [vmem:[%s0 + $0x13c] sm:$0xf]
  %v78 = vld [vmem:[%s1] sm:$0xf]
  %v79 = vld [vmem:[%s1 + $0x4] sm:$0xf]
  %v80 = vld [vmem:[%s1 + $0x8] sm:$0xf]
  %v81 = vld [vmem:[%s1 + $0xc] sm:$0xf]
  %v82 = vld [vmem:[%s1 + $0x10] sm:$0xf]
  %v83 = vld [vmem:[%s1 + $0x14] sm:$0xf]
  %v84 = vld [vmem:[%s1 + $0x18] sm:$0xf]
  %v85 = vld [vmem:[%s1 + $0x1c] sm:$0xf]
  %v86 = vld [vmem:[%s1 + $0x20] sm:$0xf]
  %v87 = vld [vmem:[%s1 + $0x24] sm:$0xf]
  %v88 = vld [vmem:[%s1 + $0x28] sm:$0xf]
  %v89 = vld [vmem:[%s1 + $0x2c] sm:$0xf]
  %v90 = vld [vmem:[%s1 + $0x30] sm:$0xf]
  %v91 = vld [vmem:[%s1 + $0x34] sm:$0xf]
  %v92 = vld [vmem:[%s1 + $0x38] sm:$0xf]
  %v93 = vld [vmem:[%s1 + $0x3c] sm:$0xf]
  %v94 = vld [vmem:[%s1 + $0x40] sm:$0xf]
  %v95 = vld [vmem:[%s1 + $0x44] sm:$0xf]
  %v96 = vld [vmem:[%s1 + $0x48] sm:$0xf]
  %v97 = vld [vmem:[%s1 + $0x4c] sm:$0xf]
  %v98 = vld [vmem:[%s1 + $0x50] sm:$0xf]
  %v99 = vld [vmem:[%s1 + $0x54] sm:$0xf]
  %v100 = vld [vmem:[%s1 + $0x58] sm:$0xf]
  %v101 = vld [vmem:[%s1 + $0x5c] sm:$0xf]
  %v102 = vld [vmem:[%s1 + $0x60] sm:$0xf]
  %v103 = vld [vmem:[%s1 + $0x64] sm:$0xf]
  %v104 = vld [vmem:[%s1 + $0x68] sm:$0xf]
  %v105 = vld [vmem:[%s1 + $0x6c] sm:$0xf]
  %v106 = vld [vmem:[%s1 + $0x70] sm:$0xf]
  %v107 = vld [vmem:[%s1 + $0x74] sm:$0xf]
  %v108 = vld [vmem:[%s1 + $0x78] sm:$0xf]
  %v109 = vld [vmem:[%s1 + $0x7c] sm:$0xf]
  %v110 = vld [vmem:[%s1 + $0x80] sm:$0xf]
  %v111 = vld [vmem:[%s1 + $0x84] sm:$0xf]
  %v112 = vld [vmem:[%s1 + $0x88] sm:$0xf]
  %v113 = vld [vmem:[%s1 + $0x8c] sm:$0xf]
  %v114 = vld [vmem:[%s1 + $0x90] sm:$0xf]
  %v115 = vld [vmem:[%s1 + $0x94] sm:$0xf]
  %v116 = vld [vmem:[%s1 + $0x98] sm:$0xf]
  %v117 = vld [vmem:[%s1 + $0x9c] sm:$0xf]
  %v118 = vld [vmem:[%s1 + $0xa0] sm:$0xf]
  %v119 = vld [vmem:[%s1 + $0xa4] sm:$0xf]
  %v120 = vld [vmem:[%s1 + $0xa8] sm:$0xf]
  %v121 = vld [vmem:[%s1 + $0xac] sm:$0xf]
  %v122 = vld [vmem:[%s1 + $0xb0] sm:$0xf]
  %v123 = vld [vmem:[%s1 + $0xb4] sm:$0xf]
  %v124 = vld [vmem:[%s1 + $0xb8] sm:$0xf]
  %v125 = vld [vmem:[%s1 + $0xbc] sm:$0xf]
  %v126 = vld [vmem:[%s1 + $0xc0] sm:$0xf]
  %v127 = vld [vmem:[%s1 + $0xc4] sm:$0xf]
  %v128 = vld [vmem:[%s1 + $0xc8] sm:$0xf]
  %v129 = vld [vmem:[%s1 + $0xcc] sm:$0xf]
  %v130 = vld [vmem:[%s1 + $0xd0] sm:$0xf]
  %v131 = vld [vmem:[%s1 + $0xd4] sm:$0xf]
  %v132 = vld [vmem:[%s1 + $0xd8] sm:$0xf]
  %v133 = vld [vmem:[%s1 + $0xdc] sm:$0xf]
  %v134 = vld [vmem:[%s1 + $0xe0] sm:$0xf]
  %v135 = vld [vmem:[%s1 + $0xe4] sm:$0xf]
  %v136 = vld [vmem:[%s1 + $0xe8] sm:$0xf]
  %v137 = vld [vmem:[%s1 + $0xec] sm:$0xf]
  %v138 = vld [vmem:[%s1 + $0xf0] sm:$0xf]
  %v139 = vld [vmem:[%s1 + $0xf4] sm:$0xf]
  %v140 = vld [vmem:[%s1 + $0xf8] sm:$0xf]
  %v141 = vld [vmem:[%s1 + $0xfc] sm:$0xf]
  %v142 = vld [vmem:[%s1 + $0x100] sm:$0xf]
  %v143 = vld [vmem:[%s1 + $0x104] sm:$0xf]
  %v144 = vld [vmem:[%s1 + $0x108] sm:$0xf]
  %v145 = vld [vmem:[%s1 + $0x10c] sm:$0xf]
  %v146 = vld [vmem:[%s1 + $0x110] sm:$0xf]
  %v147 = vld [vmem:[%s1 + $0x114] sm:$0xf]
  %v148 = vld [vmem:[%s1 + $0x118] sm:$0xf]
  %v149 = vld [vmem:[%s1 + $0x11c] sm:$0xf]
  %v198 = vunpack.c.l.b16 %v30
  %v199 = vunpack.c.h.b16 %v30
  %v200 = vunpack.c.l.b16 %v31
  %v201 = vunpack.c.h.b16 %v31
  %v202 = vunpack.c.l.b16 %v32
  %v203 = vunpack.c.l.b16 %v33
  %v204 = vunpack.c.h.b16 %v33
  %v205 = vunpack.c.l.b16 %v34
  %v206 = vunpack.c.h.b16 %v34
  %v207 = vunpack.c.l.b16 %v35
  %v208 = vunpack.c.l.b16 %v36
  %v209 = vunpack.c.h.b16 %v36
  %v210 = vunpack.c.l.b16 %v37
  %v211 = vunpack.c.h.b16 %v37
  %v212 = vunpack.c.l.b16 %v38
  %v213 = vunpack.c.l.b16 %v39
  %v214 = vunpack.c.h.b16 %v39
  %v215 = vunpack.c.l.b16 %v40
  %v216 = vunpack.c.h.b16 %v40
  %v217 = vunpack.c.l.b16 %v41
  %v218 = vunpack.c.l.b16 %v42
  %v219 = vunpack.c.h.b16 %v42
  %v220 = vunpack.c.l.b16 %v43
  %v221 = vunpack.c.h.b16 %v43
  %v222 = vunpack.c.l.b16 %v44
  %v223 = vunpack.c.l.b16 %v45
  %v224 = vunpack.c.h.b16 %v45
  %v225 = vunpack.c.l.b16 %v46
  %v226 = vunpack.c.h.b16 %v46
  %v227 = vunpack.c.l.b16 %v47
  %v228 = vunpack.c.l.b16 %v48
  %v229 = vunpack.c.h.b16 %v48
  %v230 = vunpack.c.l.b16 %v49
  %v231 = vunpack.c.h.b16 %v49
  %v232 = vunpack.c.l.b16 %v50
  %v233 = vunpack.c.l.b16 %v51
  %v234 = vunpack.c.h.b16 %v51
  %v235 = vunpack.c.l.b16 %v52
  %v236 = vunpack.c.h.b16 %v52
  %v237 = vunpack.c.l.b16 %v53
  %v238 = vunpack.c.l.b16 %v54
  %v239 = vunpack.c.h.b16 %v54
  %v240 = vunpack.c.l.b16 %v55
  %v241 = vunpack.c.h.b16 %v55
  %v242 = vunpack.c.l.b16 %v56
  %v243 = vunpack.c.l.b16 %v57
  %v244 = vunpack.c.h.b16 %v57
  %v245 = vunpack.c.l.b16 %v58
  %v246 = vunpack.c.h.b16 %v58
  %v247 = vunpack.c.l.b16 %v59
  %v248 = vunpack.c.l.b16 %v60
  %v249 = vunpack.c.h.b16 %v60
  %v250 = vunpack.c.l.b16 %v61
  %v251 = vunpack.c.h.b16 %v61
  %v252 = vunpack.c.l.b16 %v62
  %v253 = vunpack.c.l.b16 %v63
  %v254 = vunpack.c.h.b16 %v63
  %v255 = vunpack.c.l.b16 %v64
  %v256 = vunpack.c.h.b16 %v64
  %v257 = vunpack.c.l.b16 %v65
  %v258 = vunpack.c.l.b16 %v66
  %v259 = vunpack.c.h.b16 %v66
  %v260 = vunpack.c.l.b16 %v67
  %v261 = vunpack.c.h.b16 %v67
  %v262 = vunpack.c.l.b16 %v68
  %v263 = vunpack.c.l.b16 %v69
  %v264 = vunpack.c.h.b16 %v69
  %v265 = vunpack.c.l.b16 %v70
  %v266 = vunpack.c.h.b16 %v70
  %v267 = vunpack.c.l.b16 %v71
  %v268 = vunpack.c.l.b16 %v72
  %v269 = vunpack.c.h.b16 %v72
  %v270 = vunpack.c.l.b16 %v73
  %v271 = vunpack.c.h.b16 %v73
  %v272 = vunpack.c.l.b16 %v74
  %v273 = vunpack.c.l.b16 %v75
  %v274 = vunpack.c.h.b16 %v75
  %v275 = vunpack.c.l.b16 %v76
  %v276 = vunpack.c.h.b16 %v76
  %v277 = vunpack.c.l.b16 %v77
  %v278 = vpack.c.b16 %v203, %v198
  %v279 = vpack.c.b16 %v204, %v199
  %v280 = vpack.c.b16 %v205, %v200
  %v281 = vpack.c.b16 %v206, %v201
  %v282 = vpack.c.b16 %v207, %v202
  %v283 = vpack.c.b16 %v213, %v208
  %v284 = vpack.c.b16 %v214, %v209
  %v285 = vpack.c.b16 %v215, %v210
  %v286 = vpack.c.b16 %v216, %v211
  %v287 = vpack.c.b16 %v217, %v212
  %v288 = vpack.c.b16 %v223, %v218
  %v289 = vpack.c.b16 %v224, %v219
  %v290 = vpack.c.b16 %v225, %v220
  %v291 = vpack.c.b16 %v226, %v221
  %v292 = vpack.c.b16 %v227, %v222
  %v293 = vpack.c.b16 %v233, %v228
  %v294 = vpack.c.b16 %v234, %v229
  %v295 = vpack.c.b16 %v235, %v230
  %v296 = vpack.c.b16 %v236, %v231
  %v297 = vpack.c.b16 %v237, %v232
  %v298 = vpack.c.b16 %v243, %v238
  %v299 = vpack.c.b16 %v244, %v239
  %v300 = vpack.c.b16 %v245, %v240
  %v301 = vpack.c.b16 %v246, %v241
  %v302 = vpack.c.b16 %v247, %v242
  %v303 = vpack.c.b16 %v253, %v248
  %v304 = vpack.c.b16 %v254, %v249
  %v305 = vpack.c.b16 %v255, %v250
  %v306 = vpack.c.b16 %v256, %v251
  %v307 = vpack.c.b16 %v257, %v252
  %v308 = vpack.c.b16 %v263, %v258
  %v309 = vpack.c.b16 %v264, %v259
  %v310 = vpack.c.b16 %v265, %v260
  %v311 = vpack.c.b16 %v266, %v261
  %v312 = vpack.c.b16 %v267, %v262
  %v313 = vpack.c.b16 %v273, %v268
  %v314 = vpack.c.b16 %v274, %v269
  %v315 = vpack.c.b16 %v275, %v270
  %v316 = vpack.c.b16 %v276, %v271
  %v317 = vpack.c.b16 %v277, %v272
  %v422 = vunpack.c.l.b16 %v78
  %v423 = vunpack.c.l.b16 %v79
  %v424 = vunpack.c.l.b16 %v80
  %v425 = vunpack.c.l.b16 %v81
  %v426 = vunpack.c.l.b16 %v82
  %v427 = vunpack.c.l.b16 %v83
  %v428 = vunpack.c.l.b16 %v84
  %v429 = vunpack.c.l.b16 %v85
  %v430 = vunpack.c.l.b16 %v86
  %v431 = vunpack.c.l.b16 %v87
  %v432 = vunpack.c.l.b16 %v88
  %v433 = vunpack.c.l.b16 %v89
  %v434 = vunpack.c.l.b16 %v90
  %v435 = vunpack.c.l.b16 %v91
  %v436 = vunpack.c.l.b16 %v92
  %v437 = vunpack.c.l.b16 %v93
  %v438 = vunpack.c.l.b16 %v94
  %v439 = vunpack.c.l.b16 %v95
  %v440 = vunpack.c.l.b16 %v96
  %v441 = vunpack.c.l.b16 %v97
  %v442 = vunpack.c.l.b16 %v98
  %v443 = vunpack.c.l.b16 %v99
  %v444 = vunpack.c.l.b16 %v100
  %v445 = vunpack.c.l.b16 %v101
  %v446 = vunpack.c.l.b16 %v102
  %v447 = vunpack.c.l.b16 %v103
  %v448 = vunpack.c.l.b16 %v104
  %v449 = vunpack.c.l.b16 %v105
  %v450 = vunpack.c.l.b16 %v106
  %v451 = vunpack.c.l.b16 %v107
  %v452 = vunpack.c.l.b16 %v108
  %v453 = vunpack.c.l.b16 %v109
  %v454 = vunpack.c.l.b16 %v110
  %v455 = vunpack.c.l.b16 %v111
  %v456 = vunpack.c.l.b16 %v112
  %v457 = vunpack.c.l.b16 %v113
  %v458 = vunpack.c.l.b16 %v114
  %v459 = vunpack.c.l.b16 %v115
  %v460 = vunpack.c.l.b16 %v116
  %v461 = vunpack.c.l.b16 %v117
  %v462 = vunpack.c.l.b16 %v118
  %v463 = vunpack.c.l.b16 %v119
  %v464 = vunpack.c.l.b16 %v120
  %v465 = vunpack.c.l.b16 %v121
  %v466 = vunpack.c.l.b16 %v122
  %v467 = vunpack.c.l.b16 %v123
  %v468 = vunpack.c.l.b16 %v124
  %v469 = vunpack.c.l.b16 %v125
  %v470 = vunpack.c.l.b16 %v126
  %v471 = vunpack.c.l.b16 %v127
  %v472 = vunpack.c.l.b16 %v128
  %v473 = vunpack.c.l.b16 %v129
  %v474 = vunpack.c.l.b16 %v130
  %v475 = vunpack.c.l.b16 %v131
  %v476 = vunpack.c.l.b16 %v132
  %v477 = vunpack.c.l.b16 %v133
  %v478 = vunpack.c.l.b16 %v134
  %v479 = vunpack.c.l.b16 %v135
  %v480 = vunpack.c.l.b16 %v136
  %v481 = vunpack.c.l.b16 %v137
  %v482 = vunpack.c.l.b16 %v138
  %v483 = vunpack.c.l.b16 %v139
  %v484 = vunpack.c.l.b16 %v140
  %v485 = vunpack.c.l.b16 %v141
  %v486 = vunpack.c.l.b16 %v142
  %v487 = vunpack.c.l.b16 %v143
  %v488 = vunpack.c.l.b16 %v144
  %v489 = vunpack.c.l.b16 %v145
  %v490 = vunpack.c.l.b16 %v146
  %v491 = vunpack.c.l.b16 %v147
  %v492 = vunpack.c.l.b16 %v148
  %v493 = vunpack.c.l.b16 %v149
  %v494 = vpack.c.b16 %v423, %v422
  %v495 = vpack.c.b16 %v425, %v424
  %v496 = vpack.c.b16 %v427, %v426
  %v497 = vpack.c.b16 %v429, %v428
  %v498 = vpack.c.b16 %v431, %v430
  %v499 = vpack.c.b16 %v433, %v432
  %v500 = vpack.c.b16 %v435, %v434
  %v501 = vpack.c.b16 %v437, %v436
  %v502 = vpack.c.b16 %v439, %v438
  %v503 = vpack.c.b16 %v441, %v440
  %v504 = vpack.c.b16 %v443, %v442
  %v505 = vpack.c.b16 %v445, %v444
  %v506 = vpack.c.b16 %v447, %v446
  %v507 = vpack.c.b16 %v449, %v448
  %v508 = vpack.c.b16 %v451, %v450
  %v509 = vpack.c.b16 %v453, %v452
  %v510 = vpack.c.b16 %v455, %v454
  %v511 = vpack.c.b16 %v457, %v456
  %v512 = vpack.c.b16 %v459, %v458
  %v513 = vpack.c.b16 %v461, %v460
  %v514 = vpack.c.b16 %v463, %v462
  %v515 = vpack.c.b16 %v465, %v464
  %v516 = vpack.c.b16 %v467, %v466
  %v517 = vpack.c.b16 %v469, %v468
  %v518 = vpack.c.b16 %v471, %v470
  %v519 = vpack.c.b16 %v473, %v472
  %v520 = vpack.c.b16 %v475, %v474
  %v521 = vpack.c.b16 %v477, %v476
  %v522 = vpack.c.b16 %v479, %v478
  %v523 = vpack.c.b16 %v481, %v480
  %v524 = vpack.c.b16 %v483, %v482
  %v525 = vpack.c.b16 %v485, %v484
  %v526 = vpack.c.b16 %v487, %v486
  %v527 = vpack.c.b16 %v489, %v488
  %v528 = vpack.c.b16 %v491, %v490
  %v529 = vpack.c.b16 %v493, %v492
  %vm566 = vcmask 523264
  %v568 = vsel %vm566, %v282, 0
  %v571 = vsel %vm566, %v287, 0
  %v574 = vsel %vm566, %v292, 0
  %v577 = vsel %vm566, %v297, 0
  %v580 = vsel %vm566, %v302, 0
  %v583 = vsel %vm566, %v307, 0
  %v586 = vsel %vm566, %v312, 0
  %v589 = vsel %vm566, %v317, 0
  %591 = vmatprep.subr.bf16.mxu0 0
  %592 = vmatpush1.bf16.msra.mxu0 %v501
  %593 = vmatprep.subr.bf16.mxu0 0
  %594 = vmatpush1.bf16.msra.mxu0 %v500
  %595 = vmatprep.subr.bf16.mxu0 0
  %596 = vmatpush1.bf16.msra.mxu0 %v499
  %597 = vmatprep.subr.bf16.mxu0 0
  %598 = vmatpush1.bf16.msra.mxu0 %v498
  %599 = vmatprep.subr.bf16.mxu0 0
  %600 = vmatpush1.bf16.msra.mxu0 %v497
  %601 = vmatprep.subr.bf16.mxu0 0
  %602 = vmatpush1.bf16.msra.mxu0 %v496
  %603 = vmatprep.subr.bf16.mxu0 0
  %604 = vmatpush1.bf16.msra.mxu0 %v495
  %605 = vmatprep.subr.bf16.mxu0 0
  %606 = vmatpush1.bf16.msra.mxu0 %v494
  %607 = vmatprep.subr.bf16.mxu0 0
  %608 = vmatpush2.bf16.msra.mxu0 %v509
  %609 = vmatprep.subr.bf16.mxu0 0
  %610 = vmatpush2.bf16.msra.mxu0 %v508
  %611 = vmatprep.subr.bf16.mxu0 0
  %612 = vmatpush2.bf16.msra.mxu0 %v507
  %613 = vmatprep.subr.bf16.mxu0 0
  %614 = vmatpush2.bf16.msra.mxu0 %v506
  %615 = vmatprep.subr.bf16.mxu0 0
  %616 = vmatpush2.bf16.msra.mxu0 %v505
  %617 = vmatprep.subr.bf16.mxu0 0
  %618 = vmatpush2.bf16.msra.mxu0 %v504
  %619 = vmatprep.subr.bf16.mxu0 0
  %620 = vmatpush2.bf16.msra.mxu0 %v503
  %621 = vmatprep.subr.bf16.mxu0 0
  %622 = vmatpush2.bf16.msra.mxu0 %v502
  %623 = vmatprep.mubr.bf16.mxu0 %v279
  %624 = vmatmul.mubr.bf16.gmra.mxu0 %v278
  %v625 = vpop.f32.mrf.mxu0
  %v626 = vadd.f32 0.0, %v625
  %v627 = vpop.f32.mrf.mxu0
  %v628 = vpop.f32.mrf.mxu0
  %v629 = vadd.f32 0.0, %v628
  %v630 = vpop.f32.mrf.mxu0
  %631 = vmatprep.mubr.bf16.mxu0 %v284
  %632 = vmatmul.mubr.bf16.gmra.mxu0 %v283
  %v633 = vpop.f32.mrf.mxu0
  %v634 = vadd.f32 0.0, %v633
  %v635 = vpop.f32.mrf.mxu0
  %v636 = vpop.f32.mrf.mxu0
  %v637 = vadd.f32 0.0, %v636
  %v638 = vpop.f32.mrf.mxu0
  %639 = vmatprep.mubr.bf16.mxu0 %v289
  %640 = vmatmul.mubr.bf16.gmra.mxu0 %v288
  %v641 = vpop.f32.mrf.mxu0
  %v642 = vadd.f32 0.0, %v641
  %v643 = vpop.f32.mrf.mxu0
  %v644 = vpop.f32.mrf.mxu0
  %v645 = vadd.f32 0.0, %v644
  %v646 = vpop.f32.mrf.mxu0
  %647 = vmatprep.mubr.bf16.mxu0 %v294
  %648 = vmatmul.mubr.bf16.gmra.mxu0 %v293
  %v649 = vpop.f32.mrf.mxu0
  %v650 = vadd.f32 0.0, %v649
  %v651 = vpop.f32.mrf.mxu0
  %v652 = vpop.f32.mrf.mxu0
  %v653 = vadd.f32 0.0, %v652
  %v654 = vpop.f32.mrf.mxu0
  %655 = vmatprep.mubr.bf16.mxu0 %v299
  %656 = vmatmul.mubr.bf16.gmra.mxu0 %v298
  %v657 = vpop.f32.mrf.mxu0
  %v658 = vadd.f32 0.0, %v657
  %v659 = vpop.f32.mrf.mxu0
  %v660 = vpop.f32.mrf.mxu0
  %v661 = vadd.f32 0.0, %v660
  %v662 = vpop.f32.mrf.mxu0
  %663 = vmatprep.mubr.bf16.mxu0 %v304
  %664 = vmatmul.mubr.bf16.gmra.mxu0 %v303
  %v665 = vpop.f32.mrf.mxu0
  %v666 = vadd.f32 0.0, %v665
  %v667 = vpop.f32.mrf.mxu0
  %v668 = vpop.f32.mrf.mxu0
  %v669 = vadd.f32 0.0, %v668
  %v670 = vpop.f32.mrf.mxu0
  %671 = vmatprep.mubr.bf16.mxu0 %v309
  %672 = vmatmul.mubr.bf16.gmra.mxu0 %v308
  %v673 = vpop.f32.mrf.mxu0
  %v674 = vadd.f32 0.0, %v673
  %v675 = vpop.f32.mrf.mxu0
  %v676 = vpop.f32.mrf.mxu0
  %v677 = vadd.f32 0.0, %v676
  %v678 = vpop.f32.mrf.mxu0
  %679 = vmatprep.mubr.bf16.mxu0 %v314
  %680 = vmatmul.mubr.bf16.gmra.mxu0 %v313
  %v681 = vpop.f32.mrf.mxu0
  %v682 = vadd.f32 0.0, %v681
  %v683 = vpop.f32.mrf.mxu0
  %v684 = vpop.f32.mrf.mxu0
  %v685 = vadd.f32 0.0, %v684
  %v686 = vpop.f32.mrf.mxu0
  %687 = vdwg.mxu0
  %688 = vmatprep.subr.bf16.mxu0 0
  %689 = vmatpush1.bf16.msra.mxu0 %v517
  %690 = vmatprep.subr.bf16.mxu0 0
  %691 = vmatpush1.bf16.msra.mxu0 %v516
  %692 = vmatprep.subr.bf16.mxu0 0
  %693 = vmatpush1.bf16.msra.mxu0 %v515
  %694 = vmatprep.subr.bf16.mxu0 0
  %695 = vmatpush1.bf16.msra.mxu0 %v514
  %696 = vmatprep.subr.bf16.mxu0 0
  %697 = vmatpush1.bf16.msra.mxu0 %v513
  %698 = vmatprep.subr.bf16.mxu0 0
  %699 = vmatpush1.bf16.msra.mxu0 %v512
  %700 = vmatprep.subr.bf16.mxu0 0
  %701 = vmatpush1.bf16.msra.mxu0 %v511
  %702 = vmatprep.subr.bf16.mxu0 0
  %703 = vmatpush1.bf16.msra.mxu0 %v510
  %704 = vmatprep.subr.bf16.mxu0 0
  %705 = vmatpush2.bf16.msra.mxu0 %v525
  %706 = vmatprep.subr.bf16.mxu0 0
  %707 = vmatpush2.bf16.msra.mxu0 %v524
  %708 = vmatprep.subr.bf16.mxu0 0
  %709 = vmatpush2.bf16.msra.mxu0 %v523
  %710 = vmatprep.subr.bf16.mxu0 0
  %711 = vmatpush2.bf16.msra.mxu0 %v522
  %712 = vmatprep.subr.bf16.mxu0 0
  %713 = vmatpush2.bf16.msra.mxu0 %v521
  %714 = vmatprep.subr.bf16.mxu0 0
  %715 = vmatpush2.bf16.msra.mxu0 %v520
  %716 = vmatprep.subr.bf16.mxu0 0
  %717 = vmatpush2.bf16.msra.mxu0 %v519
  %718 = vmatprep.subr.bf16.mxu0 0
  %719 = vmatpush2.bf16.msra.mxu0 %v518
  %720 = vmatprep.mubr.bf16.mxu0 %v281
  %721 = vmatmul.mubr.bf16.gmra.mxu0 %v280
  %v722 = vpop.f32.mrf.mxu0
  %v723 = vadd.f32 %v626, %v722
  %v724 = vpop.f32.mrf.mxu0
  %v725 = vpop.f32.mrf.mxu0
  %v726 = vadd.f32 %v629, %v725
  %v727 = vpop.f32.mrf.mxu0
  %728 = vmatprep.mubr.bf16.mxu0 %v286
  %729 = vmatmul.mubr.bf16.gmra.mxu0 %v285
  %v730 = vpop.f32.mrf.mxu0
  %v731 = vadd.f32 %v634, %v730
  %v732 = vpop.f32.mrf.mxu0
  %v733 = vpop.f32.mrf.mxu0
  %v734 = vadd.f32 %v637, %v733
  %v735 = vpop.f32.mrf.mxu0
  %736 = vmatprep.mubr.bf16.mxu0 %v291
  %737 = vmatmul.mubr.bf16.gmra.mxu0 %v290
  %v738 = vpop.f32.mrf.mxu0
  %v739 = vadd.f32 %v642, %v738
  %v740 = vpop.f32.mrf.mxu0
  %v741 = vpop.f32.mrf.mxu0
  %v742 = vadd.f32 %v645, %v741
  %v743 = vpop.f32.mrf.mxu0
  %744 = vmatprep.mubr.bf16.mxu0 %v296
  %745 = vmatmul.mubr.bf16.gmra.mxu0 %v295
  %v746 = vpop.f32.mrf.mxu0
  %v747 = vadd.f32 %v650, %v746
  %v748 = vpop.f32.mrf.mxu0
  %v749 = vpop.f32.mrf.mxu0
  %v750 = vadd.f32 %v653, %v749
  %v751 = vpop.f32.mrf.mxu0
  %752 = vmatprep.mubr.bf16.mxu0 %v301
  %753 = vmatmul.mubr.bf16.gmra.mxu0 %v300
  %v754 = vpop.f32.mrf.mxu0
  %v755 = vadd.f32 %v658, %v754
  %v756 = vpop.f32.mrf.mxu0
  %v757 = vpop.f32.mrf.mxu0
  %v758 = vadd.f32 %v661, %v757
  %v759 = vpop.f32.mrf.mxu0
  %760 = vmatprep.mubr.bf16.mxu0 %v306
  %761 = vmatmul.mubr.bf16.gmra.mxu0 %v305
  %v762 = vpop.f32.mrf.mxu0
  %v763 = vadd.f32 %v666, %v762
  %v764 = vpop.f32.mrf.mxu0
  %v765 = vpop.f32.mrf.mxu0
  %v766 = vadd.f32 %v669, %v765
  %v767 = vpop.f32.mrf.mxu0
  %768 = vmatprep.mubr.bf16.mxu0 %v311
  %769 = vmatmul.mubr.bf16.gmra.mxu0 %v310
  %v770 = vpop.f32.mrf.mxu0
  %v771 = vadd.f32 %v674, %v770
  %v772 = vpop.f32.mrf.mxu0
  %v773 = vpop.f32.mrf.mxu0
  %v774 = vadd.f32 %v677, %v773
  %v775 = vpop.f32.mrf.mxu0
  %776 = vmatprep.mubr.bf16.mxu0 %v316
  %777 = vmatmul.mubr.bf16.gmra.mxu0 %v315
  %v778 = vpop.f32.mrf.mxu0
  %v779 = vadd.f32 %v682, %v778
  %v780 = vpop.f32.mrf.mxu0
  %v781 = vpop.f32.mrf.mxu0
  %v782 = vadd.f32 %v685, %v781
  %v783 = vpop.f32.mrf.mxu0
  %784 = vdwg.mxu0
  %785 = vmatprep.subr.bf16.mxu0 0
  %786 = vmatpush1.bf16.msra.mxu0 0
  %787 = vmatprep.subr.bf16.mxu0 0
  %788 = vmatpush1.bf16.msra.mxu0 0
  %789 = vmatprep.subr.bf16.mxu0 0
  %790 = vmatpush1.bf16.msra.mxu0 0
  %791 = vmatprep.subr.bf16.mxu0 0
  %792 = vmatpush1.bf16.msra.mxu0 0
  %793 = vmatprep.subr.bf16.mxu0 0
  %794 = vmatpush1.bf16.msra.mxu0 %v529
  %795 = vmatprep.subr.bf16.mxu0 0
  %796 = vmatpush1.bf16.msra.mxu0 %v528
  %797 = vmatprep.subr.bf16.mxu0 0
  %798 = vmatpush1.bf16.msra.mxu0 %v527
  %799 = vmatprep.subr.bf16.mxu0 0
  %800 = vmatpush1.bf16.msra.mxu0 %v526
  %801 = vmatprep.subr.bf16.mxu0 0
  %802 = vmatpush2.bf16.msra.mxu0 0
  %803 = vmatprep.subr.bf16.mxu0 0
  %804 = vmatpush2.bf16.msra.mxu0 0
  %805 = vmatprep.subr.bf16.mxu0 0
  %806 = vmatpush2.bf16.msra.mxu0 0
  %807 = vmatprep.subr.bf16.mxu0 0
  %808 = vmatpush2.bf16.msra.mxu0 0
  %809 = vmatprep.subr.bf16.mxu0 0
  %810 = vmatpush2.bf16.msra.mxu0 0
  %811 = vmatprep.subr.bf16.mxu0 0
  %812 = vmatpush2.bf16.msra.mxu0 0
  %813 = vmatprep.subr.bf16.mxu0 0
  %814 = vmatpush2.bf16.msra.mxu0 0
  %815 = vmatprep.subr.bf16.mxu0 0
  %816 = vmatpush2.bf16.msra.mxu0 0
  %817 = vmatprep.mubr.bf16.mxu0 0
  %818 = vmatmul.mubr.bf16.gmra.mxu0 %v568
  %v819 = vpop.f32.mrf.mxu0
  %v820 = vadd.f32 %v723, %v819
  %v821 = vpop.f32.mrf.mxu0
  %v822 = vpop.f32.mrf.mxu0
  %v823 = vadd.f32 %v726, %v822
  %v824 = vpop.f32.mrf.mxu0
  %825 = vmatprep.mubr.bf16.mxu0 0
  %826 = vmatmul.mubr.bf16.gmra.mxu0 %v571
  %v827 = vpop.f32.mrf.mxu0
  %v828 = vadd.f32 %v731, %v827
  %v829 = vpop.f32.mrf.mxu0
  %v830 = vpop.f32.mrf.mxu0
  %v831 = vadd.f32 %v734, %v830
  %v832 = vpop.f32.mrf.mxu0
  %833 = vmatprep.mubr.bf16.mxu0 0
  %834 = vmatmul.mubr.bf16.gmra.mxu0 %v574
  %v835 = vpop.f32.mrf.mxu0
  %v836 = vadd.f32 %v739, %v835
  %v837 = vpop.f32.mrf.mxu0
  %v838 = vpop.f32.mrf.mxu0
  %v839 = vadd.f32 %v742, %v838
  %v840 = vpop.f32.mrf.mxu0
  %841 = vmatprep.mubr.bf16.mxu0 0
  %842 = vmatmul.mubr.bf16.gmra.mxu0 %v577
  %v843 = vpop.f32.mrf.mxu0
  %v844 = vadd.f32 %v747, %v843
  %v845 = vpop.f32.mrf.mxu0
  %v846 = vpop.f32.mrf.mxu0
  %v847 = vadd.f32 %v750, %v846
  %v848 = vpop.f32.mrf.mxu0
  %849 = vmatprep.mubr.bf16.mxu0 0
  %850 = vmatmul.mubr.bf16.gmra.mxu0 %v580
  %v851 = vpop.f32.mrf.mxu0
  %v852 = vadd.f32 %v755, %v851
  %v853 = vpop.f32.mrf.mxu0
  %v854 = vpop.f32.mrf.mxu0
  %v855 = vadd.f32 %v758, %v854
  %v856 = vpop.f32.mrf.mxu0
  %857 = vmatprep.mubr.bf16.mxu0 0
  %858 = vmatmul.mubr.bf16.gmra.mxu0 %v583
  %v859 = vpop.f32.mrf.mxu0
  %v860 = vadd.f32 %v763, %v859
  %v861 = vpop.f32.mrf.mxu0
  %v862 = vpop.f32.mrf.mxu0
  %v863 = vadd.f32 %v766, %v862
  %v864 = vpop.f32.mrf.mxu0
  %865 = vmatprep.mubr.bf16.mxu0 0
  %866 = vmatmul.mubr.bf16.gmra.mxu0 %v586
  %v867 = vpop.f32.mrf.mxu0
  %v868 = vadd.f32 %v771, %v867
  %v869 = vpop.f32.mrf.mxu0
  %v870 = vpop.f32.mrf.mxu0
  %v871 = vadd.f32 %v774, %v870
  %v872 = vpop.f32.mrf.mxu0
  %873 = vmatprep.mubr.bf16.mxu0 0
  %874 = vmatmul.mubr.bf16.gmra.mxu0 %v589
  %v875 = vpop.f32.mrf.mxu0
  %v876 = vadd.f32 %v779, %v875
  %v877 = vpop.f32.mrf.mxu0
  %v878 = vpop.f32.mrf.mxu0
  %v879 = vadd.f32 %v782, %v878
  %v880 = vpop.f32.mrf.mxu0
  %881 = vdwg.mxu0
  %s882 = smul.u32 0, 128
  %s883 = scalar_lea.vmem [#allocation2], %s882
  %884 = vst [vmem:[%s883] sm:$0xff] %v820
  %885 = vst [vmem:[%s883 + $0x8] sm:$0xff] %v823
  %886 = vst [vmem:[%s883 + $0x10] sm:$0xff] %v828
  %887 = vst [vmem:[%s883 + $0x18] sm:$0xff] %v831
  %888 = vst [vmem:[%s883 + $0x20] sm:$0xff] %v836
  %889 = vst [vmem:[%s883 + $0x28] sm:$0xff] %v839
  %890 = vst [vmem:[%s883 + $0x30] sm:$0xff] %v844
  %891 = vst [vmem:[%s883 + $0x38] sm:$0xff] %v847
  %892 = vst [vmem:[%s883 + $0x40] sm:$0xff] %v852
  %893 = vst [vmem:[%s883 + $0x48] sm:$0xff] %v855
  %894 = vst [vmem:[%s883 + $0x50] sm:$0xff] %v860
  %895 = vst [vmem:[%s883 + $0x58] sm:$0xff] %v863
  %896 = vst [vmem:[%s883 + $0x60] sm:$0xff] %v868
  %897 = vst [vmem:[%s883 + $0x68] sm:$0xff] %v871
  %898 = vst [vmem:[%s883 + $0x70] sm:$0xff] %v876
  %899 = vst [vmem:[%s883 + $0x78] sm:$0xff] %v879
  %v900 = vld [vmem:[#allocation3] sm:$0x1]
  %v901 = vadd.f32 %v820, %v823
  %v902 = vadd.f32 %v901, %v828
  %v903 = vadd.f32 %v902, %v831
  %v904 = vadd.f32 %v903, %v836
  %v905 = vadd.f32 %v904, %v839
  %v906 = vadd.f32 %v905, %v844
  %v907 = vadd.f32 %v906, %v847
  %v908 = vadd.f32 %v907, %v852
  %v909 = vadd.f32 %v908, %v855
  %v910 = vadd.f32 %v909, %v860
  %v911 = vadd.f32 %v910, %v863
  %v912 = vadd.f32 %v911, %v868
  %v913 = vadd.f32 %v912, %v871
  %v914 = vadd.f32 %v913, %v876
  %v915 = vadd.f32 %v914, %v879
  %v916 = vrot.slane %v915, 4
  %v917 = vadd.f32 %v915, %v916
  %v918 = vrot.slane %v917, 2
  %v919 = vadd.f32 %v917, %v918
  %v920 = vrot.slane %v919, 1
  %v921 = vadd.f32 %v919, %v920
  %v922 = vadd.f32 %v900, %v921
  %923 = vst [vmem:[#allocation3] sm:$0x1] %v922
  %v924 = vld [vmem:[#allocation4] sm:$0x1]
  %v925 = vmul.f32 %v820, %v820
  %v926 = vmul.f32 %v823, %v823
  %v927 = vmul.f32 %v828, %v828
  %v928 = vmul.f32 %v831, %v831
  %v929 = vmul.f32 %v836, %v836
  %v930 = vmul.f32 %v839, %v839
  %v931 = vmul.f32 %v844, %v844
  %v932 = vmul.f32 %v847, %v847
  %v933 = vmul.f32 %v852, %v852
  %v934 = vmul.f32 %v855, %v855
  %v935 = vmul.f32 %v860, %v860
  %v936 = vmul.f32 %v863, %v863
  %v937 = vmul.f32 %v868, %v868
  %v938 = vmul.f32 %v871, %v871
  %v939 = vmul.f32 %v876, %v876
  %v940 = vmul.f32 %v879, %v879
  %v941 = vadd.f32 %v925, %v926
  %v942 = vadd.f32 %v941, %v927
  %v943 = vadd.f32 %v942, %v928
  %v944 = vadd.f32 %v943, %v929
  %v945 = vadd.f32 %v944, %v930
  %v946 = vadd.f32 %v945, %v931
  %v947 = vadd.f32 %v946, %v932
  %v948 = vadd.f32 %v947, %v933
  %v949 = vadd.f32 %v948, %v934
  %v950 = vadd.f32 %v949, %v935
  %v951 = vadd.f32 %v950, %v936
  %v952 = vadd.f32 %v951, %v937
  %v953 = vadd.f32 %v952, %v938
  %v954 = vadd.f32 %v953, %v939
  %v955 = vadd.f32 %v954, %v940
  %v956 = vrot.slane %v955, 4
  %v957 = vadd.f32 %v955, %v956
  %v958 = vrot.slane %v957, 2
  %v959 = vadd.f32 %v957, %v958
  %v960 = vrot.slane %v959, 1
  %v961 = vadd.f32 %v959, %v960
  %v962 = vadd.f32 %v924, %v961
  %963 = vst [vmem:[#allocation4] sm:$0x1] %v962
  // Predicated region
  $region30: #{generator_forward.7} parent=0 // pred_check
    %p964 = pneg %p24
  $region31: #{generator_forward.7} parent=0 // pred_check_branch
    %966 = sbr.rel (%p964) target = $region33
  $region32: #{generator_forward.7} parent=0 // pred_region
    %v967 = vld [vmem:[#allocation3] sm:$0x1]
    %v968 = vld [vmem:[%s4] sm:$0xff]
    %v969 = vld [vmem:[%s4 + $0x8] sm:$0xff]
    %v970 = vld [vmem:[%s4 + $0x10] sm:$0xff]
    %v971 = vld [vmem:[%s4 + $0x18] sm:$0xff]
    %v972 = vld [vmem:[%s4 + $0x20] sm:$0xff]
    %v973 = vld [vmem:[%s4 + $0x28] sm:$0xff]
    %v974 = vld [vmem:[%s4 + $0x30] sm:$0xff]
    %v975 = vld [vmem:[%s4 + $0x38] sm:$0xff]
    %v976 = vld [vmem:[%s4 + $0x40] sm:$0xff]
    %v977 = vld [vmem:[%s4 + $0x48] sm:$0xff]
    %v978 = vld [vmem:[%s4 + $0x50] sm:$0xff]
    %v979 = vld [vmem:[%s4 + $0x58] sm:$0xff]
    %v980 = vld [vmem:[%s4 + $0x60] sm:$0xff]
    %v981 = vld [vmem:[%s4 + $0x68] sm:$0xff]
    %v982 = vld [vmem:[%s4 + $0x70] sm:$0xff]
    %v983 = vld [vmem:[%s4 + $0x78] sm:$0xff]
    %984 = vmatprep.subr.mxu0 0.0
    %985 = vmatpush1.msra.mxu0 %v983
    %986 = vmatprep.subr.mxu0 0.0
    %987 = vmatpush1.msra.mxu0 %v982
    %988 = vmatprep.subr.mxu0 0.0
    %989 = vmatpush1.msra.mxu0 %v981
    %990 = vmatprep.subr.mxu0 0.0
    %991 = vmatpush1.msra.mxu0 %v980
    %992 = vmatprep.subr.mxu0 0.0
    %993 = vmatpush1.msra.mxu0 %v979
    %994 = vmatprep.subr.mxu0 0.0
    %995 = vmatpush1.msra.mxu0 %v978
    %996 = vmatprep.subr.mxu0 0.0
    %997 = vmatpush1.msra.mxu0 %v977
    %998 = vmatprep.subr.mxu0 0.0
    %999 = vmatpush1.msra.mxu0 %v976
    %1000 = vmatprep.subr.mxu0 0.0
    %1001 = vmatpush1.msra.mxu0 %v975
    %1002 = vmatprep.subr.mxu0 0.0
    %1003 = vmatpush1.msra.mxu0 %v974
    %1004 = vmatprep.subr.mxu0 0.0
    %1005 = vmatpush1.msra.mxu0 %v973
    %1006 = vmatprep.subr.mxu0 0.0
    %1007 = vmatpush1.msra.mxu0 %v972
    %1008 = vmatprep.subr.mxu0 0.0
    %1009 = vmatpush1.msra.mxu0 %v971
    %1010 = vmatprep.subr.mxu0 0.0
    %1011 = vmatpush1.msra.mxu0 %v970
    %1012 = vmatprep.subr.mxu0 0.0
    %1013 = vmatpush1.msra.mxu0 %v969
    %1014 = vmatprep.subr.mxu0 0.0
    %1015 = vmatpush1.msra.mxu0 %v968
    %1016 = vmatprep.subr.mxu0 0.0
    %1017 = vmatpush2.msra.mxu0 0.0
    %1018 = vmatprep.subr.mxu0 0.0
    %1019 = vmatpush2.msra.mxu0 0.0
    %1020 = vmatprep.subr.mxu0 0.0
    %1021 = vmatpush2.msra.mxu0 0.0
    %1022 = vmatprep.subr.mxu0 0.0
    %1023 = vmatpush2.msra.mxu0 0.0
    %1024 = vmatprep.subr.mxu0 0.0
    %1025 = vmatpush2.msra.mxu0 0.0
    %1026 = vmatprep.subr.mxu0 0.0
    %1027 = vmatpush2.msra.mxu0 0.0
    %1028 = vmatprep.subr.mxu0 0.0
    %1029 = vmatpush2.msra.mxu0 0.0
    %1030 = vmatprep.subr.mxu0 0.0
    %1031 = vmatpush2.msra.mxu0 0.0
    %1032 = vmatprep.subr.mxu0 0.0
    %1033 = vmatpush2.msra.mxu0 0.0
    %1034 = vmatprep.subr.mxu0 0.0
    %1035 = vmatpush2.msra.mxu0 0.0
    %1036 = vmatprep.subr.mxu0 0.0
    %1037 = vmatpush2.msra.mxu0 0.0
    %1038 = vmatprep.subr.mxu0 0.0
    %1039 = vmatpush2.msra.mxu0 0.0
    %1040 = vmatprep.subr.mxu0 0.0
    %1041 = vmatpush2.msra.mxu0 0.0
    %1042 = vmatprep.subr.mxu0 0.0
    %1043 = vmatpush2.msra.mxu0 0.0
    %1044 = vmatprep.subr.mxu0 0.0
    %1045 = vmatpush2.msra.mxu0 0.0
    %1046 = vmatprep.subr.mxu0 0.0
    %1047 = vmatpush2.msra.mxu0 0.0
    %1048 = vmatprep.mubr.f32.mxu0 0.0
    %1049 = vmatmul.mubr.f32.gmra.mxu0 %v967
    %v1050 = vpop.f32.mrf.mxu0
    %v1051 = vadd.f32 0.0, %v1050
    %v1052 = vpop.f32.mrf.mxu0
    %1053 = vdwg.mxu0
    %v1054 = vld [vmem:[#allocation4] sm:$0x1]
    %1055 = vmatprep.subr.mxu0 0.0
    %1056 = vmatpush1.msra.mxu0 %v983
    %1057 = vmatprep.subr.mxu0 0.0
    %1058 = vmatpush1.msra.mxu0 %v982
    %1059 = vmatprep.subr.mxu0 0.0
    %1060 = vmatpush1.msra.mxu0 %v981
    %1061 = vmatprep.subr.mxu0 0.0
    %1062 = vmatpush1.msra.mxu0 %v980
    %1063 = vmatprep.subr.mxu0 0.0
    %1064 = vmatpush1.msra.mxu0 %v979
    %1065 = vmatprep.subr.mxu0 0.0
    %1066 = vmatpush1.msra.mxu0 %v978
    %1067 = vmatprep.subr.mxu0 0.0
    %1068 = vmatpush1.msra.mxu0 %v977
    %1069 = vmatprep.subr.mxu0 0.0
    %1070 = vmatpush1.msra.mxu0 %v976
    %1071 = vmatprep.subr.mxu0 0.0
    %1072 = vmatpush1.msra.mxu0 %v975
    %1073 = vmatprep.subr.mxu0 0.0
    %1074 = vmatpush1.msra.mxu0 %v974
    %1075 = vmatprep.subr.mxu0 0.0
    %1076 = vmatpush1.msra.mxu0 %v973
    %1077 = vmatprep.subr.mxu0 0.0
    %1078 = vmatpush1.msra.mxu0 %v972
    %1079 = vmatprep.subr.mxu0 0.0
    %1080 = vmatpush1.msra.mxu0 %v971
    %1081 = vmatprep.subr.mxu0 0.0
    %1082 = vmatpush1.msra.mxu0 %v970
    %1083 = vmatprep.subr.mxu0 0.0
    %1084 = vmatpush1.msra.mxu0 %v969
    %1085 = vmatprep.subr.mxu0 0.0
    %1086 = vmatpush1.msra.mxu0 %v968
    %1087 = vmatprep.subr.mxu0 0.0
    %1088 = vmatpush2.msra.mxu0 0.0
    %1089 = vmatprep.subr.mxu0 0.0
    %1090 = vmatpush2.msra.mxu0 0.0
    %1091 = vmatprep.subr.mxu0 0.0
    %1092 = vmatpush2.msra.mxu0 0.0
    %1093 = vmatprep.subr.mxu0 0.0
    %1094 = vmatpush2.msra.mxu0 0.0
    %1095 = vmatprep.subr.mxu0 0.0
    %1096 = vmatpush2.msra.mxu0 0.0
    %1097 = vmatprep.subr.mxu0 0.0
    %1098 = vmatpush2.msra.mxu0 0.0
    %1099 = vmatprep.subr.mxu0 0.0
    %1100 = vmatpush2.msra.mxu0 0.0
    %1101 = vmatprep.subr.mxu0 0.0
    %1102 = vmatpush2.msra.mxu0 0.0
    %1103 = vmatprep.subr.mxu0 0.0
    %1104 = vmatpush2.msra.mxu0 0.0
    %1105 = vmatprep.subr.mxu0 0.0
    %1106 = vmatpush2.msra.mxu0 0.0
    %1107 = vmatprep.subr.mxu0 0.0
    %1108 = vmatpush2.msra.mxu0 0.0
    %1109 = vmatprep.subr.mxu0 0.0
    %1110 = vmatpush2.msra.mxu0 0.0
    %1111 = vmatprep.subr.mxu0 0.0
    %1112 = vmatpush2.msra.mxu0 0.0
    %1113 = vmatprep.subr.mxu0 0.0
    %1114 = vmatpush2.msra.mxu0 0.0
    %1115 = vmatprep.subr.mxu0 0.0
    %1116 = vmatpush2.msra.mxu0 0.0
    %1117 = vmatprep.subr.mxu0 0.0
    %1118 = vmatpush2.msra.mxu0 0.0
    %1119 = vmatprep.mubr.f32.mxu0 0.0
    %1120 = vmatmul.mubr.f32.gmra.mxu0 %v1054
    %v1121 = vpop.f32.mrf.mxu0
    %v1122 = vadd.f32 0.0, %v1121
    %v1123 = vpop.f32.mrf.mxu0
    %1124 = vdwg.mxu0
    %v1125 = vmul.f32 %v1051, 0.001953125
    %v1126 = vmul.f32 %v1122, 0.001953125
    %v1127 = vmul.f32 %v1125, %v1125
    %v1128 = vsub.f32 %v1126, %v1127
    %v1129 = vmax.f32 %v1128, 0.0
    %v1130 = vld [vmem:[%s2] sm:$0x1]
    %v1131 = vadd.f32 %v1129, 1e-05
    %v1132 = vrsqrt.pop %v1131
    %v1133 = vmul.f32 %v1130, %v1132
    %v1134 = vld [vmem:[%s3] sm:$0x1]
    %v1135 = vmul.f32 %v1125, %v1133
    %v1136 = vsub.f32 %v1134, %v1135
    %v1137 = vld [vmem:[%s5] sm:$0xff]
    %v1138 = vld [vmem:[%s5 + $0x8] sm:$0xff]
    %v1139 = vld [vmem:[%s5 + $0x10] sm:$0xff]
    %v1140 = vld [vmem:[%s5 + $0x18] sm:$0xff]
    %v1141 = vld [vmem:[%s5 + $0x20] sm:$0xff]
    %v1142 = vld [vmem:[%s5 + $0x28] sm:$0xff]
    %v1143 = vld [vmem:[%s5 + $0x30] sm:$0xff]
    %v1144 = vld [vmem:[%s5 + $0x38] sm:$0xff]
    %v1145 = vld [vmem:[%s5 + $0x40] sm:$0xff]
    %v1146 = vld [vmem:[%s5 + $0x48] sm:$0xff]
    %v1147 = vld [vmem:[%s5 + $0x50] sm:$0xff]
    %v1148 = vld [vmem:[%s5 + $0x58] sm:$0xff]
    %v1149 = vld [vmem:[%s5 + $0x60] sm:$0xff]
    %v1150 = vld [vmem:[%s5 + $0x68] sm:$0xff]
    %v1151 = vld [vmem:[%s5 + $0x70] sm:$0xff]
    %v1152 = vld [vmem:[%s5 + $0x78] sm:$0xff]
    %1153 = vmatprep.subr.mxu0 0.0
    %1154 = vmatpush1.msra.mxu0 %v1152
    %1155 = vmatprep.subr.mxu0 0.0
    %1156 = vmatpush1.msra.mxu0 %v1151
    %1157 = vmatprep.subr.mxu0 0.0
    %1158 = vmatpush1.msra.mxu0 %v1150
    %1159 = vmatprep.subr.mxu0 0.0
    %1160 = vmatpush1.msra.mxu0 %v1149
    %1161 = vmatprep.subr.mxu0 0.0
    %1162 = vmatpush1.msra.mxu0 %v1148
    %1163 = vmatprep.subr.mxu0 0.0
    %1164 = vmatpush1.msra.mxu0 %v1147
    %1165 = vmatprep.subr.mxu0 0.0
    %1166 = vmatpush1.msra.mxu0 %v1146
    %1167 = vmatprep.subr.mxu0 0.0
    %1168 = vmatpush1.msra.mxu0 %v1145
    %1169 = vmatprep.subr.mxu0 0.0
    %1170 = vmatpush1.msra.mxu0 %v1144
    %1171 = vmatprep.subr.mxu0 0.0
    %1172 = vmatpush1.msra.mxu0 %v1143
    %1173 = vmatprep.subr.mxu0 0.0
    %1174 = vmatpush1.msra.mxu0 %v1142
    %1175 = vmatprep.subr.mxu0 0.0
    %1176 = vmatpush1.msra.mxu0 %v1141
    %1177 = vmatprep.subr.mxu0 0.0
    %1178 = vmatpush1.msra.mxu0 %v1140
    %1179 = vmatprep.subr.mxu0 0.0
    %1180 = vmatpush1.msra.mxu0 %v1139
    %1181 = vmatprep.subr.mxu0 0.0
    %1182 = vmatpush1.msra.mxu0 %v1138
    %1183 = vmatprep.subr.mxu0 0.0
    %1184 = vmatpush1.msra.mxu0 %v1137
    %1185 = vmatprep.subr.mxu0 0.0
    %1186 = vmatpush2.msra.mxu0 0.0
    %1187 = vmatprep.subr.mxu0 0.0
    %1188 = vmatpush2.msra.mxu0 0.0
    %1189 = vmatprep.subr.mxu0 0.0
    %1190 = vmatpush2.msra.mxu0 0.0
    %1191 = vmatprep.subr.mxu0 0.0
    %1192 = vmatpush2.msra.mxu0 0.0
    %1193 = vmatprep.subr.mxu0 0.0
    %1194 = vmatpush2.msra.mxu0 0.0
    %1195 = vmatprep.subr.mxu0 0.0
    %1196 = vmatpush2.msra.mxu0 0.0
    %1197 = vmatprep.subr.mxu0 0.0
    %1198 = vmatpush2.msra.mxu0 0.0
    %1199 = vmatprep.subr.mxu0 0.0
    %1200 = vmatpush2.msra.mxu0 0.0
    %1201 = vmatprep.subr.mxu0 0.0
    %1202 = vmatpush2.msra.mxu0 0.0
    %1203 = vmatprep.subr.mxu0 0.0
    %1204 = vmatpush2.msra.mxu0 0.0
    %1205 = vmatprep.subr.mxu0 0.0
    %1206 = vmatpush2.msra.mxu0 0.0
    %1207 = vmatprep.subr.mxu0 0.0
    %1208 = vmatpush2.msra.mxu0 0.0
    %1209 = vmatprep.subr.mxu0 0.0
    %1210 = vmatpush2.msra.mxu0 0.0
    %1211 = vmatprep.subr.mxu0 0.0
    %1212 = vmatpush2.msra.mxu0 0.0
    %1213 = vmatprep.subr.mxu0 0.0
    %1214 = vmatpush2.msra.mxu0 0.0
    %1215 = vmatprep.subr.mxu0 0.0
    %1216 = vmatpush2.msra.mxu0 0.0
    %1217 = vmatprep.mubr.f32.mxu0 0.0
    %1218 = vmatmul.mubr.f32.gmra.mxu0 %v1133
    %v1219 = vpop.f32.mrf.mxu0
    %v1220 = vadd.f32 0.0, %v1219
    %v1221 = vpop.f32.mrf.mxu0
    %1222 = vdwg.mxu0
    %1223 = vmatprep.subr.mxu0 0.0
    %1224 = vmatpush1.msra.mxu0 %v1152
    %1225 = vmatprep.subr.mxu0 0.0
    %1226 = vmatpush1.msra.mxu0 %v1151
    %1227 = vmatprep.subr.mxu0 0.0
    %1228 = vmatpush1.msra.mxu0 %v1150
    %1229 = vmatprep.subr.mxu0 0.0
    %1230 = vmatpush1.msra.mxu0 %v1149
    %1231 = vmatprep.subr.mxu0 0.0
    %1232 = vmatpush1.msra.mxu0 %v1148
    %1233 = vmatprep.subr.mxu0 0.0
    %1234 = vmatpush1.msra.mxu0 %v1147
    %1235 = vmatprep.subr.mxu0 0.0
    %1236 = vmatpush1.msra.mxu0 %v1146
    %1237 = vmatprep.subr.mxu0 0.0
    %1238 = vmatpush1.msra.mxu0 %v1145
    %1239 = vmatprep.subr.mxu0 0.0
    %1240 = vmatpush1.msra.mxu0 %v1144
    %1241 = vmatprep.subr.mxu0 0.0
    %1242 = vmatpush1.msra.mxu0 %v1143
    %1243 = vmatprep.subr.mxu0 0.0
    %1244 = vmatpush1.msra.mxu0 %v1142
    %1245 = vmatprep.subr.mxu0 0.0
    %1246 = vmatpush1.msra.mxu0 %v1141
    %1247 = vmatprep.subr.mxu0 0.0
    %1248 = vmatpush1.msra.mxu0 %v1140
    %1249 = vmatprep.subr.mxu0 0.0
    %1250 = vmatpush1.msra.mxu0 %v1139
    %1251 = vmatprep.subr.mxu0 0.0
    %1252 = vmatpush1.msra.mxu0 %v1138
    %1253 = vmatprep.subr.mxu0 0.0
    %1254 = vmatpush1.msra.mxu0 %v1137
    %1255 = vmatprep.subr.mxu0 0.0
    %1256 = vmatpush2.msra.mxu0 0.0
    %1257 = vmatprep.subr.mxu0 0.0
    %1258 = vmatpush2.msra.mxu0 0.0
    %1259 = vmatprep.subr.mxu0 0.0
    %1260 = vmatpush2.msra.mxu0 0.0
    %1261 = vmatprep.subr.mxu0 0.0
    %1262 = vmatpush2.msra.mxu0 0.0
    %1263 = vmatprep.subr.mxu0 0.0
    %1264 = vmatpush2.msra.mxu0 0.0
    %1265 = vmatprep.subr.mxu0 0.0
    %1266 = vmatpush2.msra.mxu0 0.0
    %1267 = vmatprep.subr.mxu0 0.0
    %1268 = vmatpush2.msra.mxu0 0.0
    %1269 = vmatprep.subr.mxu0 0.0
    %1270 = vmatpush2.msra.mxu0 0.0
    %1271 = vmatprep.subr.mxu0 0.0
    %1272 = vmatpush2.msra.mxu0 0.0
    %1273 = vmatprep.subr.mxu0 0.0
    %1274 = vmatpush2.msra.mxu0 0.0
    %1275 = vmatprep.subr.mxu0 0.0
    %1276 = vmatpush2.msra.mxu0 0.0
    %1277 = vmatprep.subr.mxu0 0.0
    %1278 = vmatpush2.msra.mxu0 0.0
    %1279 = vmatprep.subr.mxu0 0.0
    %1280 = vmatpush2.msra.mxu0 0.0
    %1281 = vmatprep.subr.mxu0 0.0
    %1282 = vmatpush2.msra.mxu0 0.0
    %1283 = vmatprep.subr.mxu0 0.0
    %1284 = vmatpush2.msra.mxu0 0.0
    %1285 = vmatprep.subr.mxu0 0.0
    %1286 = vmatpush2.msra.mxu0 0.0
    %1287 = vmatprep.mubr.f32.mxu0 0.0
    %1288 = vmatmul.mubr.f32.gmra.mxu0 %v1136
    %v1289 = vpop.f32.mrf.mxu0
    %v1290 = vadd.f32 0.0, %v1289
    %v1291 = vpop.f32.mrf.mxu0
    %1292 = vdwg.mxu0
    %v1293 = vld [vmem:[#allocation2] sm:$0xff]
    %v1294 = vld [vmem:[#allocation2 + $0x8] sm:$0xff]
    %v1295 = vld [vmem:[#allocation2 + $0x10] sm:$0xff]
    %v1296 = vld [vmem:[#allocation2 + $0x18] sm:$0xff]
    %v1297 = vld [vmem:[#allocation2 + $0x20] sm:$0xff]
    %v1298 = vld [vmem:[#allocation2 + $0x28] sm:$0xff]
    %v1299 = vld [vmem:[#allocation2 + $0x30] sm:$0xff]
    %v1300 = vld [vmem:[#allocation2 + $0x38] sm:$0xff]
    %v1301 = vld [vmem:[#allocation2 + $0x40] sm:$0xff]
    %v1302 = vld [vmem:[#allocation2 + $0x48] sm:$0xff]
    %v1303 = vld [vmem:[#allocation2 + $0x50] sm:$0xff]
    %v1304 = vld [vmem:[#allocation2 + $0x58] sm:$0xff]
    %v1305 = vld [vmem:[#allocation2 + $0x60] sm:$0xff]
    %v1306 = vld [vmem:[#allocation2 + $0x68] sm:$0xff]
    %v1307 = vld [vmem:[#allocation2 + $0x70] sm:$0xff]
    %v1308 = vld [vmem:[#allocation2 + $0x78] sm:$0xff]
    %v1309 = vlaneseq
    %v1310 = vshrl.u32 %v1309, 7
    %v1311 = vsub.s32 0, %v1310
    %v1312 = vrot.slane %v1220, %v1311
    %v1313 = vmul.f32 %v1293, %v1312
    %v1314 = vmul.f32 %v1294, %v1312
    %v1315 = vmul.f32 %v1295, %v1312
    %v1316 = vmul.f32 %v1296, %v1312
    %v1317 = vmul.f32 %v1297, %v1312
    %v1318 = vmul.f32 %v1298, %v1312
    %v1319 = vmul.f32 %v1299, %v1312
    %v1320 = vmul.f32 %v1300, %v1312
    %v1321 = vmul.f32 %v1301, %v1312
    %v1322 = vmul.f32 %v1302, %v1312
    %v1323 = vmul.f32 %v1303, %v1312
    %v1324 = vmul.f32 %v1304, %v1312
    %v1325 = vmul.f32 %v1305, %v1312
    %v1326 = vmul.f32 %v1306, %v1312
    %v1327 = vmul.f32 %v1307, %v1312
    %v1328 = vmul.f32 %v1308, %v1312
    %v1329 = vlaneseq
    %v1330 = vshrl.u32 %v1329, 7
    %v1331 = vsub.s32 0, %v1330
    %v1332 = vrot.slane %v1290, %v1331
    %v1333 = vadd.f32 %v1313, %v1332
    %v1334 = vadd.f32 %v1314, %v1332
    %v1335 = vadd.f32 %v1315, %v1332
    %v1336 = vadd.f32 %v1316, %v1332
    %v1337 = vadd.f32 %v1317, %v1332
    %v1338 = vadd.f32 %v1318, %v1332
    %v1339 = vadd.f32 %v1319, %v1332
    %v1340 = vadd.f32 %v1320, %v1332
    %v1341 = vadd.f32 %v1321, %v1332
    %v1342 = vadd.f32 %v1322, %v1332
    %v1343 = vadd.f32 %v1323, %v1332
    %v1344 = vadd.f32 %v1324, %v1332
    %v1345 = vadd.f32 %v1325, %v1332
    %v1346 = vadd.f32 %v1326, %v1332
    %v1347 = vadd.f32 %v1327, %v1332
    %v1348 = vadd.f32 %v1328, %v1332
    %vm1349 = vcmp.ge.f32.partialorder %v1333, 0.0
    %vm1350 = vcmp.ge.f32.partialorder %v1334, 0.0
    %vm1351 = vcmp.ge.f32.partialorder %v1335, 0.0
    %vm1352 = vcmp.ge.f32.partialorder %v1336, 0.0
    %vm1353 = vcmp.ge.f32.partialorder %v1337, 0.0
    %vm1354 = vcmp.ge.f32.partialorder %v1338, 0.0
    %vm1355 = vcmp.ge.f32.partialorder %v1339, 0.0
    %vm1356 = vcmp.ge.f32.partialorder %v1340, 0.0
    %vm1357 = vcmp.ge.f32.partialorder %v1341, 0.0
    %vm1358 = vcmp.ge.f32.partialorder %v1342, 0.0
    %vm1359 = vcmp.ge.f32.partialorder %v1343, 0.0
    %vm1360 = vcmp.ge.f32.partialorder %v1344, 0.0
    %vm1361 = vcmp.ge.f32.partialorder %v1345, 0.0
    %vm1362 = vcmp.ge.f32.partialorder %v1346, 0.0
    %vm1363 = vcmp.ge.f32.partialorder %v1347, 0.0
    %vm1364 = vcmp.ge.f32.partialorder %v1348, 0.0
    %v1365 = vmul.f32 %v1333, 0.2
    %v1366 = vmul.f32 %v1334, 0.2
    %v1367 = vmul.f32 %v1335, 0.2
    %v1368 = vmul.f32 %v1336, 0.2
    %v1369 = vmul.f32 %v1337, 0.2
    %v1370 = vmul.f32 %v1338, 0.2
    %v1371 = vmul.f32 %v1339, 0.2
    %v1372 = vmul.f32 %v1340, 0.2
    %v1373 = vmul.f32 %v1341, 0.2
    %v1374 = vmul.f32 %v1342, 0.2
    %v1375 = vmul.f32 %v1343, 0.2
    %v1376 = vmul.f32 %v1344, 0.2
    %v1377 = vmul.f32 %v1345, 0.2
    %v1378 = vmul.f32 %v1346, 0.2
    %v1379 = vmul.f32 %v1347, 0.2
    %v1380 = vmul.f32 %v1348, 0.2
    %v1381 = vsel %vm1349, %v1333, %v1365
    %v1382 = vsel %vm1350, %v1334, %v1366
    %v1383 = vsel %vm1351, %v1335, %v1367
    %v1384 = vsel %vm1352, %v1336, %v1368
    %v1385 = vsel %vm1353, %v1337, %v1369
    %v1386 = vsel %vm1354, %v1338, %v1370
    %v1387 = vsel %vm1355, %v1339, %v1371
    %v1388 = vsel %vm1356, %v1340, %v1372
    %v1389 = vsel %vm1357, %v1341, %v1373
    %v1390 = vsel %vm1358, %v1342, %v1374
    %v1391 = vsel %vm1359, %v1343, %v1375
    %v1392 = vsel %vm1360, %v1344, %v1376
    %v1393 = vsel %vm1361, %v1345, %v1377
    %v1394 = vsel %vm1362, %v1346, %v1378
    %v1395 = vsel %vm1363, %v1347, %v1379
    %v1396 = vsel %vm1364, %v1348, %v1380
    %v1397 = vpack.c.bf16 %v1382, %v1381
    %v1398 = vpack.c.bf16 %v1384, %v1383
    %v1399 = vpack.c.bf16 %v1386, %v1385
    %v1400 = vpack.c.bf16 %v1388, %v1387
    %v1401 = vpack.c.bf16 %v1390, %v1389
    %v1402 = vpack.c.bf16 %v1392, %v1391
    %v1403 = vpack.c.bf16 %v1394, %v1393
    %v1404 = vpack.c.bf16 %v1396, %v1395
    %v1413 = vunpack.c.l.b16 %v1397
    %v1414 = vunpack.c.h.b16 %v1397
    %v1415 = vunpack.c.l.b16 %v1398
    %v1416 = vunpack.c.h.b16 %v1398
    %v1417 = vunpack.c.l.b16 %v1399
    %v1418 = vunpack.c.h.b16 %v1399
    %v1419 = vunpack.c.l.b16 %v1400
    %v1420 = vunpack.c.h.b16 %v1400
    %v1421 = vunpack.c.l.b16 %v1401
    %v1422 = vunpack.c.h.b16 %v1401
    %v1423 = vunpack.c.l.b16 %v1402
    %v1424 = vunpack.c.h.b16 %v1402
    %v1425 = vunpack.c.l.b16 %v1403
    %v1426 = vunpack.c.h.b16 %v1403
    %v1427 = vunpack.c.l.b16 %v1404
    %v1428 = vunpack.c.h.b16 %v1404
    %v1429 = vpack.c.b16 %v1413, %v1413
    %v1430 = vpack.c.b16 %v1414, %v1414
    %v1431 = vpack.c.b16 %v1415, %v1415
    %v1432 = vpack.c.b16 %v1416, %v1416
    %v1433 = vpack.c.b16 %v1417, %v1417
    %v1434 = vpack.c.b16 %v1418, %v1418
    %v1435 = vpack.c.b16 %v1419, %v1419
    %v1436 = vpack.c.b16 %v1420, %v1420
    %v1437 = vpack.c.b16 %v1421, %v1421
    %v1438 = vpack.c.b16 %v1422, %v1422
    %v1439 = vpack.c.b16 %v1423, %v1423
    %v1440 = vpack.c.b16 %v1424, %v1424
    %v1441 = vpack.c.b16 %v1425, %v1425
    %v1442 = vpack.c.b16 %v1426, %v1426
    %v1443 = vpack.c.b16 %v1427, %v1427
    %v1444 = vpack.c.b16 %v1428, %v1428
    %1461 = vst [vmem:[%s6] sm:$0xf] %v1429
    %1462 = vst [vmem:[%s6 + $0x4] sm:$0xf] %v1430
    %1463 = vst [vmem:[%s6 + $0x8] sm:$0xf] %v1431
    %1464 = vst [vmem:[%s6 + $0xc] sm:$0xf] %v1432
    %1465 = vst [vmem:[%s6 + $0x10] sm:$0xf] %v1433
    %1466 = vst [vmem:[%s6 + $0x14] sm:$0xf] %v1434
    %1467 = vst [vmem:[%s6 + $0x18] sm:$0xf] %v1435
    %1468 = vst [vmem:[%s6 + $0x1c] sm:$0xf] %v1436
    %1469 = vst [vmem:[%s6 + $0x20] sm:$0xf] %v1437
    %1470 = vst [vmem:[%s6 + $0x24] sm:$0xf] %v1438
    %1471 = vst [vmem:[%s6 + $0x28] sm:$0xf] %v1439
    %1472 = vst [vmem:[%s6 + $0x2c] sm:$0xf] %v1440
    %1473 = vst [vmem:[%s6 + $0x30] sm:$0xf] %v1441
    %1474 = vst [vmem:[%s6 + $0x34] sm:$0xf] %v1442
    %1475 = vst [vmem:[%s6 + $0x38] sm:$0xf] %v1443
    %1476 = vst [vmem:[%s6 + $0x3c] sm:$0xf] %v1444
  $region33: #{generator_forward.7} parent=0 // pred_fallthru
    _
  // Predicated region
  $region34: #{generator_forward.7} parent=0 // pred_check
    _
  $region35: #{generator_forward.7} parent=0 // pred_check_branch
    %1478 = sbr.rel (0) target = $region37
  $region36: #{generator_forward.7} parent=0 // pred_region
    _
  $region37: #{generator_forward.7} parent=0 // pred_fallthru
    _
  // Predicated region
  $region38: #{generator_forward.7} parent=0 // pred_check
    _
  $region39: #{generator_forward.7} parent=0 // pred_check_branch
    %1480 = sbr.rel (0) target = $region41
  $region40: #{generator_forward.7} parent=0 // pred_region
    _
  $region41: #{generator_forward.7} parent=0 // pred_fallthru
    _

// kernel: generator_forward.8
$region0: #{generator_forward.8}
  #allocation0 [shape = 'u32[]', space=smem, size = 0x4, offset = 0x4, fixed_abs, tag = 'smem constant byte address 0x4 - core index']
  #allocation1 [shape = 'u32[144,128]{1,0:T(1,128)}', space=vmem, size = 0x12000, scoped, tag = 'internal scratch']
  #allocation2 [shape = 'f32[512,128]{1,0:T(8,128)}', space=vmem, size = 0x40000, scoped, tag = 'scratch operand']
  #allocation3 [shape = 'f32[1,128]{1,0:T(1,128)}', space=vmem, size = 0x200, scoped, tag = 'scratch operand']
  #allocation4 [shape = 'f32[1,128]{1,0:T(1,128)}', space=vmem, size = 0x200, scoped, tag = 'scratch operand']
  %s0 = inlined_call_operand.vmem [shape: bf16[512,288], index: 0, kind: input, shape index: {}]
  %s1 = inlined_call_operand.vmem [shape: bf16[288,128], index: 1, kind: input, shape index: {}]
  %s2 = inlined_call_operand.vmem [shape: f32[1,128], index: 2, kind: input, shape index: {}]
  %s3 = inlined_call_operand.vmem [shape: f32[1,128], index: 3, kind: input, shape index: {}]
  %s4 = inlined_call_operand.vmem [shape: f32[128,128], index: 4, kind: input, shape index: {}]
  %s5 = inlined_call_operand.vmem [shape: f32[128,128], index: 5, kind: input, shape index: {}]
  %s6 = inlined_call_operand.vmem [shape: bf16[512,128], index: 6, kind: output, shape index: {}]
  %s7 = sld [smem:[#allocation0]]
  $region42: #{generator_forward.8} parent=0
    _
  %s9 = ssub.s32 1, %s7
  %s10 = scalar_select 0, %s9, %s7
  // Predicated region
  $region2: #{generator_forward.8} parent=0 // pred_check
    _
  $region3: #{generator_forward.8} parent=0 // pred_check_branch
    %12 = sbr.rel (0) target = $region5
  $region4: #{generator_forward.8} parent=0 // pred_region
    _
  $region5: #{generator_forward.8} parent=0 // pred_fallthru
    _
  // Predicated region
  $region6: #{generator_forward.8} parent=0 // pred_check
    _
  $region7: #{generator_forward.8} parent=0 // pred_check_branch
    %14 = sbr.rel (0) target = $region9
  $region8: #{generator_forward.8} parent=0 // pred_region
    _
  $region9: #{generator_forward.8} parent=0 // pred_fallthru
    _
  // Predicated region
  $region10: #{generator_forward.8} parent=0 // pred_check
    _
  $region11: #{generator_forward.8} parent=0 // pred_check_branch
    %16 = sbr.rel (0) target = $region13
  $region12: #{generator_forward.8} parent=0 // pred_region
    _
  $region13: #{generator_forward.8} parent=0 // pred_fallthru
    _
  // Predicated region
  $region14: #{generator_forward.8} parent=0 // pred_check
    _
  $region15: #{generator_forward.8} parent=0 // pred_check_branch
    %18 = sbr.rel (0) target = $region17
  $region16: #{generator_forward.8} parent=0 // pred_region
    _
  $region17: #{generator_forward.8} parent=0 // pred_fallthru
    _
  // Predicated region
  $region18: #{generator_forward.8} parent=0 // pred_check
    _
  $region19: #{generator_forward.8} parent=0 // pred_check_branch
    %20 = sbr.rel (0) target = $region21
  $region20: #{generator_forward.8} parent=0 // pred_region
    _
  $region21: #{generator_forward.8} parent=0 // pred_fallthru
    _
  // Predicated region
  $region22: #{generator_forward.8} parent=0 // pred_check
    _
  $region23: #{generator_forward.8} parent=0 // pred_check_branch
    %22 = sbr.rel (0) target = $region25
  $region24: #{generator_forward.8} parent=0 // pred_region
    _
  $region25: #{generator_forward.8} parent=0 // pred_fallthru
    _
  %p24 = scmp.eq.s32.totalorder 0, 0
  // Predicated region
  $region26: #{generator_forward.8} parent=0 // pred_check
    %p25 = pneg %p24
  $region27: #{generator_forward.8} parent=0 // pred_check_branch
    %27 = sbr.rel (%p25) target = $region29
  $region28: #{generator_forward.8} parent=0 // pred_region
    %28 = vst [vmem:[#allocation3] sm:$0x1] 0.0
    %29 = vst [vmem:[#allocation4] sm:$0x1] 0.0
  $region29: #{generator_forward.8} parent=0 // pred_fallthru
    _
  %v30 = vld [vmem:[%s0] sm:$0xff]
  %v31 = vld [vmem:[%s0 + $0x8] sm:$0xf]
  %v32 = vld [vmem:[%s0 + $0xc] sm:$0xff]
  %v33 = vld [vmem:[%s0 + $0x14] sm:$0xf]
  %v34 = vld [vmem:[%s0 + $0x18] sm:$0xff]
  %v35 = vld [vmem:[%s0 + $0x20] sm:$0xf]
  %v36 = vld [vmem:[%s0 + $0x24] sm:$0xff]
  %v37 = vld [vmem:[%s0 + $0x2c] sm:$0xf]
  %v38 = vld [vmem:[%s0 + $0x30] sm:$0xff]
  %v39 = vld [vmem:[%s0 + $0x38] sm:$0xf]
  %v40 = vld [vmem:[%s0 + $0x3c] sm:$0xff]
  %v41 = vld [vmem:[%s0 + $0x44] sm:$0xf]
  %v42 = vld [vmem:[%s0 + $0x48] sm:$0xff]
  %v43 = vld [vmem:[%s0 + $0x50] sm:$0xf]
  %v44 = vld [vmem:[%s0 + $0x54] sm:$0xff]
  %v45 = vld [vmem:[%s0 + $0x5c] sm:$0xf]
  %v46 = vld [vmem:[%s0 + $0x60] sm:$0xff]
  %v47 = vld [vmem:[%s0 + $0x68] sm:$0xf]
  %v48 = vld [vmem:[%s0 + $0x6c] sm:$0xff]
  %v49 = vld [vmem:[%s0 + $0x74] sm:$0xf]
  %v50 = vld [vmem:[%s0 + $0x78] sm:$0xff]
  %v51 = vld [vmem:[%s0 + $0x80] sm:$0xf]
  %v52 = vld [vmem:[%s0 + $0x84] sm:$0xff]
  %v53 = vld [vmem:[%s0 + $0x8c] sm:$0xf]
  %v54 = vld [vmem:[%s0 + $0x90] sm:$0xff]
  %v55 = vld [vmem:[%s0 + $0x98] sm:$0xf]
  %v56 = vld [vmem:[%s0 + $0x9c] sm:$0xff]
  %v57 = vld [vmem:[%s0 + $0xa4] sm:$0xf]
  %v58 = vld [vmem:[%s0 + $0xa8] sm:$0xff]
  %v59 = vld [vmem:[%s0 + $0xb0] sm:$0xf]
  %v60 = vld [vmem:[%s0 + $0xb4] sm:$0xff]
  %v61 = vld [vmem:[%s0 + $0xbc] sm:$0xf]
  %v62 = vld [vmem:[%s0 + $0xc0] sm:$0xff]
  %v63 = vld [vmem:[%s0 + $0xc8] sm:$0xf]
  %v64 = vld [vmem:[%s0 + $0xcc] sm:$0xff]
  %v65 = vld [vmem:[%s0 + $0xd4] sm:$0xf]
  %v66 = vld [vmem:[%s0 + $0xd8] sm:$0xff]
  %v67 = vld [vmem:[%s0 + $0xe0] sm:$0xf]
  %v68 = vld [vmem:[%s0 + $0xe4] sm:$0xff]
  %v69 = vld [vmem:[%s0 + $0xec] sm:$0xf]
  %v70 = vld [vmem:[%s0 + $0xf0] sm:$0xff]
  %v71 = vld [vmem:[%s0 + $0xf8] sm:$0xf]
  %v72 = vld [vmem:[%s0 + $0xfc] sm:$0xff]
  %v73 = vld [vmem:[%s0 + $0x104] sm:$0xf]
  %v74 = vld [vmem:[%s0 + $0x108] sm:$0xff]
  %v75 = vld [vmem:[%s0 + $0x110] sm:$0xf]
  %v76 = vld [vmem:[%s0 + $0x114] sm:$0xff]
  %v77 = vld [vmem:[%s0 + $0x11c] sm:$0xf]
  %v78 = vld [vmem:[%s0 + $0x120] sm:$0xff]
  %v79 = vld [vmem:[%s0 + $0x128] sm:$0xf]
  %v80 = vld [vmem:[%s0 + $0x12c] sm:$0xff]
  %v81 = vld [vmem:[%s0 + $0x134] sm:$0xf]
  %v82 = vld [vmem:[%s0 + $0x138] sm:$0xff]
  %v83 = vld [vmem:[%s0 + $0x140] sm:$0xf]
  %v84 = vld [vmem:[%s0 + $0x144] sm:$0xff]
  %v85 = vld [vmem:[%s0 + $0x14c] sm:$0xf]
  %v86 = vld [vmem:[%s0 + $0x150] sm:$0xff]
  %v87 = vld [vmem:[%s0 + $0x158] sm:$0xf]
  %v88 = vld [vmem:[%s0 + $0x15c] sm:$0xff]
  %v89 = vld [vmem:[%s0 + $0x164] sm:$0xf]
  %v90 = vld [vmem:[%s0 + $0x168] sm:$0xff]
  %v91 = vld [vmem:[%s0 + $0x170] sm:$0xf]
  %v92 = vld [vmem:[%s0 + $0x174] sm:$0xff]
  %v93 = vld [vmem:[%s0 + $0x17c] sm:$0xf]
  %v94 = vld [vmem:[%s0 + $0x180] sm:$0xff]
  %v95 = vld [vmem:[%s0 + $0x188] sm:$0xf]
  %v96 = vld [vmem:[%s0 + $0x18c] sm:$0xff]
  %v97 = vld [vmem:[%s0 + $0x194] sm:$0xf]
  %v98 = vld [vmem:[%s0 + $0x198] sm:$0xff]
  %v99 = vld [vmem:[%s0 + $0x1a0] sm:$0xf]
  %v100 = vld [vmem:[%s0 + $0x1a4] sm:$0xff]
  %v101 = vld [vmem:[%s0 + $0x1ac] sm:$0xf]
  %v102 = vld [vmem:[%s0 + $0x1b0] sm:$0xff]
  %v103 = vld [vmem:[%s0 + $0x1b8] sm:$0xf]
  %v104 = vld [vmem:[%s0 + $0x1bc] sm:$0xff]
  %v105 = vld [vmem:[%s0 + $0x1c4] sm:$0xf]
  %v106 = vld [vmem:[%s0 + $0x1c8] sm:$0xff]
  %v107 = vld [vmem:[%s0 + $0x1d0] sm:$0xf]
  %v108 = vld [vmem:[%s0 + $0x1d4] sm:$0xff]
  %v109 = vld [vmem:[%s0 + $0x1dc] sm:$0xf]
  %v110 = vld [vmem:[%s0 + $0x1e0] sm:$0xff]
  %v111 = vld [vmem:[%s0 + $0x1e8] sm:$0xf]
  %v112 = vld [vmem:[%s0 + $0x1ec] sm:$0xff]
  %v113 = vld [vmem:[%s0 + $0x1f4] sm:$0xf]
  %v114 = vld [vmem:[%s0 + $0x1f8] sm:$0xff]
  %v115 = vld [vmem:[%s0 + $0x200] sm:$0xf]
  %v116 = vld [vmem:[%s0 + $0x204] sm:$0xff]
  %v117 = vld [vmem:[%s0 + $0x20c] sm:$0xf]
  %v118 = vld [vmem:[%s0 + $0x210] sm:$0xff]
  %v119 = vld [vmem:[%s0 + $0x218] sm:$0xf]
  %v120 = vld [vmem:[%s0 + $0x21c] sm:$0xff]
  %v121 = vld [vmem:[%s0 + $0x224] sm:$0xf]
  %v122 = vld [vmem:[%s0 + $0x228] sm:$0xff]
  %v123 = vld [vmem:[%s0 + $0x230] sm:$0xf]
  %v124 = vld [vmem:[%s0 + $0x234] sm:$0xff]
  %v125 = vld [vmem:[%s0 + $0x23c] sm:$0xf]
  %v126 = vld [vmem:[%s0 + $0x240] sm:$0xff]
  %v127 = vld [vmem:[%s0 + $0x248] sm:$0xf]
  %v128 = vld [vmem:[%s0 + $0x24c] sm:$0xff]
  %v129 = vld [vmem:[%s0 + $0x254] sm:$0xf]
  %v130 = vld [vmem:[%s0 + $0x258] sm:$0xff]
  %v131 = vld [vmem:[%s0 + $0x260] sm:$0xf]
  %v132 = vld [vmem:[%s0 + $0x264] sm:$0xff]
  %v133 = vld [vmem:[%s0 + $0x26c] sm:$0xf]
  %v134 = vld [vmem:[%s0 + $0x270] sm:$0xff]
  %v135 = vld [vmem:[%s0 + $0x278] sm:$0xf]
  %v136 = vld [vmem:[%s0 + $0x27c] sm:$0xff]
  %v137 = vld [vmem:[%s0 + $0x284] sm:$0xf]
  %v138 = vld [vmem:[%s0 + $0x288] sm:$0xff]
  %v139 = vld [vmem:[%s0 + $0x290] sm:$0xf]
  %v140 = vld [vmem:[%s0 + $0x294] sm:$0xff]
  %v141 = vld [vmem:[%s0 + $0x29c] sm:$0xf]
  %v142 = vld [vmem:[%s0 + $0x2a0] sm:$0xff]
  %v143 = vld [vmem:[%s0 + $0x2a8] sm:$0xf]
  %v144 = vld [vmem:[%s0 + $0x2ac] sm:$0xff]
  %v145 = vld [vmem:[%s0 + $0x2b4] sm:$0xf]
  %v146 = vld [vmem:[%s0 + $0x2b8] sm:$0xff]
  %v147 = vld [vmem:[%s0 + $0x2c0] sm:$0xf]
  %v148 = vld [vmem:[%s0 + $0x2c4] sm:$0xff]
  %v149 = vld [vmem:[%s0 + $0x2cc] sm:$0xf]
  %v150 = vld [vmem:[%s0 + $0x2d0] sm:$0xff]
  %v151 = vld [vmem:[%s0 + $0x2d8] sm:$0xf]
  %v152 = vld [vmem:[%s0 + $0x2dc] sm:$0xff]
  %v153 = vld [vmem:[%s0 + $0x2e4] sm:$0xf]
  %v154 = vld [vmem:[%s0 + $0x2e8] sm:$0xff]
  %v155 = vld [vmem:[%s0 + $0x2f0] sm:$0xf]
  %v156 = vld [vmem:[%s0 + $0x2f4] sm:$0xff]
  %v157 = vld [vmem:[%s0 + $0x2fc] sm:$0xf]
  %v158 = vld [vmem:[%s1] sm:$0xf]
  %v159 = vld [vmem:[%s1 + $0x4] sm:$0xf]
  %v160 = vld [vmem:[%s1 + $0x8] sm:$0xf]
  %v161 = vld [vmem:[%s1 + $0xc] sm:$0xf]
  %v162 = vld [vmem:[%s1 + $0x10] sm:$0xf]
  %v163 = vld [vmem:[%s1 + $0x14] sm:$0xf]
  %v164 = vld [vmem:[%s1 + $0x18] sm:$0xf]
  %v165 = vld [vmem:[%s1 + $0x1c] sm:$0xf]
  %v166 = vld [vmem:[%s1 + $0x20] sm:$0xf]
  %v167 = vld [vmem:[%s1 + $0x24] sm:$0xf]
  %v168 = vld [vmem:[%s1 + $0x28] sm:$0xf]
  %v169 = vld [vmem:[%s1 + $0x2c] sm:$0xf]
  %v170 = vld [vmem:[%s1 + $0x30] sm:$0xf]
  %v171 = vld [vmem:[%s1 + $0x34] sm:$0xf]
  %v172 = vld [vmem:[%s1 + $0x38] sm:$0xf]
  %v173 = vld [vmem:[%s1 + $0x3c] sm:$0xf]
  %v174 = vld [vmem:[%s1 + $0x40] sm:$0xf]
  %v175 = vld [vmem:[%s1 + $0x44] sm:$0xf]
  %v176 = vld [vmem:[%s1 + $0x48] sm:$0xf]
  %v177 = vld [vmem:[%s1 + $0x4c] sm:$0xf]
  %v178 = vld [vmem:[%s1 + $0x50] sm:$0xf]
  %v179 = vld [vmem:[%s1 + $0x54] sm:$0xf]
  %v180 = vld [vmem:[%s1 + $0x58] sm:$0xf]
  %v181 = vld [vmem:[%s1 + $0x5c] sm:$0xf]
  %v182 = vld [vmem:[%s1 + $0x60] sm:$0xf]
  %v183 = vld [vmem:[%s1 + $0x64] sm:$0xf]
  %v184 = vld [vmem:[%s1 + $0x68] sm:$0xf]
  %v185 = vld [vmem:[%s1 + $0x6c] sm:$0xf]
  %v186 = vld [vmem:[%s1 + $0x70] sm:$0xf]
  %v187 = vld [vmem:[%s1 + $0x74] sm:$0xf]
  %v188 = vld [vmem:[%s1 + $0x78] sm:$0xf]
  %v189 = vld [vmem:[%s1 + $0x7c] sm:$0xf]
  %v190 = vld [vmem:[%s1 + $0x80] sm:$0xf]
  %v191 = vld [vmem:[%s1 + $0x84] sm:$0xf]
  %v192 = vld [vmem:[%s1 + $0x88] sm:$0xf]
  %v193 = vld [vmem:[%s1 + $0x8c] sm:$0xf]
  %v322 = vunpack.c.l.b16 %v30
  %v323 = vunpack.c.h.b16 %v30
  %v324 = vunpack.c.l.b16 %v31
  %v325 = vunpack.c.l.b16 %v32
  %v326 = vunpack.c.h.b16 %v32
  %v327 = vunpack.c.l.b16 %v33
  %v328 = vunpack.c.l.b16 %v34
  %v329 = vunpack.c.h.b16 %v34
  %v330 = vunpack.c.l.b16 %v35
  %v331 = vunpack.c.l.b16 %v36
  %v332 = vunpack.c.h.b16 %v36
  %v333 = vunpack.c.l.b16 %v37
  %v334 = vunpack.c.l.b16 %v38
  %v335 = vunpack.c.h.b16 %v38
  %v336 = vunpack.c.l.b16 %v39
  %v337 = vunpack.c.l.b16 %v40
  %v338 = vunpack.c.h.b16 %v40
  %v339 = vunpack.c.l.b16 %v41
  %v340 = vunpack.c.l.b16 %v42
  %v341 = vunpack.c.h.b16 %v42
  %v342 = vunpack.c.l.b16 %v43
  %v343 = vunpack.c.l.b16 %v44
  %v344 = vunpack.c.h.b16 %v44
  %v345 = vunpack.c.l.b16 %v45
  %v346 = vunpack.c.l.b16 %v46
  %v347 = vunpack.c.h.b16 %v46
  %v348 = vunpack.c.l.b16 %v47
  %v349 = vunpack.c.l.b16 %v48
  %v350 = vunpack.c.h.b16 %v48
  %v351 = vunpack.c.l.b16 %v49
  %v352 = vunpack.c.l.b16 %v50
  %v353 = vunpack.c.h.b16 %v50
  %v354 = vunpack.c.l.b16 %v51
  %v355 = vunpack.c.l.b16 %v52
  %v356 = vunpack.c.h.b16 %v52
  %v357 = vunpack.c.l.b16 %v53
  %v358 = vunpack.c.l.b16 %v54
  %v359 = vunpack.c.h.b16 %v54
  %v360 = vunpack.c.l.b16 %v55
  %v361 = vunpack.c.l.b16 %v56
  %v362 = vunpack.c.h.b16 %v56
  %v363 = vunpack.c.l.b16 %v57
  %v364 = vunpack.c.l.b16 %v58
  %v365 = vunpack.c.h.b16 %v58
  %v366 = vunpack.c.l.b16 %v59
  %v367 = vunpack.c.l.b16 %v60
  %v368 = vunpack.c.h.b16 %v60
  %v369 = vunpack.c.l.b16 %v61
  %v370 = vunpack.c.l.b16 %v62
  %v371 = vunpack.c.h.b16 %v62
  %v372 = vunpack.c.l.b16 %v63
  %v373 = vunpack.c.l.b16 %v64
  %v374 = vunpack.c.h.b16 %v64
  %v375 = vunpack.c.l.b16 %v65
  %v376 = vunpack.c.l.b16 %v66
  %v377 = vunpack.c.h.b16 %v66
  %v378 = vunpack.c.l.b16 %v67
  %v379 = vunpack.c.l.b16 %v68
  %v380 = vunpack.c.h.b16 %v68
  %v381 = vunpack.c.l.b16 %v69
  %v382 = vunpack.c.l.b16 %v70
  %v383 = vunpack.c.h.b16 %v70
  %v384 = vunpack.c.l.b16 %v71
  %v385 = vunpack.c.l.b16 %v72
  %v386 = vunpack.c.h.b16 %v72
  %v387 = vunpack.c.l.b16 %v73
  %v388 = vunpack.c.l.b16 %v74
  %v389 = vunpack.c.h.b16 %v74
  %v390 = vunpack.c.l.b16 %v75
  %v391 = vunpack.c.l.b16 %v76
  %v392 = vunpack.c.h.b16 %v76
  %v393 = vunpack.c.l.b16 %v77
  %v394 = vunpack.c.l.b16 %v78
  %v395 = vunpack.c.h.b16 %v78
  %v396 = vunpack.c.l.b16 %v79
  %v397 = vunpack.c.l.b16 %v80
  %v398 = vunpack.c.h.b16 %v80
  %v399 = vunpack.c.l.b16 %v81
  %v400 = vunpack.c.l.b16 %v82
  %v401 = vunpack.c.h.b16 %v82
  %v402 = vunpack.c.l.b16 %v83
  %v403 = vunpack.c.l.b16 %v84
  %v404 = vunpack.c.h.b16 %v84
  %v405 = vunpack.c.l.b16 %v85
  %v406 = vunpack.c.l.b16 %v86
  %v407 = vunpack.c.h.b16 %v86
  %v408 = vunpack.c.l.b16 %v87
  %v409 = vunpack.c.l.b16 %v88
  %v410 = vunpack.c.h.b16 %v88
  %v411 = vunpack.c.l.b16 %v89
  %v412 = vunpack.c.l.b16 %v90
  %v413 = vunpack.c.h.b16 %v90
  %v414 = vunpack.c.l.b16 %v91
  %v415 = vunpack.c.l.b16 %v92
  %v416 = vunpack.c.h.b16 %v92
  %v417 = vunpack.c.l.b16 %v93
  %v418 = vunpack.c.l.b16 %v94
  %v419 = vunpack.c.h.b16 %v94
  %v420 = vunpack.c.l.b16 %v95
  %v421 = vunpack.c.l.b16 %v96
  %v422 = vunpack.c.h.b16 %v96
  %v423 = vunpack.c.l.b16 %v97
  %v424 = vunpack.c.l.b16 %v98
  %v425 = vunpack.c.h.b16 %v98
  %v426 = vunpack.c.l.b16 %v99
  %v427 = vunpack.c.l.b16 %v100
  %v428 = vunpack.c.h.b16 %v100
  %v429 = vunpack.c.l.b16 %v101
  %v430 = vunpack.c.l.b16 %v102
  %v431 = vunpack.c.h.b16 %v102
  %v432 = vunpack.c.l.b16 %v103
  %v433 = vunpack.c.l.b16 %v104
  %v434 = vunpack.c.h.b16 %v104
  %v435 = vunpack.c.l.b16 %v105
  %v436 = vunpack.c.l.b16 %v106
  %v437 = vunpack.c.h.b16 %v106
  %v438 = vunpack.c.l.b16 %v107
  %v439 = vunpack.c.l.b16 %v108
  %v440 = vunpack.c.h.b16 %v108
  %v441 = vunpack.c.l.b16 %v109
  %v442 = vunpack.c.l.b16 %v110
  %v443 = vunpack.c.h.b16 %v110
  %v444 = vunpack.c.l.b16 %v111
  %v445 = vunpack.c.l.b16 %v112
  %v446 = vunpack.c.h.b16 %v112
  %v447 = vunpack.c.l.b16 %v113
  %v448 = vunpack.c.l.b16 %v114
  %v449 = vunpack.c.h.b16 %v114
  %v450 = vunpack.c.l.b16 %v115
  %v451 = vunpack.c.l.b16 %v116
  %v452 = vunpack.c.h.b16 %v116
  %v453 = vunpack.c.l.b16 %v117
  %v454 = vunpack.c.l.b16 %v118
  %v455 = vunpack.c.h.b16 %v118
  %v456 = vunpack.c.l.b16 %v119
  %v457 = vunpack.c.l.b16 %v120
  %v458 = vunpack.c.h.b16 %v120
  %v459 = vunpack.c.l.b16 %v121
  %v460 = vunpack.c.l.b16 %v122
  %v461 = vunpack.c.h.b16 %v122
  %v462 = vunpack.c.l.b16 %v123
  %v463 = vunpack.c.l.b16 %v124
  %v464 = vunpack.c.h.b16 %v124
  %v465 = vunpack.c.l.b16 %v125
  %v466 = vunpack.c.l.b16 %v126
  %v467 = vunpack.c.h.b16 %v126
  %v468 = vunpack.c.l.b16 %v127
  %v469 = vunpack.c.l.b16 %v128
  %v470 = vunpack.c.h.b16 %v128
  %v471 = vunpack.c.l.b16 %v129
  %v472 = vunpack.c.l.b16 %v130
  %v473 = vunpack.c.h.b16 %v130
  %v474 = vunpack.c.l.b16 %v131
  %v475 = vunpack.c.l.b16 %v132
  %v476 = vunpack.c.h.b16 %v132
  %v477 = vunpack.c.l.b16 %v133
  %v478 = vunpack.c.l.b16 %v134
  %v479 = vunpack.c.h.b16 %v134
  %v480 = vunpack.c.l.b16 %v135
  %v481 = vunpack.c.l.b16 %v136
  %v482 = vunpack.c.h.b16 %v136
  %v483 = vunpack.c.l.b16 %v137
  %v484 = vunpack.c.l.b16 %v138
  %v485 = vunpack.c.h.b16 %v138
  %v486 = vunpack.c.l.b16 %v139
  %v487 = vunpack.c.l.b16 %v140
  %v488 = vunpack.c.h.b16 %v140
  %v489 = vunpack.c.l.b16 %v141
  %v490 = vunpack.c.l.b16 %v142
  %v491 = vunpack.c.h.b16 %v142
  %v492 = vunpack.c.l.b16 %v143
  %v493 = vunpack.c.l.b16 %v144
  %v494 = vunpack.c.h.b16 %v144
  %v495 = vunpack.c.l.b16 %v145
  %v496 = vunpack.c.l.b16 %v146
  %v497 = vunpack.c.h.b16 %v146
  %v498 = vunpack.c.l.b16 %v147
  %v499 = vunpack.c.l.b16 %v148
  %v500 = vunpack.c.h.b16 %v148
  %v501 = vunpack.c.l.b16 %v149
  %v502 = vunpack.c.l.b16 %v150
  %v503 = vunpack.c.h.b16 %v150
  %v504 = vunpack.c.l.b16 %v151
  %v505 = vunpack.c.l.b16 %v152
  %v506 = vunpack.c.h.b16 %v152
  %v507 = vunpack.c.l.b16 %v153
  %v508 = vunpack.c.l.b16 %v154
  %v509 = vunpack.c.h.b16 %v154
  %v510 = vunpack.c.l.b16 %v155
  %v511 = vunpack.c.l.b16 %v156
  %v512 = vunpack.c.h.b16 %v156
  %v513 = vunpack.c.l.b16 %v157
  %v514 = vpack.c.b16 %v325, %v322
  %v515 = vpack.c.b16 %v326, %v323
  %v516 = vpack.c.b16 %v327, %v324
  %v517 = vpack.c.b16 %v331, %v328
  %v518 = vpack.c.b16 %v332, %v329
  %v519 = vpack.c.b16 %v333, %v330
  %v520 = vpack.c.b16 %v337, %v334
  %v521 = vpack.c.b16 %v338, %v335
  %v522 = vpack.c.b16 %v339, %v336
  %v523 = vpack.c.b16 %v343, %v340
  %v524 = vpack.c.b16 %v344, %v341
  %v525 = vpack.c.b16 %v345, %v342
  %v526 = vpack.c.b16 %v349, %v346
  %v527 = vpack.c.b16 %v350, %v347
  %v528 = vpack.c.b16 %v351, %v348
  %v529 = vpack.c.b16 %v355, %v352
  %v530 = vpack.c.b16 %v356, %v353
  %v531 = vpack.c.b16 %v357, %v354
  %v532 = vpack.c.b16 %v361, %v358
  %v533 = vpack.c.b16 %v362, %v359
  %v534 = vpack.c.b16 %v363, %v360
  %v535 = vpack.c.b16 %v367, %v364
  %v536 = vpack.c.b16 %v368, %v365
  %v537 = vpack.c.b16 %v369, %v366
  %v538 = vpack.c.b16 %v373, %v370
  %v539 = vpack.c.b16 %v374, %v371
  %v540 = vpack.c.b16 %v375, %v372
  %v541 = vpack.c.b16 %v379, %v376
  %v542 = vpack.c.b16 %v380, %v377
  %v543 = vpack.c.b16 %v381, %v378
  %v544 = vpack.c.b16 %v385, %v382
  %v545 = vpack.c.b16 %v386, %v383
  %v546 = vpack.c.b16 %v387, %v384
  %v547 = vpack.c.b16 %v391, %v388
  %v548 = vpack.c.b16 %v392, %v389
  %v549 = vpack.c.b16 %v393, %v390
  %v550 = vpack.c.b16 %v397, %v394
  %v551 = vpack.c.b16 %v398, %v395
  %v552 = vpack.c.b16 %v399, %v396
  %v553 = vpack.c.b16 %v403, %v400
  %v554 = vpack.c.b16 %v404, %v401
  %v555 = vpack.c.b16 %v405, %v402
  %v556 = vpack.c.b16 %v409, %v406
  %v557 = vpack.c.b16 %v410, %v407
  %v558 = vpack.c.b16 %v411, %v408
  %v559 = vpack.c.b16 %v415, %v412
  %v560 = vpack.c.b16 %v416, %v413
  %v561 = vpack.c.b16 %v417, %v414
  %v562 = vpack.c.b16 %v421, %v418
  %v563 = vpack.c.b16 %v422, %v419
  %v564 = vpack.c.b16 %v423, %v420
  %v565 = vpack.c.b16 %v427, %v424
  %v566 = vpack.c.b16 %v428, %v425
  %v567 = vpack.c.b16 %v429, %v426
  %v568 = vpack.c.b16 %v433, %v430
  %v569 = vpack.c.b16 %v434, %v431
  %v570 = vpack.c.b16 %v435, %v432
  %v571 = vpack.c.b16 %v439, %v436
  %v572 = vpack.c.b16 %v440, %v437
  %v573 = vpack.c.b16 %v441, %v438
  %v574 = vpack.c.b16 %v445, %v442
  %v575 = vpack.c.b16 %v446, %v443
  %v576 = vpack.c.b16 %v447, %v444
  %v577 = vpack.c.b16 %v451, %v448
  %v578 = vpack.c.b16 %v452, %v449
  %v579 = vpack.c.b16 %v453, %v450
  %v580 = vpack.c.b16 %v457, %v454
  %v581 = vpack.c.b16 %v458, %v455
  %v582 = vpack.c.b16 %v459, %v456
  %v583 = vpack.c.b16 %v463, %v460
  %v584 = vpack.c.b16 %v464, %v461
  %v585 = vpack.c.b16 %v465, %v462
  %v586 = vpack.c.b16 %v469, %v466
  %v587 = vpack.c.b16 %v470, %v467
  %v588 = vpack.c.b16 %v471, %v468
  %v589 = vpack.c.b16 %v475, %v472
  %v590 = vpack.c.b16 %v476, %v473
  %v591 = vpack.c.b16 %v477, %v474
  %v592 = vpack.c.b16 %v481, %v478
  %v593 = vpack.c.b16 %v482, %v479
  %v594 = vpack.c.b16 %v483, %v480
  %v595 = vpack.c.b16 %v487, %v484
  %v596 = vpack.c.b16 %v488, %v485
  %v597 = vpack.c.b16 %v489, %v486
  %v598 = vpack.c.b16 %v493, %v490
  %v599 = vpack.c.b16 %v494, %v491
  %v600 = vpack.c.b16 %v495, %v492
  %v601 = vpack.c.b16 %v499, %v496
  %v602 = vpack.c.b16 %v500, %v497
  %v603 = vpack.c.b16 %v501, %v498
  %v604 = vpack.c.b16 %v505, %v502
  %v605 = vpack.c.b16 %v506, %v503
  %v606 = vpack.c.b16 %v507, %v504
  %v607 = vpack.c.b16 %v511, %v508
  %v608 = vpack.c.b16 %v512, %v509
  %v609 = vpack.c.b16 %v513, %v510
  %v710 = vunpack.c.l.b16 %v158
  %v711 = vunpack.c.l.b16 %v159
  %v712 = vunpack.c.l.b16 %v160
  %v713 = vunpack.c.l.b16 %v161
  %v714 = vunpack.c.l.b16 %v162
  %v715 = vunpack.c.l.b16 %v163
  %v716 = vunpack.c.l.b16 %v164
  %v717 = vunpack.c.l.b16 %v165
  %v718 = vunpack.c.l.b16 %v166
  %v719 = vunpack.c.l.b16 %v167
  %v720 = vunpack.c.l.b16 %v168
  %v721 = vunpack.c.l.b16 %v169
  %v722 = vunpack.c.l.b16 %v170
  %v723 = vunpack.c.l.b16 %v171
  %v724 = vunpack.c.l.b16 %v172
  %v725 = vunpack.c.l.b16 %v173
  %v726 = vunpack.c.l.b16 %v174
  %v727 = vunpack.c.l.b16 %v175
  %v728 = vunpack.c.l.b16 %v176
  %v729 = vunpack.c.l.b16 %v177
  %v730 = vunpack.c.l.b16 %v178
  %v731 = vunpack.c.l.b16 %v179
  %v732 = vunpack.c.l.b16 %v180
  %v733 = vunpack.c.l.b16 %v181
  %v734 = vunpack.c.l.b16 %v182
  %v735 = vunpack.c.l.b16 %v183
  %v736 = vunpack.c.l.b16 %v184
  %v737 = vunpack.c.l.b16 %v185
  %v738 = vunpack.c.l.b16 %v186
  %v739 = vunpack.c.l.b16 %v187
  %v740 = vunpack.c.l.b16 %v188
  %v741 = vunpack.c.l.b16 %v189
  %v742 = vunpack.c.l.b16 %v190
  %v743 = vunpack.c.l.b16 %v191
  %v744 = vunpack.c.l.b16 %v192
  %v745 = vunpack.c.l.b16 %v193
  %v746 = vpack.c.b16 %v711, %v710
  %v747 = vpack.c.b16 %v713, %v712
  %v748 = vpack.c.b16 %v715, %v714
  %v749 = vpack.c.b16 %v717, %v716
  %v750 = vpack.c.b16 %v719, %v718
  %v751 = vpack.c.b16 %v721, %v720
  %v752 = vpack.c.b16 %v723, %v722
  %v753 = vpack.c.b16 %v725, %v724
  %v754 = vpack.c.b16 %v727, %v726
  %v755 = vpack.c.b16 %v729, %v728
  %v756 = vpack.c.b16 %v731, %v730
  %v757 = vpack.c.b16 %v733, %v732
  %v758 = vpack.c.b16 %v735, %v734
  %v759 = vpack.c.b16 %v737, %v736
  %v760 = vpack.c.b16 %v739, %v738
  %v761 = vpack.c.b16 %v741, %v740
  %v762 = vpack.c.b16 %v743, %v742
  %v763 = vpack.c.b16 %v745, %v744
  %vm782 = vcmask 261120
  %v784 = vsel %vm782, %v516, 0
  %v787 = vsel %vm782, %v519, 0
  %v790 = vsel %vm782, %v522, 0
  %v793 = vsel %vm782, %v525, 0
  %v796 = vsel %vm782, %v528, 0
  %v799 = vsel %vm782, %v531, 0
  %v802 = vsel %vm782, %v534, 0
  %v805 = vsel %vm782, %v537, 0
  %v808 = vsel %vm782, %v540, 0
  %v811 = vsel %vm782, %v543, 0
  %v814 = vsel %vm782, %v546, 0
  %v817 = vsel %vm782, %v549, 0
  %v820 = vsel %vm782, %v552, 0
  %v823 = vsel %vm782, %v555, 0
  %v826 = vsel %vm782, %v558, 0
  %v829 = vsel %vm782, %v561, 0
  %v832 = vsel %vm782, %v564, 0
  %v835 = vsel %vm782, %v567, 0
  %v838 = vsel %vm782, %v570, 0
  %v841 = vsel %vm782, %v573, 0
  %v844 = vsel %vm782, %v576, 0
  %v847 = vsel %vm782, %v579, 0
  %v850 = vsel %vm782, %v582, 0
  %v853 = vsel %vm782, %v585, 0
  %v856 = vsel %vm782, %v588, 0
  %v859 = vsel %vm782, %v591, 0
  %v862 = vsel %vm782, %v594, 0
  %v865 = vsel %vm782, %v597, 0
  %v868 = vsel %vm782, %v600, 0
  %v871 = vsel %vm782, %v603, 0
  %v874 = vsel %vm782, %v606, 0
  %v877 = vsel %vm782, %v609, 0
  %879 = vmatprep.subr.bf16.mxu0 0
  %880 = vmatpush1.bf16.msra.mxu0 %v753
  %881 = vmatprep.subr.bf16.mxu0 0
  %882 = vmatpush1.bf16.msra.mxu0 %v752
  %883 = vmatprep.subr.bf16.mxu0 0
  %884 = vmatpush1.bf16.msra.mxu0 %v751
  %885 = vmatprep.subr.bf16.mxu0 0
  %886 = vmatpush1.bf16.msra.mxu0 %v750
  %887 = vmatprep.subr.bf16.mxu0 0
  %888 = vmatpush1.bf16.msra.mxu0 %v749
  %889 = vmatprep.subr.bf16.mxu0 0
  %890 = vmatpush1.bf16.msra.mxu0 %v748
  %891 = vmatprep.subr.bf16.mxu0 0
  %892 = vmatpush1.bf16.msra.mxu0 %v747
  %893 = vmatprep.subr.bf16.mxu0 0
  %894 = vmatpush1.bf16.msra.mxu0 %v746
  %895 = vmatprep.subr.bf16.mxu0 0
  %896 = vmatpush2.bf16.msra.mxu0 %v761
  %897 = vmatprep.subr.bf16.mxu0 0
  %898 = vmatpush2.bf16.msra.mxu0 %v760
  %899 = vmatprep.subr.bf16.mxu0 0
  %900 = vmatpush2.bf16.msra.mxu0 %v759
  %901 = vmatprep.subr.bf16.mxu0 0
  %902 = vmatpush2.bf16.msra.mxu0 %v758
  %903 = vmatprep.subr.bf16.mxu0 0
  %904 = vmatpush2.bf16.msra.mxu0 %v757
  %905 = vmatprep.subr.bf16.mxu0 0
  %906 = vmatpush2.bf16.msra.mxu0 %v756
  %907 = vmatprep.subr.bf16.mxu0 0
  %908 = vmatpush2.bf16.msra.mxu0 %v755
  %909 = vmatprep.subr.bf16.mxu0 0
  %910 = vmatpush2.bf16.msra.mxu0 %v754
  %911 = vmatprep.mubr.bf16.mxu0 %v515
  %912 = vmatmul.mubr.bf16.gmra.mxu0 %v514
  %v913 = vpop.f32.mrf.mxu0
  %v914 = vadd.f32 0.0, %v913
  %v915 = vpop.f32.mrf.mxu0
  %v916 = vpop.f32.mrf.mxu0
  %v917 = vadd.f32 0.0, %v916
  %v918 = vpop.f32.mrf.mxu0
  %919 = vmatprep.mubr.bf16.mxu0 %v518
  %920 = vmatmul.mubr.bf16.gmra.mxu0 %v517
  %v921 = vpop.f32.mrf.mxu0
  %v922 = vadd.f32 0.0, %v921
  %v923 = vpop.f32.mrf.mxu0
  %v924 = vpop.f32.mrf.mxu0
  %v925 = vadd.f32 0.0, %v924
  %v926 = vpop.f32.mrf.mxu0
  %927 = vmatprep.mubr.bf16.mxu0 %v521
  %928 = vmatmul.mubr.bf16.gmra.mxu0 %v520
  %v929 = vpop.f32.mrf.mxu0
  %v930 = vadd.f32 0.0, %v929
  %v931 = vpop.f32.mrf.mxu0
  %v932 = vpop.f32.mrf.mxu0
  %v933 = vadd.f32 0.0, %v932
  %v934 = vpop.f32.mrf.mxu0
  %935 = vmatprep.mubr.bf16.mxu0 %v524
  %936 = vmatmul.mubr.bf16.gmra.mxu0 %v523
  %v937 = vpop.f32.mrf.mxu0
  %v938 = vadd.f32 0.0, %v937
  %v939 = vpop.f32.mrf.mxu0
  %v940 = vpop.f32.mrf.mxu0
  %v941 = vadd.f32 0.0, %v940
  %v942 = vpop.f32.mrf.mxu0
  %943 = vmatprep.mubr.bf16.mxu0 %v527
  %944 = vmatmul.mubr.bf16.gmra.mxu0 %v526
  %v945 = vpop.f32.mrf.mxu0
  %v946 = vadd.f32 0.0, %v945
  %v947 = vpop.f32.mrf.mxu0
  %v948 = vpop.f32.mrf.mxu0
  %v949 = vadd.f32 0.0, %v948
  %v950 = vpop.f32.mrf.mxu0
  %951 = vmatprep.mubr.bf16.mxu0 %v530
  %952 = vmatmul.mubr.bf16.gmra.mxu0 %v529
  %v953 = vpop.f32.mrf.mxu0
  %v954 = vadd.f32 0.0, %v953
  %v955 = vpop.f32.mrf.mxu0
  %v956 = vpop.f32.mrf.mxu0
  %v957 = vadd.f32 0.0, %v956
  %v958 = vpop.f32.mrf.mxu0
  %959 = vmatprep.mubr.bf16.mxu0 %v533
  %960 = vmatmul.mubr.bf16.gmra.mxu0 %v532
  %v961 = vpop.f32.mrf.mxu0
  %v962 = vadd.f32 0.0, %v961
  %v963 = vpop.f32.mrf.mxu0
  %v964 = vpop.f32.mrf.mxu0
  %v965 = vadd.f32 0.0, %v964
  %v966 = vpop.f32.mrf.mxu0
  %967 = vmatprep.mubr.bf16.mxu0 %v536
  %968 = vmatmul.mubr.bf16.gmra.mxu0 %v535
  %v969 = vpop.f32.mrf.mxu0
  %v970 = vadd.f32 0.0, %v969
  %v971 = vpop.f32.mrf.mxu0
  %v972 = vpop.f32.mrf.mxu0
  %v973 = vadd.f32 0.0, %v972
  %v974 = vpop.f32.mrf.mxu0
  %975 = vmatprep.mubr.bf16.mxu0 %v539
  %976 = vmatmul.mubr.bf16.gmra.mxu0 %v538
  %v977 = vpop.f32.mrf.mxu0
  %v978 = vadd.f32 0.0, %v977
  %v979 = vpop.f32.mrf.mxu0
  %v980 = vpop.f32.mrf.mxu0
  %v981 = vadd.f32 0.0, %v980
  %v982 = vpop.f32.mrf.mxu0
  %983 = vmatprep.mubr.bf16.mxu0 %v542
  %984 = vmatmul.mubr.bf16.gmra.mxu0 %v541
  %v985 = vpop.f32.mrf.mxu0
  %v986 = vadd.f32 0.0, %v985
  %v987 = vpop.f32.mrf.mxu0
  %v988 = vpop.f32.mrf.mxu0
  %v989 = vadd.f32 0.0, %v988
  %v990 = vpop.f32.mrf.mxu0
  %991 = vmatprep.mubr.bf16.mxu0 %v545
  %992 = vmatmul.mubr.bf16.gmra.mxu0 %v544
  %v993 = vpop.f32.mrf.mxu0
  %v994 = vadd.f32 0.0, %v993
  %v995 = vpop.f32.mrf.mxu0
  %v996 = vpop.f32.mrf.mxu0
  %v997 = vadd.f32 0.0, %v996
  %v998 = vpop.f32.mrf.mxu0
  %999 = vmatprep.mubr.bf16.mxu0 %v548
  %1000 = vmatmul.mubr.bf16.gmra.mxu0 %v547
  %v1001 = vpop.f32.mrf.mxu0
  %v1002 = vadd.f32 0.0, %v1001
  %v1003 = vpop.f32.mrf.mxu0
  %v1004 = vpop.f32.mrf.mxu0
  %v1005 = vadd.f32 0.0, %v1004
  %v1006 = vpop.f32.mrf.mxu0
  %1007 = vmatprep.mubr.bf16.mxu0 %v551
  %1008 = vmatmul.mubr.bf16.gmra.mxu0 %v550
  %v1009 = vpop.f32.mrf.mxu0
  %v1010 = vadd.f32 0.0, %v1009
  %v1011 = vpop.f32.mrf.mxu0
  %v1012 = vpop.f32.mrf.mxu0
  %v1013 = vadd.f32 0.0, %v1012
  %v1014 = vpop.f32.mrf.mxu0
  %1015 = vmatprep.mubr.bf16.mxu0 %v554
  %1016 = vmatmul.mubr.bf16.gmra.mxu0 %v553
  %v1017 = vpop.f32.mrf.mxu0
  %v1018 = vadd.f32 0.0, %v1017
  %v1019 = vpop.f32.mrf.mxu0
  %v1020 = vpop.f32.mrf.mxu0
  %v1021 = vadd.f32 0.0, %v1020
  %v1022 = vpop.f32.mrf.mxu0
  %1023 = vmatprep.mubr.bf16.mxu0 %v557
  %1024 = vmatmul.mubr.bf16.gmra.mxu0 %v556
  %v1025 = vpop.f32.mrf.mxu0
  %v1026 = vadd.f32 0.0, %v1025
  %v1027 = vpop.f32.mrf.mxu0
  %v1028 = vpop.f32.mrf.mxu0
  %v1029 = vadd.f32 0.0, %v1028
  %v1030 = vpop.f32.mrf.mxu0
  %1031 = vmatprep.mubr.bf16.mxu0 %v560
  %1032 = vmatmul.mubr.bf16.gmra.mxu0 %v559
  %v1033 = vpop.f32.mrf.mxu0
  %v1034 = vadd.f32 0.0, %v1033
  %v1035 = vpop.f32.mrf.mxu0
  %v1036 = vpop.f32.mrf.mxu0
  %v1037 = vadd.f32 0.0, %v1036
  %v1038 = vpop.f32.mrf.mxu0
  %1039 = vmatprep.mubr.bf16.mxu0 %v563
  %1040 = vmatmul.mubr.bf16.gmra.mxu0 %v562
  %v1041 = vpop.f32.mrf.mxu0
  %v1042 = vadd.f32 0.0, %v1041
  %v1043 = vpop.f32.mrf.mxu0
  %v1044 = vpop.f32.mrf.mxu0
  %v1045 = vadd.f32 0.0, %v1044
  %v1046 = vpop.f32.mrf.mxu0
  %1047 = vmatprep.mubr.bf16.mxu0 %v566
  %1048 = vmatmul.mubr.bf16.gmra.mxu0 %v565
  %v1049 = vpop.f32.mrf.mxu0
  %v1050 = vadd.f32 0.0, %v1049
  %v1051 = vpop.f32.mrf.mxu0
  %v1052 = vpop.f32.mrf.mxu0
  %v1053 = vadd.f32 0.0, %v1052
  %v1054 = vpop.f32.mrf.mxu0
  %1055 = vmatprep.mubr.bf16.mxu0 %v569
  %1056 = vmatmul.mubr.bf16.gmra.mxu0 %v568
  %v1057 = vpop.f32.mrf.mxu0
  %v1058 = vadd.f32 0.0, %v1057
  %v1059 = vpop.f32.mrf.mxu0
  %v1060 = vpop.f32.mrf.mxu0
  %v1061 = vadd.f32 0.0, %v1060
  %v1062 = vpop.f32.mrf.mxu0
  %1063 = vmatprep.mubr.bf16.mxu0 %v572
  %1064 = vmatmul.mubr.bf16.gmra.mxu0 %v571
  %v1065 = vpop.f32.mrf.mxu0
  %v1066 = vadd.f32 0.0, %v1065
  %v1067 = vpop.f32.mrf.mxu0
  %v1068 = vpop.f32.mrf.mxu0
  %v1069 = vadd.f32 0.0, %v1068
  %v1070 = vpop.f32.mrf.mxu0
  %1071 = vmatprep.mubr.bf16.mxu0 %v575
  %1072 = vmatmul.mubr.bf16.gmra.mxu0 %v574
  %v1073 = vpop.f32.mrf.mxu0
  %v1074 = vadd.f32 0.0, %v1073
  %v1075 = vpop.f32.mrf.mxu0
  %v1076 = vpop.f32.mrf.mxu0
  %v1077 = vadd.f32 0.0, %v1076
  %v1078 = vpop.f32.mrf.mxu0
  %1079 = vmatprep.mubr.bf16.mxu0 %v578
  %1080 = vmatmul.mubr.bf16.gmra.mxu0 %v577
  %v1081 = vpop.f32.mrf.mxu0
  %v1082 = vadd.f32 0.0, %v1081
  %v1083 = vpop.f32.mrf.mxu0
  %v1084 = vpop.f32.mrf.mxu0
  %v1085 = vadd.f32 0.0, %v1084
  %v1086 = vpop.f32.mrf.mxu0
  %1087 = vmatprep.mubr.bf16.mxu0 %v581
  %1088 = vmatmul.mubr.bf16.gmra.mxu0 %v580
  %v1089 = vpop.f32.mrf.mxu0
  %v1090 = vadd.f32 0.0, %v1089
  %v1091 = vpop.f32.mrf.mxu0
  %v1092 = vpop.f32.mrf.mxu0
  %v1093 = vadd.f32 0.0, %v1092
  %v1094 = vpop.f32.mrf.mxu0
  %1095 = vmatprep.mubr.bf16.mxu0 %v584
  %1096 = vmatmul.mubr.bf16.gmra.mxu0 %v583
  %v1097 = vpop.f32.mrf.mxu0
  %v1098 = vadd.f32 0.0, %v1097
  %v1099 = vpop.f32.mrf.mxu0
  %v1100 = vpop.f32.mrf.mxu0
  %v1101 = vadd.f32 0.0, %v1100
  %v1102 = vpop.f32.mrf.mxu0
  %1103 = vmatprep.mubr.bf16.mxu0 %v587
  %1104 = vmatmul.mubr.bf16.gmra.mxu0 %v586
  %v1105 = vpop.f32.mrf.mxu0
  %v1106 = vadd.f32 0.0, %v1105
  %v1107 = vpop.f32.mrf.mxu0
  %v1108 = vpop.f32.mrf.mxu0
  %v1109 = vadd.f32 0.0, %v1108
  %v1110 = vpop.f32.mrf.mxu0
  %1111 = vmatprep.mubr.bf16.mxu0 %v590
  %1112 = vmatmul.mubr.bf16.gmra.mxu0 %v589
  %v1113 = vpop.f32.mrf.mxu0
  %v1114 = vadd.f32 0.0, %v1113
  %v1115 = vpop.f32.mrf.mxu0
  %v1116 = vpop.f32.mrf.mxu0
  %v1117 = vadd.f32 0.0, %v1116
  %v1118 = vpop.f32.mrf.mxu0
  %1119 = vmatprep.mubr.bf16.mxu0 %v593
  %1120 = vmatmul.mubr.bf16.gmra.mxu0 %v592
  %v1121 = vpop.f32.mrf.mxu0
  %v1122 = vadd.f32 0.0, %v1121
  %v1123 = vpop.f32.mrf.mxu0
  %v1124 = vpop.f32.mrf.mxu0
  %v1125 = vadd.f32 0.0, %v1124
  %v1126 = vpop.f32.mrf.mxu0
  %1127 = vmatprep.mubr.bf16.mxu0 %v596
  %1128 = vmatmul.mubr.bf16.gmra.mxu0 %v595
  %v1129 = vpop.f32.mrf.mxu0
  %v1130 = vadd.f32 0.0, %v1129
  %v1131 = vpop.f32.mrf.mxu0
  %v1132 = vpop.f32.mrf.mxu0
  %v1133 = vadd.f32 0.0, %v1132
  %v1134 = vpop.f32.mrf.mxu0
  %1135 = vmatprep.mubr.bf16.mxu0 %v599
  %1136 = vmatmul.mubr.bf16.gmra.mxu0 %v598
  %v1137 = vpop.f32.mrf.mxu0
  %v1138 = vadd.f32 0.0, %v1137
  %v1139 = vpop.f32.mrf.mxu0
  %v1140 = vpop.f32.mrf.mxu0
  %v1141 = vadd.f32 0.0, %v1140
  %v1142 = vpop.f32.mrf.mxu0
  %1143 = vmatprep.mubr.bf16.mxu0 %v602
  %1144 = vmatmul.mubr.bf16.gmra.mxu0 %v601
  %v1145 = vpop.f32.mrf.mxu0
  %v1146 = vadd.f32 0.0, %v1145
  %v1147 = vpop.f32.mrf.mxu0
  %v1148 = vpop.f32.mrf.mxu0
  %v1149 = vadd.f32 0.0, %v1148
  %v1150 = vpop.f32.mrf.mxu0
  %1151 = vmatprep.mubr.bf16.mxu0 %v605
  %1152 = vmatmul.mubr.bf16.gmra.mxu0 %v604
  %v1153 = vpop.f32.mrf.mxu0
  %v1154 = vadd.f32 0.0, %v1153
  %v1155 = vpop.f32.mrf.mxu0
  %v1156 = vpop.f32.mrf.mxu0
  %v1157 = vadd.f32 0.0, %v1156
  %v1158 = vpop.f32.mrf.mxu0
  %1159 = vmatprep.mubr.bf16.mxu0 %v608
  %1160 = vmatmul.mubr.bf16.gmra.mxu0 %v607
  %v1161 = vpop.f32.mrf.mxu0
  %v1162 = vadd.f32 0.0, %v1161
  %v1163 = vpop.f32.mrf.mxu0
  %v1164 = vpop.f32.mrf.mxu0
  %v1165 = vadd.f32 0.0, %v1164
  %v1166 = vpop.f32.mrf.mxu0
  %1167 = vdwg.mxu0
  %1168 = vmatprep.subr.bf16.mxu0 0
  %1169 = vmatpush1.bf16.msra.mxu0 0
  %1170 = vmatprep.subr.bf16.mxu0 0
  %1171 = vmatpush1.bf16.msra.mxu0 0
  %1172 = vmatprep.subr.bf16.mxu0 0
  %1173 = vmatpush1.bf16.msra.mxu0 0
  %1174 = vmatprep.subr.bf16.mxu0 0
  %1175 = vmatpush1.bf16.msra.mxu0 0
  %1176 = vmatprep.subr.bf16.mxu0 0
  %1177 = vmatpush1.bf16.msra.mxu0 0
  %1178 = vmatprep.subr.bf16.mxu0 0
  %1179 = vmatpush1.bf16.msra.mxu0 0
  %1180 = vmatprep.subr.bf16.mxu0 0
  %1181 = vmatpush1.bf16.msra.mxu0 %v763
  %1182 = vmatprep.subr.bf16.mxu0 0
  %1183 = vmatpush1.bf16.msra.mxu0 %v762
  %1184 = vmatprep.subr.bf16.mxu0 0
  %1185 = vmatpush2.bf16.msra.mxu0 0
  %1186 = vmatprep.subr.bf16.mxu0 0
  %1187 = vmatpush2.bf16.msra.mxu0 0
  %1188 = vmatprep.subr.bf16.mxu0 0
  %1189 = vmatpush2.bf16.msra.mxu0 0
  %1190 = vmatprep.subr.bf16.mxu0 0
  %1191 = vmatpush2.bf16.msra.mxu0 0
  %1192 = vmatprep.subr.bf16.mxu0 0
  %1193 = vmatpush2.bf16.msra.mxu0 0
  %1194 = vmatprep.subr.bf16.mxu0 0
  %1195 = vmatpush2.bf16.msra.mxu0 0
  %1196 = vmatprep.subr.bf16.mxu0 0
  %1197 = vmatpush2.bf16.msra.mxu0 0
  %1198 = vmatprep.subr.bf16.mxu0 0
  %1199 = vmatpush2.bf16.msra.mxu0 0
  %1200 = vmatprep.mubr.bf16.mxu0 0
  %1201 = vmatmul.mubr.bf16.gmra.mxu0 %v784
  %v1202 = vpop.f32.mrf.mxu0
  %v1203 = vadd.f32 %v914, %v1202
  %v1204 = vpop.f32.mrf.mxu0
  %v1205 = vpop.f32.mrf.mxu0
  %v1206 = vadd.f32 %v917, %v1205
  %v1207 = vpop.f32.mrf.mxu0
  %1208 = vmatprep.mubr.bf16.mxu0 0
  %1209 = vmatmul.mubr.bf16.gmra.mxu0 %v787
  %v1210 = vpop.f32.mrf.mxu0
  %v1211 = vadd.f32 %v922, %v1210
  %v1212 = vpop.f32.mrf.mxu0
  %v1213 = vpop.f32.mrf.mxu0
  %v1214 = vadd.f32 %v925, %v1213
  %v1215 = vpop.f32.mrf.mxu0
  %1216 = vmatprep.mubr.bf16.mxu0 0
  %1217 = vmatmul.mubr.bf16.gmra.mxu0 %v790
  %v1218 = vpop.f32.mrf.mxu0
  %v1219 = vadd.f32 %v930, %v1218
  %v1220 = vpop.f32.mrf.mxu0
  %v1221 = vpop.f32.mrf.mxu0
  %v1222 = vadd.f32 %v933, %v1221
  %v1223 = vpop.f32.mrf.mxu0
  %1224 = vmatprep.mubr.bf16.mxu0 0
  %1225 = vmatmul.mubr.bf16.gmra.mxu0 %v793
  %v1226 = vpop.f32.mrf.mxu0
  %v1227 = vadd.f32 %v938, %v1226
  %v1228 = vpop.f32.mrf.mxu0
  %v1229 = vpop.f32.mrf.mxu0
  %v1230 = vadd.f32 %v941, %v1229
  %v1231 = vpop.f32.mrf.mxu0
  %1232 = vmatprep.mubr.bf16.mxu0 0
  %1233 = vmatmul.mubr.bf16.gmra.mxu0 %v796
  %v1234 = vpop.f32.mrf.mxu0
  %v1235 = vadd.f32 %v946, %v1234
  %v1236 = vpop.f32.mrf.mxu0
  %v1237 = vpop.f32.mrf.mxu0
  %v1238 = vadd.f32 %v949, %v1237
  %v1239 = vpop.f32.mrf.mxu0
  %1240 = vmatprep.mubr.bf16.mxu0 0
  %1241 = vmatmul.mubr.bf16.gmra.mxu0 %v799
  %v1242 = vpop.f32.mrf.mxu0
  %v1243 = vadd.f32 %v954, %v1242
  %v1244 = vpop.f32.mrf.mxu0
  %v1245 = vpop.f32.mrf.mxu0
  %v1246 = vadd.f32 %v957, %v1245
  %v1247 = vpop.f32.mrf.mxu0
  %1248 = vmatprep.mubr.bf16.mxu0 0
  %1249 = vmatmul.mubr.bf16.gmra.mxu0 %v802
  %v1250 = vpop.f32.mrf.mxu0
  %v1251 = vadd.f32 %v962, %v1250
  %v1252 = vpop.f32.mrf.mxu0
  %v1253 = vpop.f32.mrf.mxu0
  %v1254 = vadd.f32 %v965, %v1253
  %v1255 = vpop.f32.mrf.mxu0
  %1256 = vmatprep.mubr.bf16.mxu0 0
  %1257 = vmatmul.mubr.bf16.gmra.mxu0 %v805
  %v1258 = vpop.f32.mrf.mxu0
  %v1259 = vadd.f32 %v970, %v1258
  %v1260 = vpop.f32.mrf.mxu0
  %v1261 = vpop.f32.mrf.mxu0
  %v1262 = vadd.f32 %v973, %v1261
  %v1263 = vpop.f32.mrf.mxu0
  %1264 = vmatprep.mubr.bf16.mxu0 0
  %1265 = vmatmul.mubr.bf16.gmra.mxu0 %v808
  %v1266 = vpop.f32.mrf.mxu0
  %v1267 = vadd.f32 %v978, %v1266
  %v1268 = vpop.f32.mrf.mxu0
  %v1269 = vpop.f32.mrf.mxu0
  %v1270 = vadd.f32 %v981, %v1269
  %v1271 = vpop.f32.mrf.mxu0
  %1272 = vmatprep.mubr.bf16.mxu0 0
  %1273 = vmatmul.mubr.bf16.gmra.mxu0 %v811
  %v1274 = vpop.f32.mrf.mxu0
  %v1275 = vadd.f32 %v986, %v1274
  %v1276 = vpop.f32.mrf.mxu0
  %v1277 = vpop.f32.mrf.mxu0
  %v1278 = vadd.f32 %v989, %v1277
  %v1279 = vpop.f32.mrf.mxu0
  %1280 = vmatprep.mubr.bf16.mxu0 0
  %1281 = vmatmul.mubr.bf16.gmra.mxu0 %v814
  %v1282 = vpop.f32.mrf.mxu0
  %v1283 = vadd.f32 %v994, %v1282
  %v1284 = vpop.f32.mrf.mxu0
  %v1285 = vpop.f32.mrf.mxu0
  %v1286 = vadd.f32 %v997, %v1285
  %v1287 = vpop.f32.mrf.mxu0
  %1288 = vmatprep.mubr.bf16.mxu0 0
  %1289 = vmatmul.mubr.bf16.gmra.mxu0 %v817
  %v1290 = vpop.f32.mrf.mxu0
  %v1291 = vadd.f32 %v1002, %v1290
  %v1292 = vpop.f32.mrf.mxu0
  %v1293 = vpop.f32.mrf.mxu0
  %v1294 = vadd.f32 %v1005, %v1293
  %v1295 = vpop.f32.mrf.mxu0
  %1296 = vmatprep.mubr.bf16.mxu0 0
  %1297 = vmatmul.mubr.bf16.gmra.mxu0 %v820
  %v1298 = vpop.f32.mrf.mxu0
  %v1299 = vadd.f32 %v1010, %v1298
  %v1300 = vpop.f32.mrf.mxu0
  %v1301 = vpop.f32.mrf.mxu0
  %v1302 = vadd.f32 %v1013, %v1301
  %v1303 = vpop.f32.mrf.mxu0
  %1304 = vmatprep.mubr.bf16.mxu0 0
  %1305 = vmatmul.mubr.bf16.gmra.mxu0 %v823
  %v1306 = vpop.f32.mrf.mxu0
  %v1307 = vadd.f32 %v1018, %v1306
  %v1308 = vpop.f32.mrf.mxu0
  %v1309 = vpop.f32.mrf.mxu0
  %v1310 = vadd.f32 %v1021, %v1309
  %v1311 = vpop.f32.mrf.mxu0
  %1312 = vmatprep.mubr.bf16.mxu0 0
  %1313 = vmatmul.mubr.bf16.gmra.mxu0 %v826
  %v1314 = vpop.f32.mrf.mxu0
  %v1315 = vadd.f32 %v1026, %v1314
  %v1316 = vpop.f32.mrf.mxu0
  %v1317 = vpop.f32.mrf.mxu0
  %v1318 = vadd.f32 %v1029, %v1317
  %v1319 = vpop.f32.mrf.mxu0
  %1320 = vmatprep.mubr.bf16.mxu0 0
  %1321 = vmatmul.mubr.bf16.gmra.mxu0 %v829
  %v1322 = vpop.f32.mrf.mxu0
  %v1323 = vadd.f32 %v1034, %v1322
  %v1324 = vpop.f32.mrf.mxu0
  %v1325 = vpop.f32.mrf.mxu0
  %v1326 = vadd.f32 %v1037, %v1325
  %v1327 = vpop.f32.mrf.mxu0
  %1328 = vmatprep.mubr.bf16.mxu0 0
  %1329 = vmatmul.mubr.bf16.gmra.mxu0 %v832
  %v1330 = vpop.f32.mrf.mxu0
  %v1331 = vadd.f32 %v1042, %v1330
  %v1332 = vpop.f32.mrf.mxu0
  %v1333 = vpop.f32.mrf.mxu0
  %v1334 = vadd.f32 %v1045, %v1333
  %v1335 = vpop.f32.mrf.mxu0
  %1336 = vmatprep.mubr.bf16.mxu0 0
  %1337 = vmatmul.mubr.bf16.gmra.mxu0 %v835
  %v1338 = vpop.f32.mrf.mxu0
  %v1339 = vadd.f32 %v1050, %v1338
  %v1340 = vpop.f32.mrf.mxu0
  %v1341 = vpop.f32.mrf.mxu0
  %v1342 = vadd.f32 %v1053, %v1341
  %v1343 = vpop.f32.mrf.mxu0
  %1344 = vmatprep.mubr.bf16.mxu0 0
  %1345 = vmatmul.mubr.bf16.gmra.mxu0 %v838
  %v1346 = vpop.f32.mrf.mxu0
  %v1347 = vadd.f32 %v1058, %v1346
  %v1348 = vpop.f32.mrf.mxu0
  %v1349 = vpop.f32.mrf.mxu0
  %v1350 = vadd.f32 %v1061, %v1349
  %v1351 = vpop.f32.mrf.mxu0
  %1352 = vmatprep.mubr.bf16.mxu0 0
  %1353 = vmatmul.mubr.bf16.gmra.mxu0 %v841
  %v1354 = vpop.f32.mrf.mxu0
  %v1355 = vadd.f32 %v1066, %v1354
  %v1356 = vpop.f32.mrf.mxu0
  %v1357 = vpop.f32.mrf.mxu0
  %v1358 = vadd.f32 %v1069, %v1357
  %v1359 = vpop.f32.mrf.mxu0
  %1360 = vmatprep.mubr.bf16.mxu0 0
  %1361 = vmatmul.mubr.bf16.gmra.mxu0 %v844
  %v1362 = vpop.f32.mrf.mxu0
  %v1363 = vadd.f32 %v1074, %v1362
  %v1364 = vpop.f32.mrf.mxu0
  %v1365 = vpop.f32.mrf.mxu0
  %v1366 = vadd.f32 %v1077, %v1365
  %v1367 = vpop.f32.mrf.mxu0
  %1368 = vmatprep.mubr.bf16.mxu0 0
  %1369 = vmatmul.mubr.bf16.gmra.mxu0 %v847
  %v1370 = vpop.f32.mrf.mxu0
  %v1371 = vadd.f32 %v1082, %v1370
  %v1372 = vpop.f32.mrf.mxu0
  %v1373 = vpop.f32.mrf.mxu0
  %v1374 = vadd.f32 %v1085, %v1373
  %v1375 = vpop.f32.mrf.mxu0
  %1376 = vmatprep.mubr.bf16.mxu0 0
  %1377 = vmatmul.mubr.bf16.gmra.mxu0 %v850
  %v1378 = vpop.f32.mrf.mxu0
  %v1379 = vadd.f32 %v1090, %v1378
  %v1380 = vpop.f32.mrf.mxu0
  %v1381 = vpop.f32.mrf.mxu0
  %v1382 = vadd.f32 %v1093, %v1381
  %v1383 = vpop.f32.mrf.mxu0
  %1384 = vmatprep.mubr.bf16.mxu0 0
  %1385 = vmatmul.mubr.bf16.gmra.mxu0 %v853
  %v1386 = vpop.f32.mrf.mxu0
  %v1387 = vadd.f32 %v1098, %v1386
  %v1388 = vpop.f32.mrf.mxu0
  %v1389 = vpop.f32.mrf.mxu0
  %v1390 = vadd.f32 %v1101, %v1389
  %v1391 = vpop.f32.mrf.mxu0
  %1392 = vmatprep.mubr.bf16.mxu0 0
  %1393 = vmatmul.mubr.bf16.gmra.mxu0 %v856
  %v1394 = vpop.f32.mrf.mxu0
  %v1395 = vadd.f32 %v1106, %v1394
  %v1396 = vpop.f32.mrf.mxu0
  %v1397 = vpop.f32.mrf.mxu0
  %v1398 = vadd.f32 %v1109, %v1397
  %v1399 = vpop.f32.mrf.mxu0
  %1400 = vmatprep.mubr.bf16.mxu0 0
  %1401 = vmatmul.mubr.bf16.gmra.mxu0 %v859
  %v1402 = vpop.f32.mrf.mxu0
  %v1403 = vadd.f32 %v1114, %v1402
  %v1404 = vpop.f32.mrf.mxu0
  %v1405 = vpop.f32.mrf.mxu0
  %v1406 = vadd.f32 %v1117, %v1405
  %v1407 = vpop.f32.mrf.mxu0
  %1408 = vmatprep.mubr.bf16.mxu0 0
  %1409 = vmatmul.mubr.bf16.gmra.mxu0 %v862
  %v1410 = vpop.f32.mrf.mxu0
  %v1411 = vadd.f32 %v1122, %v1410
  %v1412 = vpop.f32.mrf.mxu0
  %v1413 = vpop.f32.mrf.mxu0
  %v1414 = vadd.f32 %v1125, %v1413
  %v1415 = vpop.f32.mrf.mxu0
  %1416 = vmatprep.mubr.bf16.mxu0 0
  %1417 = vmatmul.mubr.bf16.gmra.mxu0 %v865
  %v1418 = vpop.f32.mrf.mxu0
  %v1419 = vadd.f32 %v1130, %v1418
  %v1420 = vpop.f32.mrf.mxu0
  %v1421 = vpop.f32.mrf.mxu0
  %v1422 = vadd.f32 %v1133, %v1421
  %v1423 = vpop.f32.mrf.mxu0
  %1424 = vmatprep.mubr.bf16.mxu0 0
  %1425 = vmatmul.mubr.bf16.gmra.mxu0 %v868
  %v1426 = vpop.f32.mrf.mxu0
  %v1427 = vadd.f32 %v1138, %v1426
  %v1428 = vpop.f32.mrf.mxu0
  %v1429 = vpop.f32.mrf.mxu0
  %v1430 = vadd.f32 %v1141, %v1429
  %v1431 = vpop.f32.mrf.mxu0
  %1432 = vmatprep.mubr.bf16.mxu0 0
  %1433 = vmatmul.mubr.bf16.gmra.mxu0 %v871
  %v1434 = vpop.f32.mrf.mxu0
  %v1435 = vadd.f32 %v1146, %v1434
  %v1436 = vpop.f32.mrf.mxu0
  %v1437 = vpop.f32.mrf.mxu0
  %v1438 = vadd.f32 %v1149, %v1437
  %v1439 = vpop.f32.mrf.mxu0
  %1440 = vmatprep.mubr.bf16.mxu0 0
  %1441 = vmatmul.mubr.bf16.gmra.mxu0 %v874
  %v1442 = vpop.f32.mrf.mxu0
  %v1443 = vadd.f32 %v1154, %v1442
  %v1444 = vpop.f32.mrf.mxu0
  %v1445 = vpop.f32.mrf.mxu0
  %v1446 = vadd.f32 %v1157, %v1445
  %v1447 = vpop.f32.mrf.mxu0
  %1448 = vmatprep.mubr.bf16.mxu0 0
  %1449 = vmatmul.mubr.bf16.gmra.mxu0 %v877
  %v1450 = vpop.f32.mrf.mxu0
  %v1451 = vadd.f32 %v1162, %v1450
  %v1452 = vpop.f32.mrf.mxu0
  %v1453 = vpop.f32.mrf.mxu0
  %v1454 = vadd.f32 %v1165, %v1453
  %v1455 = vpop.f32.mrf.mxu0
  %1456 = vdwg.mxu0
  %s1457 = smul.u32 0, 512
  %s1458 = scalar_lea.vmem [#allocation2], %s1457
  %1459 = vst [vmem:[%s1458] sm:$0xff] %v1203
  %1460 = vst [vmem:[%s1458 + $0x8] sm:$0xff] %v1206
  %1461 = vst [vmem:[%s1458 + $0x10] sm:$0xff] %v1211
  %1462 = vst [vmem:[%s1458 + $0x18] sm:$0xff] %v1214
  %1463 = vst [vmem:[%s1458 + $0x20] sm:$0xff] %v1219
  %1464 = vst [vmem:[%s1458 + $0x28] sm:$0xff] %v1222
  %1465 = vst [vmem:[%s1458 + $0x30] sm:$0xff] %v1227
  %1466 = vst [vmem:[%s1458 + $0x38] sm:$0xff] %v1230
  %1467 = vst [vmem:[%s1458 + $0x40] sm:$0xff] %v1235
  %1468 = vst [vmem:[%s1458 + $0x48] sm:$0xff] %v1238
  %1469 = vst [vmem:[%s1458 + $0x50] sm:$0xff] %v1243
  %1470 = vst [vmem:[%s1458 + $0x58] sm:$0xff] %v1246
  %1471 = vst [vmem:[%s1458 + $0x60] sm:$0xff] %v1251
  %1472 = vst [vmem:[%s1458 + $0x68] sm:$0xff] %v1254
  %1473 = vst [vmem:[%s1458 + $0x70] sm:$0xff] %v1259
  %1474 = vst [vmem:[%s1458 + $0x78] sm:$0xff] %v1262
  %1475 = vst [vmem:[%s1458 + $0x80] sm:$0xff] %v1267
  %1476 = vst [vmem:[%s1458 + $0x88] sm:$0xff] %v1270
  %1477 = vst [vmem:[%s1458 + $0x90] sm:$0xff] %v1275
  %1478 = vst [vmem:[%s1458 + $0x98] sm:$0xff] %v1278
  %1479 = vst [vmem:[%s1458 + $0xa0] sm:$0xff] %v1283
  %1480 = vst [vmem:[%s1458 + $0xa8] sm:$0xff] %v1286
  %1481 = vst [vmem:[%s1458 + $0xb0] sm:$0xff] %v1291
  %1482 = vst [vmem:[%s1458 + $0xb8] sm:$0xff] %v1294
  %1483 = vst [vmem:[%s1458 + $0xc0] sm:$0xff] %v1299
  %1484 = vst [vmem:[%s1458 + $0xc8] sm:$0xff] %v1302
  %1485 = vst [vmem:[%s1458 + $0xd0] sm:$0xff] %v1307
  %1486 = vst [vmem:[%s1458 + $0xd8] sm:$0xff] %v1310
  %1487 = vst [vmem:[%s1458 + $0xe0] sm:$0xff] %v1315
  %1488 = vst [vmem:[%s1458 + $0xe8] sm:$0xff] %v1318
  %1489 = vst [vmem:[%s1458 + $0xf0] sm:$0xff] %v1323
  %1490 = vst [vmem:[%s1458 + $0xf8] sm:$0xff] %v1326
  %1491 = vst [vmem:[%s1458 + $0x100] sm:$0xff] %v1331
  %1492 = vst [vmem:[%s1458 + $0x108] sm:$0xff] %v1334
  %1493 = vst [vmem:[%s1458 + $0x110] sm:$0xff] %v1339
  %1494 = vst [vmem:[%s1458 + $0x118] sm:$0xff] %v1342
  %1495 = vst [vmem:[%s1458 + $0x120] sm:$0xff] %v1347
  %1496 = vst [vmem:[%s1458 + $0x128] sm:$0xff] %v1350
  %1497 = vst [vmem:[%s1458 + $0x130] sm:$0xff] %v1355
  %1498 = vst [vmem:[%s1458 + $0x138] sm:$0xff] %v1358
  %1499 = vst [vmem:[%s1458 + $0x140] sm:$0xff] %v1363
  %1500 = vst [vmem:[%s1458 + $0x148] sm:$0xff] %v1366
  %1501 = vst [vmem:[%s1458 + $0x150] sm:$0xff] %v1371
  %1502 = vst [vmem:[%s1458 + $0x158] sm:$0xff] %v1374
  %1503 = vst [vmem:[%s1458 + $0x160] sm:$0xff] %v1379
  %1504 = vst [vmem:[%s1458 + $0x168] sm:$0xff] %v1382
  %1505 = vst [vmem:[%s1458 + $0x170] sm:$0xff] %v1387
  %1506 = vst [vmem:[%s1458 + $0x178] sm:$0xff] %v1390
  %1507 = vst [vmem:[%s1458 + $0x180] sm:$0xff] %v1395
  %1508 = vst [vmem:[%s1458 + $0x188] sm:$0xff] %v1398
  %1509 = vst [vmem:[%s1458 + $0x190] sm:$0xff] %v1403
  %1510 = vst [vmem:[%s1458 + $0x198] sm:$0xff] %v1406
  %1511 = vst [vmem:[%s1458 + $0x1a0] sm:$0xff] %v1411
  %1512 = vst [vmem:[%s1458 + $0x1a8] sm:$0xff] %v1414
  %1513 = vst [vmem:[%s1458 + $0x1b0] sm:$0xff] %v1419
  %1514 = vst [vmem:[%s1458 + $0x1b8] sm:$0xff] %v1422
  %1515 = vst [vmem:[%s1458 + $0x1c0] sm:$0xff] %v1427
  %1516 = vst [vmem:[%s1458 + $0x1c8] sm:$0xff] %v1430
  %1517 = vst [vmem:[%s1458 + $0x1d0] sm:$0xff] %v1435
  %1518 = vst [vmem:[%s1458 + $0x1d8] sm:$0xff] %v1438
  %1519 = vst [vmem:[%s1458 + $0x1e0] sm:$0xff] %v1443
  %1520 = vst [vmem:[%s1458 + $0x1e8] sm:$0xff] %v1446
  %1521 = vst [vmem:[%s1458 + $0x1f0] sm:$0xff] %v1451
  %1522 = vst [vmem:[%s1458 + $0x1f8] sm:$0xff] %v1454
  %v1523 = vld [vmem:[#allocation3] sm:$0x1]
  %v1524 = vadd.f32 %v1203, %v1206
  %v1525 = vadd.f32 %v1524, %v1211
  %v1526 = vadd.f32 %v1525, %v1214
  %v1527 = vadd.f32 %v1526, %v1219
  %v1528 = vadd.f32 %v1527, %v1222
  %v1529 = vadd.f32 %v1528, %v1227
  %v1530 = vadd.f32 %v1529, %v1230
  %v1531 = vadd.f32 %v1530, %v1235
  %v1532 = vadd.f32 %v1531, %v1238
  %v1533 = vadd.f32 %v1532, %v1243
  %v1534 = vadd.f32 %v1533, %v1246
  %v1535 = vadd.f32 %v1534, %v1251
  %v1536 = vadd.f32 %v1535, %v1254
  %v1537 = vadd.f32 %v1536, %v1259
  %v1538 = vadd.f32 %v1537, %v1262
  %v1539 = vadd.f32 %v1538, %v1267
  %v1540 = vadd.f32 %v1539, %v1270
  %v1541 = vadd.f32 %v1540, %v1275
  %v1542 = vadd.f32 %v1541, %v1278
  %v1543 = vadd.f32 %v1542, %v1283
  %v1544 = vadd.f32 %v1543, %v1286
  %v1545 = vadd.f32 %v1544, %v1291
  %v1546 = vadd.f32 %v1545, %v1294
  %v1547 = vadd.f32 %v1546, %v1299
  %v1548 = vadd.f32 %v1547, %v1302
  %v1549 = vadd.f32 %v1548, %v1307
  %v1550 = vadd.f32 %v1549, %v1310
  %v1551 = vadd.f32 %v1550, %v1315
  %v1552 = vadd.f32 %v1551, %v1318
  %v1553 = vadd.f32 %v1552, %v1323
  %v1554 = vadd.f32 %v1553, %v1326
  %v1555 = vadd.f32 %v1554, %v1331
  %v1556 = vadd.f32 %v1555, %v1334
  %v1557 = vadd.f32 %v1556, %v1339
  %v1558 = vadd.f32 %v1557, %v1342
  %v1559 = vadd.f32 %v1558, %v1347
  %v1560 = vadd.f32 %v1559, %v1350
  %v1561 = vadd.f32 %v1560, %v1355
  %v1562 = vadd.f32 %v1561, %v1358
  %v1563 = vadd.f32 %v1562, %v1363
  %v1564 = vadd.f32 %v1563, %v1366
  %v1565 = vadd.f32 %v1564, %v1371
  %v1566 = vadd.f32 %v1565, %v1374
  %v1567 = vadd.f32 %v1566, %v1379
  %v1568 = vadd.f32 %v1567, %v1382
  %v1569 = vadd.f32 %v1568, %v1387
  %v1570 = vadd.f32 %v1569, %v1390
  %v1571 = vadd.f32 %v1570, %v1395
  %v1572 = vadd.f32 %v1571, %v1398
  %v1573 = vadd.f32 %v1572, %v1403
  %v1574 = vadd.f32 %v1573, %v1406
  %v1575 = vadd.f32 %v1574, %v1411
  %v1576 = vadd.f32 %v1575, %v1414
  %v1577 = vadd.f32 %v1576, %v1419
  %v1578 = vadd.f32 %v1577, %v1422
  %v1579 = vadd.f32 %v1578, %v1427
  %v1580 = vadd.f32 %v1579, %v1430
  %v1581 = vadd.f32 %v1580, %v1435
  %v1582 = vadd.f32 %v1581, %v1438
  %v1583 = vadd.f32 %v1582, %v1443
  %v1584 = vadd.f32 %v1583, %v1446
  %v1585 = vadd.f32 %v1584, %v1451
  %v1586 = vadd.f32 %v1585, %v1454
  %v1587 = vrot.slane %v1586, 4
  %v1588 = vadd.f32 %v1586, %v1587
  %v1589 = vrot.slane %v1588, 2
  %v1590 = vadd.f32 %v1588, %v1589
  %v1591 = vrot.slane %v1590, 1
  %v1592 = vadd.f32 %v1590, %v1591
  %v1593 = vadd.f32 %v1523, %v1592
  %1594 = vst [vmem:[#allocation3] sm:$0x1] %v1593
  %v1595 = vld [vmem:[#allocation4] sm:$0x1]
  %v1596 = vmul.f32 %v1203, %v1203
  %v1597 = vmul.f32 %v1206, %v1206
  %v1598 = vmul.f32 %v1211, %v1211
  %v1599 = vmul.f32 %v1214, %v1214
  %v1600 = vmul.f32 %v1219, %v1219
  %v1601 = vmul.f32 %v1222, %v1222
  %v1602 = vmul.f32 %v1227, %v1227
  %v1603 = vmul.f32 %v1230, %v1230
  %v1604 = vmul.f32 %v1235, %v1235
  %v1605 = vmul.f32 %v1238, %v1238
  %v1606 = vmul.f32 %v1243, %v1243
  %v1607 = vmul.f32 %v1246, %v1246
  %v1608 = vmul.f32 %v1251, %v1251
  %v1609 = vmul.f32 %v1254, %v1254
  %v1610 = vmul.f32 %v1259, %v1259
  %v1611 = vmul.f32 %v1262, %v1262
  %v1612 = vmul.f32 %v1267, %v1267
  %v1613 = vmul.f32 %v1270, %v1270
  %v1614 = vmul.f32 %v1275, %v1275
  %v1615 = vmul.f32 %v1278, %v1278
  %v1616 = vmul.f32 %v1283, %v1283
  %v1617 = vmul.f32 %v1286, %v1286
  %v1618 = vmul.f32 %v1291, %v1291
  %v1619 = vmul.f32 %v1294, %v1294
  %v1620 = vmul.f32 %v1299, %v1299
  %v1621 = vmul.f32 %v1302, %v1302
  %v1622 = vmul.f32 %v1307, %v1307
  %v1623 = vmul.f32 %v1310, %v1310
  %v1624 = vmul.f32 %v1315, %v1315
  %v1625 = vmul.f32 %v1318, %v1318
  %v1626 = vmul.f32 %v1323, %v1323
  %v1627 = vmul.f32 %v1326, %v1326
  %v1628 = vmul.f32 %v1331, %v1331
  %v1629 = vmul.f32 %v1334, %v1334
  %v1630 = vmul.f32 %v1339, %v1339
  %v1631 = vmul.f32 %v1342, %v1342
  %v1632 = vmul.f32 %v1347, %v1347
  %v1633 = vmul.f32 %v1350, %v1350
  %v1634 = vmul.f32 %v1355, %v1355
  %v1635 = vmul.f32 %v1358, %v1358
  %v1636 = vmul.f32 %v1363, %v1363
  %v1637 = vmul.f32 %v1366, %v1366
  %v1638 = vmul.f32 %v1371, %v1371
  %v1639 = vmul.f32 %v1374, %v1374
  %v1640 = vmul.f32 %v1379, %v1379
  %v1641 = vmul.f32 %v1382, %v1382
  %v1642 = vmul.f32 %v1387, %v1387
  %v1643 = vmul.f32 %v1390, %v1390
  %v1644 = vmul.f32 %v1395, %v1395
  %v1645 = vmul.f32 %v1398, %v1398
  %v1646 = vmul.f32 %v1403, %v1403
  %v1647 = vmul.f32 %v1406, %v1406
  %v1648 = vmul.f32 %v1411, %v1411
  %v1649 = vmul.f32 %v1414, %v1414
  %v1650 = vmul.f32 %v1419, %v1419
  %v1651 = vmul.f32 %v1422, %v1422
  %v1652 = vmul.f32 %v1427, %v1427
  %v1653 = vmul.f32 %v1430, %v1430
  %v1654 = vmul.f32 %v1435, %v1435
  %v1655 = vmul.f32 %v1438, %v1438
  %v1656 = vmul.f32 %v1443, %v1443
  %v1657 = vmul.f32 %v1446, %v1446
  %v1658 = vmul.f32 %v1451, %v1451
  %v1659 = vmul.f32 %v1454, %v1454
  %v1660 = vadd.f32 %v1596, %v1597
  %v1661 = vadd.f32 %v1660, %v1598
  %v1662 = vadd.f32 %v1661, %v1599
  %v1663 = vadd.f32 %v1662, %v1600
  %v1664 = vadd.f32 %v1663, %v1601
  %v1665 = vadd.f32 %v1664, %v1602
  %v1666 = vadd.f32 %v1665, %v1603
  %v1667 = vadd.f32 %v1666, %v1604
  %v1668 = vadd.f32 %v1667, %v1605
  %v1669 = vadd.f32 %v1668, %v1606
  %v1670 = vadd.f32 %v1669, %v1607
  %v1671 = vadd.f32 %v1670, %v1608
  %v1672 = vadd.f32 %v1671, %v1609
  %v1673 = vadd.f32 %v1672, %v1610
  %v1674 = vadd.f32 %v1673, %v1611
  %v1675 = vadd.f32 %v1674, %v1612
  %v1676 = vadd.f32 %v1675, %v1613
  %v1677 = vadd.f32 %v1676, %v1614
  %v1678 = vadd.f32 %v1677, %v1615
  %v1679 = vadd.f32 %v1678, %v1616
  %v1680 = vadd.f32 %v1679, %v1617
  %v1681 = vadd.f32 %v1680, %v1618
  %v1682 = vadd.f32 %v1681, %v1619
  %v1683 = vadd.f32 %v1682, %v1620
  %v1684 = vadd.f32 %v1683, %v1621
  %v1685 = vadd.f32 %v1684, %v1622
  %v1686 = vadd.f32 %v1685, %v1623
  %v1687 = vadd.f32 %v1686, %v1624
  %v1688 = vadd.f32 %v1687, %v1625
  %v1689 = vadd.f32 %v1688, %v1626
  %v1690 = vadd.f32 %v1689, %v1627
  %v1691 = vadd.f32 %v1690, %v1628
  %v1692 = vadd.f32 %v1691, %v1629
  %v1693 = vadd.f32 %v1692, %v1630
  %v1694 = vadd.f32 %v1693, %v1631
  %v1695 = vadd.f32 %v1694, %v1632
  %v1696 = vadd.f32 %v1695, %v1633
  %v1697 = vadd.f32 %v1696, %v1634
  %v1698 = vadd.f32 %v1697, %v1635
  %v1699 = vadd.f32 %v1698, %v1636
  %v1700 = vadd.f32 %v1699, %v1637
  %v1701 = vadd.f32 %v1700, %v1638
  %v1702 = vadd.f32 %v1701, %v1639
  %v1703 = vadd.f32 %v1702, %v1640
  %v1704 = vadd.f32 %v1703, %v1641
  %v1705 = vadd.f32 %v1704, %v1642
  %v1706 = vadd.f32 %v1705, %v1643
  %v1707 = vadd.f32 %v1706, %v1644
  %v1708 = vadd.f32 %v1707, %v1645
  %v1709 = vadd.f32 %v1708, %v1646
  %v1710 = vadd.f32 %v1709, %v1647
  %v1711 = vadd.f32 %v1710, %v1648
  %v1712 = vadd.f32 %v1711, %v1649
  %v1713 = vadd.f32 %v1712, %v1650
  %v1714 = vadd.f32 %v1713, %v1651
  %v1715 = vadd.f32 %v1714, %v1652
  %v1716 = vadd.f32 %v1715, %v1653
  %v1717 = vadd.f32 %v1716, %v1654
  %v1718 = vadd.f32 %v1717, %v1655
  %v1719 = vadd.f32 %v1718, %v1656
  %v1720 = vadd.f32 %v1719, %v1657
  %v1721 = vadd.f32 %v1720, %v1658
  %v1722 = vadd.f32 %v1721, %v1659
  %v1723 = vrot.slane %v1722, 4
  %v1724 = vadd.f32 %v1722, %v1723
  %v1725 = vrot.slane %v1724, 2
  %v1726 = vadd.f32 %v1724, %v1725
  %v1727 = vrot.slane %v1726, 1
  %v1728 = vadd.f32 %v1726, %v1727
  %v1729 = vadd.f32 %v1595, %v1728
  %1730 = vst [vmem:[#allocation4] sm:$0x1] %v1729
  // Predicated region
  $region30: #{generator_forward.8} parent=0 // pred_check
    %p1731 = pneg %p24
  $region31: #{generator_forward.8} parent=0 // pred_check_branch
    %1733 = sbr.rel (%p1731) target = $region33
  $region32: #{generator_forward.8} parent=0 // pred_region
    %v1734 = vld [vmem:[#allocation3] sm:$0x1]
    %v1735 = vld [vmem:[%s4] sm:$0xff]
    %v1736 = vld [vmem:[%s4 + $0x8] sm:$0xff]
    %v1737 = vld [vmem:[%s4 + $0x10] sm:$0xff]
    %v1738 = vld [vmem:[%s4 + $0x18] sm:$0xff]
    %v1739 = vld [vmem:[%s4 + $0x20] sm:$0xff]
    %v1740 = vld [vmem:[%s4 + $0x28] sm:$0xff]
    %v1741 = vld [vmem:[%s4 + $0x30] sm:$0xff]
    %v1742 = vld [vmem:[%s4 + $0x38] sm:$0xff]
    %v1743 = vld [vmem:[%s4 + $0x40] sm:$0xff]
    %v1744 = vld [vmem:[%s4 + $0x48] sm:$0xff]
    %v1745 = vld [vmem:[%s4 + $0x50] sm:$0xff]
    %v1746 = vld [vmem:[%s4 + $0x58] sm:$0xff]
    %v1747 = vld [vmem:[%s4 + $0x60] sm:$0xff]
    %v1748 = vld [vmem:[%s4 + $0x68] sm:$0xff]
    %v1749 = vld [vmem:[%s4 + $0x70] sm:$0xff]
    %v1750 = vld [vmem:[%s4 + $0x78] sm:$0xff]
    %1751 = vmatprep.subr.mxu0 0.0
    %1752 = vmatpush1.msra.mxu0 %v1750
    %1753 = vmatprep.subr.mxu0 0.0
    %1754 = vmatpush1.msra.mxu0 %v1749
    %1755 = vmatprep.subr.mxu0 0.0
    %1756 = vmatpush1.msra.mxu0 %v1748
    %1757 = vmatprep.subr.mxu0 0.0
    %1758 = vmatpush1.msra.mxu0 %v1747
    %1759 = vmatprep.subr.mxu0 0.0
    %1760 = vmatpush1.msra.mxu0 %v1746
    %1761 = vmatprep.subr.mxu0 0.0
    %1762 = vmatpush1.msra.mxu0 %v1745
    %1763 = vmatprep.subr.mxu0 0.0
    %1764 = vmatpush1.msra.mxu0 %v1744
    %1765 = vmatprep.subr.mxu0 0.0
    %1766 = vmatpush1.msra.mxu0 %v1743
    %1767 = vmatprep.subr.mxu0 0.0
    %1768 = vmatpush1.msra.mxu0 %v1742
    %1769 = vmatprep.subr.mxu0 0.0
    %1770 = vmatpush1.msra.mxu0 %v1741
    %1771 = vmatprep.subr.mxu0 0.0
    %1772 = vmatpush1.msra.mxu0 %v1740
    %1773 = vmatprep.subr.mxu0 0.0
    %1774 = vmatpush1.msra.mxu0 %v1739
    %1775 = vmatprep.subr.mxu0 0.0
    %1776 = vmatpush1.msra.mxu0 %v1738
    %1777 = vmatprep.subr.mxu0 0.0
    %1778 = vmatpush1.msra.mxu0 %v1737
    %1779 = vmatprep.subr.mxu0 0.0
    %1780 = vmatpush1.msra.mxu0 %v1736
    %1781 = vmatprep.subr.mxu0 0.0
    %1782 = vmatpush1.msra.mxu0 %v1735
    %1783 = vmatprep.subr.mxu0 0.0
    %1784 = vmatpush2.msra.mxu0 0.0
    %1785 = vmatprep.subr.mxu0 0.0
    %1786 = vmatpush2.msra.mxu0 0.0
    %1787 = vmatprep.subr.mxu0 0.0
    %1788 = vmatpush2.msra.mxu0 0.0
    %1789 = vmatprep.subr.mxu0 0.0
    %1790 = vmatpush2.msra.mxu0 0.0
    %1791 = vmatprep.subr.mxu0 0.0
    %1792 = vmatpush2.msra.mxu0 0.0
    %1793 = vmatprep.subr.mxu0 0.0
    %1794 = vmatpush2.msra.mxu0 0.0
    %1795 = vmatprep.subr.mxu0 0.0
    %1796 = vmatpush2.msra.mxu0 0.0
    %1797 = vmatprep.subr.mxu0 0.0
    %1798 = vmatpush2.msra.mxu0 0.0
    %1799 = vmatprep.subr.mxu0 0.0
    %1800 = vmatpush2.msra.mxu0 0.0
    %1801 = vmatprep.subr.mxu0 0.0
    %1802 = vmatpush2.msra.mxu0 0.0
    %1803 = vmatprep.subr.mxu0 0.0
    %1804 = vmatpush2.msra.mxu0 0.0
    %1805 = vmatprep.subr.mxu0 0.0
    %1806 = vmatpush2.msra.mxu0 0.0
    %1807 = vmatprep.subr.mxu0 0.0
    %1808 = vmatpush2.msra.mxu0 0.0
    %1809 = vmatprep.subr.mxu0 0.0
    %1810 = vmatpush2.msra.mxu0 0.0
    %1811 = vmatprep.subr.mxu0 0.0
    %1812 = vmatpush2.msra.mxu0 0.0
    %1813 = vmatprep.subr.mxu0 0.0
    %1814 = vmatpush2.msra.mxu0 0.0
    %1815 = vmatprep.mubr.f32.mxu0 0.0
    %1816 = vmatmul.mubr.f32.gmra.mxu0 %v1734
    %v1817 = vpop.f32.mrf.mxu0
    %v1818 = vadd.f32 0.0, %v1817
    %v1819 = vpop.f32.mrf.mxu0
    %1820 = vdwg.mxu0
    %v1821 = vld [vmem:[#allocation4] sm:$0x1]
    %1822 = vmatprep.subr.mxu0 0.0
    %1823 = vmatpush1.msra.mxu0 %v1750
    %1824 = vmatprep.subr.mxu0 0.0
    %1825 = vmatpush1.msra.mxu0 %v1749
    %1826 = vmatprep.subr.mxu0 0.0
    %1827 = vmatpush1.msra.mxu0 %v1748
    %1828 = vmatprep.subr.mxu0 0.0
    %1829 = vmatpush1.msra.mxu0 %v1747
    %1830 = vmatprep.subr.mxu0 0.0
    %1831 = vmatpush1.msra.mxu0 %v1746
    %1832 = vmatprep.subr.mxu0 0.0
    %1833 = vmatpush1.msra.mxu0 %v1745
    %1834 = vmatprep.subr.mxu0 0.0
    %1835 = vmatpush1.msra.mxu0 %v1744
    %1836 = vmatprep.subr.mxu0 0.0
    %1837 = vmatpush1.msra.mxu0 %v1743
    %1838 = vmatprep.subr.mxu0 0.0
    %1839 = vmatpush1.msra.mxu0 %v1742
    %1840 = vmatprep.subr.mxu0 0.0
    %1841 = vmatpush1.msra.mxu0 %v1741
    %1842 = vmatprep.subr.mxu0 0.0
    %1843 = vmatpush1.msra.mxu0 %v1740
    %1844 = vmatprep.subr.mxu0 0.0
    %1845 = vmatpush1.msra.mxu0 %v1739
    %1846 = vmatprep.subr.mxu0 0.0
    %1847 = vmatpush1.msra.mxu0 %v1738
    %1848 = vmatprep.subr.mxu0 0.0
    %1849 = vmatpush1.msra.mxu0 %v1737
    %1850 = vmatprep.subr.mxu0 0.0
    %1851 = vmatpush1.msra.mxu0 %v1736
    %1852 = vmatprep.subr.mxu0 0.0
    %1853 = vmatpush1.msra.mxu0 %v1735
    %1854 = vmatprep.subr.mxu0 0.0
    %1855 = vmatpush2.msra.mxu0 0.0
    %1856 = vmatprep.subr.mxu0 0.0
    %1857 = vmatpush2.msra.mxu0 0.0
    %1858 = vmatprep.subr.mxu0 0.0
    %1859 = vmatpush2.msra.mxu0 0.0
    %1860 = vmatprep.subr.mxu0 0.0
    %1861 = vmatpush2.msra.mxu0 0.0
    %1862 = vmatprep.subr.mxu0 0.0
    %1863 = vmatpush2.msra.mxu0 0.0
    %1864 = vmatprep.subr.mxu0 0.0
    %1865 = vmatpush2.msra.mxu0 0.0
    %1866 = vmatprep.subr.mxu0 0.0
    %1867 = vmatpush2.msra.mxu0 0.0
    %1868 = vmatprep.subr.mxu0 0.0
    %1869 = vmatpush2.msra.mxu0 0.0
    %1870 = vmatprep.subr.mxu0 0.0
    %1871 = vmatpush2.msra.mxu0 0.0
    %1872 = vmatprep.subr.mxu0 0.0
    %1873 = vmatpush2.msra.mxu0 0.0
    %1874 = vmatprep.subr.mxu0 0.0
    %1875 = vmatpush2.msra.mxu0 0.0
    %1876 = vmatprep.subr.mxu0 0.0
    %1877 = vmatpush2.msra.mxu0 0.0
    %1878 = vmatprep.subr.mxu0 0.0
    %1879 = vmatpush2.msra.mxu0 0.0
    %1880 = vmatprep.subr.mxu0 0.0
    %1881 = vmatpush2.msra.mxu0 0.0
    %1882 = vmatprep.subr.mxu0 0.0
    %1883 = vmatpush2.msra.mxu0 0.0
    %1884 = vmatprep.subr.mxu0 0.0
    %1885 = vmatpush2.msra.mxu0 0.0
    %1886 = vmatprep.mubr.f32.mxu0 0.0
    %1887 = vmatmul.mubr.f32.gmra.mxu0 %v1821
    %v1888 = vpop.f32.mrf.mxu0
    %v1889 = vadd.f32 0.0, %v1888
    %v1890 = vpop.f32.mrf.mxu0
    %1891 = vdwg.mxu0
    %v1892 = vmul.f32 %v1818, 0.00048828125
    %v1893 = vmul.f32 %v1889, 0.00048828125
    %v1894 = vmul.f32 %v1892, %v1892
    %v1895 = vsub.f32 %v1893, %v1894
    %v1896 = vmax.f32 %v1895, 0.0
    %v1897 = vld [vmem:[%s2] sm:$0x1]
    %v1898 = vadd.f32 %v1896, 1e-05
    %v1899 = vrsqrt.pop %v1898
    %v1900 = vmul.f32 %v1897, %v1899
    %v1901 = vld [vmem:[%s3] sm:$0x1]
    %v1902 = vmul.f32 %v1892, %v1900
    %v1903 = vsub.f32 %v1901, %v1902
    %v1904 = vld [vmem:[%s5] sm:$0xff]
    %v1905 = vld [vmem:[%s5 + $0x8] sm:$0xff]
    %v1906 = vld [vmem:[%s5 + $0x10] sm:$0xff]
    %v1907 = vld [vmem:[%s5 + $0x18] sm:$0xff]
    %v1908 = vld [vmem:[%s5 + $0x20] sm:$0xff]
    %v1909 = vld [vmem:[%s5 + $0x28] sm:$0xff]
    %v1910 = vld [vmem:[%s5 + $0x30] sm:$0xff]
    %v1911 = vld [vmem:[%s5 + $0x38] sm:$0xff]
    %v1912 = vld [vmem:[%s5 + $0x40] sm:$0xff]
    %v1913 = vld [vmem:[%s5 + $0x48] sm:$0xff]
    %v1914 = vld [vmem:[%s5 + $0x50] sm:$0xff]
    %v1915 = vld [vmem:[%s5 + $0x58] sm:$0xff]
    %v1916 = vld [vmem:[%s5 + $0x60] sm:$0xff]
    %v1917 = vld [vmem:[%s5 + $0x68] sm:$0xff]
    %v1918 = vld [vmem:[%s5 + $0x70] sm:$0xff]
    %v1919 = vld [vmem:[%s5 + $0x78] sm:$0xff]
    %1920 = vmatprep.subr.mxu0 0.0
    %1921 = vmatpush1.msra.mxu0 %v1919
    %1922 = vmatprep.subr.mxu0 0.0
    %1923 = vmatpush1.msra.mxu0 %v1918
    %1924 = vmatprep.subr.mxu0 0.0
    %1925 = vmatpush1.msra.mxu0 %v1917
    %1926 = vmatprep.subr.mxu0 0.0
    %1927 = vmatpush1.msra.mxu0 %v1916
    %1928 = vmatprep.subr.mxu0 0.0
    %1929 = vmatpush1.msra.mxu0 %v1915
    %1930 = vmatprep.subr.mxu0 0.0
    %1931 = vmatpush1.msra.mxu0 %v1914
    %1932 = vmatprep.subr.mxu0 0.0
    %1933 = vmatpush1.msra.mxu0 %v1913
    %1934 = vmatprep.subr.mxu0 0.0
    %1935 = vmatpush1.msra.mxu0 %v1912
    %1936 = vmatprep.subr.mxu0 0.0
    %1937 = vmatpush1.msra.mxu0 %v1911
    %1938 = vmatprep.subr.mxu0 0.0
    %1939 = vmatpush1.msra.mxu0 %v1910
    %1940 = vmatprep.subr.mxu0 0.0
    %1941 = vmatpush1.msra.mxu0 %v1909
    %1942 = vmatprep.subr.mxu0 0.0
    %1943 = vmatpush1.msra.mxu0 %v1908
    %1944 = vmatprep.subr.mxu0 0.0
    %1945 = vmatpush1.msra.mxu0 %v1907
    %1946 = vmatprep.subr.mxu0 0.0
    %1947 = vmatpush1.msra.mxu0 %v1906
    %1948 = vmatprep.subr.mxu0 0.0
    %1949 = vmatpush1.msra.mxu0 %v1905
    %1950 = vmatprep.subr.mxu0 0.0
    %1951 = vmatpush1.msra.mxu0 %v1904
    %1952 = vmatprep.subr.mxu0 0.0
    %1953 = vmatpush2.msra.mxu0 0.0
    %1954 = vmatprep.subr.mxu0 0.0
    %1955 = vmatpush2.msra.mxu0 0.0
    %1956 = vmatprep.subr.mxu0 0.0
    %1957 = vmatpush2.msra.mxu0 0.0
    %1958 = vmatprep.subr.mxu0 0.0
    %1959 = vmatpush2.msra.mxu0 0.0
    %1960 = vmatprep.subr.mxu0 0.0
    %1961 = vmatpush2.msra.mxu0 0.0
    %1962 = vmatprep.subr.mxu0 0.0
    %1963 = vmatpush2.msra.mxu0 0.0
    %1964 = vmatprep.subr.mxu0 0.0
    %1965 = vmatpush2.msra.mxu0 0.0
    %1966 = vmatprep.subr.mxu0 0.0
    %1967 = vmatpush2.msra.mxu0 0.0
    %1968 = vmatprep.subr.mxu0 0.0
    %1969 = vmatpush2.msra.mxu0 0.0
    %1970 = vmatprep.subr.mxu0 0.0
    %1971 = vmatpush2.msra.mxu0 0.0
    %1972 = vmatprep.subr.mxu0 0.0
    %1973 = vmatpush2.msra.mxu0 0.0
    %1974 = vmatprep.subr.mxu0 0.0
    %1975 = vmatpush2.msra.mxu0 0.0
    %1976 = vmatprep.subr.mxu0 0.0
    %1977 = vmatpush2.msra.mxu0 0.0
    %1978 = vmatprep.subr.mxu0 0.0
    %1979 = vmatpush2.msra.mxu0 0.0
    %1980 = vmatprep.subr.mxu0 0.0
    %1981 = vmatpush2.msra.mxu0 0.0
    %1982 = vmatprep.subr.mxu0 0.0
    %1983 = vmatpush2.msra.mxu0 0.0
    %1984 = vmatprep.mubr.f32.mxu0 0.0
    %1985 = vmatmul.mubr.f32.gmra.mxu0 %v1900
    %v1986 = vpop.f32.mrf.mxu0
    %v1987 = vadd.f32 0.0, %v1986
    %v1988 = vpop.f32.mrf.mxu0
    %1989 = vdwg.mxu0
    %1990 = vmatprep.subr.mxu0 0.0
    %1991 = vmatpush1.msra.mxu0 %v1919
    %1992 = vmatprep.subr.mxu0 0.0
    %1993 = vmatpush1.msra.mxu0 %v1918
    %1994 = vmatprep.subr.mxu0 0.0
    %1995 = vmatpush1.msra.mxu0 %v1917
    %1996 = vmatprep.subr.mxu0 0.0
    %1997 = vmatpush1.msra.mxu0 %v1916
    %1998 = vmatprep.subr.mxu0 0.0
    %1999 = vmatpush1.msra.mxu0 %v1915
    %2000 = vmatprep.subr.mxu0 0.0
    %2001 = vmatpush1.msra.mxu0 %v1914
    %2002 = vmatprep.subr.mxu0 0.0
    %2003 = vmatpush1.msra.mxu0 %v1913
    %2004 = vmatprep.subr.mxu0 0.0
    %2005 = vmatpush1.msra.mxu0 %v1912
    %2006 = vmatprep.subr.mxu0 0.0
    %2007 = vmatpush1.msra.mxu0 %v1911
    %2008 = vmatprep.subr.mxu0 0.0
    %2009 = vmatpush1.msra.mxu0 %v1910
    %2010 = vmatprep.subr.mxu0 0.0
    %2011 = vmatpush1.msra.mxu0 %v1909
    %2012 = vmatprep.subr.mxu0 0.0
    %2013 = vmatpush1.msra.mxu0 %v1908
    %2014 = vmatprep.subr.mxu0 0.0
    %2015 = vmatpush1.msra.mxu0 %v1907
    %2016 = vmatprep.subr.mxu0 0.0
    %2017 = vmatpush1.msra.mxu0 %v1906
    %2018 = vmatprep.subr.mxu0 0.0
    %2019 = vmatpush1.msra.mxu0 %v1905
    %2020 = vmatprep.subr.mxu0 0.0
    %2021 = vmatpush1.msra.mxu0 %v1904
    %2022 = vmatprep.subr.mxu0 0.0
    %2023 = vmatpush2.msra.mxu0 0.0
    %2024 = vmatprep.subr.mxu0 0.0
    %2025 = vmatpush2.msra.mxu0 0.0
    %2026 = vmatprep.subr.mxu0 0.0
    %2027 = vmatpush2.msra.mxu0 0.0
    %2028 = vmatprep.subr.mxu0 0.0
    %2029 = vmatpush2.msra.mxu0 0.0
    %2030 = vmatprep.subr.mxu0 0.0
    %2031 = vmatpush2.msra.mxu0 0.0
    %2032 = vmatprep.subr.mxu0 0.0
    %2033 = vmatpush2.msra.mxu0 0.0
    %2034 = vmatprep.subr.mxu0 0.0
    %2035 = vmatpush2.msra.mxu0 0.0
    %2036 = vmatprep.subr.mxu0 0.0
    %2037 = vmatpush2.msra.mxu0 0.0
    %2038 = vmatprep.subr.mxu0 0.0
    %2039 = vmatpush2.msra.mxu0 0.0
    %2040 = vmatprep.subr.mxu0 0.0
    %2041 = vmatpush2.msra.mxu0 0.0
    %2042 = vmatprep.subr.mxu0 0.0
    %2043 = vmatpush2.msra.mxu0 0.0
    %2044 = vmatprep.subr.mxu0 0.0
    %2045 = vmatpush2.msra.mxu0 0.0
    %2046 = vmatprep.subr.mxu0 0.0
    %2047 = vmatpush2.msra.mxu0 0.0
    %2048 = vmatprep.subr.mxu0 0.0
    %2049 = vmatpush2.msra.mxu0 0.0
    %2050 = vmatprep.subr.mxu0 0.0
    %2051 = vmatpush2.msra.mxu0 0.0
    %2052 = vmatprep.subr.mxu0 0.0
    %2053 = vmatpush2.msra.mxu0 0.0
    %2054 = vmatprep.mubr.f32.mxu0 0.0
    %2055 = vmatmul.mubr.f32.gmra.mxu0 %v1903
    %v2056 = vpop.f32.mrf.mxu0
    %v2057 = vadd.f32 0.0, %v2056
    %v2058 = vpop.f32.mrf.mxu0
    %2059 = vdwg.mxu0
    %v2060 = vld [vmem:[#allocation2] sm:$0xff]
    %v2061 = vld [vmem:[#allocation2 + $0x8] sm:$0xff]
    %v2062 = vld [vmem:[#allocation2 + $0x10] sm:$0xff]
    %v2063 = vld [vmem:[#allocation2 + $0x18] sm:$0xff]
    %v2064 = vld [vmem:[#allocation2 + $0x20] sm:$0xff]
    %v2065 = vld [vmem:[#allocation2 + $0x28] sm:$0xff]
    %v2066 = vld [vmem:[#allocation2 + $0x30] sm:$0xff]
    %v2067 = vld [vmem:[#allocation2 + $0x38] sm:$0xff]
    %v2068 = vld [vmem:[#allocation2 + $0x40] sm:$0xff]
    %v2069 = vld [vmem:[#allocation2 + $0x48] sm:$0xff]
    %v2070 = vld [vmem:[#allocation2 + $0x50] sm:$0xff]
    %v2071 = vld [vmem:[#allocation2 + $0x58] sm:$0xff]
    %v2072 = vld [vmem:[#allocation2 + $0x60] sm:$0xff]
    %v2073 = vld [vmem:[#allocation2 + $0x68] sm:$0xff]
    %v2074 = vld [vmem:[#allocation2 + $0x70] sm:$0xff]
    %v2075 = vld [vmem:[#allocation2 + $0x78] sm:$0xff]
    %v2076 = vld [vmem:[#allocation2 + $0x80] sm:$0xff]
    %v2077 = vld [vmem:[#allocation2 + $0x88] sm:$0xff]
    %v2078 = vld [vmem:[#allocation2 + $0x90] sm:$0xff]
    %v2079 = vld [vmem:[#allocation2 + $0x98] sm:$0xff]
    %v2080 = vld [vmem:[#allocation2 + $0xa0] sm:$0xff]
    %v2081 = vld [vmem:[#allocation2 + $0xa8] sm:$0xff]
    %v2082 = vld [vmem:[#allocation2 + $0xb0] sm:$0xff]
    %v2083 = vld [vmem:[#allocation2 + $0xb8] sm:$0xff]
    %v2084 = vld [vmem:[#allocation2 + $0xc0] sm:$0xff]
    %v2085 = vld [vmem:[#allocation2 + $0xc8] sm:$0xff]
    %v2086 = vld [vmem:[#allocation2 + $0xd0] sm:$0xff]
    %v2087 = vld [vmem:[#allocation2 + $0xd8] sm:$0xff]
    %v2088 = vld [vmem:[#allocation2 + $0xe0] sm:$0xff]
    %v2089 = vld [vmem:[#allocation2 + $0xe8] sm:$0xff]
    %v2090 = vld [vmem:[#allocation2 + $0xf0] sm:$0xff]
    %v2091 = vld [vmem:[#allocation2 + $0xf8] sm:$0xff]
    %v2092 = vld [vmem:[#allocation2 + $0x100] sm:$0xff]
    %v2093 = vld [vmem:[#allocation2 + $0x108] sm:$0xff]
    %v2094 = vld [vmem:[#allocation2 + $0x110] sm:$0xff]
    %v2095 = vld [vmem:[#allocation2 + $0x118] sm:$0xff]
    %v2096 = vld [vmem:[#allocation2 + $0x120] sm:$0xff]
    %v2097 = vld [vmem:[#allocation2 + $0x128] sm:$0xff]
    %v2098 = vld [vmem:[#allocation2 + $0x130] sm:$0xff]
    %v2099 = vld [vmem:[#allocation2 + $0x138] sm:$0xff]
    %v2100 = vld [vmem:[#allocation2 + $0x140] sm:$0xff]
    %v2101 = vld [vmem:[#allocation2 + $0x148] sm:$0xff]
    %v2102 = vld [vmem:[#allocation2 + $0x150] sm:$0xff]
    %v2103 = vld [vmem:[#allocation2 + $0x158] sm:$0xff]
    %v2104 = vld [vmem:[#allocation2 + $0x160] sm:$0xff]
    %v2105 = vld [vmem:[#allocation2 + $0x168] sm:$0xff]
    %v2106 = vld [vmem:[#allocation2 + $0x170] sm:$0xff]
    %v2107 = vld [vmem:[#allocation2 + $0x178] sm:$0xff]
    %v2108 = vld [vmem:[#allocation2 + $0x180] sm:$0xff]
    %v2109 = vld [vmem:[#allocation2 + $0x188] sm:$0xff]
    %v2110 = vld [vmem:[#allocation2 + $0x190] sm:$0xff]
    %v2111 = vld [vmem:[#allocation2 + $0x198] sm:$0xff]
    %v2112 = vld [vmem:[#allocation2 + $0x1a0] sm:$0xff]
    %v2113 = vld [vmem:[#allocation2 + $0x1a8] sm:$0xff]
    %v2114 = vld [vmem:[#allocation2 + $0x1b0] sm:$0xff]
    %v2115 = vld [vmem:[#allocation2 + $0x1b8] sm:$0xff]
    %v2116 = vld [vmem:[#allocation2 + $0x1c0] sm:$0xff]
    %v2117 = vld [vmem:[#allocation2 + $0x1c8] sm:$0xff]
    %v2118 = vld [vmem:[#allocation2 + $0x1d0] sm:$0xff]
    %v2119 = vld [vmem:[#allocation2 + $0x1d8] sm:$0xff]
    %v2120 = vld [vmem:[#allocation2 + $0x1e0] sm:$0xff]
    %v2121 = vld [vmem:[#allocation2 + $0x1e8] sm:$0xff]
    %v2122 = vld [vmem:[#allocation2 + $0x1f0] sm:$0xff]
    %v2123 = vld [vmem:[#allocation2 + $0x1f8] sm:$0xff]
    %v2124 = vlaneseq
    %v2125 = vshrl.u32 %v2124, 7
    %v2126 = vsub.s32 0, %v2125
    %v2127 = vrot.slane %v1987, %v2126
    %v2128 = vmul.f32 %v2060, %v2127
    %v2129 = vmul.f32 %v2061, %v2127
    %v2130 = vmul.f32 %v2062, %v2127
    %v2131 = vmul.f32 %v2063, %v2127
    %v2132 = vmul.f32 %v2064, %v2127
    %v2133 = vmul.f32 %v2065, %v2127
    %v2134 = vmul.f32 %v2066, %v2127
    %v2135 = vmul.f32 %v2067, %v2127
    %v2136 = vmul.f32 %v2068, %v2127
    %v2137 = vmul.f32 %v2069, %v2127
    %v2138 = vmul.f32 %v2070, %v2127
    %v2139 = vmul.f32 %v2071, %v2127
    %v2140 = vmul.f32 %v2072, %v2127
    %v2141 = vmul.f32 %v2073, %v2127
    %v2142 = vmul.f32 %v2074, %v2127
    %v2143 = vmul.f32 %v2075, %v2127
    %v2144 = vmul.f32 %v2076, %v2127
    %v2145 = vmul.f32 %v2077, %v2127
    %v2146 = vmul.f32 %v2078, %v2127
    %v2147 = vmul.f32 %v2079, %v2127
    %v2148 = vmul.f32 %v2080, %v2127
    %v2149 = vmul.f32 %v2081, %v2127
    %v2150 = vmul.f32 %v2082, %v2127
    %v2151 = vmul.f32 %v2083, %v2127
    %v2152 = vmul.f32 %v2084, %v2127
    %v2153 = vmul.f32 %v2085, %v2127
    %v2154 = vmul.f32 %v2086, %v2127
    %v2155 = vmul.f32 %v2087, %v2127
    %v2156 = vmul.f32 %v2088, %v2127
    %v2157 = vmul.f32 %v2089, %v2127
    %v2158 = vmul.f32 %v2090, %v2127
    %v2159 = vmul.f32 %v2091, %v2127
    %v2160 = vmul.f32 %v2092, %v2127
    %v2161 = vmul.f32 %v2093, %v2127
    %v2162 = vmul.f32 %v2094, %v2127
    %v2163 = vmul.f32 %v2095, %v2127
    %v2164 = vmul.f32 %v2096, %v2127
    %v2165 = vmul.f32 %v2097, %v2127
    %v2166 = vmul.f32 %v2098, %v2127
    %v2167 = vmul.f32 %v2099, %v2127
    %v2168 = vmul.f32 %v2100, %v2127
    %v2169 = vmul.f32 %v2101, %v2127
    %v2170 = vmul.f32 %v2102, %v2127
    %v2171 = vmul.f32 %v2103, %v2127
    %v2172 = vmul.f32 %v2104, %v2127
    %v2173 = vmul.f32 %v2105, %v2127
    %v2174 = vmul.f32 %v2106, %v2127
    %v2175 = vmul.f32 %v2107, %v2127
    %v2176 = vmul.f32 %v2108, %v2127
    %v2177 = vmul.f32 %v2109, %v2127
    %v2178 = vmul.f32 %v2110, %v2127
    %v2179 = vmul.f32 %v2111, %v2127
    %v2180 = vmul.f32 %v2112, %v2127
    %v2181 = vmul.f32 %v2113, %v2127
    %v2182 = vmul.f32 %v2114, %v2127
    %v2183 = vmul.f32 %v2115, %v2127
    %v2184 = vmul.f32 %v2116, %v2127
    %v2185 = vmul.f32 %v2117, %v2127
    %v2186 = vmul.f32 %v2118, %v2127
    %v2187 = vmul.f32 %v2119, %v2127
    %v2188 = vmul.f32 %v2120, %v2127
    %v2189 = vmul.f32 %v2121, %v2127
    %v2190 = vmul.f32 %v2122, %v2127
    %v2191 = vmul.f32 %v2123, %v2127
    %v2192 = vlaneseq
    %v2193 = vshrl.u32 %v2192, 7
    %v2194 = vsub.s32 0, %v2193
    %v2195 = vrot.slane %v2057, %v2194
    %v2196 = vadd.f32 %v2128, %v2195
    %v2197 = vadd.f32 %v2129, %v2195
    %v2198 = vadd.f32 %v2130, %v2195
    %v2199 = vadd.f32 %v2131, %v2195
    %v2200 = vadd.f32 %v2132, %v2195
    %v2201 = vadd.f32 %v2133, %v2195
    %v2202 = vadd.f32 %v2134, %v2195
    %v2203 = vadd.f32 %v2135, %v2195
    %v2204 = vadd.f32 %v2136, %v2195
    %v2205 = vadd.f32 %v2137, %v2195
    %v2206 = vadd.f32 %v2138, %v2195
    %v2207 = vadd.f32 %v2139, %v2195
    %v2208 = vadd.f32 %v2140, %v2195
    %v2209 = vadd.f32 %v2141, %v2195
    %v2210 = vadd.f32 %v2142, %v2195
    %v2211 = vadd.f32 %v2143, %v2195
    %v2212 = vadd.f32 %v2144, %v2195
    %v2213 = vadd.f32 %v2145, %v2195
    %v2214 = vadd.f32 %v2146, %v2195
    %v2215 = vadd.f32 %v2147, %v2195
    %v2216 = vadd.f32 %v2148, %v2195
    %v2217 = vadd.f32 %v2149, %v2195
    %v2218 = vadd.f32 %v2150, %v2195
    %v2219 = vadd.f32 %v2151, %v2195
    %v2220 = vadd.f32 %v2152, %v2195
    %v2221 = vadd.f32 %v2153, %v2195
    %v2222 = vadd.f32 %v2154, %v2195
    %v2223 = vadd.f32 %v2155, %v2195
    %v2224 = vadd.f32 %v2156, %v2195
    %v2225 = vadd.f32 %v2157, %v2195
    %v2226 = vadd.f32 %v2158, %v2195
    %v2227 = vadd.f32 %v2159, %v2195
    %v2228 = vadd.f32 %v2160, %v2195
    %v2229 = vadd.f32 %v2161, %v2195
    %v2230 = vadd.f32 %v2162, %v2195
    %v2231 = vadd.f32 %v2163, %v2195
    %v2232 = vadd.f32 %v2164, %v2195
    %v2233 = vadd.f32 %v2165, %v2195
    %v2234 = vadd.f32 %v2166, %v2195
    %v2235 = vadd.f32 %v2167, %v2195
    %v2236 = vadd.f32 %v2168, %v2195
    %v2237 = vadd.f32 %v2169, %v2195
    %v2238 = vadd.f32 %v2170, %v2195
    %v2239 = vadd.f32 %v2171, %v2195
    %v2240 = vadd.f32 %v2172, %v2195
    %v2241 = vadd.f32 %v2173, %v2195
    %v2242 = vadd.f32 %v2174, %v2195
    %v2243 = vadd.f32 %v2175, %v2195
    %v2244 = vadd.f32 %v2176, %v2195
    %v2245 = vadd.f32 %v2177, %v2195
    %v2246 = vadd.f32 %v2178, %v2195
    %v2247 = vadd.f32 %v2179, %v2195
    %v2248 = vadd.f32 %v2180, %v2195
    %v2249 = vadd.f32 %v2181, %v2195
    %v2250 = vadd.f32 %v2182, %v2195
    %v2251 = vadd.f32 %v2183, %v2195
    %v2252 = vadd.f32 %v2184, %v2195
    %v2253 = vadd.f32 %v2185, %v2195
    %v2254 = vadd.f32 %v2186, %v2195
    %v2255 = vadd.f32 %v2187, %v2195
    %v2256 = vadd.f32 %v2188, %v2195
    %v2257 = vadd.f32 %v2189, %v2195
    %v2258 = vadd.f32 %v2190, %v2195
    %v2259 = vadd.f32 %v2191, %v2195
    %vm2260 = vcmp.ge.f32.partialorder %v2196, 0.0
    %vm2261 = vcmp.ge.f32.partialorder %v2197, 0.0
    %vm2262 = vcmp.ge.f32.partialorder %v2198, 0.0
    %vm2263 = vcmp.ge.f32.partialorder %v2199, 0.0
    %vm2264 = vcmp.ge.f32.partialorder %v2200, 0.0
    %vm2265 = vcmp.ge.f32.partialorder %v2201, 0.0
    %vm2266 = vcmp.ge.f32.partialorder %v2202, 0.0
    %vm2267 = vcmp.ge.f32.partialorder %v2203, 0.0
    %vm2268 = vcmp.ge.f32.partialorder %v2204, 0.0
    %vm2269 = vcmp.ge.f32.partialorder %v2205, 0.0
    %vm2270 = vcmp.ge.f32.partialorder %v2206, 0.0
    %vm2271 = vcmp.ge.f32.partialorder %v2207, 0.0
    %vm2272 = vcmp.ge.f32.partialorder %v2208, 0.0
    %vm2273 = vcmp.ge.f32.partialorder %v2209, 0.0
    %vm2274 = vcmp.ge.f32.partialorder %v2210, 0.0
    %vm2275 = vcmp.ge.f32.partialorder %v2211, 0.0
    %vm2276 = vcmp.ge.f32.partialorder %v2212, 0.0
    %vm2277 = vcmp.ge.f32.partialorder %v2213, 0.0
    %vm2278 = vcmp.ge.f32.partialorder %v2214, 0.0
    %vm2279 = vcmp.ge.f32.partialorder %v2215, 0.0
    %vm2280 = vcmp.ge.f32.partialorder %v2216, 0.0
    %vm2281 = vcmp.ge.f32.partialorder %v2217, 0.0
    %vm2282 = vcmp.ge.f32.partialorder %v2218, 0.0
    %vm2283 = vcmp.ge.f32.partialorder %v2219, 0.0
    %vm2284 = vcmp.ge.f32.partialorder %v2220, 0.0
    %vm2285 = vcmp.ge.f32.partialorder %v2221, 0.0
    %vm2286 = vcmp.ge.f32.partialorder %v2222, 0.0
    %vm2287 = vcmp.ge.f32.partialorder %v2223, 0.0
    %vm2288 = vcmp.ge.f32.partialorder %v2224, 0.0
    %vm2289 = vcmp.ge.f32.partialorder %v2225, 0.0
    %vm2290 = vcmp.ge.f32.partialorder %v2226, 0.0
    %vm2291 = vcmp.ge.f32.partialorder %v2227, 0.0
    %vm2292 = vcmp.ge.f32.partialorder %v2228, 0.0
    %vm2293 = vcmp.ge.f32.partialorder %v2229, 0.0
    %vm2294 = vcmp.ge.f32.partialorder %v2230, 0.0
    %vm2295 = vcmp.ge.f32.partialorder %v2231, 0.0
    %vm2296 = vcmp.ge.f32.partialorder %v2232, 0.0
    %vm2297 = vcmp.ge.f32.partialorder %v2233, 0.0
    %vm2298 = vcmp.ge.f32.partialorder %v2234, 0.0
    %vm2299 = vcmp.ge.f32.partialorder %v2235, 0.0
    %vm2300 = vcmp.ge.f32.partialorder %v2236, 0.0
    %vm2301 = vcmp.ge.f32.partialorder %v2237, 0.0
    %vm2302 = vcmp.ge.f32.partialorder %v2238, 0.0
    %vm2303 = vcmp.ge.f32.partialorder %v2239, 0.0
    %vm2304 = vcmp.ge.f32.partialorder %v2240, 0.0
    %vm2305 = vcmp.ge.f32.partialorder %v2241, 0.0
    %vm2306 = vcmp.ge.f32.partialorder %v2242, 0.0
    %vm2307 = vcmp.ge.f32.partialorder %v2243, 0.0
    %vm2308 = vcmp.ge.f32.partialorder %v2244, 0.0
    %vm2309 = vcmp.ge.f32.partialorder %v2245, 0.0
    %vm2310 = vcmp.ge.f32.partialorder %v2246, 0.0
    %vm2311 = vcmp.ge.f32.partialorder %v2247, 0.0
    %vm2312 = vcmp.ge.f32.partialorder %v2248, 0.0
    %vm2313 = vcmp.ge.f32.partialorder %v2249, 0.0
    %vm2314 = vcmp.ge.f32.partialorder %v2250, 0.0
    %vm2315 = vcmp.ge.f32.partialorder %v2251, 0.0
    %vm2316 = vcmp.ge.f32.partialorder %v2252, 0.0
    %vm2317 = vcmp.ge.f32.partialorder %v2253, 0.0
    %vm2318 = vcmp.ge.f32.partialorder %v2254, 0.0
    %vm2319 = vcmp.ge.f32.partialorder %v2255, 0.0
    %vm2320 = vcmp.ge.f32.partialorder %v2256, 0.0
    %vm2321 = vcmp.ge.f32.partialorder %v2257, 0.0
    %vm2322 = vcmp.ge.f32.partialorder %v2258, 0.0
    %vm2323 = vcmp.ge.f32.partialorder %v2259, 0.0
    %v2324 = vmul.f32 %v2196, 0.2
    %v2325 = vmul.f32 %v2197, 0.2
    %v2326 = vmul.f32 %v2198, 0.2
    %v2327 = vmul.f32 %v2199, 0.2
    %v2328 = vmul.f32 %v2200, 0.2
    %v2329 = vmul.f32 %v2201, 0.2
    %v2330 = vmul.f32 %v2202, 0.2
    %v2331 = vmul.f32 %v2203, 0.2
    %v2332 = vmul.f32 %v2204, 0.2
    %v2333 = vmul.f32 %v2205, 0.2
    %v2334 = vmul.f32 %v2206, 0.2
    %v2335 = vmul.f32 %v2207, 0.2
    %v2336 = vmul.f32 %v2208, 0.2
    %v2337 = vmul.f32 %v2209, 0.2
    %v2338 = vmul.f32 %v2210, 0.2
    %v2339 = vmul.f32 %v2211, 0.2
    %v2340 = vmul.f32 %v2212, 0.2
    %v2341 = vmul.f32 %v2213, 0.2
    %v2342 = vmul.f32 %v2214, 0.2
    %v2343 = vmul.f32 %v2215, 0.2
    %v2344 = vmul.f32 %v2216, 0.2
    %v2345 = vmul.f32 %v2217, 0.2
    %v2346 = vmul.f32 %v2218, 0.2
    %v2347 = vmul.f32 %v2219, 0.2
    %v2348 = vmul.f32 %v2220, 0.2
    %v2349 = vmul.f32 %v2221, 0.2
    %v2350 = vmul.f32 %v2222, 0.2
    %v2351 = vmul.f32 %v2223, 0.2
    %v2352 = vmul.f32 %v2224, 0.2
    %v2353 = vmul.f32 %v2225, 0.2
    %v2354 = vmul.f32 %v2226, 0.2
    %v2355 = vmul.f32 %v2227, 0.2
    %v2356 = vmul.f32 %v2228, 0.2
    %v2357 = vmul.f32 %v2229, 0.2
    %v2358 = vmul.f32 %v2230, 0.2
    %v2359 = vmul.f32 %v2231, 0.2
    %v2360 = vmul.f32 %v2232, 0.2
    %v2361 = vmul.f32 %v2233, 0.2
    %v2362 = vmul.f32 %v2234, 0.2
    %v2363 = vmul.f32 %v2235, 0.2
    %v2364 = vmul.f32 %v2236, 0.2
    %v2365 = vmul.f32 %v2237, 0.2
    %v2366 = vmul.f32 %v2238, 0.2
    %v2367 = vmul.f32 %v2239, 0.2
    %v2368 = vmul.f32 %v2240, 0.2
    %v2369 = vmul.f32 %v2241, 0.2
    %v2370 = vmul.f32 %v2242, 0.2
    %v2371 = vmul.f32 %v2243, 0.2
    %v2372 = vmul.f32 %v2244, 0.2
    %v2373 = vmul.f32 %v2245, 0.2
    %v2374 = vmul.f32 %v2246, 0.2
    %v2375 = vmul.f32 %v2247, 0.2
    %v2376 = vmul.f32 %v2248, 0.2
    %v2377 = vmul.f32 %v2249, 0.2
    %v2378 = vmul.f32 %v2250, 0.2
    %v2379 = vmul.f32 %v2251, 0.2
    %v2380 = vmul.f32 %v2252, 0.2
    %v2381 = vmul.f32 %v2253, 0.2
    %v2382 = vmul.f32 %v2254, 0.2
    %v2383 = vmul.f32 %v2255, 0.2
    %v2384 = vmul.f32 %v2256, 0.2
    %v2385 = vmul.f32 %v2257, 0.2
    %v2386 = vmul.f32 %v2258, 0.2
    %v2387 = vmul.f32 %v2259, 0.2
    %v2388 = vsel %vm2260, %v2196, %v2324
    %v2389 = vsel %vm2261, %v2197, %v2325
    %v2390 = vsel %vm2262, %v2198, %v2326
    %v2391 = vsel %vm2263, %v2199, %v2327
    %v2392 = vsel %vm2264, %v2200, %v2328
    %v2393 = vsel %vm2265, %v2201, %v2329
    %v2394 = vsel %vm2266, %v2202, %v2330
    %v2395 = vsel %vm2267, %v2203, %v2331
    %v2396 = vsel %vm2268, %v2204, %v2332
    %v2397 = vsel %vm2269, %v2205, %v2333
    %v2398 = vsel %vm2270, %v2206, %v2334
    %v2399 = vsel %vm2271, %v2207, %v2335
    %v2400 = vsel %vm2272, %v2208, %v2336
    %v2401 = vsel %vm2273, %v2209, %v2337
    %v2402 = vsel %vm2274, %v2210, %v2338
    %v2403 = vsel %vm2275, %v2211, %v2339
    %v2404 = vsel %vm2276, %v2212, %v2340
    %v2405 = vsel %vm2277, %v2213, %v2341
    %v2406 = vsel %vm2278, %v2214, %v2342
    %v2407 = vsel %vm2279, %v2215, %v2343
    %v2408 = vsel %vm2280, %v2216, %v2344
    %v2409 = vsel %vm2281, %v2217, %v2345
    %v2410 = vsel %vm2282, %v2218, %v2346
    %v2411 = vsel %vm2283, %v2219, %v2347
    %v2412 = vsel %vm2284, %v2220, %v2348
    %v2413 = vsel %vm2285, %v2221, %v2349
    %v2414 = vsel %vm2286, %v2222, %v2350
    %v2415 = vsel %vm2287, %v2223, %v2351
    %v2416 = vsel %vm2288, %v2224, %v2352
    %v2417 = vsel %vm2289, %v2225, %v2353
    %v2418 = vsel %vm2290, %v2226, %v2354
    %v2419 = vsel %vm2291, %v2227, %v2355
    %v2420 = vsel %vm2292, %v2228, %v2356
    %v2421 = vsel %vm2293, %v2229, %v2357
    %v2422 = vsel %vm2294, %v2230, %v2358
    %v2423 = vsel %vm2295, %v2231, %v2359
    %v2424 = vsel %vm2296, %v2232, %v2360
    %v2425 = vsel %vm2297, %v2233, %v2361
    %v2426 = vsel %vm2298, %v2234, %v2362
    %v2427 = vsel %vm2299, %v2235, %v2363
    %v2428 = vsel %vm2300, %v2236, %v2364
    %v2429 = vsel %vm2301, %v2237, %v2365
    %v2430 = vsel %vm2302, %v2238, %v2366
    %v2431 = vsel %vm2303, %v2239, %v2367
    %v2432 = vsel %vm2304, %v2240, %v2368
    %v2433 = vsel %vm2305, %v2241, %v2369
    %v2434 = vsel %vm2306, %v2242, %v2370
    %v2435 = vsel %vm2307, %v2243, %v2371
    %v2436 = vsel %vm2308, %v2244, %v2372
    %v2437 = vsel %vm2309, %v2245, %v2373
    %v2438 = vsel %vm2310, %v2246, %v2374
    %v2439 = vsel %vm2311, %v2247, %v2375
    %v2440 = vsel %vm2312, %v2248, %v2376
    %v2441 = vsel %vm2313, %v2249, %v2377
    %v2442 = vsel %vm2314, %v2250, %v2378
    %v2443 = vsel %vm2315, %v2251, %v2379
    %v2444 = vsel %vm2316, %v2252, %v2380
    %v2445 = vsel %vm2317, %v2253, %v2381
    %v2446 = vsel %vm2318, %v2254, %v2382
    %v2447 = vsel %vm2319, %v2255, %v2383
    %v2448 = vsel %vm2320, %v2256, %v2384
    %v2449 = vsel %vm2321, %v2257, %v2385
    %v2450 = vsel %vm2322, %v2258, %v2386
    %v2451 = vsel %vm2323, %v2259, %v2387
    %v2452 = vpack.c.bf16 %v2389, %v2388
    %v2453 = vpack.c.bf16 %v2391, %v2390
    %v2454 = vpack.c.bf16 %v2393, %v2392
    %v2455 = vpack.c.bf16 %v2395, %v2394
    %v2456 = vpack.c.bf16 %v2397, %v2396
    %v2457 = vpack.c.bf16 %v2399, %v2398
    %v2458 = vpack.c.bf16 %v2401, %v2400
    %v2459 = vpack.c.bf16 %v2403, %v2402
    %v2460 = vpack.c.bf16 %v2405, %v2404
    %v2461 = vpack.c.bf16 %v2407, %v2406
    %v2462 = vpack.c.bf16 %v2409, %v2408
    %v2463 = vpack.c.bf16 %v2411, %v2410
    %v2464 = vpack.c.bf16 %v2413, %v2412
    %v2465 = vpack.c.bf16 %v2415, %v2414
    %v2466 = vpack.c.bf16 %v2417, %v2416
    %v2467 = vpack.c.bf16 %v2419, %v2418
    %v2468 = vpack.c.bf16 %v2421, %v2420
    %v2469 = vpack.c.bf16 %v2423, %v2422
    %v2470 = vpack.c.bf16 %v2425, %v2424
    %v2471 = vpack.c.bf16 %v2427, %v2426
    %v2472 = vpack.c.bf16 %v2429, %v2428
    %v2473 = vpack.c.bf16 %v2431, %v2430
    %v2474 = vpack.c.bf16 %v2433, %v2432
    %v2475 = vpack.c.bf16 %v2435, %v2434
    %v2476 = vpack.c.bf16 %v2437, %v2436
    %v2477 = vpack.c.bf16 %v2439, %v2438
    %v2478 = vpack.c.bf16 %v2441, %v2440
    %v2479 = vpack.c.bf16 %v2443, %v2442
    %v2480 = vpack.c.bf16 %v2445, %v2444
    %v2481 = vpack.c.bf16 %v2447, %v2446
    %v2482 = vpack.c.bf16 %v2449, %v2448
    %v2483 = vpack.c.bf16 %v2451, %v2450
    %v2516 = vunpack.c.l.b16 %v2452
    %v2517 = vunpack.c.h.b16 %v2452
    %v2518 = vunpack.c.l.b16 %v2453
    %v2519 = vunpack.c.h.b16 %v2453
    %v2520 = vunpack.c.l.b16 %v2454
    %v2521 = vunpack.c.h.b16 %v2454
    %v2522 = vunpack.c.l.b16 %v2455
    %v2523 = vunpack.c.h.b16 %v2455
    %v2524 = vunpack.c.l.b16 %v2456
    %v2525 = vunpack.c.h.b16 %v2456
    %v2526 = vunpack.c.l.b16 %v2457
    %v2527 = vunpack.c.h.b16 %v2457
    %v2528 = vunpack.c.l.b16 %v2458
    %v2529 = vunpack.c.h.b16 %v2458
    %v2530 = vunpack.c.l.b16 %v2459
    %v2531 = vunpack.c.h.b16 %v2459
    %v2532 = vunpack.c.l.b16 %v2460
    %v2533 = vunpack.c.h.b16 %v2460
    %v2534 = vunpack.c.l.b16 %v2461
    %v2535 = vunpack.c.h.b16 %v2461
    %v2536 = vunpack.c.l.b16 %v2462
    %v2537 = vunpack.c.h.b16 %v2462
    %v2538 = vunpack.c.l.b16 %v2463
    %v2539 = vunpack.c.h.b16 %v2463
    %v2540 = vunpack.c.l.b16 %v2464
    %v2541 = vunpack.c.h.b16 %v2464
    %v2542 = vunpack.c.l.b16 %v2465
    %v2543 = vunpack.c.h.b16 %v2465
    %v2544 = vunpack.c.l.b16 %v2466
    %v2545 = vunpack.c.h.b16 %v2466
    %v2546 = vunpack.c.l.b16 %v2467
    %v2547 = vunpack.c.h.b16 %v2467
    %v2548 = vunpack.c.l.b16 %v2468
    %v2549 = vunpack.c.h.b16 %v2468
    %v2550 = vunpack.c.l.b16 %v2469
    %v2551 = vunpack.c.h.b16 %v2469
    %v2552 = vunpack.c.l.b16 %v2470
    %v2553 = vunpack.c.h.b16 %v2470
    %v2554 = vunpack.c.l.b16 %v2471
    %v2555 = vunpack.c.h.b16 %v2471
    %v2556 = vunpack.c.l.b16 %v2472
    %v2557 = vunpack.c.h.b16 %v2472
    %v2558 = vunpack.c.l.b16 %v2473
    %v2559 = vunpack.c.h.b16 %v2473
    %v2560 = vunpack.c.l.b16 %v2474
    %v2561 = vunpack.c.h.b16 %v2474
    %v2562 = vunpack.c.l.b16 %v2475
    %v2563 = vunpack.c.h.b16 %v2475
    %v2564 = vunpack.c.l.b16 %v2476
    %v2565 = vunpack.c.h.b16 %v2476
    %v2566 = vunpack.c.l.b16 %v2477
    %v2567 = vunpack.c.h.b16 %v2477
    %v2568 = vunpack.c.l.b16 %v2478
    %v2569 = vunpack.c.h.b16 %v2478
    %v2570 = vunpack.c.l.b16 %v2479
    %v2571 = vunpack.c.h.b16 %v2479
    %v2572 = vunpack.c.l.b16 %v2480
    %v2573 = vunpack.c.h.b16 %v2480
    %v2574 = vunpack.c.l.b16 %v2481
    %v2575 = vunpack.c.h.b16 %v2481
    %v2576 = vunpack.c.l.b16 %v2482
    %v2577 = vunpack.c.h.b16 %v2482
    %v2578 = vunpack.c.l.b16 %v2483
    %v2579 = vunpack.c.h.b16 %v2483
    %v2580 = vpack.c.b16 %v2516, %v2516
    %v2581 = vpack.c.b16 %v2517, %v2517
    %v2582 = vpack.c.b16 %v2518, %v2518
    %v2583 = vpack.c.b16 %v2519, %v2519
    %v2584 = vpack.c.b16 %v2520, %v2520
    %v2585 = vpack.c.b16 %v2521, %v2521
    %v2586 = vpack.c.b16 %v2522, %v2522
    %v2587 = vpack.c.b16 %v2523, %v2523
    %v2588 = vpack.c.b16 %v2524, %v2524
    %v2589 = vpack.c.b16 %v2525, %v2525
    %v2590 = vpack.c.b16 %v2526, %v2526
    %v2591 = vpack.c.b16 %v2527, %v2527
    %v2592 = vpack.c.b16 %v2528, %v2528
    %v2593 = vpack.c.b16 %v2529, %v2529
    %v2594 = vpack.c.b16 %v2530, %v2530
    %v2595 = vpack.c.b16 %v2531, %v2531
    %v2596 = vpack.c.b16 %v2532, %v2532
    %v2597 = vpack.c.b16 %v2533, %v2533
    %v2598 = vpack.c.b16 %v2534, %v2534
    %v2599 = vpack.c.b16 %v2535, %v2535
    %v2600 = vpack.c.b16 %v2536, %v2536
    %v2601 = vpack.c.b16 %v2537, %v2537
    %v2602 = vpack.c.b16 %v2538, %v2538
    %v2603 = vpack.c.b16 %v2539, %v2539
    %v2604 = vpack.c.b16 %v2540, %v2540
    %v2605 = vpack.c.b16 %v2541, %v2541
    %v2606 = vpack.c.b16 %v2542, %v2542
    %v2607 = vpack.c.b16 %v2543, %v2543
    %v2608 = vpack.c.b16 %v2544, %v2544
    %v2609 = vpack.c.b16 %v2545, %v2545
    %v2610 = vpack.c.b16 %v2546, %v2546
    %v2611 = vpack.c.b16 %v2547, %v2547
    %v2612 = vpack.c.b16 %v2548, %v2548
    %v2613 = vpack.c.b16 %v2549, %v2549
    %v2614 = vpack.c.b16 %v2550, %v2550
    %v2615 = vpack.c.b16 %v2551, %v2551
    %v2616 = vpack.c.b16 %v2552, %v2552
    %v2617 = vpack.c.b16 %v2553, %v2553
    %v2618 = vpack.c.b16 %v2554, %v2554
    %v2619 = vpack.c.b16 %v2555, %v2555
    %v2620 = vpack.c.b16 %v2556, %v2556
    %v2621 = vpack.c.b16 %v2557, %v2557
    %v2622 = vpack.c.b16 %v2558, %v2558
    %v2623 = vpack.c.b16 %v2559, %v2559
    %v2624 = vpack.c.b16 %v2560, %v2560
    %v2625 = vpack.c.b16 %v2561, %v2561
    %v2626 = vpack.c.b16 %v2562, %v2562
    %v2627 = vpack.c.b16 %v2563, %v2563
    %v2628 = vpack.c.b16 %v2564, %v2564
    %v2629 = vpack.c.b16 %v2565, %v2565
    %v2630 = vpack.c.b16 %v2566, %v2566
    %v2631 = vpack.c.b16 %v2567, %v2567
    %v2632 = vpack.c.b16 %v2568, %v2568
    %v2633 = vpack.c.b16 %v2569, %v2569
    %v2634 = vpack.c.b16 %v2570, %v2570
    %v2635 = vpack.c.b16 %v2571, %v2571
    %v2636 = vpack.c.b16 %v2572, %v2572
    %v2637 = vpack.c.b16 %v2573, %v2573
    %v2638 = vpack.c.b16 %v2574, %v2574
    %v2639 = vpack.c.b16 %v2575, %v2575
    %v2640 = vpack.c.b16 %v2576, %v2576
    %v2641 = vpack.c.b16 %v2577, %v2577
    %v2642 = vpack.c.b16 %v2578, %v2578
    %v2643 = vpack.c.b16 %v2579, %v2579
    %2708 = vst [vmem:[%s6] sm:$0xf] %v2580
    %2709 = vst [vmem:[%s6 + $0x4] sm:$0xf] %v2581
    %2710 = vst [vmem:[%s6 + $0x8] sm:$0xf] %v2582
    %2711 = vst [vmem:[%s6 + $0xc] sm:$0xf] %v2583
    %2712 = vst [vmem:[%s6 + $0x10] sm:$0xf] %v2584
    %2713 = vst [vmem:[%s6 + $0x14] sm:$0xf] %v2585
    %2714 = vst [vmem:[%s6 + $0x18] sm:$0xf] %v2586
    %2715 = vst [vmem:[%s6 + $0x1c] sm:$0xf] %v2587
    %2716 = vst [vmem:[%s6 + $0x20] sm:$0xf] %v2588
    %2717 = vst [vmem:[%s6 + $0x24] sm:$0xf] %v2589
    %2718 = vst [vmem:[%s6 + $0x28] sm:$0xf] %v2590
    %2719 = vst [vmem:[%s6 + $0x2c] sm:$0xf] %v2591
    %2720 = vst [vmem:[%s6 + $0x30] sm:$0xf] %v2592
    %2721 = vst [vmem:[%s6 + $0x34] sm:$0xf] %v2593
    %2722 = vst [vmem:[%s6 + $0x38] sm:$0xf] %v2594
    %2723 = vst [vmem:[%s6 + $0x3c] sm:$0xf] %v2595
    %2724 = vst [vmem:[%s6 + $0x40] sm:$0xf] %v2596
    %2725 = vst [vmem:[%s6 + $0x44] sm:$0xf] %v2597
    %2726 = vst [vmem:[%s6 + $0x48] sm:$0xf] %v2598
    %2727 = vst [vmem:[%s6 + $0x4c] sm:$0xf] %v2599
    %2728 = vst [vmem:[%s6 + $0x50] sm:$0xf] %v2600
    %2729 = vst [vmem:[%s6 + $0x54] sm:$0xf] %v2601
    %2730 = vst [vmem:[%s6 + $0x58] sm:$0xf] %v2602
    %2731 = vst [vmem:[%s6 + $0x5c] sm:$0xf] %v2603
    %2732 = vst [vmem:[%s6 + $0x60] sm:$0xf] %v2604
    %2733 = vst [vmem:[%s6 + $0x64] sm:$0xf] %v2605
    %2734 = vst [vmem:[%s6 + $0x68] sm:$0xf] %v2606
    %2735 = vst [vmem:[%s6 + $0x6c] sm:$0xf] %v2607
    %2736 = vst [vmem:[%s6 + $0x70] sm:$0xf] %v2608
    %2737 = vst [vmem:[%s6 + $0x74] sm:$0xf] %v2609
    %2738 = vst [vmem:[%s6 + $0x78] sm:$0xf] %v2610
    %2739 = vst [vmem:[%s6 + $0x7c] sm:$0xf] %v2611
    %2740 = vst [vmem:[%s6 + $0x80] sm:$0xf] %v2612
    %2741 = vst [vmem:[%s6 + $0x84] sm:$0xf] %v2613
    %2742 = vst [vmem:[%s6 + $0x88] sm:$0xf] %v2614
    %2743 = vst [vmem:[%s6 + $0x8c] sm:$0xf] %v2615
    %2744 = vst [vmem:[%s6 + $0x90] sm:$0xf] %v2616
    %2745 = vst [vmem:[%s6 + $0x94] sm:$0xf] %v2617
    %2746 = vst [vmem:[%s6 + $0x98] sm:$0xf] %v2618
    %2747 = vst [vmem:[%s6 + $0x9c] sm:$0xf] %v2619
    %2748 = vst [vmem:[%s6 + $0xa0] sm:$0xf] %v2620
    %2749 = vst [vmem:[%s6 + $0xa4] sm:$0xf] %v2621
    %2750 = vst [vmem:[%s6 + $0xa8] sm:$0xf] %v2622
    %2751 = vst [vmem:[%s6 + $0xac] sm:$0xf] %v2623
    %2752 = vst [vmem:[%s6 + $0xb0] sm:$0xf] %v2624
    %2753 = vst [vmem:[%s6 + $0xb4] sm:$0xf] %v2625
    %2754 = vst [vmem:[%s6 + $0xb8] sm:$0xf] %v2626
    %2755 = vst [vmem:[%s6 + $0xbc] sm:$0xf] %v2627
    %2756 = vst [vmem:[%s6 + $0xc0] sm:$0xf] %v2628
    %2757 = vst [vmem:[%s6 + $0xc4] sm:$0xf] %v2629
    %2758 = vst [vmem:[%s6 + $0xc8] sm:$0xf] %v2630
    %2759 = vst [vmem:[%s6 + $0xcc] sm:$0xf] %v2631
    %2760 = vst [vmem:[%s6 + $0xd0] sm:$0xf] %v2632
    %2761 = vst [vmem:[%s6 + $0xd4] sm:$0xf] %v2633
    %2762 = vst [vmem:[%s6 + $0xd8] sm:$0xf] %v2634
    %2763 = vst [vmem:[%s6 + $0xdc] sm:$0xf] %v2635
    %2764 = vst [vmem:[%s6 + $0xe0] sm:$0xf] %v2636
    %2765 = vst [vmem:[%s6 + $0xe4] sm:$0xf] %v2637
    %2766 = vst [vmem:[%s6 + $0xe8] sm:$0xf] %v2638
    %2767 = vst [vmem:[%s6 + $0xec] sm:$0xf] %v2639
    %2768 = vst [vmem:[%s6 + $0xf0] sm:$0xf] %v2640
    %2769 = vst [vmem:[%s6 + $0xf4] sm:$0xf] %v2641
    %2770 = vst [vmem:[%s6 + $0xf8] sm:$0xf] %v2642
    %2771 = vst [vmem:[%s6 + $0xfc] sm:$0xf] %v2643
  $region33: #{generator_forward.8} parent=0 // pred_fallthru
    _
  // Predicated region
  $region34: #{generator_forward.8} parent=0 // pred_check
    _
  $region35: #{generator_forward.8} parent=0 // pred_check_branch
    %2773 = sbr.rel (0) target = $region37
  $region36: #{generator_forward.8} parent=0 // pred_region
    _
  $region37: #{generator_forward.8} parent=0 // pred_fallthru
    _
  // Predicated region
  $region38: #{generator_forward.8} parent=0 // pred_check
    _
  $region39: #{generator_forward.8} parent=0 // pred_check_branch
    %2775 = sbr.rel (0) target = $region41
  $region40: #{generator_forward.8} parent=0 // pred_region
    _
  $region41: #{generator_forward.8} parent=0 // pred_fallthru
    _

// kernel: generator_forward.9
$region0: #{generator_forward.9}
  #allocation0 [shape = 'u32[]', space=smem, size = 0x4, offset = 0x4, fixed_abs, tag = 'smem constant byte address 0x4 - core index']
  #allocation1 [shape = 'u32[144,128]{1,0:T(1,128)}', space=vmem, size = 0x12000, scoped, tag = 'internal scratch']
  %s0 = inlined_call_operand.vmem [shape: bf16[2048,144], index: 0, kind: input, shape index: {}]
  %s1 = inlined_call_operand.vmem [shape: bf16[144,128], index: 1, kind: input, shape index: {}]
  %s2 = inlined_call_operand.vmem [shape: f32[1,128], index: 2, kind: input, shape index: {}]
  %s3 = inlined_call_operand.vmem [shape: bf16[2048,128], index: 3, kind: output, shape index: {}]
  %s4 = sld [smem:[#allocation0]]
  $region45: #{generator_forward.9} parent=0
    _
  %s6 = ssub.s32 1, %s4
  %s7 = scalar_select 0, %s6, %s4
  loop: start=0, step=1, limit=4
  $region2: #{generator_forward.9} parent=0 // loop_pre_header
    _
  $region3: #{generator_forward.9} parent=0 // loop_header
    %s9 = sphi 0, %s13
    %p10 = scmp.ge.s32.totalorder %s9, 4
    %s19 = sphi 0, %s21
    %s22 = sphi 0, %s19
    %s23 = sphi 0, %s22
    %s39 = sphi 0, %s23
    %s43 = sphi 0, %s43
    %s45 = sphi 0, %s43
    %s46 = sphi 0, %s45
    %s60 = sphi 0, %s46
    %s64 = sphi 0, %s64
    %s66 = sphi 0, %s64
    %s67 = sphi 0, %s66
    %s81 = sphi 0, %s67
    %s87 = sphi 0, %s89
    %s90 = sphi 0, %s87
    %s91 = sphi 0, %s90
    %s107 = sphi 0, %s91
  $region4: #{generator_forward.9} parent=0 // loop_header_branch
    %12 = sbr.rel (%p10) target = $region8
  $region5: #{generator_forward.9} parent=0 // loop_body
    %s14 = ssub.s32 %s9, 1
    %s15 = ssub.s32 %s9, 2
    %s16 = sadd.s32 %s9, 1
    %s17 = ssub.s32 %s9, %s16
    %p18 = scmp.eq.s32.totalorder %s17, 0
    %s20 = sadd.s32 %s19, 1
    %s21 = scalar_select %p18, %s19, %s20
    %p24 = pneg %p18
    %p25 = scmp.eq.s32.totalorder %s9, 1
    %p26 = por %p24, %p25
    %p27 = scmp.ne.s32.totalorder %s19, %s22
    %p28 = scmp.eq.s32.totalorder %s9, 0
    %p29 = por %p27, %p28
    %p30 = scmp.ne.s32.totalorder %s19, %s22
    %p31 = scmp.eq.s32.totalorder %s14, 1
    %p32 = por %p30, %p31
    %p33 = scmp.ne.s32.totalorder %s22, %s23
    %p34 = scmp.eq.s32.totalorder %s14, 0
    %p35 = por %p33, %p34
    %p36 = scmp.ne.s32.totalorder %s22, %s23
    %p37 = scmp.eq.s32.totalorder %s15, 1
    %p38 = por %p36, %p37
    %p40 = scmp.ne.s32.totalorder %s23, %s39
    %p41 = scmp.eq.s32.totalorder %s15, 0
    %p42 = por %p40, %p41
    %s44 = sadd.s32 %s43, 1
    %p47 = scmp.eq.s32.totalorder %s9, 1
    %p48 = scmp.ne.s32.totalorder %s43, %s45
    %p49 = scmp.eq.s32.totalorder %s9, 0
    %p50 = por %p48, %p49
    %p51 = scmp.ne.s32.totalorder %s43, %s45
    %p52 = scmp.eq.s32.totalorder %s14, 1
    %p53 = por %p51, %p52
    %p54 = scmp.ne.s32.totalorder %s45, %s46
    %p55 = scmp.eq.s32.totalorder %s14, 0
    %p56 = por %p54, %p55
    %p57 = scmp.ne.s32.totalorder %s45, %s46
    %p58 = scmp.eq.s32.totalorder %s15, 1
    %p59 = por %p57, %p58
    %p61 = scmp.ne.s32.totalorder %s46, %s60
    %p62 = scmp.eq.s32.totalorder %s15, 0
    %p63 = por %p61, %p62
    %s65 = sadd.s32 %s64, 1
    %p68 = scmp.eq.s32.totalorder %s9, 1
    %p69 = scmp.ne.s32.totalorder %s64, %s66
    %p70 = scmp.eq.s32.totalorder %s9, 0
    %p71 = por %p69, %p70
    %p72 = scmp.ne.s32.totalorder %s64, %s66
    %p73 = scmp.eq.s32.totalorder %s14, 1
    %p74 = por %p72, %p73
    %p75 = scmp.ne.s32.totalorder %s66, %s67
    %p76 = scmp.eq.s32.totalorder %s14, 0
    %p77 = por %p75, %p76
    %p78 = scmp.ne.s32.totalorder %s66, %s67
    %p79 = scmp.eq.s32.totalorder %s15, 1
    %p80 = por %p78, %p79
    %p82 = scmp.ne.s32.totalorder %s67, %s81
    %p83 = scmp.eq.s32.totalorder %s15, 0
    %p84 = por %p82, %p83
    %s85 = ssub.s32 %s9, %s16
    %p86 = scmp.eq.s32.totalorder %s85, 0
    %s88 = sadd.s32 %s87, 1
    %s89 = scalar_select %p86, %s87, %s88
    %p92 = pneg %p86
    %p93 = scmp.eq.s32.totalorder %s9, 1
    %p94 = por %p92, %p93
    %p95 = scmp.ne.s32.totalorder %s87, %s90
    %p96 = scmp.eq.s32.totalorder %s9, 0
    %p97 = por %p95, %p96
    %p98 = scmp.ne.s32.totalorder %s87, %s90
    %p99 = scmp.eq.s32.totalorder %s14, 1
    %p100 = por %p98, %p99
    %p101 = scmp.ne.s32.totalorder %s90, %s91
    %p102 = scmp.eq.s32.totalorder %s14, 0
    %p103 = por %p101, %p102
    %p104 = scmp.ne.s32.totalorder %s90, %s91
    %p105 = scmp.eq.s32.totalorder %s15, 1
    %p106 = por %p104, %p105
    %p108 = scmp.ne.s32.totalorder %s91, %s107
    %p109 = scmp.eq.s32.totalorder %s15, 0
    %p110 = por %p108, %p109
    %p111 = scmp.le.s32.totalorder 1, %s9
    %p112 = scmp.lt.s32.totalorder %s9, 3
    %p113 = pnand %p111, %p112
    %p114 = pneg %p113
    // Predicated region
    $region9: #{generator_forward.9} parent=5 // pred_check
      _
    $region10: #{generator_forward.9} parent=5 // pred_check_branch
      %116 = sbr.rel (%p113) target = $region12
    $region11: #{generator_forward.9} parent=5 // pred_region
      %s117 = ssub.s32 %s9, 1
      // Predicated region
      $region13: #{generator_forward.9} parent=11 // pred_check
        %p118 = pneg %p56
      $region14: #{generator_forward.9} parent=11 // pred_check_branch
        %120 = sbr.rel (%p118) target = $region16
      $region15: #{generator_forward.9} parent=11 // pred_region
        _
      $region16: #{generator_forward.9} parent=11 // pred_fallthru
        _
      // Predicated region
      $region17: #{generator_forward.9} parent=11 // pred_check
        %p121 = pneg %p77
      $region18: #{generator_forward.9} parent=11 // pred_check_branch
        %123 = sbr.rel (%p121) target = $region20
      $region19: #{generator_forward.9} parent=11 // pred_region
        _
      $region20: #{generator_forward.9} parent=11 // pred_fallthru
        _
    $region12: #{generator_forward.9} parent=5 // pred_fallthru
      _
    %p124 = scmp.lt.s32.totalorder %s9, 2
    // Predicated region
    $region21: #{generator_forward.9} parent=5 // pred_check
      %p125 = pneg %p124
    $region22: #{generator_forward.9} parent=5 // pred_check_branch
      %127 = sbr.rel (%p125) target = $region24
    $region23: #{generator_forward.9} parent=5 // pred_region
      // Predicated region
      $region25: #{generator_forward.9} parent=23 // pred_check
        %p128 = pneg %p29
      $region26: #{generator_forward.9} parent=23 // pred_check_branch
        %130 = sbr.rel (%p128) target = $region28
      $region27: #{generator_forward.9} parent=23 // pred_region
        %s131 = smul.u32 128, %s9
        %p132 = scmp.lt.s32.totalorder %s131, 255
        %s133 = scalar_select %p132, %s131, 255
        %s134 = smul.addr %s133, 2
        %s135 = smul.addr %s134, 4
        %s136 = scalar_lea.vmem %s0, %s135
        %s137 = smul.u32 128, %s9
      $region28: #{generator_forward.9} parent=23 // pred_fallthru
        _
    $region24: #{generator_forward.9} parent=5 // pred_fallthru
      _
    %p138 = scmp.le.s32.totalorder 1, %s9
    %p139 = scmp.lt.s32.totalorder %s9, 3
    %p140 = pnand %p138, %p139
    %p141 = pneg %p140
    // Predicated region
    $region29: #{generator_forward.9} parent=5 // pred_check
      _
    $region30: #{generator_forward.9} parent=5 // pred_check_branch
      %143 = sbr.rel (%p140) target = $region32
    $region31: #{generator_forward.9} parent=5 // pred_region
      %s144 = ssub.s32 %s9, 1
      %s145 = smul.u32 128, %s14
      %p146 = scmp.lt.s32.totalorder %s145, 255
      %s147 = scalar_select %p146, %s145, 255
      %s148 = smul.addr %s147, 2
      %s149 = smul.addr %s148, 4
      %s150 = scalar_lea.vmem %s0, %s149
      %p151 = pneg %p35
      %p152 = pneg %p32
      %p153 = pneg %p56
      %p154 = pneg %p53
      %p155 = pneg %p77
      %p156 = pneg %p74
      %p157 = pneg %p103
      %p158 = pneg %p100
      %s159 = smul.u32 128, %s14
      %p160 = scmp.lt.s32.totalorder %s159, 255
      %s161 = scalar_select %p160, %s159, 255
      %s162 = smul.addr %s161, 4
      %s163 = scalar_lea.vmem %s3, %s162
      %s164 = smul.u32 128, %s14
      %p165 = scmp.lt.s32.totalorder %s164, 255
      %s166 = scalar_select %p165, %s164, 255
      %s167 = smul.addr %s166, 2
      %s168 = smul.addr %s167, 4
      %s169 = scalar_lea.vmem %s0, %s168
      %s170 = smul.u32 128, %s14
      %s171 = smul.u32 128, %s14
      %p172 = scmp.lt.s32.totalorder %s171, 255
      %s173 = scalar_select %p172, %s171, 255
      %s174 = smul.addr %s173, 4
      %s175 = scalar_lea.vmem %s3, %s174
      %s176 = smul.u32 128, %s14
      %v178 = vld [vmem:[%s169] sm:$0xff]
      %v179 = vld [vmem:[%s169 + $0x8] sm:$0xff]
      %v180 = vld [vmem:[%s169 + $0x10] sm:$0xff]
      %v181 = vld [vmem:[%s169 + $0x18] sm:$0xff]
      %v182 = vld [vmem:[%s169 + $0x20] sm:$0xff]
      %v183 = vld [vmem:[%s169 + $0x28] sm:$0xff]
      %v184 = vld [vmem:[%s169 + $0x30] sm:$0xff]
      %v185 = vld [vmem:[%s169 + $0x38] sm:$0xff]
      %v186 = vld [vmem:[%s169 + $0x40] sm:$0xff]
      %v187 = vld [vmem:[%s169 + $0x48] sm:$0xff]
      %v188 = vld [vmem:[%s169 + $0x50] sm:$0xff]
      %v189 = vld [vmem:[%s169 + $0x58] sm:$0xff]
      %v190 = vld [vmem:[%s169 + $0x60] sm:$0xff]
      %v191 = vld [vmem:[%s169 + $0x68] sm:$0xff]
      %v192 = vld [vmem:[%s169 + $0x70] sm:$0xff]
      %v193 = vld [vmem:[%s169 + $0x78] sm:$0xff]
      %v194 = vld [vmem:[%s169 + $0x80] sm:$0xff]
      %v195 = vld [vmem:[%s169 + $0x88] sm:$0xff]
      %v196 = vld [vmem:[%s169 + $0x90] sm:$0xff]
      %v197 = vld [vmem:[%s169 + $0x98] sm:$0xff]
      %v198 = vld [vmem:[%s169 + $0xa0] sm:$0xff]
      %v199 = vld [vmem:[%s169 + $0xa8] sm:$0xff]
      %v200 = vld [vmem:[%s169 + $0xb0] sm:$0xff]
      %v201 = vld [vmem:[%s169 + $0xb8] sm:$0xff]
      %v202 = vld [vmem:[%s169 + $0xc0] sm:$0xff]
      %v203 = vld [vmem:[%s169 + $0xc8] sm:$0xff]
      %v204 = vld [vmem:[%s169 + $0xd0] sm:$0xff]
      %v205 = vld [vmem:[%s169 + $0xd8] sm:$0xff]
      %v206 = vld [vmem:[%s169 + $0xe0] sm:$0xff]
      %v207 = vld [vmem:[%s169 + $0xe8] sm:$0xff]
      %v208 = vld [vmem:[%s169 + $0xf0] sm:$0xff]
      %v209 = vld [vmem:[%s169 + $0xf8] sm:$0xff]
      %v210 = vld [vmem:[%s169 + $0x100] sm:$0xff]
      %v211 = vld [vmem:[%s169 + $0x108] sm:$0xff]
      %v212 = vld [vmem:[%s169 + $0x110] sm:$0xff]
      %v213 = vld [vmem:[%s169 + $0x118] sm:$0xff]
      %v214 = vld [vmem:[%s169 + $0x120] sm:$0xff]
      %v215 = vld [vmem:[%s169 + $0x128] sm:$0xff]
      %v216 = vld [vmem:[%s169 + $0x130] sm:$0xff]
      %v217 = vld [vmem:[%s169 + $0x138] sm:$0xff]
      %v218 = vld [vmem:[%s169 + $0x140] sm:$0xff]
      %v219 = vld [vmem:[%s169 + $0x148] sm:$0xff]
      %v220 = vld [vmem:[%s169 + $0x150] sm:$0xff]
      %v221 = vld [vmem:[%s169 + $0x158] sm:$0xff]
      %v222 = vld [vmem:[%s169 + $0x160] sm:$0xff]
      %v223 = vld [vmem:[%s169 + $0x168] sm:$0xff]
      %v224 = vld [vmem:[%s169 + $0x170] sm:$0xff]
      %v225 = vld [vmem:[%s169 + $0x178] sm:$0xff]
      %v226 = vld [vmem:[%s169 + $0x180] sm:$0xff]
      %v227 = vld [vmem:[%s169 + $0x188] sm:$0xff]
      %v228 = vld [vmem:[%s169 + $0x190] sm:$0xff]
      %v229 = vld [vmem:[%s169 + $0x198] sm:$0xff]
      %v230 = vld [vmem:[%s169 + $0x1a0] sm:$0xff]
      %v231 = vld [vmem:[%s169 + $0x1a8] sm:$0xff]
      %v232 = vld [vmem:[%s169 + $0x1b0] sm:$0xff]
      %v233 = vld [vmem:[%s169 + $0x1b8] sm:$0xff]
      %v234 = vld [vmem:[%s169 + $0x1c0] sm:$0xff]
      %v235 = vld [vmem:[%s169 + $0x1c8] sm:$0xff]
      %v236 = vld [vmem:[%s169 + $0x1d0] sm:$0xff]
      %v237 = vld [vmem:[%s169 + $0x1d8] sm:$0xff]
      %v238 = vld [vmem:[%s169 + $0x1e0] sm:$0xff]
      %v239 = vld [vmem:[%s169 + $0x1e8] sm:$0xff]
      %v240 = vld [vmem:[%s169 + $0x1f0] sm:$0xff]
      %v241 = vld [vmem:[%s169 + $0x1f8] sm:$0xff]
      %v242 = vld [vmem:[%s169 + $0x200] sm:$0xff]
      %v243 = vld [vmem:[%s169 + $0x208] sm:$0xff]
      %v244 = vld [vmem:[%s169 + $0x210] sm:$0xff]
      %v245 = vld [vmem:[%s169 + $0x218] sm:$0xff]
      %v246 = vld [vmem:[%s169 + $0x220] sm:$0xff]
      %v247 = vld [vmem:[%s169 + $0x228] sm:$0xff]
      %v248 = vld [vmem:[%s169 + $0x230] sm:$0xff]
      %v249 = vld [vmem:[%s169 + $0x238] sm:$0xff]
      %v250 = vld [vmem:[%s169 + $0x240] sm:$0xff]
      %v251 = vld [vmem:[%s169 + $0x248] sm:$0xff]
      %v252 = vld [vmem:[%s169 + $0x250] sm:$0xff]
      %v253 = vld [vmem:[%s169 + $0x258] sm:$0xff]
      %v254 = vld [vmem:[%s169 + $0x260] sm:$0xff]
      %v255 = vld [vmem:[%s169 + $0x268] sm:$0xff]
      %v256 = vld [vmem:[%s169 + $0x270] sm:$0xff]
      %v257 = vld [vmem:[%s169 + $0x278] sm:$0xff]
      %v258 = vld [vmem:[%s169 + $0x280] sm:$0xff]
      %v259 = vld [vmem:[%s169 + $0x288] sm:$0xff]
      %v260 = vld [vmem:[%s169 + $0x290] sm:$0xff]
      %v261 = vld [vmem:[%s169 + $0x298] sm:$0xff]
      %v262 = vld [vmem:[%s169 + $0x2a0] sm:$0xff]
      %v263 = vld [vmem:[%s169 + $0x2a8] sm:$0xff]
      %v264 = vld [vmem:[%s169 + $0x2b0] sm:$0xff]
      %v265 = vld [vmem:[%s169 + $0x2b8] sm:$0xff]
      %v266 = vld [vmem:[%s169 + $0x2c0] sm:$0xff]
      %v267 = vld [vmem:[%s169 + $0x2c8] sm:$0xff]
      %v268 = vld [vmem:[%s169 + $0x2d0] sm:$0xff]
      %v269 = vld [vmem:[%s169 + $0x2d8] sm:$0xff]
      %v270 = vld [vmem:[%s169 + $0x2e0] sm:$0xff]
      %v271 = vld [vmem:[%s169 + $0x2e8] sm:$0xff]
      %v272 = vld [vmem:[%s169 + $0x2f0] sm:$0xff]
      %v273 = vld [vmem:[%s169 + $0x2f8] sm:$0xff]
      %v274 = vld [vmem:[%s169 + $0x300] sm:$0xff]
      %v275 = vld [vmem:[%s169 + $0x308] sm:$0xff]
      %v276 = vld [vmem:[%s169 + $0x310] sm:$0xff]
      %v277 = vld [vmem:[%s169 + $0x318] sm:$0xff]
      %v278 = vld [vmem:[%s169 + $0x320] sm:$0xff]
      %v279 = vld [vmem:[%s169 + $0x328] sm:$0xff]
      %v280 = vld [vmem:[%s169 + $0x330] sm:$0xff]
      %v281 = vld [vmem:[%s169 + $0x338] sm:$0xff]
      %v282 = vld [vmem:[%s169 + $0x340] sm:$0xff]
      %v283 = vld [vmem:[%s169 + $0x348] sm:$0xff]
      %v284 = vld [vmem:[%s169 + $0x350] sm:$0xff]
      %v285 = vld [vmem:[%s169 + $0x358] sm:$0xff]
      %v286 = vld [vmem:[%s169 + $0x360] sm:$0xff]
      %v287 = vld [vmem:[%s169 + $0x368] sm:$0xff]
      %v288 = vld [vmem:[%s169 + $0x370] sm:$0xff]
      %v289 = vld [vmem:[%s169 + $0x378] sm:$0xff]
      %v290 = vld [vmem:[%s169 + $0x380] sm:$0xff]
      %v291 = vld [vmem:[%s169 + $0x388] sm:$0xff]
      %v292 = vld [vmem:[%s169 + $0x390] sm:$0xff]
      %v293 = vld [vmem:[%s169 + $0x398] sm:$0xff]
      %v294 = vld [vmem:[%s169 + $0x3a0] sm:$0xff]
      %v295 = vld [vmem:[%s169 + $0x3a8] sm:$0xff]
      %v296 = vld [vmem:[%s169 + $0x3b0] sm:$0xff]
      %v297 = vld [vmem:[%s169 + $0x3b8] sm:$0xff]
      %v298 = vld [vmem:[%s169 + $0x3c0] sm:$0xff]
      %v299 = vld [vmem:[%s169 + $0x3c8] sm:$0xff]
      %v300 = vld [vmem:[%s169 + $0x3d0] sm:$0xff]
      %v301 = vld [vmem:[%s169 + $0x3d8] sm:$0xff]
      %v302 = vld [vmem:[%s169 + $0x3e0] sm:$0xff]
      %v303 = vld [vmem:[%s169 + $0x3e8] sm:$0xff]
      %v304 = vld [vmem:[%s169 + $0x3f0] sm:$0xff]
      %v305 = vld [vmem:[%s169 + $0x3f8] sm:$0xff]
      %v306 = vld [vmem:[%s1] sm:$0xf]
      %v307 = vld [vmem:[%s1 + $0x4] sm:$0xf]
      %v308 = vld [vmem:[%s1 + $0x8] sm:$0xf]
      %v309 = vld [vmem:[%s1 + $0xc] sm:$0xf]
      %v310 = vld [vmem:[%s1 + $0x10] sm:$0xf]
      %v311 = vld [vmem:[%s1 + $0x14] sm:$0xf]
      %v312 = vld [vmem:[%s1 + $0x18] sm:$0xf]
      %v313 = vld [vmem:[%s1 + $0x1c] sm:$0xf]
      %v314 = vld [vmem:[%s1 + $0x20] sm:$0xf]
      %v315 = vld [vmem:[%s1 + $0x24] sm:$0xf]
      %v316 = vld [vmem:[%s1 + $0x28] sm:$0xf]
      %v317 = vld [vmem:[%s1 + $0x2c] sm:$0xf]
      %v318 = vld [vmem:[%s1 + $0x30] sm:$0xf]
      %v319 = vld [vmem:[%s1 + $0x34] sm:$0xf]
      %v320 = vld [vmem:[%s1 + $0x38] sm:$0xf]
      %v321 = vld [vmem:[%s1 + $0x3c] sm:$0xf]
      %v322 = vld [vmem:[%s1 + $0x40] sm:$0xf]
      %v323 = vld [vmem:[%s1 + $0x44] sm:$0xf]
      %v324 = vld [vmem:[%s2] sm:$0x1]
      %v326 = vlaneseq
      %v327 = vshrl.u32 %v326, 7
      %v328 = vsub.s32 0, %v327
      %v329 = vrot.slane %v324, %v328
      %v459 = vunpack.c.l.b16 %v178
      %v460 = vunpack.c.h.b16 %v178
      %v461 = vunpack.c.l.b16 %v179
      %v462 = vunpack.c.h.b16 %v179
      %v463 = vunpack.c.l.b16 %v180
      %v464 = vunpack.c.h.b16 %v180
      %v465 = vunpack.c.l.b16 %v181
      %v466 = vunpack.c.h.b16 %v181
      %v467 = vunpack.c.l.b16 %v182
      %v468 = vunpack.c.h.b16 %v182
      %v469 = vunpack.c.l.b16 %v183
      %v470 = vunpack.c.h.b16 %v183
      %v471 = vunpack.c.l.b16 %v184
      %v472 = vunpack.c.h.b16 %v184
      %v473 = vunpack.c.l.b16 %v185
      %v474 = vunpack.c.h.b16 %v185
      %v475 = vunpack.c.l.b16 %v186
      %v476 = vunpack.c.h.b16 %v186
      %v477 = vunpack.c.l.b16 %v187
      %v478 = vunpack.c.h.b16 %v187
      %v479 = vunpack.c.l.b16 %v188
      %v480 = vunpack.c.h.b16 %v188
      %v481 = vunpack.c.l.b16 %v189
      %v482 = vunpack.c.h.b16 %v189
      %v483 = vunpack.c.l.b16 %v190
      %v484 = vunpack.c.h.b16 %v190
      %v485 = vunpack.c.l.b16 %v191
      %v486 = vunpack.c.h.b16 %v191
      %v487 = vunpack.c.l.b16 %v192
      %v488 = vunpack.c.h.b16 %v192
      %v489 = vunpack.c.l.b16 %v193
      %v490 = vunpack.c.h.b16 %v193
      %v491 = vunpack.c.l.b16 %v194
      %v492 = vunpack.c.h.b16 %v194
      %v493 = vunpack.c.l.b16 %v195
      %v494 = vunpack.c.h.b16 %v195
      %v495 = vunpack.c.l.b16 %v196
      %v496 = vunpack.c.h.b16 %v196
      %v497 = vunpack.c.l.b16 %v197
      %v498 = vunpack.c.h.b16 %v197
      %v499 = vunpack.c.l.b16 %v198
      %v500 = vunpack.c.h.b16 %v198
      %v501 = vunpack.c.l.b16 %v199
      %v502 = vunpack.c.h.b16 %v199
      %v503 = vunpack.c.l.b16 %v200
      %v504 = vunpack.c.h.b16 %v200
      %v505 = vunpack.c.l.b16 %v201
      %v506 = vunpack.c.h.b16 %v201
      %v507 = vunpack.c.l.b16 %v202
      %v508 = vunpack.c.h.b16 %v202
      %v509 = vunpack.c.l.b16 %v203
      %v510 = vunpack.c.h.b16 %v203
      %v511 = vunpack.c.l.b16 %v204
      %v512 = vunpack.c.h.b16 %v204
      %v513 = vunpack.c.l.b16 %v205
      %v514 = vunpack.c.h.b16 %v205
      %v515 = vunpack.c.l.b16 %v206
      %v516 = vunpack.c.h.b16 %v206
      %v517 = vunpack.c.l.b16 %v207
      %v518 = vunpack.c.h.b16 %v207
      %v519 = vunpack.c.l.b16 %v208
      %v520 = vunpack.c.h.b16 %v208
      %v521 = vunpack.c.l.b16 %v209
      %v522 = vunpack.c.h.b16 %v209
      %v523 = vunpack.c.l.b16 %v210
      %v524 = vunpack.c.h.b16 %v210
      %v525 = vunpack.c.l.b16 %v211
      %v526 = vunpack.c.h.b16 %v211
      %v527 = vunpack.c.l.b16 %v212
      %v528 = vunpack.c.h.b16 %v212
      %v529 = vunpack.c.l.b16 %v213
      %v530 = vunpack.c.h.b16 %v213
      %v531 = vunpack.c.l.b16 %v214
      %v532 = vunpack.c.h.b16 %v214
      %v533 = vunpack.c.l.b16 %v215
      %v534 = vunpack.c.h.b16 %v215
      %v535 = vunpack.c.l.b16 %v216
      %v536 = vunpack.c.h.b16 %v216
      %v537 = vunpack.c.l.b16 %v217
      %v538 = vunpack.c.h.b16 %v217
      %v539 = vunpack.c.l.b16 %v218
      %v540 = vunpack.c.h.b16 %v218
      %v541 = vunpack.c.l.b16 %v219
      %v542 = vunpack.c.h.b16 %v219
      %v543 = vunpack.c.l.b16 %v220
      %v544 = vunpack.c.h.b16 %v220
      %v545 = vunpack.c.l.b16 %v221
      %v546 = vunpack.c.h.b16 %v221
      %v547 = vunpack.c.l.b16 %v222
      %v548 = vunpack.c.h.b16 %v222
      %v549 = vunpack.c.l.b16 %v223
      %v550 = vunpack.c.h.b16 %v223
      %v551 = vunpack.c.l.b16 %v224
      %v552 = vunpack.c.h.b16 %v224
      %v553 = vunpack.c.l.b16 %v225
      %v554 = vunpack.c.h.b16 %v225
      %v555 = vunpack.c.l.b16 %v226
      %v556 = vunpack.c.h.b16 %v226
      %v557 = vunpack.c.l.b16 %v227
      %v558 = vunpack.c.h.b16 %v227
      %v559 = vunpack.c.l.b16 %v228
      %v560 = vunpack.c.h.b16 %v228
      %v561 = vunpack.c.l.b16 %v229
      %v562 = vunpack.c.h.b16 %v229
      %v563 = vunpack.c.l.b16 %v230
      %v564 = vunpack.c.h.b16 %v230
      %v565 = vunpack.c.l.b16 %v231
      %v566 = vunpack.c.h.b16 %v231
      %v567 = vunpack.c.l.b16 %v232
      %v568 = vunpack.c.h.b16 %v232
      %v569 = vunpack.c.l.b16 %v233
      %v570 = vunpack.c.h.b16 %v233
      %v571 = vunpack.c.l.b16 %v234
      %v572 = vunpack.c.h.b16 %v234
      %v573 = vunpack.c.l.b16 %v235
      %v574 = vunpack.c.h.b16 %v235
      %v575 = vunpack.c.l.b16 %v236
      %v576 = vunpack.c.h.b16 %v236
      %v577 = vunpack.c.l.b16 %v237
      %v578 = vunpack.c.h.b16 %v237
      %v579 = vunpack.c.l.b16 %v238
      %v580 = vunpack.c.h.b16 %v238
      %v581 = vunpack.c.l.b16 %v239
      %v582 = vunpack.c.h.b16 %v239
      %v583 = vunpack.c.l.b16 %v240
      %v584 = vunpack.c.h.b16 %v240
      %v585 = vunpack.c.l.b16 %v241
      %v586 = vunpack.c.h.b16 %v241
      %v587 = vunpack.c.l.b16 %v242
      %v588 = vunpack.c.h.b16 %v242
      %v589 = vunpack.c.l.b16 %v243
      %v590 = vunpack.c.h.b16 %v243
      %v591 = vunpack.c.l.b16 %v244
      %v592 = vunpack.c.h.b16 %v244
      %v593 = vunpack.c.l.b16 %v245
      %v594 = vunpack.c.h.b16 %v245
      %v595 = vunpack.c.l.b16 %v246
      %v596 = vunpack.c.h.b16 %v246
      %v597 = vunpack.c.l.b16 %v247
      %v598 = vunpack.c.h.b16 %v247
      %v599 = vunpack.c.l.b16 %v248
      %v600 = vunpack.c.h.b16 %v248
      %v601 = vunpack.c.l.b16 %v249
      %v602 = vunpack.c.h.b16 %v249
      %v603 = vunpack.c.l.b16 %v250
      %v604 = vunpack.c.h.b16 %v250
      %v605 = vunpack.c.l.b16 %v251
      %v606 = vunpack.c.h.b16 %v251
      %v607 = vunpack.c.l.b16 %v252
      %v608 = vunpack.c.h.b16 %v252
      %v609 = vunpack.c.l.b16 %v253
      %v610 = vunpack.c.h.b16 %v253
      %v611 = vunpack.c.l.b16 %v254
      %v612 = vunpack.c.h.b16 %v254
      %v613 = vunpack.c.l.b16 %v255
      %v614 = vunpack.c.h.b16 %v255
      %v615 = vunpack.c.l.b16 %v256
      %v616 = vunpack.c.h.b16 %v256
      %v617 = vunpack.c.l.b16 %v257
      %v618 = vunpack.c.h.b16 %v257
      %v619 = vunpack.c.l.b16 %v258
      %v620 = vunpack.c.h.b16 %v258
      %v621 = vunpack.c.l.b16 %v259
      %v622 = vunpack.c.h.b16 %v259
      %v623 = vunpack.c.l.b16 %v260
      %v624 = vunpack.c.h.b16 %v260
      %v625 = vunpack.c.l.b16 %v261
      %v626 = vunpack.c.h.b16 %v261
      %v627 = vunpack.c.l.b16 %v262
      %v628 = vunpack.c.h.b16 %v262
      %v629 = vunpack.c.l.b16 %v263
      %v630 = vunpack.c.h.b16 %v263
      %v631 = vunpack.c.l.b16 %v264
      %v632 = vunpack.c.h.b16 %v264
      %v633 = vunpack.c.l.b16 %v265
      %v634 = vunpack.c.h.b16 %v265
      %v635 = vunpack.c.l.b16 %v266
      %v636 = vunpack.c.h.b16 %v266
      %v637 = vunpack.c.l.b16 %v267
      %v638 = vunpack.c.h.b16 %v267
      %v639 = vunpack.c.l.b16 %v268
      %v640 = vunpack.c.h.b16 %v268
      %v641 = vunpack.c.l.b16 %v269
      %v642 = vunpack.c.h.b16 %v269
      %v643 = vunpack.c.l.b16 %v270
      %v644 = vunpack.c.h.b16 %v270
      %v645 = vunpack.c.l.b16 %v271
      %v646 = vunpack.c.h.b16 %v271
      %v647 = vunpack.c.l.b16 %v272
      %v648 = vunpack.c.h.b16 %v272
      %v649 = vunpack.c.l.b16 %v273
      %v650 = vunpack.c.h.b16 %v273
      %v651 = vunpack.c.l.b16 %v274
      %v652 = vunpack.c.h.b16 %v274
      %v653 = vunpack.c.l.b16 %v275
      %v654 = vunpack.c.h.b16 %v275
      %v655 = vunpack.c.l.b16 %v276
      %v656 = vunpack.c.h.b16 %v276
      %v657 = vunpack.c.l.b16 %v277
      %v658 = vunpack.c.h.b16 %v277
      %v659 = vunpack.c.l.b16 %v278
      %v660 = vunpack.c.h.b16 %v278
      %v661 = vunpack.c.l.b16 %v279
      %v662 = vunpack.c.h.b16 %v279
      %v663 = vunpack.c.l.b16 %v280
      %v664 = vunpack.c.h.b16 %v280
      %v665 = vunpack.c.l.b16 %v281
      %v666 = vunpack.c.h.b16 %v281
      %v667 = vunpack.c.l.b16 %v282
      %v668 = vunpack.c.h.b16 %v282
      %v669 = vunpack.c.l.b16 %v283
      %v670 = vunpack.c.h.b16 %v283
      %v671 = vunpack.c.l.b16 %v284
      %v672 = vunpack.c.h.b16 %v284
      %v673 = vunpack.c.l.b16 %v285
      %v674 = vunpack.c.h.b16 %v285
      %v675 = vunpack.c.l.b16 %v286
      %v676 = vunpack.c.h.b16 %v286
      %v677 = vunpack.c.l.b16 %v287
      %v678 = vunpack.c.h.b16 %v287
      %v679 = vunpack.c.l.b16 %v288
      %v680 = vunpack.c.h.b16 %v288
      %v681 = vunpack.c.l.b16 %v289
      %v682 = vunpack.c.h.b16 %v289
      %v683 = vunpack.c.l.b16 %v290
      %v684 = vunpack.c.h.b16 %v290
      %v685 = vunpack.c.l.b16 %v291
      %v686 = vunpack.c.h.b16 %v291
      %v687 = vunpack.c.l.b16 %v292
      %v688 = vunpack.c.h.b16 %v292
      %v689 = vunpack.c.l.b16 %v293
      %v690 = vunpack.c.h.b16 %v293
      %v691 = vunpack.c.l.b16 %v294
      %v692 = vunpack.c.h.b16 %v294
      %v693 = vunpack.c.l.b16 %v295
      %v694 = vunpack.c.h.b16 %v295
      %v695 = vunpack.c.l.b16 %v296
      %v696 = vunpack.c.h.b16 %v296
      %v697 = vunpack.c.l.b16 %v297
      %v698 = vunpack.c.h.b16 %v297
      %v699 = vunpack.c.l.b16 %v298
      %v700 = vunpack.c.h.b16 %v298
      %v701 = vunpack.c.l.b16 %v299
      %v702 = vunpack.c.h.b16 %v299
      %v703 = vunpack.c.l.b16 %v300
      %v704 = vunpack.c.h.b16 %v300
      %v705 = vunpack.c.l.b16 %v301
      %v706 = vunpack.c.h.b16 %v301
      %v707 = vunpack.c.l.b16 %v302
      %v708 = vunpack.c.h.b16 %v302
      %v709 = vunpack.c.l.b16 %v303
      %v710 = vunpack.c.h.b16 %v303
      %v711 = vunpack.c.l.b16 %v304
      %v712 = vunpack.c.h.b16 %v304
      %v713 = vunpack.c.l.b16 %v305
      %v714 = vunpack.c.h.b16 %v305
      %v715 = vpack.c.b16 %v461, %v459
      %v716 = vpack.c.b16 %v462, %v460
      %v717 = vpack.c.b16 %v465, %v463
      %v718 = vpack.c.b16 %v466, %v464
      %v719 = vpack.c.b16 %v469, %v467
      %v720 = vpack.c.b16 %v470, %v468
      %v721 = vpack.c.b16 %v473, %v471
      %v722 = vpack.c.b16 %v474, %v472
      %v723 = vpack.c.b16 %v477, %v475
      %v724 = vpack.c.b16 %v478, %v476
      %v725 = vpack.c.b16 %v481, %v479
      %v726 = vpack.c.b16 %v482, %v480
      %v727 = vpack.c.b16 %v485, %v483
      %v728 = vpack.c.b16 %v486, %v484
      %v729 = vpack.c.b16 %v489, %v487
      %v730 = vpack.c.b16 %v490, %v488
      %v731 = vpack.c.b16 %v493, %v491
      %v732 = vpack.c.b16 %v494, %v492
      %v733 = vpack.c.b16 %v497, %v495
      %v734 = vpack.c.b16 %v498, %v496
      %v735 = vpack.c.b16 %v501, %v499
      %v736 = vpack.c.b16 %v502, %v500
      %v737 = vpack.c.b16 %v505, %v503
      %v738 = vpack.c.b16 %v506, %v504
      %v739 = vpack.c.b16 %v509, %v507
      %v740 = vpack.c.b16 %v510, %v508
      %v741 = vpack.c.b16 %v513, %v511
      %v742 = vpack.c.b16 %v514, %v512
      %v743 = vpack.c.b16 %v517, %v515
      %v744 = vpack.c.b16 %v518, %v516
      %v745 = vpack.c.b16 %v521, %v519
      %v746 = vpack.c.b16 %v522, %v520
      %v747 = vpack.c.b16 %v525, %v523
      %v748 = vpack.c.b16 %v526, %v524
      %v749 = vpack.c.b16 %v529, %v527
      %v750 = vpack.c.b16 %v530, %v528
      %v751 = vpack.c.b16 %v533, %v531
      %v752 = vpack.c.b16 %v534, %v532
      %v753 = vpack.c.b16 %v537, %v535
      %v754 = vpack.c.b16 %v538, %v536
      %v755 = vpack.c.b16 %v541, %v539
      %v756 = vpack.c.b16 %v542, %v540
      %v757 = vpack.c.b16 %v545, %v543
      %v758 = vpack.c.b16 %v546, %v544
      %v759 = vpack.c.b16 %v549, %v547
      %v760 = vpack.c.b16 %v550, %v548
      %v761 = vpack.c.b16 %v553, %v551
      %v762 = vpack.c.b16 %v554, %v552
      %v763 = vpack.c.b16 %v557, %v555
      %v764 = vpack.c.b16 %v558, %v556
      %v765 = vpack.c.b16 %v561, %v559
      %v766 = vpack.c.b16 %v562, %v560
      %v767 = vpack.c.b16 %v565, %v563
      %v768 = vpack.c.b16 %v566, %v564
      %v769 = vpack.c.b16 %v569, %v567
      %v770 = vpack.c.b16 %v570, %v568
      %v771 = vpack.c.b16 %v573, %v571
      %v772 = vpack.c.b16 %v574, %v572
      %v773 = vpack.c.b16 %v577, %v575
      %v774 = vpack.c.b16 %v578, %v576
      %v775 = vpack.c.b16 %v581, %v579
      %v776 = vpack.c.b16 %v582, %v580
      %v777 = vpack.c.b16 %v585, %v583
      %v778 = vpack.c.b16 %v586, %v584
      %v779 = vpack.c.b16 %v589, %v587
      %v780 = vpack.c.b16 %v590, %v588
      %v781 = vpack.c.b16 %v593, %v591
      %v782 = vpack.c.b16 %v594, %v592
      %v783 = vpack.c.b16 %v597, %v595
      %v784 = vpack.c.b16 %v598, %v596
      %v785 = vpack.c.b16 %v601, %v599
      %v786 = vpack.c.b16 %v602, %v600
      %v787 = vpack.c.b16 %v605, %v603
      %v788 = vpack.c.b16 %v606, %v604
      %v789 = vpack.c.b16 %v609, %v607
      %v790 = vpack.c.b16 %v610, %v608
      %v791 = vpack.c.b16 %v613, %v611
      %v792 = vpack.c.b16 %v614, %v612
      %v793 = vpack.c.b16 %v617, %v615
      %v794 = vpack.c.b16 %v618, %v616
      %v795 = vpack.c.b16 %v621, %v619
      %v796 = vpack.c.b16 %v622, %v620
      %v797 = vpack.c.b16 %v625, %v623
      %v798 = vpack.c.b16 %v626, %v624
      %v799 = vpack.c.b16 %v629, %v627
      %v800 = vpack.c.b16 %v630, %v628
      %v801 = vpack.c.b16 %v633, %v631
      %v802 = vpack.c.b16 %v634, %v632
      %v803 = vpack.c.b16 %v637, %v635
      %v804 = vpack.c.b16 %v638, %v636
      %v805 = vpack.c.b16 %v641, %v639
      %v806 = vpack.c.b16 %v642, %v640
      %v807 = vpack.c.b16 %v645, %v643
      %v808 = vpack.c.b16 %v646, %v644
      %v809 = vpack.c.b16 %v649, %v647
      %v810 = vpack.c.b16 %v650, %v648
      %v811 = vpack.c.b16 %v653, %v651
      %v812 = vpack.c.b16 %v654, %v652
      %v813 = vpack.c.b16 %v657, %v655
      %v814 = vpack.c.b16 %v658, %v656
      %v815 = vpack.c.b16 %v661, %v659
      %v816 = vpack.c.b16 %v662, %v660
      %v817 = vpack.c.b16 %v665, %v663
      %v818 = vpack.c.b16 %v666, %v664
      %v819 = vpack.c.b16 %v669, %v667
      %v820 = vpack.c.b16 %v670, %v668
      %v821 = vpack.c.b16 %v673, %v671
      %v822 = vpack.c.b16 %v674, %v672
      %v823 = vpack.c.b16 %v677, %v675
      %v824 = vpack.c.b16 %v678, %v676
      %v825 = vpack.c.b16 %v681, %v679
      %v826 = vpack.c.b16 %v682, %v680
      %v827 = vpack.c.b16 %v685, %v683
      %v828 = vpack.c.b16 %v686, %v684
      %v829 = vpack.c.b16 %v689, %v687
      %v830 = vpack.c.b16 %v690, %v688
      %v831 = vpack.c.b16 %v693, %v691
      %v832 = vpack.c.b16 %v694, %v692
      %v833 = vpack.c.b16 %v697, %v695
      %v834 = vpack.c.b16 %v698, %v696
      %v835 = vpack.c.b16 %v701, %v699
      %v836 = vpack.c.b16 %v702, %v700
      %v837 = vpack.c.b16 %v705, %v703
      %v838 = vpack.c.b16 %v706, %v704
      %v839 = vpack.c.b16 %v709, %v707
      %v840 = vpack.c.b16 %v710, %v708
      %v841 = vpack.c.b16 %v713, %v711
      %v842 = vpack.c.b16 %v714, %v712
      %v925 = vunpack.c.l.b16 %v306
      %v926 = vunpack.c.l.b16 %v307
      %v927 = vunpack.c.l.b16 %v308
      %v928 = vunpack.c.l.b16 %v309
      %v929 = vunpack.c.l.b16 %v310
      %v930 = vunpack.c.l.b16 %v311
      %v931 = vunpack.c.l.b16 %v312
      %v932 = vunpack.c.l.b16 %v313
      %v933 = vunpack.c.l.b16 %v314
      %v934 = vunpack.c.l.b16 %v315
      %v935 = vunpack.c.l.b16 %v316
      %v936 = vunpack.c.l.b16 %v317
      %v937 = vunpack.c.l.b16 %v318
      %v938 = vunpack.c.l.b16 %v319
      %v939 = vunpack.c.l.b16 %v320
      %v940 = vunpack.c.l.b16 %v321
      %v941 = vunpack.c.l.b16 %v322
      %v942 = vunpack.c.l.b16 %v323
      %v943 = vpack.c.b16 %v926, %v925
      %v944 = vpack.c.b16 %v928, %v927
      %v945 = vpack.c.b16 %v930, %v929
      %v946 = vpack.c.b16 %v932, %v931
      %v947 = vpack.c.b16 %v934, %v933
      %v948 = vpack.c.b16 %v936, %v935
      %v949 = vpack.c.b16 %v938, %v937
      %v950 = vpack.c.b16 %v940, %v939
      %v951 = vpack.c.b16 %v942, %v941
      %vm961 = vcmask 130048
      %v963 = vsel %vm961, %v716, 0
      %v966 = vsel %vm961, %v718, 0
      %v969 = vsel %vm961, %v720, 0
      %v972 = vsel %vm961, %v722, 0
      %v975 = vsel %vm961, %v724, 0
      %v978 = vsel %vm961, %v726, 0
      %v981 = vsel %vm961, %v728, 0
      %v984 = vsel %vm961, %v730, 0
      %v987 = vsel %vm961, %v732, 0
      %v990 = vsel %vm961, %v734, 0
      %v993 = vsel %vm961, %v736, 0
      %v996 = vsel %vm961, %v738, 0
      %v999 = vsel %vm961, %v740, 0
      %v1002 = vsel %vm961, %v742, 0
      %v1005 = vsel %vm961, %v744, 0
      %v1008 = vsel %vm961, %v746, 0
      %v1011 = vsel %vm961, %v748, 0
      %v1014 = vsel %vm961, %v750, 0
      %v1017 = vsel %vm961, %v752, 0
      %v1020 = vsel %vm961, %v754, 0
      %v1023 = vsel %vm961, %v756, 0
      %v1026 = vsel %vm961, %v758, 0
      %v1029 = vsel %vm961, %v760, 0
      %v1032 = vsel %vm961, %v762, 0
      %v1035 = vsel %vm961, %v764, 0
      %v1038 = vsel %vm961, %v766, 0
      %v1041 = vsel %vm961, %v768, 0
      %v1044 = vsel %vm961, %v770, 0
      %v1047 = vsel %vm961, %v772, 0
      %v1050 = vsel %vm961, %v774, 0
      %v1053 = vsel %vm961, %v776, 0
      %v1056 = vsel %vm961, %v778, 0
      %v1059 = vsel %vm961, %v780, 0
      %v1062 = vsel %vm961, %v782, 0
      %v1065 = vsel %vm961, %v784, 0
      %v1068 = vsel %vm961, %v786, 0
      %v1071 = vsel %vm961, %v788, 0
      %v1074 = vsel %vm961, %v790, 0
      %v1077 = vsel %vm961, %v792, 0
      %v1080 = vsel %vm961, %v794, 0
      %v1083 = vsel %vm961, %v796, 0
      %v1086 = vsel %vm961, %v798, 0
      %v1089 = vsel %vm961, %v800, 0
      %v1092 = vsel %vm961, %v802, 0
      %v1095 = vsel %vm961, %v804, 0
      %v1098 = vsel %vm961, %v806, 0
      %v1101 = vsel %vm961, %v808, 0
      %v1104 = vsel %vm961, %v810, 0
      %v1107 = vsel %vm961, %v812, 0
      %v1110 = vsel %vm961, %v814, 0
      %v1113 = vsel %vm961, %v816, 0
      %v1116 = vsel %vm961, %v818, 0
      %v1119 = vsel %vm961, %v820, 0
      %v1122 = vsel %vm961, %v822, 0
      %v1125 = vsel %vm961, %v824, 0
      %v1128 = vsel %vm961, %v826, 0
      %v1131 = vsel %vm961, %v828, 0
      %v1134 = vsel %vm961, %v830, 0
      %v1137 = vsel %vm961, %v832, 0
      %v1140 = vsel %vm961, %v834, 0
      %v1143 = vsel %vm961, %v836, 0
      %v1146 = vsel %vm961, %v838, 0
      %v1149 = vsel %vm961, %v840, 0
      %v1152 = vsel %vm961, %v842, 0
      %1154 = vmatprep.subr.bf16.mxu0 0
      %1155 = vmatpush1.bf16.msra.mxu0 %v950
      %1156 = vmatprep.subr.bf16.mxu0 0
      %1157 = vmatpush1.bf16.msra.mxu0 %v949
      %1158 = vmatprep.subr.bf16.mxu0 0
      %1159 = vmatpush1.bf16.msra.mxu0 %v948
      %1160 = vmatprep.subr.bf16.mxu0 0
      %1161 = vmatpush1.bf16.msra.mxu0 %v947
      %1162 = vmatprep.subr.bf16.mxu0 0
      %1163 = vmatpush1.bf16.msra.mxu0 %v946
      %1164 = vmatprep.subr.bf16.mxu0 0
      %1165 = vmatpush1.bf16.msra.mxu0 %v945
      %1166 = vmatprep.subr.bf16.mxu0 0
      %1167 = vmatpush1.bf16.msra.mxu0 %v944
      %1168 = vmatprep.subr.bf16.mxu0 0
      %1169 = vmatpush1.bf16.msra.mxu0 %v943
      %1170 = vmatprep.subr.bf16.mxu0 0
      %1171 = vmatpush2.bf16.msra.mxu0 0
      %1172 = vmatprep.subr.bf16.mxu0 0
      %1173 = vmatpush2.bf16.msra.mxu0 0
      %1174 = vmatprep.subr.bf16.mxu0 0
      %1175 = vmatpush2.bf16.msra.mxu0 0
      %1176 = vmatprep.subr.bf16.mxu0 0
      %1177 = vmatpush2.bf16.msra.mxu0 0
      %1178 = vmatprep.subr.bf16.mxu0 0
      %1179 = vmatpush2.bf16.msra.mxu0 0
      %1180 = vmatprep.subr.bf16.mxu0 0
      %1181 = vmatpush2.bf16.msra.mxu0 0
      %1182 = vmatprep.subr.bf16.mxu0 0
      %1183 = vmatpush2.bf16.msra.mxu0 0
      %1184 = vmatprep.subr.bf16.mxu0 0
      %1185 = vmatpush2.bf16.msra.mxu0 %v951
      %1186 = vmatprep.mubr.bf16.mxu0 %v963
      %1187 = vmatmul.mubr.bf16.gmra.mxu0 %v715
      %v1188 = vpop.f32.mrf.mxu0
      %v1189 = vadd.f32 %v329, %v1188
      %v1190 = vpop.f32.mrf.mxu0
      %v1191 = vpop.f32.mrf.mxu0
      %v1192 = vadd.f32 %v329, %v1191
      %v1193 = vpop.f32.mrf.mxu0
      %1194 = vmatprep.mubr.bf16.mxu0 %v966
      %1195 = vmatmul.mubr.bf16.gmra.mxu0 %v717
      %v1196 = vpop.f32.mrf.mxu0
      %v1197 = vadd.f32 %v329, %v1196
      %v1198 = vpop.f32.mrf.mxu0
      %v1199 = vpop.f32.mrf.mxu0
      %v1200 = vadd.f32 %v329, %v1199
      %v1201 = vpop.f32.mrf.mxu0
      %1202 = vmatprep.mubr.bf16.mxu0 %v969
      %1203 = vmatmul.mubr.bf16.gmra.mxu0 %v719
      %v1204 = vpop.f32.mrf.mxu0
      %v1205 = vadd.f32 %v329, %v1204
      %v1206 = vpop.f32.mrf.mxu0
      %v1207 = vpop.f32.mrf.mxu0
      %v1208 = vadd.f32 %v329, %v1207
      %v1209 = vpop.f32.mrf.mxu0
      %1210 = vmatprep.mubr.bf16.mxu0 %v972
      %1211 = vmatmul.mubr.bf16.gmra.mxu0 %v721
      %v1212 = vpop.f32.mrf.mxu0
      %v1213 = vadd.f32 %v329, %v1212
      %v1214 = vpop.f32.mrf.mxu0
      %v1215 = vpop.f32.mrf.mxu0
      %v1216 = vadd.f32 %v329, %v1215
      %v1217 = vpop.f32.mrf.mxu0
      %1218 = vmatprep.mubr.bf16.mxu0 %v975
      %1219 = vmatmul.mubr.bf16.gmra.mxu0 %v723
      %v1220 = vpop.f32.mrf.mxu0
      %v1221 = vadd.f32 %v329, %v1220
      %v1222 = vpop.f32.mrf.mxu0
      %v1223 = vpop.f32.mrf.mxu0
      %v1224 = vadd.f32 %v329, %v1223
      %v1225 = vpop.f32.mrf.mxu0
      %1226 = vmatprep.mubr.bf16.mxu0 %v978
      %1227 = vmatmul.mubr.bf16.gmra.mxu0 %v725
      %v1228 = vpop.f32.mrf.mxu0
      %v1229 = vadd.f32 %v329, %v1228
      %v1230 = vpop.f32.mrf.mxu0
      %v1231 = vpop.f32.mrf.mxu0
      %v1232 = vadd.f32 %v329, %v1231
      %v1233 = vpop.f32.mrf.mxu0
      %1234 = vmatprep.mubr.bf16.mxu0 %v981
      %1235 = vmatmul.mubr.bf16.gmra.mxu0 %v727
      %v1236 = vpop.f32.mrf.mxu0
      %v1237 = vadd.f32 %v329, %v1236
      %v1238 = vpop.f32.mrf.mxu0
      %v1239 = vpop.f32.mrf.mxu0
      %v1240 = vadd.f32 %v329, %v1239
      %v1241 = vpop.f32.mrf.mxu0
      %1242 = vmatprep.mubr.bf16.mxu0 %v984
      %1243 = vmatmul.mubr.bf16.gmra.mxu0 %v729
      %v1244 = vpop.f32.mrf.mxu0
      %v1245 = vadd.f32 %v329, %v1244
      %v1246 = vpop.f32.mrf.mxu0
      %v1247 = vpop.f32.mrf.mxu0
      %v1248 = vadd.f32 %v329, %v1247
      %v1249 = vpop.f32.mrf.mxu0
      %1250 = vmatprep.mubr.bf16.mxu0 %v987
      %1251 = vmatmul.mubr.bf16.gmra.mxu0 %v731
      %v1252 = vpop.f32.mrf.mxu0
      %v1253 = vadd.f32 %v329, %v1252
      %v1254 = vpop.f32.mrf.mxu0
      %v1255 = vpop.f32.mrf.mxu0
      %v1256 = vadd.f32 %v329, %v1255
      %v1257 = vpop.f32.mrf.mxu0
      %1258 = vmatprep.mubr.bf16.mxu0 %v990
      %1259 = vmatmul.mubr.bf16.gmra.mxu0 %v733
      %v1260 = vpop.f32.mrf.mxu0
      %v1261 = vadd.f32 %v329, %v1260
      %v1262 = vpop.f32.mrf.mxu0
      %v1263 = vpop.f32.mrf.mxu0
      %v1264 = vadd.f32 %v329, %v1263
      %v1265 = vpop.f32.mrf.mxu0
      %1266 = vmatprep.mubr.bf16.mxu0 %v993
      %1267 = vmatmul.mubr.bf16.gmra.mxu0 %v735
      %v1268 = vpop.f32.mrf.mxu0
      %v1269 = vadd.f32 %v329, %v1268
      %v1270 = vpop.f32.mrf.mxu0
      %v1271 = vpop.f32.mrf.mxu0
      %v1272 = vadd.f32 %v329, %v1271
      %v1273 = vpop.f32.mrf.mxu0
      %1274 = vmatprep.mubr.bf16.mxu0 %v996
      %1275 = vmatmul.mubr.bf16.gmra.mxu0 %v737
      %v1276 = vpop.f32.mrf.mxu0
      %v1277 = vadd.f32 %v329, %v1276
      %v1278 = vpop.f32.mrf.mxu0
      %v1279 = vpop.f32.mrf.mxu0
      %v1280 = vadd.f32 %v329, %v1279
      %v1281 = vpop.f32.mrf.mxu0
      %1282 = vmatprep.mubr.bf16.mxu0 %v999
      %1283 = vmatmul.mubr.bf16.gmra.mxu0 %v739
      %v1284 = vpop.f32.mrf.mxu0
      %v1285 = vadd.f32 %v329, %v1284
      %v1286 = vpop.f32.mrf.mxu0
      %v1287 = vpop.f32.mrf.mxu0
      %v1288 = vadd.f32 %v329, %v1287
      %v1289 = vpop.f32.mrf.mxu0
      %1290 = vmatprep.mubr.bf16.mxu0 %v1002
      %1291 = vmatmul.mubr.bf16.gmra.mxu0 %v741
      %v1292 = vpop.f32.mrf.mxu0
      %v1293 = vadd.f32 %v329, %v1292
      %v1294 = vpop.f32.mrf.mxu0
      %v1295 = vpop.f32.mrf.mxu0
      %v1296 = vadd.f32 %v329, %v1295
      %v1297 = vpop.f32.mrf.mxu0
      %1298 = vmatprep.mubr.bf16.mxu0 %v1005
      %1299 = vmatmul.mubr.bf16.gmra.mxu0 %v743
      %v1300 = vpop.f32.mrf.mxu0
      %v1301 = vadd.f32 %v329, %v1300
      %v1302 = vpop.f32.mrf.mxu0
      %v1303 = vpop.f32.mrf.mxu0
      %v1304 = vadd.f32 %v329, %v1303
      %v1305 = vpop.f32.mrf.mxu0
      %1306 = vmatprep.mubr.bf16.mxu0 %v1008
      %1307 = vmatmul.mubr.bf16.gmra.mxu0 %v745
      %v1308 = vpop.f32.mrf.mxu0
      %v1309 = vadd.f32 %v329, %v1308
      %v1310 = vpop.f32.mrf.mxu0
      %v1311 = vpop.f32.mrf.mxu0
      %v1312 = vadd.f32 %v329, %v1311
      %v1313 = vpop.f32.mrf.mxu0
      %1314 = vmatprep.mubr.bf16.mxu0 %v1011
      %1315 = vmatmul.mubr.bf16.gmra.mxu0 %v747
      %v1316 = vpop.f32.mrf.mxu0
      %v1317 = vadd.f32 %v329, %v1316
      %v1318 = vpop.f32.mrf.mxu0
      %v1319 = vpop.f32.mrf.mxu0
      %v1320 = vadd.f32 %v329, %v1319
      %v1321 = vpop.f32.mrf.mxu0
      %1322 = vmatprep.mubr.bf16.mxu0 %v1014
      %1323 = vmatmul.mubr.bf16.gmra.mxu0 %v749
      %v1324 = vpop.f32.mrf.mxu0
      %v1325 = vadd.f32 %v329, %v1324
      %v1326 = vpop.f32.mrf.mxu0
      %v1327 = vpop.f32.mrf.mxu0
      %v1328 = vadd.f32 %v329, %v1327
      %v1329 = vpop.f32.mrf.mxu0
      %1330 = vmatprep.mubr.bf16.mxu0 %v1017
      %1331 = vmatmul.mubr.bf16.gmra.mxu0 %v751
      %v1332 = vpop.f32.mrf.mxu0
      %v1333 = vadd.f32 %v329, %v1332
      %v1334 = vpop.f32.mrf.mxu0
      %v1335 = vpop.f32.mrf.mxu0
      %v1336 = vadd.f32 %v329, %v1335
      %v1337 = vpop.f32.mrf.mxu0
      %1338 = vmatprep.mubr.bf16.mxu0 %v1020
      %1339 = vmatmul.mubr.bf16.gmra.mxu0 %v753
      %v1340 = vpop.f32.mrf.mxu0
      %v1341 = vadd.f32 %v329, %v1340
      %v1342 = vpop.f32.mrf.mxu0
      %v1343 = vpop.f32.mrf.mxu0
      %v1344 = vadd.f32 %v329, %v1343
      %v1345 = vpop.f32.mrf.mxu0
      %1346 = vmatprep.mubr.bf16.mxu0 %v1023
      %1347 = vmatmul.mubr.bf16.gmra.mxu0 %v755
      %v1348 = vpop.f32.mrf.mxu0
      %v1349 = vadd.f32 %v329, %v1348
      %v1350 = vpop.f32.mrf.mxu0
      %v1351 = vpop.f32.mrf.mxu0
      %v1352 = vadd.f32 %v329, %v1351
      %v1353 = vpop.f32.mrf.mxu0
      %1354 = vmatprep.mubr.bf16.mxu0 %v1026
      %1355 = vmatmul.mubr.bf16.gmra.mxu0 %v757
      %v1356 = vpop.f32.mrf.mxu0
      %v1357 = vadd.f32 %v329, %v1356
      %v1358 = vpop.f32.mrf.mxu0
      %v1359 = vpop.f32.mrf.mxu0
      %v1360 = vadd.f32 %v329, %v1359
      %v1361 = vpop.f32.mrf.mxu0
      %1362 = vmatprep.mubr.bf16.mxu0 %v1029
      %1363 = vmatmul.mubr.bf16.gmra.mxu0 %v759
      %v1364 = vpop.f32.mrf.mxu0
      %v1365 = vadd.f32 %v329, %v1364
      %v1366 = vpop.f32.mrf.mxu0
      %v1367 = vpop.f32.mrf.mxu0
      %v1368 = vadd.f32 %v329, %v1367
      %v1369 = vpop.f32.mrf.mxu0
      %1370 = vmatprep.mubr.bf16.mxu0 %v1032
      %1371 = vmatmul.mubr.bf16.gmra.mxu0 %v761
      %v1372 = vpop.f32.mrf.mxu0
      %v1373 = vadd.f32 %v329, %v1372
      %v1374 = vpop.f32.mrf.mxu0
      %v1375 = vpop.f32.mrf.mxu0
      %v1376 = vadd.f32 %v329, %v1375
      %v1377 = vpop.f32.mrf.mxu0
      %1378 = vmatprep.mubr.bf16.mxu0 %v1035
      %1379 = vmatmul.mubr.bf16.gmra.mxu0 %v763
      %v1380 = vpop.f32.mrf.mxu0
      %v1381 = vadd.f32 %v329, %v1380
      %v1382 = vpop.f32.mrf.mxu0
      %v1383 = vpop.f32.mrf.mxu0
      %v1384 = vadd.f32 %v329, %v1383
      %v1385 = vpop.f32.mrf.mxu0
      %1386 = vmatprep.mubr.bf16.mxu0 %v1038
      %1387 = vmatmul.mubr.bf16.gmra.mxu0 %v765
      %v1388 = vpop.f32.mrf.mxu0
      %v1389 = vadd.f32 %v329, %v1388
      %v1390 = vpop.f32.mrf.mxu0
      %v1391 = vpop.f32.mrf.mxu0
      %v1392 = vadd.f32 %v329, %v1391
      %v1393 = vpop.f32.mrf.mxu0
      %1394 = vmatprep.mubr.bf16.mxu0 %v1041
      %1395 = vmatmul.mubr.bf16.gmra.mxu0 %v767
      %v1396 = vpop.f32.mrf.mxu0
      %v1397 = vadd.f32 %v329, %v1396
      %v1398 = vpop.f32.mrf.mxu0
      %v1399 = vpop.f32.mrf.mxu0
      %v1400 = vadd.f32 %v329, %v1399
      %v1401 = vpop.f32.mrf.mxu0
      %1402 = vmatprep.mubr.bf16.mxu0 %v1044
      %1403 = vmatmul.mubr.bf16.gmra.mxu0 %v769
      %v1404 = vpop.f32.mrf.mxu0
      %v1405 = vadd.f32 %v329, %v1404
      %v1406 = vpop.f32.mrf.mxu0
      %v1407 = vpop.f32.mrf.mxu0
      %v1408 = vadd.f32 %v329, %v1407
      %v1409 = vpop.f32.mrf.mxu0
      %1410 = vmatprep.mubr.bf16.mxu0 %v1047
      %1411 = vmatmul.mubr.bf16.gmra.mxu0 %v771
      %v1412 = vpop.f32.mrf.mxu0
      %v1413 = vadd.f32 %v329, %v1412
      %v1414 = vpop.f32.mrf.mxu0
      %v1415 = vpop.f32.mrf.mxu0
      %v1416 = vadd.f32 %v329, %v1415
      %v1417 = vpop.f32.mrf.mxu0
      %1418 = vmatprep.mubr.bf16.mxu0 %v1050
      %1419 = vmatmul.mubr.bf16.gmra.mxu0 %v773
      %v1420 = vpop.f32.mrf.mxu0
      %v1421 = vadd.f32 %v329, %v1420
      %v1422 = vpop.f32.mrf.mxu0
      %v1423 = vpop.f32.mrf.mxu0
      %v1424 = vadd.f32 %v329, %v1423
      %v1425 = vpop.f32.mrf.mxu0
      %1426 = vmatprep.mubr.bf16.mxu0 %v1053
      %1427 = vmatmul.mubr.bf16.gmra.mxu0 %v775
      %v1428 = vpop.f32.mrf.mxu0
      %v1429 = vadd.f32 %v329, %v1428
      %v1430 = vpop.f32.mrf.mxu0
      %v1431 = vpop.f32.mrf.mxu0
      %v1432 = vadd.f32 %v329, %v1431
      %v1433 = vpop.f32.mrf.mxu0
      %1434 = vmatprep.mubr.bf16.mxu0 %v1056
      %1435 = vmatmul.mubr.bf16.gmra.mxu0 %v777
      %v1436 = vpop.f32.mrf.mxu0
      %v1437 = vadd.f32 %v329, %v1436
      %v1438 = vpop.f32.mrf.mxu0
      %v1439 = vpop.f32.mrf.mxu0
      %v1440 = vadd.f32 %v329, %v1439
      %v1441 = vpop.f32.mrf.mxu0
      %1442 = vmatprep.mubr.bf16.mxu0 %v1059
      %1443 = vmatmul.mubr.bf16.gmra.mxu0 %v779
      %v1444 = vpop.f32.mrf.mxu0
      %v1445 = vadd.f32 %v329, %v1444
      %v1446 = vpop.f32.mrf.mxu0
      %v1447 = vpop.f32.mrf.mxu0
      %v1448 = vadd.f32 %v329, %v1447
      %v1449 = vpop.f32.mrf.mxu0
      %1450 = vmatprep.mubr.bf16.mxu0 %v1062
      %1451 = vmatmul.mubr.bf16.gmra.mxu0 %v781
      %v1452 = vpop.f32.mrf.mxu0
      %v1453 = vadd.f32 %v329, %v1452
      %v1454 = vpop.f32.mrf.mxu0
      %v1455 = vpop.f32.mrf.mxu0
      %v1456 = vadd.f32 %v329, %v1455
      %v1457 = vpop.f32.mrf.mxu0
      %1458 = vmatprep.mubr.bf16.mxu0 %v1065
      %1459 = vmatmul.mubr.bf16.gmra.mxu0 %v783
      %v1460 = vpop.f32.mrf.mxu0
      %v1461 = vadd.f32 %v329, %v1460
      %v1462 = vpop.f32.mrf.mxu0
      %v1463 = vpop.f32.mrf.mxu0
      %v1464 = vadd.f32 %v329, %v1463
      %v1465 = vpop.f32.mrf.mxu0
      %1466 = vmatprep.mubr.bf16.mxu0 %v1068
      %1467 = vmatmul.mubr.bf16.gmra.mxu0 %v785
      %v1468 = vpop.f32.mrf.mxu0
      %v1469 = vadd.f32 %v329, %v1468
      %v1470 = vpop.f32.mrf.mxu0
      %v1471 = vpop.f32.mrf.mxu0
      %v1472 = vadd.f32 %v329, %v1471
      %v1473 = vpop.f32.mrf.mxu0
      %1474 = vmatprep.mubr.bf16.mxu0 %v1071
      %1475 = vmatmul.mubr.bf16.gmra.mxu0 %v787
      %v1476 = vpop.f32.mrf.mxu0
      %v1477 = vadd.f32 %v329, %v1476
      %v1478 = vpop.f32.mrf.mxu0
      %v1479 = vpop.f32.mrf.mxu0
      %v1480 = vadd.f32 %v329, %v1479
      %v1481 = vpop.f32.mrf.mxu0
      %1482 = vmatprep.mubr.bf16.mxu0 %v1074
      %1483 = vmatmul.mubr.bf16.gmra.mxu0 %v789
      %v1484 = vpop.f32.mrf.mxu0
      %v1485 = vadd.f32 %v329, %v1484
      %v1486 = vpop.f32.mrf.mxu0
      %v1487 = vpop.f32.mrf.mxu0
      %v1488 = vadd.f32 %v329, %v1487
      %v1489 = vpop.f32.mrf.mxu0
      %1490 = vmatprep.mubr.bf16.mxu0 %v1077
      %1491 = vmatmul.mubr.bf16.gmra.mxu0 %v791
      %v1492 = vpop.f32.mrf.mxu0
      %v1493 = vadd.f32 %v329, %v1492
      %v1494 = vpop.f32.mrf.mxu0
      %v1495 = vpop.f32.mrf.mxu0
      %v1496 = vadd.f32 %v329, %v1495
      %v1497 = vpop.f32.mrf.mxu0
      %1498 = vmatprep.mubr.bf16.mxu0 %v1080
      %1499 = vmatmul.mubr.bf16.gmra.mxu0 %v793
      %v1500 = vpop.f32.mrf.mxu0
      %v1501 = vadd.f32 %v329, %v1500
      %v1502 = vpop.f32.mrf.mxu0
      %v1503 = vpop.f32.mrf.mxu0
      %v1504 = vadd.f32 %v329, %v1503
      %v1505 = vpop.f32.mrf.mxu0
      %1506 = vmatprep.mubr.bf16.mxu0 %v1083
      %1507 = vmatmul.mubr.bf16.gmra.mxu0 %v795
      %v1508 = vpop.f32.mrf.mxu0
      %v1509 = vadd.f32 %v329, %v1508
      %v1510 = vpop.f32.mrf.mxu0
      %v1511 = vpop.f32.mrf.mxu0
      %v1512 = vadd.f32 %v329, %v1511
      %v1513 = vpop.f32.mrf.mxu0
      %1514 = vmatprep.mubr.bf16.mxu0 %v1086
      %1515 = vmatmul.mubr.bf16.gmra.mxu0 %v797
      %v1516 = vpop.f32.mrf.mxu0
      %v1517 = vadd.f32 %v329, %v1516
      %v1518 = vpop.f32.mrf.mxu0
      %v1519 = vpop.f32.mrf.mxu0
      %v1520 = vadd.f32 %v329, %v1519
      %v1521 = vpop.f32.mrf.mxu0
      %1522 = vmatprep.mubr.bf16.mxu0 %v1089
      %1523 = vmatmul.mubr.bf16.gmra.mxu0 %v799
      %v1524 = vpop.f32.mrf.mxu0
      %v1525 = vadd.f32 %v329, %v1524
      %v1526 = vpop.f32.mrf.mxu0
      %v1527 = vpop.f32.mrf.mxu0
      %v1528 = vadd.f32 %v329, %v1527
      %v1529 = vpop.f32.mrf.mxu0
      %1530 = vmatprep.mubr.bf16.mxu0 %v1092
      %1531 = vmatmul.mubr.bf16.gmra.mxu0 %v801
      %v1532 = vpop.f32.mrf.mxu0
      %v1533 = vadd.f32 %v329, %v1532
      %v1534 = vpop.f32.mrf.mxu0
      %v1535 = vpop.f32.mrf.mxu0
      %v1536 = vadd.f32 %v329, %v1535
      %v1537 = vpop.f32.mrf.mxu0
      %1538 = vmatprep.mubr.bf16.mxu0 %v1095
      %1539 = vmatmul.mubr.bf16.gmra.mxu0 %v803
      %v1540 = vpop.f32.mrf.mxu0
      %v1541 = vadd.f32 %v329, %v1540
      %v1542 = vpop.f32.mrf.mxu0
      %v1543 = vpop.f32.mrf.mxu0
      %v1544 = vadd.f32 %v329, %v1543
      %v1545 = vpop.f32.mrf.mxu0
      %1546 = vmatprep.mubr.bf16.mxu0 %v1098
      %1547 = vmatmul.mubr.bf16.gmra.mxu0 %v805
      %v1548 = vpop.f32.mrf.mxu0
      %v1549 = vadd.f32 %v329, %v1548
      %v1550 = vpop.f32.mrf.mxu0
      %v1551 = vpop.f32.mrf.mxu0
      %v1552 = vadd.f32 %v329, %v1551
      %v1553 = vpop.f32.mrf.mxu0
      %1554 = vmatprep.mubr.bf16.mxu0 %v1101
      %1555 = vmatmul.mubr.bf16.gmra.mxu0 %v807
      %v1556 = vpop.f32.mrf.mxu0
      %v1557 = vadd.f32 %v329, %v1556
      %v1558 = vpop.f32.mrf.mxu0
      %v1559 = vpop.f32.mrf.mxu0
      %v1560 = vadd.f32 %v329, %v1559
      %v1561 = vpop.f32.mrf.mxu0
      %1562 = vmatprep.mubr.bf16.mxu0 %v1104
      %1563 = vmatmul.mubr.bf16.gmra.mxu0 %v809
      %v1564 = vpop.f32.mrf.mxu0
      %v1565 = vadd.f32 %v329, %v1564
      %v1566 = vpop.f32.mrf.mxu0
      %v1567 = vpop.f32.mrf.mxu0
      %v1568 = vadd.f32 %v329, %v1567
      %v1569 = vpop.f32.mrf.mxu0
      %1570 = vmatprep.mubr.bf16.mxu0 %v1107
      %1571 = vmatmul.mubr.bf16.gmra.mxu0 %v811
      %v1572 = vpop.f32.mrf.mxu0
      %v1573 = vadd.f32 %v329, %v1572
      %v1574 = vpop.f32.mrf.mxu0
      %v1575 = vpop.f32.mrf.mxu0
      %v1576 = vadd.f32 %v329, %v1575
      %v1577 = vpop.f32.mrf.mxu0
      %1578 = vmatprep.mubr.bf16.mxu0 %v1110
      %1579 = vmatmul.mubr.bf16.gmra.mxu0 %v813
      %v1580 = vpop.f32.mrf.mxu0
      %v1581 = vadd.f32 %v329, %v1580
      %v1582 = vpop.f32.mrf.mxu0
      %v1583 = vpop.f32.mrf.mxu0
      %v1584 = vadd.f32 %v329, %v1583
      %v1585 = vpop.f32.mrf.mxu0
      %1586 = vmatprep.mubr.bf16.mxu0 %v1113
      %1587 = vmatmul.mubr.bf16.gmra.mxu0 %v815
      %v1588 = vpop.f32.mrf.mxu0
      %v1589 = vadd.f32 %v329, %v1588
      %v1590 = vpop.f32.mrf.mxu0
      %v1591 = vpop.f32.mrf.mxu0
      %v1592 = vadd.f32 %v329, %v1591
      %v1593 = vpop.f32.mrf.mxu0
      %1594 = vmatprep.mubr.bf16.mxu0 %v1116
      %1595 = vmatmul.mubr.bf16.gmra.mxu0 %v817
      %v1596 = vpop.f32.mrf.mxu0
      %v1597 = vadd.f32 %v329, %v1596
      %v1598 = vpop.f32.mrf.mxu0
      %v1599 = vpop.f32.mrf.mxu0
      %v1600 = vadd.f32 %v329, %v1599
      %v1601 = vpop.f32.mrf.mxu0
      %1602 = vmatprep.mubr.bf16.mxu0 %v1119
      %1603 = vmatmul.mubr.bf16.gmra.mxu0 %v819
      %v1604 = vpop.f32.mrf.mxu0
      %v1605 = vadd.f32 %v329, %v1604
      %v1606 = vpop.f32.mrf.mxu0
      %v1607 = vpop.f32.mrf.mxu0
      %v1608 = vadd.f32 %v329, %v1607
      %v1609 = vpop.f32.mrf.mxu0
      %1610 = vmatprep.mubr.bf16.mxu0 %v1122
      %1611 = vmatmul.mubr.bf16.gmra.mxu0 %v821
      %v1612 = vpop.f32.mrf.mxu0
      %v1613 = vadd.f32 %v329, %v1612
      %v1614 = vpop.f32.mrf.mxu0
      %v1615 = vpop.f32.mrf.mxu0
      %v1616 = vadd.f32 %v329, %v1615
      %v1617 = vpop.f32.mrf.mxu0
      %1618 = vmatprep.mubr.bf16.mxu0 %v1125
      %1619 = vmatmul.mubr.bf16.gmra.mxu0 %v823
      %v1620 = vpop.f32.mrf.mxu0
      %v1621 = vadd.f32 %v329, %v1620
      %v1622 = vpop.f32.mrf.mxu0
      %v1623 = vpop.f32.mrf.mxu0
      %v1624 = vadd.f32 %v329, %v1623
      %v1625 = vpop.f32.mrf.mxu0
      %1626 = vmatprep.mubr.bf16.mxu0 %v1128
      %1627 = vmatmul.mubr.bf16.gmra.mxu0 %v825
      %v1628 = vpop.f32.mrf.mxu0
      %v1629 = vadd.f32 %v329, %v1628
      %v1630 = vpop.f32.mrf.mxu0
      %v1631 = vpop.f32.mrf.mxu0
      %v1632 = vadd.f32 %v329, %v1631
      %v1633 = vpop.f32.mrf.mxu0
      %1634 = vmatprep.mubr.bf16.mxu0 %v1131
      %1635 = vmatmul.mubr.bf16.gmra.mxu0 %v827
      %v1636 = vpop.f32.mrf.mxu0
      %v1637 = vadd.f32 %v329, %v1636
      %v1638 = vpop.f32.mrf.mxu0
      %v1639 = vpop.f32.mrf.mxu0
      %v1640 = vadd.f32 %v329, %v1639
      %v1641 = vpop.f32.mrf.mxu0
      %1642 = vmatprep.mubr.bf16.mxu0 %v1134
      %1643 = vmatmul.mubr.bf16.gmra.mxu0 %v829
      %v1644 = vpop.f32.mrf.mxu0
      %v1645 = vadd.f32 %v329, %v1644
      %v1646 = vpop.f32.mrf.mxu0
      %v1647 = vpop.f32.mrf.mxu0
      %v1648 = vadd.f32 %v329, %v1647
      %v1649 = vpop.f32.mrf.mxu0
      %1650 = vmatprep.mubr.bf16.mxu0 %v1137
      %1651 = vmatmul.mubr.bf16.gmra.mxu0 %v831
      %v1652 = vpop.f32.mrf.mxu0
      %v1653 = vadd.f32 %v329, %v1652
      %v1654 = vpop.f32.mrf.mxu0
      %v1655 = vpop.f32.mrf.mxu0
      %v1656 = vadd.f32 %v329, %v1655
      %v1657 = vpop.f32.mrf.mxu0
      %1658 = vmatprep.mubr.bf16.mxu0 %v1140
      %1659 = vmatmul.mubr.bf16.gmra.mxu0 %v833
      %v1660 = vpop.f32.mrf.mxu0
      %v1661 = vadd.f32 %v329, %v1660
      %v1662 = vpop.f32.mrf.mxu0
      %v1663 = vpop.f32.mrf.mxu0
      %v1664 = vadd.f32 %v329, %v1663
      %v1665 = vpop.f32.mrf.mxu0
      %1666 = vmatprep.mubr.bf16.mxu0 %v1143
      %1667 = vmatmul.mubr.bf16.gmra.mxu0 %v835
      %v1668 = vpop.f32.mrf.mxu0
      %v1669 = vadd.f32 %v329, %v1668
      %v1670 = vpop.f32.mrf.mxu0
      %v1671 = vpop.f32.mrf.mxu0
      %v1672 = vadd.f32 %v329, %v1671
      %v1673 = vpop.f32.mrf.mxu0
      %1674 = vmatprep.mubr.bf16.mxu0 %v1146
      %1675 = vmatmul.mubr.bf16.gmra.mxu0 %v837
      %v1676 = vpop.f32.mrf.mxu0
      %v1677 = vadd.f32 %v329, %v1676
      %v1678 = vpop.f32.mrf.mxu0
      %v1679 = vpop.f32.mrf.mxu0
      %v1680 = vadd.f32 %v329, %v1679
      %v1681 = vpop.f32.mrf.mxu0
      %1682 = vmatprep.mubr.bf16.mxu0 %v1149
      %1683 = vmatmul.mubr.bf16.gmra.mxu0 %v839
      %v1684 = vpop.f32.mrf.mxu0
      %v1685 = vadd.f32 %v329, %v1684
      %v1686 = vpop.f32.mrf.mxu0
      %v1687 = vpop.f32.mrf.mxu0
      %v1688 = vadd.f32 %v329, %v1687
      %v1689 = vpop.f32.mrf.mxu0
      %1690 = vmatprep.mubr.bf16.mxu0 %v1152
      %1691 = vmatmul.mubr.bf16.gmra.mxu0 %v841
      %v1692 = vpop.f32.mrf.mxu0
      %v1693 = vadd.f32 %v329, %v1692
      %v1694 = vpop.f32.mrf.mxu0
      %v1695 = vpop.f32.mrf.mxu0
      %v1696 = vadd.f32 %v329, %v1695
      %v1697 = vpop.f32.mrf.mxu0
      %1698 = vdwg.mxu0
      %v1699 = vtanh.pop %v1189
      %v1700 = vtanh.pop %v1192
      %v1701 = vtanh.pop %v1197
      %v1702 = vtanh.pop %v1200
      %v1703 = vtanh.pop %v1205
      %v1704 = vtanh.pop %v1208
      %v1705 = vtanh.pop %v1213
      %v1706 = vtanh.pop %v1216
      %v1707 = vtanh.pop %v1221
      %v1708 = vtanh.pop %v1224
      %v1709 = vtanh.pop %v1229
      %v1710 = vtanh.pop %v1232
      %v1711 = vtanh.pop %v1237
      %v1712 = vtanh.pop %v1240
      %v1713 = vtanh.pop %v1245
      %v1714 = vtanh.pop %v1248
      %v1715 = vtanh.pop %v1253
      %v1716 = vtanh.pop %v1256
      %v1717 = vtanh.pop %v1261
      %v1718 = vtanh.pop %v1264
      %v1719 = vtanh.pop %v1269
      %v1720 = vtanh.pop %v1272
      %v1721 = vtanh.pop %v1277
      %v1722 = vtanh.pop %v1280
      %v1723 = vtanh.pop %v1285
      %v1724 = vtanh.pop %v1288
      %v1725 = vtanh.pop %v1293
      %v1726 = vtanh.pop %v1296
      %v1727 = vtanh.pop %v1301
      %v1728 = vtanh.pop %v1304
      %v1729 = vtanh.pop %v1309
      %v1730 = vtanh.pop %v1312
      %v1731 = vtanh.pop %v1317
      %v1732 = vtanh.pop %v1320
      %v1733 = vtanh.pop %v1325
      %v1734 = vtanh.pop %v1328
      %v1735 = vtanh.pop %v1333
      %v1736 = vtanh.pop %v1336
      %v1737 = vtanh.pop %v1341
      %v1738 = vtanh.pop %v1344
      %v1739 = vtanh.pop %v1349
      %v1740 = vtanh.pop %v1352
      %v1741 = vtanh.pop %v1357
      %v1742 = vtanh.pop %v1360
      %v1743 = vtanh.pop %v1365
      %v1744 = vtanh.pop %v1368
      %v1745 = vtanh.pop %v1373
      %v1746 = vtanh.pop %v1376
      %v1747 = vtanh.pop %v1381
      %v1748 = vtanh.pop %v1384
      %v1749 = vtanh.pop %v1389
      %v1750 = vtanh.pop %v1392
      %v1751 = vtanh.pop %v1397
      %v1752 = vtanh.pop %v1400
      %v1753 = vtanh.pop %v1405
      %v1754 = vtanh.pop %v1408
      %v1755 = vtanh.pop %v1413
      %v1756 = vtanh.pop %v1416
      %v1757 = vtanh.pop %v1421
      %v1758 = vtanh.pop %v1424
      %v1759 = vtanh.pop %v1429
      %v1760 = vtanh.pop %v1432
      %v1761 = vtanh.pop %v1437
      %v1762 = vtanh.pop %v1440
      %v1763 = vtanh.pop %v1445
      %v1764 = vtanh.pop %v1448
      %v1765 = vtanh.pop %v1453
      %v1766 = vtanh.pop %v1456
      %v1767 = vtanh.pop %v1461
      %v1768 = vtanh.pop %v1464
      %v1769 = vtanh.pop %v1469
      %v1770 = vtanh.pop %v1472
      %v1771 = vtanh.pop %v1477
      %v1772 = vtanh.pop %v1480
      %v1773 = vtanh.pop %v1485
      %v1774 = vtanh.pop %v1488
      %v1775 = vtanh.pop %v1493
      %v1776 = vtanh.pop %v1496
      %v1777 = vtanh.pop %v1501
      %v1778 = vtanh.pop %v1504
      %v1779 = vtanh.pop %v1509
      %v1780 = vtanh.pop %v1512
      %v1781 = vtanh.pop %v1517
      %v1782 = vtanh.pop %v1520
      %v1783 = vtanh.pop %v1525
      %v1784 = vtanh.pop %v1528
      %v1785 = vtanh.pop %v1533
      %v1786 = vtanh.pop %v1536
      %v1787 = vtanh.pop %v1541
      %v1788 = vtanh.pop %v1544
      %v1789 = vtanh.pop %v1549
      %v1790 = vtanh.pop %v1552
      %v1791 = vtanh.pop %v1557
      %v1792 = vtanh.pop %v1560
      %v1793 = vtanh.pop %v1565
      %v1794 = vtanh.pop %v1568
      %v1795 = vtanh.pop %v1573
      %v1796 = vtanh.pop %v1576
      %v1797 = vtanh.pop %v1581
      %v1798 = vtanh.pop %v1584
      %v1799 = vtanh.pop %v1589
      %v1800 = vtanh.pop %v1592
      %v1801 = vtanh.pop %v1597
      %v1802 = vtanh.pop %v1600
      %v1803 = vtanh.pop %v1605
      %v1804 = vtanh.pop %v1608
      %v1805 = vtanh.pop %v1613
      %v1806 = vtanh.pop %v1616
      %v1807 = vtanh.pop %v1621
      %v1808 = vtanh.pop %v1624
      %v1809 = vtanh.pop %v1629
      %v1810 = vtanh.pop %v1632
      %v1811 = vtanh.pop %v1637
      %v1812 = vtanh.pop %v1640
      %v1813 = vtanh.pop %v1645
      %v1814 = vtanh.pop %v1648
      %v1815 = vtanh.pop %v1653
      %v1816 = vtanh.pop %v1656
      %v1817 = vtanh.pop %v1661
      %v1818 = vtanh.pop %v1664
      %v1819 = vtanh.pop %v1669
      %v1820 = vtanh.pop %v1672
      %v1821 = vtanh.pop %v1677
      %v1822 = vtanh.pop %v1680
      %v1823 = vtanh.pop %v1685
      %v1824 = vtanh.pop %v1688
      %v1825 = vtanh.pop %v1693
      %v1826 = vtanh.pop %v1696
      %v1827 = vpack.c.bf16 %v1700, %v1699
      %v1828 = vpack.c.bf16 %v1702, %v1701
      %v1829 = vpack.c.bf16 %v1704, %v1703
      %v1830 = vpack.c.bf16 %v1706, %v1705
      %v1831 = vpack.c.bf16 %v1708, %v1707
      %v1832 = vpack.c.bf16 %v1710, %v1709
      %v1833 = vpack.c.bf16 %v1712, %v1711
      %v1834 = vpack.c.bf16 %v1714, %v1713
      %v1835 = vpack.c.bf16 %v1716, %v1715
      %v1836 = vpack.c.bf16 %v1718, %v1717
      %v1837 = vpack.c.bf16 %v1720, %v1719
      %v1838 = vpack.c.bf16 %v1722, %v1721
      %v1839 = vpack.c.bf16 %v1724, %v1723
      %v1840 = vpack.c.bf16 %v1726, %v1725
      %v1841 = vpack.c.bf16 %v1728, %v1727
      %v1842 = vpack.c.bf16 %v1730, %v1729
      %v1843 = vpack.c.bf16 %v1732, %v1731
      %v1844 = vpack.c.bf16 %v1734, %v1733
      %v1845 = vpack.c.bf16 %v1736, %v1735
      %v1846 = vpack.c.bf16 %v1738, %v1737
      %v1847 = vpack.c.bf16 %v1740, %v1739
      %v1848 = vpack.c.bf16 %v1742, %v1741
      %v1849 = vpack.c.bf16 %v1744, %v1743
      %v1850 = vpack.c.bf16 %v1746, %v1745
      %v1851 = vpack.c.bf16 %v1748, %v1747
      %v1852 = vpack.c.bf16 %v1750, %v1749
      %v1853 = vpack.c.bf16 %v1752, %v1751
      %v1854 = vpack.c.bf16 %v1754, %v1753
      %v1855 = vpack.c.bf16 %v1756, %v1755
      %v1856 = vpack.c.bf16 %v1758, %v1757
      %v1857 = vpack.c.bf16 %v1760, %v1759
      %v1858 = vpack.c.bf16 %v1762, %v1761
      %v1859 = vpack.c.bf16 %v1764, %v1763
      %v1860 = vpack.c.bf16 %v1766, %v1765
      %v1861 = vpack.c.bf16 %v1768, %v1767
      %v1862 = vpack.c.bf16 %v1770, %v1769
      %v1863 = vpack.c.bf16 %v1772, %v1771
      %v1864 = vpack.c.bf16 %v1774, %v1773
      %v1865 = vpack.c.bf16 %v1776, %v1775
      %v1866 = vpack.c.bf16 %v1778, %v1777
      %v1867 = vpack.c.bf16 %v1780, %v1779
      %v1868 = vpack.c.bf16 %v1782, %v1781
      %v1869 = vpack.c.bf16 %v1784, %v1783
      %v1870 = vpack.c.bf16 %v1786, %v1785
      %v1871 = vpack.c.bf16 %v1788, %v1787
      %v1872 = vpack.c.bf16 %v1790, %v1789
      %v1873 = vpack.c.bf16 %v1792, %v1791
      %v1874 = vpack.c.bf16 %v1794, %v1793
      %v1875 = vpack.c.bf16 %v1796, %v1795
      %v1876 = vpack.c.bf16 %v1798, %v1797
      %v1877 = vpack.c.bf16 %v1800, %v1799
      %v1878 = vpack.c.bf16 %v1802, %v1801
      %v1879 = vpack.c.bf16 %v1804, %v1803
      %v1880 = vpack.c.bf16 %v1806, %v1805
      %v1881 = vpack.c.bf16 %v1808, %v1807
      %v1882 = vpack.c.bf16 %v1810, %v1809
      %v1883 = vpack.c.bf16 %v1812, %v1811
      %v1884 = vpack.c.bf16 %v1814, %v1813
      %v1885 = vpack.c.bf16 %v1816, %v1815
      %v1886 = vpack.c.bf16 %v1818, %v1817
      %v1887 = vpack.c.bf16 %v1820, %v1819
      %v1888 = vpack.c.bf16 %v1822, %v1821
      %v1889 = vpack.c.bf16 %v1824, %v1823
      %v1890 = vpack.c.bf16 %v1826, %v1825
      %v1955 = vunpack.c.l.b16 %v1827
      %v1956 = vunpack.c.h.b16 %v1827
      %v1957 = vunpack.c.l.b16 %v1828
      %v1958 = vunpack.c.h.b16 %v1828
      %v1959 = vunpack.c.l.b16 %v1829
      %v1960 = vunpack.c.h.b16 %v1829
      %v1961 = vunpack.c.l.b16 %v1830
      %v1962 = vunpack.c.h.b16 %v1830
      %v1963 = vunpack.c.l.b16 %v1831
      %v1964 = vunpack.c.h.b16 %v1831
      %v1965 = vunpack.c.l.b16 %v1832
      %v1966 = vunpack.c.h.b16 %v1832
      %v1967 = vunpack.c.l.b16 %v1833
      %v1968 = vunpack.c.h.b16 %v1833
      %v1969 = vunpack.c.l.b16 %v1834
      %v1970 = vunpack.c.h.b16 %v1834
      %v1971 = vunpack.c.l.b16 %v1835
      %v1972 = vunpack.c.h.b16 %v1835
      %v1973 = vunpack.c.l.b16 %v1836
      %v1974 = vunpack.c.h.b16 %v1836
      %v1975 = vunpack.c.l.b16 %v1837
      %v1976 = vunpack.c.h.b16 %v1837
      %v1977 = vunpack.c.l.b16 %v1838
      %v1978 = vunpack.c.h.b16 %v1838
      %v1979 = vunpack.c.l.b16 %v1839
      %v1980 = vunpack.c.h.b16 %v1839
      %v1981 = vunpack.c.l.b16 %v1840
      %v1982 = vunpack.c.h.b16 %v1840
      %v1983 = vunpack.c.l.b16 %v1841
      %v1984 = vunpack.c.h.b16 %v1841
      %v1985 = vunpack.c.l.b16 %v1842
      %v1986 = vunpack.c.h.b16 %v1842
      %v1987 = vunpack.c.l.b16 %v1843
      %v1988 = vunpack.c.h.b16 %v1843
      %v1989 = vunpack.c.l.b16 %v1844
      %v1990 = vunpack.c.h.b16 %v1844
      %v1991 = vunpack.c.l.b16 %v1845
      %v1992 = vunpack.c.h.b16 %v1845
      %v1993 = vunpack.c.l.b16 %v1846
      %v1994 = vunpack.c.h.b16 %v1846
      %v1995 = vunpack.c.l.b16 %v1847
      %v1996 = vunpack.c.h.b16 %v1847
      %v1997 = vunpack.c.l.b16 %v1848
      %v1998 = vunpack.c.h.b16 %v1848
      %v1999 = vunpack.c.l.b16 %v1849
      %v2000 = vunpack.c.h.b16 %v1849
      %v2001 = vunpack.c.l.b16 %v1850
      %v2002 = vunpack.c.h.b16 %v1850
      %v2003 = vunpack.c.l.b16 %v1851
      %v2004 = vunpack.c.h.b16 %v1851
      %v2005 = vunpack.c.l.b16 %v1852
      %v2006 = vunpack.c.h.b16 %v1852
      %v2007 = vunpack.c.l.b16 %v1853
      %v2008 = vunpack.c.h.b16 %v1853
      %v2009 = vunpack.c.l.b16 %v1854
      %v2010 = vunpack.c.h.b16 %v1854
      %v2011 = vunpack.c.l.b16 %v1855
      %v2012 = vunpack.c.h.b16 %v1855
      %v2013 = vunpack.c.l.b16 %v1856
      %v2014 = vunpack.c.h.b16 %v1856
      %v2015 = vunpack.c.l.b16 %v1857
      %v2016 = vunpack.c.h.b16 %v1857
      %v2017 = vunpack.c.l.b16 %v1858
      %v2018 = vunpack.c.h.b16 %v1858
      %v2019 = vunpack.c.l.b16 %v1859
      %v2020 = vunpack.c.h.b16 %v1859
      %v2021 = vunpack.c.l.b16 %v1860
      %v2022 = vunpack.c.h.b16 %v1860
      %v2023 = vunpack.c.l.b16 %v1861
      %v2024 = vunpack.c.h.b16 %v1861
      %v2025 = vunpack.c.l.b16 %v1862
      %v2026 = vunpack.c.h.b16 %v1862
      %v2027 = vunpack.c.l.b16 %v1863
      %v2028 = vunpack.c.h.b16 %v1863
      %v2029 = vunpack.c.l.b16 %v1864
      %v2030 = vunpack.c.h.b16 %v1864
      %v2031 = vunpack.c.l.b16 %v1865
      %v2032 = vunpack.c.h.b16 %v1865
      %v2033 = vunpack.c.l.b16 %v1866
      %v2034 = vunpack.c.h.b16 %v1866
      %v2035 = vunpack.c.l.b16 %v1867
      %v2036 = vunpack.c.h.b16 %v1867
      %v2037 = vunpack.c.l.b16 %v1868
      %v2038 = vunpack.c.h.b16 %v1868
      %v2039 = vunpack.c.l.b16 %v1869
      %v2040 = vunpack.c.h.b16 %v1869
      %v2041 = vunpack.c.l.b16 %v1870
      %v2042 = vunpack.c.h.b16 %v1870
      %v2043 = vunpack.c.l.b16 %v1871
      %v2044 = vunpack.c.h.b16 %v1871
      %v2045 = vunpack.c.l.b16 %v1872
      %v2046 = vunpack.c.h.b16 %v1872
      %v2047 = vunpack.c.l.b16 %v1873
      %v2048 = vunpack.c.h.b16 %v1873
      %v2049 = vunpack.c.l.b16 %v1874
      %v2050 = vunpack.c.h.b16 %v1874
      %v2051 = vunpack.c.l.b16 %v1875
      %v2052 = vunpack.c.h.b16 %v1875
      %v2053 = vunpack.c.l.b16 %v1876
      %v2054 = vunpack.c.h.b16 %v1876
      %v2055 = vunpack.c.l.b16 %v1877
      %v2056 = vunpack.c.h.b16 %v1877
      %v2057 = vunpack.c.l.b16 %v1878
      %v2058 = vunpack.c.h.b16 %v1878
      %v2059 = vunpack.c.l.b16 %v1879
      %v2060 = vunpack.c.h.b16 %v1879
      %v2061 = vunpack.c.l.b16 %v1880
      %v2062 = vunpack.c.h.b16 %v1880
      %v2063 = vunpack.c.l.b16 %v1881
      %v2064 = vunpack.c.h.b16 %v1881
      %v2065 = vunpack.c.l.b16 %v1882
      %v2066 = vunpack.c.h.b16 %v1882
      %v2067 = vunpack.c.l.b16 %v1883
      %v2068 = vunpack.c.h.b16 %v1883
      %v2069 = vunpack.c.l.b16 %v1884
      %v2070 = vunpack.c.h.b16 %v1884
      %v2071 = vunpack.c.l.b16 %v1885
      %v2072 = vunpack.c.h.b16 %v1885
      %v2073 = vunpack.c.l.b16 %v1886
      %v2074 = vunpack.c.h.b16 %v1886
      %v2075 = vunpack.c.l.b16 %v1887
      %v2076 = vunpack.c.h.b16 %v1887
      %v2077 = vunpack.c.l.b16 %v1888
      %v2078 = vunpack.c.h.b16 %v1888
      %v2079 = vunpack.c.l.b16 %v1889
      %v2080 = vunpack.c.h.b16 %v1889
      %v2081 = vunpack.c.l.b16 %v1890
      %v2082 = vunpack.c.h.b16 %v1890
      %v2083 = vpack.c.b16 %v1955, %v1955
      %v2084 = vpack.c.b16 %v1956, %v1956
      %v2085 = vpack.c.b16 %v1957, %v1957
      %v2086 = vpack.c.b16 %v1958, %v1958
      %v2087 = vpack.c.b16 %v1959, %v1959
      %v2088 = vpack.c.b16 %v1960, %v1960
      %v2089 = vpack.c.b16 %v1961, %v1961
      %v2090 = vpack.c.b16 %v1962, %v1962
      %v2091 = vpack.c.b16 %v1963, %v1963
      %v2092 = vpack.c.b16 %v1964, %v1964
      %v2093 = vpack.c.b16 %v1965, %v1965
      %v2094 = vpack.c.b16 %v1966, %v1966
      %v2095 = vpack.c.b16 %v1967, %v1967
      %v2096 = vpack.c.b16 %v1968, %v1968
      %v2097 = vpack.c.b16 %v1969, %v1969
      %v2098 = vpack.c.b16 %v1970, %v1970
      %v2099 = vpack.c.b16 %v1971, %v1971
      %v2100 = vpack.c.b16 %v1972, %v1972
      %v2101 = vpack.c.b16 %v1973, %v1973
      %v2102 = vpack.c.b16 %v1974, %v1974
      %v2103 = vpack.c.b16 %v1975, %v1975
      %v2104 = vpack.c.b16 %v1976, %v1976
      %v2105 = vpack.c.b16 %v1977, %v1977
      %v2106 = vpack.c.b16 %v1978, %v1978
      %v2107 = vpack.c.b16 %v1979, %v1979
      %v2108 = vpack.c.b16 %v1980, %v1980
      %v2109 = vpack.c.b16 %v1981, %v1981
      %v2110 = vpack.c.b16 %v1982, %v1982
      %v2111 = vpack.c.b16 %v1983, %v1983
      %v2112 = vpack.c.b16 %v1984, %v1984
      %v2113 = vpack.c.b16 %v1985, %v1985
      %v2114 = vpack.c.b16 %v1986, %v1986
      %v2115 = vpack.c.b16 %v1987, %v1987
      %v2116 = vpack.c.b16 %v1988, %v1988
      %v2117 = vpack.c.b16 %v1989, %v1989
      %v2118 = vpack.c.b16 %v1990, %v1990
      %v2119 = vpack.c.b16 %v1991, %v1991
      %v2120 = vpack.c.b16 %v1992, %v1992
      %v2121 = vpack.c.b16 %v1993, %v1993
      %v2122 = vpack.c.b16 %v1994, %v1994
      %v2123 = vpack.c.b16 %v1995, %v1995
      %v2124 = vpack.c.b16 %v1996, %v1996
      %v2125 = vpack.c.b16 %v1997, %v1997
      %v2126 = vpack.c.b16 %v1998, %v1998
      %v2127 = vpack.c.b16 %v1999, %v1999
      %v2128 = vpack.c.b16 %v2000, %v2000
      %v2129 = vpack.c.b16 %v2001, %v2001
      %v2130 = vpack.c.b16 %v2002, %v2002
      %v2131 = vpack.c.b16 %v2003, %v2003
      %v2132 = vpack.c.b16 %v2004, %v2004
      %v2133 = vpack.c.b16 %v2005, %v2005
      %v2134 = vpack.c.b16 %v2006, %v2006
      %v2135 = vpack.c.b16 %v2007, %v2007
      %v2136 = vpack.c.b16 %v2008, %v2008
      %v2137 = vpack.c.b16 %v2009, %v2009
      %v2138 = vpack.c.b16 %v2010, %v2010
      %v2139 = vpack.c.b16 %v2011, %v2011
      %v2140 = vpack.c.b16 %v2012, %v2012
      %v2141 = vpack.c.b16 %v2013, %v2013
      %v2142 = vpack.c.b16 %v2014, %v2014
      %v2143 = vpack.c.b16 %v2015, %v2015
      %v2144 = vpack.c.b16 %v2016, %v2016
      %v2145 = vpack.c.b16 %v2017, %v2017
      %v2146 = vpack.c.b16 %v2018, %v2018
      %v2147 = vpack.c.b16 %v2019, %v2019
      %v2148 = vpack.c.b16 %v2020, %v2020
      %v2149 = vpack.c.b16 %v2021, %v2021
      %v2150 = vpack.c.b16 %v2022, %v2022
      %v2151 = vpack.c.b16 %v2023, %v2023
      %v2152 = vpack.c.b16 %v2024, %v2024
      %v2153 = vpack.c.b16 %v2025, %v2025
      %v2154 = vpack.c.b16 %v2026, %v2026
      %v2155 = vpack.c.b16 %v2027, %v2027
      %v2156 = vpack.c.b16 %v2028, %v2028
      %v2157 = vpack.c.b16 %v2029, %v2029
      %v2158 = vpack.c.b16 %v2030, %v2030
      %v2159 = vpack.c.b16 %v2031, %v2031
      %v2160 = vpack.c.b16 %v2032, %v2032
      %v2161 = vpack.c.b16 %v2033, %v2033
      %v2162 = vpack.c.b16 %v2034, %v2034
      %v2163 = vpack.c.b16 %v2035, %v2035
      %v2164 = vpack.c.b16 %v2036, %v2036
      %v2165 = vpack.c.b16 %v2037, %v2037
      %v2166 = vpack.c.b16 %v2038, %v2038
      %v2167 = vpack.c.b16 %v2039, %v2039
      %v2168 = vpack.c.b16 %v2040, %v2040
      %v2169 = vpack.c.b16 %v2041, %v2041
      %v2170 = vpack.c.b16 %v2042, %v2042
      %v2171 = vpack.c.b16 %v2043, %v2043
      %v2172 = vpack.c.b16 %v2044, %v2044
      %v2173 = vpack.c.b16 %v2045, %v2045
      %v2174 = vpack.c.b16 %v2046, %v2046
      %v2175 = vpack.c.b16 %v2047, %v2047
      %v2176 = vpack.c.b16 %v2048, %v2048
      %v2177 = vpack.c.b16 %v2049, %v2049
      %v2178 = vpack.c.b16 %v2050, %v2050
      %v2179 = vpack.c.b16 %v2051, %v2051
      %v2180 = vpack.c.b16 %v2052, %v2052
      %v2181 = vpack.c.b16 %v2053, %v2053
      %v2182 = vpack.c.b16 %v2054, %v2054
      %v2183 = vpack.c.b16 %v2055, %v2055
      %v2184 = vpack.c.b16 %v2056, %v2056
      %v2185 = vpack.c.b16 %v2057, %v2057
      %v2186 = vpack.c.b16 %v2058, %v2058
      %v2187 = vpack.c.b16 %v2059, %v2059
      %v2188 = vpack.c.b16 %v2060, %v2060
      %v2189 = vpack.c.b16 %v2061, %v2061
      %v2190 = vpack.c.b16 %v2062, %v2062
      %v2191 = vpack.c.b16 %v2063, %v2063
      %v2192 = vpack.c.b16 %v2064, %v2064
      %v2193 = vpack.c.b16 %v2065, %v2065
      %v2194 = vpack.c.b16 %v2066, %v2066
      %v2195 = vpack.c.b16 %v2067, %v2067
      %v2196 = vpack.c.b16 %v2068, %v2068
      %v2197 = vpack.c.b16 %v2069, %v2069
      %v2198 = vpack.c.b16 %v2070, %v2070
      %v2199 = vpack.c.b16 %v2071, %v2071
      %v2200 = vpack.c.b16 %v2072, %v2072
      %v2201 = vpack.c.b16 %v2073, %v2073
      %v2202 = vpack.c.b16 %v2074, %v2074
      %v2203 = vpack.c.b16 %v2075, %v2075
      %v2204 = vpack.c.b16 %v2076, %v2076
      %v2205 = vpack.c.b16 %v2077, %v2077
      %v2206 = vpack.c.b16 %v2078, %v2078
      %v2207 = vpack.c.b16 %v2079, %v2079
      %v2208 = vpack.c.b16 %v2080, %v2080
      %v2209 = vpack.c.b16 %v2081, %v2081
      %v2210 = vpack.c.b16 %v2082, %v2082
      %2339 = vst [vmem:[%s175] sm:$0xf] %v2083
      %2340 = vst [vmem:[%s175 + $0x4] sm:$0xf] %v2084
      %2341 = vst [vmem:[%s175 + $0x8] sm:$0xf] %v2085
      %2342 = vst [vmem:[%s175 + $0xc] sm:$0xf] %v2086
      %2343 = vst [vmem:[%s175 + $0x10] sm:$0xf] %v2087
      %2344 = vst [vmem:[%s175 + $0x14] sm:$0xf] %v2088
      %2345 = vst [vmem:[%s175 + $0x18] sm:$0xf] %v2089
      %2346 = vst [vmem:[%s175 + $0x1c] sm:$0xf] %v2090
      %2347 = vst [vmem:[%s175 + $0x20] sm:$0xf] %v2091
      %2348 = vst [vmem:[%s175 + $0x24] sm:$0xf] %v2092
      %2349 = vst [vmem:[%s175 + $0x28] sm:$0xf] %v2093
      %2350 = vst [vmem:[%s175 + $0x2c] sm:$0xf] %v2094
      %2351 = vst [vmem:[%s175 + $0x30] sm:$0xf] %v2095
      %2352 = vst [vmem:[%s175 + $0x34] sm:$0xf] %v2096
      %2353 = vst [vmem:[%s175 + $0x38] sm:$0xf] %v2097
      %2354 = vst [vmem:[%s175 + $0x3c] sm:$0xf] %v2098
      %2355 = vst [vmem:[%s175 + $0x40] sm:$0xf] %v2099
      %2356 = vst [vmem:[%s175 + $0x44] sm:$0xf] %v2100
      %2357 = vst [vmem:[%s175 + $0x48] sm:$0xf] %v2101
      %2358 = vst [vmem:[%s175 + $0x4c] sm:$0xf] %v2102
      %2359 = vst [vmem:[%s175 + $0x50] sm:$0xf] %v2103
      %2360 = vst [vmem:[%s175 + $0x54] sm:$0xf] %v2104
      %2361 = vst [vmem:[%s175 + $0x58] sm:$0xf] %v2105
      %2362 = vst [vmem:[%s175 + $0x5c] sm:$0xf] %v2106
      %2363 = vst [vmem:[%s175 + $0x60] sm:$0xf] %v2107
      %2364 = vst [vmem:[%s175 + $0x64] sm:$0xf] %v2108
      %2365 = vst [vmem:[%s175 + $0x68] sm:$0xf] %v2109
      %2366 = vst [vmem:[%s175 + $0x6c] sm:$0xf] %v2110
      %2367 = vst [vmem:[%s175 + $0x70] sm:$0xf] %v2111
      %2368 = vst [vmem:[%s175 + $0x74] sm:$0xf] %v2112
      %2369 = vst [vmem:[%s175 + $0x78] sm:$0xf] %v2113
      %2370 = vst [vmem:[%s175 + $0x7c] sm:$0xf] %v2114
      %2371 = vst [vmem:[%s175 + $0x80] sm:$0xf] %v2115
      %2372 = vst [vmem:[%s175 + $0x84] sm:$0xf] %v2116
      %2373 = vst [vmem:[%s175 + $0x88] sm:$0xf] %v2117
      %2374 = vst [vmem:[%s175 + $0x8c] sm:$0xf] %v2118
      %2375 = vst [vmem:[%s175 + $0x90] sm:$0xf] %v2119
      %2376 = vst [vmem:[%s175 + $0x94] sm:$0xf] %v2120
      %2377 = vst [vmem:[%s175 + $0x98] sm:$0xf] %v2121
      %2378 = vst [vmem:[%s175 + $0x9c] sm:$0xf] %v2122
      %2379 = vst [vmem:[%s175 + $0xa0] sm:$0xf] %v2123
      %2380 = vst [vmem:[%s175 + $0xa4] sm:$0xf] %v2124
      %2381 = vst [vmem:[%s175 + $0xa8] sm:$0xf] %v2125
      %2382 = vst [vmem:[%s175 + $0xac] sm:$0xf] %v2126
      %2383 = vst [vmem:[%s175 + $0xb0] sm:$0xf] %v2127
      %2384 = vst [vmem:[%s175 + $0xb4] sm:$0xf] %v2128
      %2385 = vst [vmem:[%s175 + $0xb8] sm:$0xf] %v2129
      %2386 = vst [vmem:[%s175 + $0xbc] sm:$0xf] %v2130
      %2387 = vst [vmem:[%s175 + $0xc0] sm:$0xf] %v2131
      %2388 = vst [vmem:[%s175 + $0xc4] sm:$0xf] %v2132
      %2389 = vst [vmem:[%s175 + $0xc8] sm:$0xf] %v2133
      %2390 = vst [vmem:[%s175 + $0xcc] sm:$0xf] %v2134
      %2391 = vst [vmem:[%s175 + $0xd0] sm:$0xf] %v2135
      %2392 = vst [vmem:[%s175 + $0xd4] sm:$0xf] %v2136
      %2393 = vst [vmem:[%s175 + $0xd8] sm:$0xf] %v2137
      %2394 = vst [vmem:[%s175 + $0xdc] sm:$0xf] %v2138
      %2395 = vst [vmem:[%s175 + $0xe0] sm:$0xf] %v2139
      %2396 = vst [vmem:[%s175 + $0xe4] sm:$0xf] %v2140
      %2397 = vst [vmem:[%s175 + $0xe8] sm:$0xf] %v2141
      %2398 = vst [vmem:[%s175 + $0xec] sm:$0xf] %v2142
      %2399 = vst [vmem:[%s175 + $0xf0] sm:$0xf] %v2143
      %2400 = vst [vmem:[%s175 + $0xf4] sm:$0xf] %v2144
      %2401 = vst [vmem:[%s175 + $0xf8] sm:$0xf] %v2145
      %2402 = vst [vmem:[%s175 + $0xfc] sm:$0xf] %v2146
      %2403 = vst [vmem:[%s175 + $0x100] sm:$0xf] %v2147
      %2404 = vst [vmem:[%s175 + $0x104] sm:$0xf] %v2148
      %2405 = vst [vmem:[%s175 + $0x108] sm:$0xf] %v2149
      %2406 = vst [vmem:[%s175 + $0x10c] sm:$0xf] %v2150
      %2407 = vst [vmem:[%s175 + $0x110] sm:$0xf] %v2151
      %2408 = vst [vmem:[%s175 + $0x114] sm:$0xf] %v2152
      %2409 = vst [vmem:[%s175 + $0x118] sm:$0xf] %v2153
      %2410 = vst [vmem:[%s175 + $0x11c] sm:$0xf] %v2154
      %2411 = vst [vmem:[%s175 + $0x120] sm:$0xf] %v2155
      %2412 = vst [vmem:[%s175 + $0x124] sm:$0xf] %v2156
      %2413 = vst [vmem:[%s175 + $0x128] sm:$0xf] %v2157
      %2414 = vst [vmem:[%s175 + $0x12c] sm:$0xf] %v2158
      %2415 = vst [vmem:[%s175 + $0x130] sm:$0xf] %v2159
      %2416 = vst [vmem:[%s175 + $0x134] sm:$0xf] %v2160
      %2417 = vst [vmem:[%s175 + $0x138] sm:$0xf] %v2161
      %2418 = vst [vmem:[%s175 + $0x13c] sm:$0xf] %v2162
      %2419 = vst [vmem:[%s175 + $0x140] sm:$0xf] %v2163
      %2420 = vst [vmem:[%s175 + $0x144] sm:$0xf] %v2164
      %2421 = vst [vmem:[%s175 + $0x148] sm:$0xf] %v2165
      %2422 = vst [vmem:[%s175 + $0x14c] sm:$0xf] %v2166
      %2423 = vst [vmem:[%s175 + $0x150] sm:$0xf] %v2167
      %2424 = vst [vmem:[%s175 + $0x154] sm:$0xf] %v2168
      %2425 = vst [vmem:[%s175 + $0x158] sm:$0xf] %v2169
      %2426 = vst [vmem:[%s175 + $0x15c] sm:$0xf] %v2170
      %2427 = vst [vmem:[%s175 + $0x160] sm:$0xf] %v2171
      %2428 = vst [vmem:[%s175 + $0x164] sm:$0xf] %v2172
      %2429 = vst [vmem:[%s175 + $0x168] sm:$0xf] %v2173
      %2430 = vst [vmem:[%s175 + $0x16c] sm:$0xf] %v2174
      %2431 = vst [vmem:[%s175 + $0x170] sm:$0xf] %v2175
      %2432 = vst [vmem:[%s175 + $0x174] sm:$0xf] %v2176
      %2433 = vst [vmem:[%s175 + $0x178] sm:$0xf] %v2177
      %2434 = vst [vmem:[%s175 + $0x17c] sm:$0xf] %v2178
      %2435 = vst [vmem:[%s175 + $0x180] sm:$0xf] %v2179
      %2436 = vst [vmem:[%s175 + $0x184] sm:$0xf] %v2180
      %2437 = vst [vmem:[%s175 + $0x188] sm:$0xf] %v2181
      %2438 = vst [vmem:[%s175 + $0x18c] sm:$0xf] %v2182
      %2439 = vst [vmem:[%s175 + $0x190] sm:$0xf] %v2183
      %2440 = vst [vmem:[%s175 + $0x194] sm:$0xf] %v2184
      %2441 = vst [vmem:[%s175 + $0x198] sm:$0xf] %v2185
      %2442 = vst [vmem:[%s175 + $0x19c] sm:$0xf] %v2186
      %2443 = vst [vmem:[%s175 + $0x1a0] sm:$0xf] %v2187
      %2444 = vst [vmem:[%s175 + $0x1a4] sm:$0xf] %v2188
      %2445 = vst [vmem:[%s175 + $0x1a8] sm:$0xf] %v2189
      %2446 = vst [vmem:[%s175 + $0x1ac] sm:$0xf] %v2190
      %2447 = vst [vmem:[%s175 + $0x1b0] sm:$0xf] %v2191
      %2448 = vst [vmem:[%s175 + $0x1b4] sm:$0xf] %v2192
      %2449 = vst [vmem:[%s175 + $0x1b8] sm:$0xf] %v2193
      %2450 = vst [vmem:[%s175 + $0x1bc] sm:$0xf] %v2194
      %2451 = vst [vmem:[%s175 + $0x1c0] sm:$0xf] %v2195
      %2452 = vst [vmem:[%s175 + $0x1c4] sm:$0xf] %v2196
      %2453 = vst [vmem:[%s175 + $0x1c8] sm:$0xf] %v2197
      %2454 = vst [vmem:[%s175 + $0x1cc] sm:$0xf] %v2198
      %2455 = vst [vmem:[%s175 + $0x1d0] sm:$0xf] %v2199
      %2456 = vst [vmem:[%s175 + $0x1d4] sm:$0xf] %v2200
      %2457 = vst [vmem:[%s175 + $0x1d8] sm:$0xf] %v2201
      %2458 = vst [vmem:[%s175 + $0x1dc] sm:$0xf] %v2202
      %2459 = vst [vmem:[%s175 + $0x1e0] sm:$0xf] %v2203
      %2460 = vst [vmem:[%s175 + $0x1e4] sm:$0xf] %v2204
      %2461 = vst [vmem:[%s175 + $0x1e8] sm:$0xf] %v2205
      %2462 = vst [vmem:[%s175 + $0x1ec] sm:$0xf] %v2206
      %2463 = vst [vmem:[%s175 + $0x1f0] sm:$0xf] %v2207
      %2464 = vst [vmem:[%s175 + $0x1f4] sm:$0xf] %v2208
      %2465 = vst [vmem:[%s175 + $0x1f8] sm:$0xf] %v2209
      %2466 = vst [vmem:[%s175 + $0x1fc] sm:$0xf] %v2210
      %s2467 = smul.u32 128, %s14
      %p2468 = scmp.lt.s32.totalorder %s2467, 255
      %s2469 = scalar_select %p2468, %s2467, 255
      %s2470 = smul.addr %s2469, 4
      %s2471 = scalar_lea.vmem %s3, %s2470
      // Predicated region
      $region33: #{generator_forward.9} parent=31 // pred_check
        %p2472 = pneg %p100
      $region34: #{generator_forward.9} parent=31 // pred_check_branch
        %2474 = sbr.rel (%p2472) target = $region36
      $region35: #{generator_forward.9} parent=31 // pred_region
        %s2475 = smul.u32 128, %s14
      $region36: #{generator_forward.9} parent=31 // pred_fallthru
        _
    $region32: #{generator_forward.9} parent=5 // pred_fallthru
      _
    %p2476 = scmp.le.s32.totalorder 2, %s9
    // Predicated region
    $region37: #{generator_forward.9} parent=5 // pred_check
      %p2477 = pneg %p2476
    $region38: #{generator_forward.9} parent=5 // pred_check_branch
      %2479 = sbr.rel (%p2477) target = $region40
    $region39: #{generator_forward.9} parent=5 // pred_region
      %s2480 = ssub.s32 %s9, 2
      // Predicated region
      $region41: #{generator_forward.9} parent=39 // pred_check
        %p2481 = pneg %p106
      $region42: #{generator_forward.9} parent=39 // pred_check_branch
        %2483 = sbr.rel (%p2481) target = $region44
      $region43: #{generator_forward.9} parent=39 // pred_region
        %s2484 = smul.u32 128, %s15
        %p2485 = scmp.lt.s32.totalorder %s2484, 255
        %s2486 = scalar_select %p2485, %s2484, 255
        %s2487 = smul.addr %s2486, 4
        %s2488 = scalar_lea.vmem %s3, %s2487
      $region44: #{generator_forward.9} parent=39 // pred_fallthru
        _
    $region40: #{generator_forward.9} parent=5 // pred_fallthru
      _
  $region6: #{generator_forward.9} parent=0 // loop_footer
    %s13 = sadd.s32 1, %s9
  $region7: #{generator_forward.9} parent=0 // loop_footer_branch
    %8 = sbr.rel target = $region3
  $region8: #{generator_forward.9} parent=0 // loop_exit
    _

</llo_original>
